<compile_context>
chip_gen: v7x
topology: tpu7x:2x2x1
jax: 0.10.0
libtpu: 0.0.40
codegen_flags: <defaults>
</compile_context>

<pallas_src>
import functools

import jax
import jax.numpy as jnp
from jax.experimental import pallas as pl
from jax.experimental.pallas import tpu as pltpu

EPS = 1e-5


# ---------------------------------------------------------------- helpers

def _pick_tile(m, max_tile=256):
    """Largest row tile <= max_tile that divides m and is a multiple of 8."""
    t = min(max_tile, m)
    while t >= 8:
        if m % t == 0 and t % 8 == 0:
            return t
        t -= 1
    return m


def _fold_bn(s, q, count, gamma, beta):
    """Fold batch statistics into per-channel scale/shift: y = x*scale + shift."""
    mean = s / count
    var = q / count - mean * mean          # biased variance (matches BatchNorm)
    scale = gamma * jax.lax.rsqrt(var + EPS)
    shift = beta - mean * scale
    return scale, shift


def _full_spec(shape):
    return pl.BlockSpec(shape, lambda i: (0,) * len(shape))


def _acc_spec(c):
    return pl.BlockSpec((1, c), lambda i: (0, 0))


def _row_spec(tile, c):
    return pl.BlockSpec((tile, c), lambda i: (i, 0))


# ---------------------------------------------------------------- kernels

def _expand_stats_kernel(x_ref, w1_ref, *rest, has_ws):
    """Pass A of stage 1: accumulate sum / sum^2 of x@w1 (and x@ws) across tiles."""
    if has_ws:
        ws_ref, s1_ref, q1_ref, ss_ref, qs_ref = rest
    else:
        ws_ref = None
        s1_ref, q1_ref = rest

    @pl.when(pl.program_id(0) == 0)
    def _init():
        s1_ref[...] = jnp.zeros_like(s1_ref)
        q1_ref[...] = jnp.zeros_like(q1_ref)
        if has_ws:
            ss_ref[...] = jnp.zeros_like(ss_ref)
            qs_ref[...] = jnp.zeros_like(qs_ref)

    x = x_ref[...].astype(jnp.bfloat16)                       # cast once per tile
    z1 = jnp.dot(x, w1_ref[...], preferred_element_type=jnp.float32)
    s1_ref[...] += jnp.sum(z1, axis=0, keepdims=True)
    q1_ref[...] += jnp.sum(z1 * z1, axis=0, keepdims=True)
    if has_ws:                                                # fuse shortcut stats
        zs = jnp.dot(x, ws_ref[...], preferred_element_type=jnp.float32)
        ss_ref[...] += jnp.sum(zs, axis=0, keepdims=True)
        qs_ref[...] += jnp.sum(zs * zs, axis=0, keepdims=True)


def _expand_apply_kernel(x_ref, w1_ref, sc_ref, sh_ref, h_ref):
    """Pass B of stage 1: expand 1x1 conv + folded BN1 + ReLU."""
    z = jnp.dot(x_ref[...].astype(jnp.bfloat16), w1_ref[...],
                preferred_element_type=jnp.float32)
    h_ref[...] = jnp.maximum(z * sc_ref[...] + sh_ref[...], 0.0)


def _dw9(xp, w9, stride, ho, wo):
    """3x3 depthwise conv of one padded image held in VMEM.

    xp: (H+2, W+2, C) f32, w9: (9, C) f32  ->  (Ho, Wo, C) f32.
    The nine taps are static slices of the in-VMEM tile (no HBM duplication).
    """
    c = xp.shape[-1]
    acc = None
    for kh in range(3):
        for kw in range(3):
            tap = jax.lax.slice(
                xp,
                (kh, kw, 0),
                (kh + stride * (ho - 1) + 1, kw + stride * (wo - 1) + 1, c),
                (stride, stride, 1))
            term = tap * w9[kh * 3 + kw].reshape(1, 1, c)
            acc = term if acc is None else acc + term
    return acc


def _dw_stats_kernel(xp_ref, w9_ref, s_ref, q_ref, *, stride, ho, wo):
    """Pass A of stage 2: accumulate BN2 statistics of the depthwise output."""
    @pl.when(pl.program_id(0) == 0)
    def _init():
        s_ref[...] = jnp.zeros_like(s_ref)
        q_ref[...] = jnp.zeros_like(q_ref)

    z = _dw9(xp_ref[0], w9_ref[...], stride, ho, wo)
    z2d = z.reshape(ho * wo, -1)
    s_ref[...] += jnp.sum(z2d, axis=0, keepdims=True)
    q_ref[...] += jnp.sum(z2d * z2d, axis=0, keepdims=True)


def _dw_apply_project_kernel(xp_ref, w9_ref, sc2_ref, sh2_ref, w3_ref,
                             z3_ref, s3_ref, q3_ref, *, stride, ho, wo):
    """Pass B of stage 2 fused with the projection matmul + its BN3 statistics.

    The expanded (Ho*Wo, planes) activation never leaves VMEM; only the smaller
    pre-BN projection output z3 is written to HBM.
    """
    @pl.when(pl.program_id(0) == 0)
    def _init():
        s3_ref[...] = jnp.zeros_like(s3_ref)
        q3_ref[...] = jnp.zeros_like(q3_ref)

    z2 = _dw9(xp_ref[0], w9_ref[...], stride, ho, wo)          # (Ho, Wo, P)
    h2 = jnp.maximum(z2 * sc2_ref[...] + sh2_ref[...], 0.0)    # BN2 + ReLU
    h2_2d = h2.reshape(ho * wo, -1).astype(jnp.bfloat16)
    z3 = jnp.dot(h2_2d, w3_ref[...], preferred_element_type=jnp.float32)
    z3_ref[0] = z3
    s3_ref[...] += jnp.sum(z3, axis=0, keepdims=True)
    q3_ref[...] += jnp.sum(z3 * z3, axis=0, keepdims=True)


def _project_apply_kernel(*refs, add_shortcut, has_ws):
    """Final pass: folded BN3 + fused shortcut (1x1 conv + BN, or identity)."""
    if add_shortcut and has_ws:
        z3_ref, x_ref, ws_ref, sc3_ref, sh3_ref, scs_ref, shs_ref, o_ref = refs
    elif add_shortcut:
        z3_ref, x_ref, sc3_ref, sh3_ref, o_ref = refs
    else:
        z3_ref, sc3_ref, sh3_ref, o_ref = refs

    out = z3_ref[...] * sc3_ref[...] + sh3_ref[...]
    if add_shortcut:
        if has_ws:
            zs = jnp.dot(x_ref[...].astype(jnp.bfloat16), ws_ref[...],
                         preferred_element_type=jnp.float32)
            out = out + (zs * scs_ref[...] + shs_ref[...])
        else:
            out = out + x_ref[...]
    o_ref[...] = out


# ---------------------------------------------------------------- wrapper

def block_forward(x_nchw, p, stride):
    n, cin, h, w = x_nchw.shape
    x = jnp.transpose(x_nchw, (0, 2, 3, 1)).astype(jnp.float32)   # NCHW -> NHWC
    m = n * h * w
    x2d = x.reshape(m, cin)

    planes = p["w1"].shape[1]
    cout = p["w3"].shape[1]
    has_ws = p.get("ws") is not None
    add_shortcut = (stride == 1)

    # weights cast once: bf16 into the MXU, f32 accumulation in-kernel
    w1 = p["w1"].astype(jnp.bfloat16)
    w3 = p["w3"].astype(jnp.bfloat16)
    ws = p["ws"].astype(jnp.bfloat16) if has_ws else None
    w9 = p["w2"].reshape(9, planes).astype(jnp.float32)

    tile_m = _pick_tile(m)
    gm = m // tile_m

    arb = pltpu.CompilerParams(dimension_semantics=("arbitrary",))
    par = pltpu.CompilerParams(dimension_semantics=("parallel",))

    # ---- stage 1, pass A: expand-conv batch stats (+ fused shortcut-conv stats)
    in_args = [x2d, w1]
    in_specs = [_row_spec(tile_m, cin), _full_spec((cin, planes))]
    out_shapes = [jax.ShapeDtypeStruct((1, planes), jnp.float32)] * 2
    out_specs = [_acc_spec(planes)] * 2
    if has_ws:
        in_args.append(ws)
        in_specs.append(_full_spec((cin, cout)))
        out_shapes += [jax.ShapeDtypeStruct((1, cout), jnp.float32)] * 2
        out_specs += [_acc_spec(cout)] * 2
    stats = pl.pallas_call(
        functools.partial(_expand_stats_kernel, has_ws=has_ws),
        grid=(gm,),
        in_specs=in_specs,
        out_specs=tuple(out_specs),
        out_shape=tuple(out_shapes),
        compiler_params=arb,
    )(*in_args)
    if has_ws:
        s1, q1, ss, qs = stats
        scs, shs = _fold_bn(ss, qs, m, p["gs"], p["bs"])
    else:
        s1, q1 = stats
        scs = shs = None
    sc1, sh1 = _fold_bn(s1, q1, m, p["g1"], p["b1"])

    # ---- stage 1, pass B: expand conv + folded BN1 + ReLU
    h1 = pl.pallas_call(
        _expand_apply_kernel,
        grid=(gm,),
        in_specs=[_row_spec(tile_m, cin), _full_spec((cin, planes)),
                  _acc_spec(planes), _acc_spec(planes)],
        out_specs=_row_spec(tile_m, planes),
        out_shape=jax.ShapeDtypeStruct((m, planes), jnp.float32),
        compiler_params=par,
    )(x2d, w1, sc1, sh1)

    # ---- stage 2 + 3: depthwise 3x3 (+BN2+ReLU) fused with projection matmul
    ho = (h + 2 - 3) // stride + 1
    wo = (w + 2 - 3) // stride + 1
    mo = n * ho * wo

    h1p = jnp.pad(h1.reshape(n, h, w, planes), ((0, 0), (1, 1), (1, 1), (0, 0)))
    img_spec = pl.BlockSpec((1, h + 2, w + 2, planes), lambda b: (b, 0, 0, 0))
    w9_spec = _full_spec((9, planes))

    s2, q2 = pl.pallas_call(
        functools.partial(_dw_stats_kernel, stride=stride, ho=ho, wo=wo),
        grid=(n,),
        in_specs=[img_spec, w9_spec],
        out_specs=(_acc_spec(planes), _acc_spec(planes)),
        out_shape=(jax.ShapeDtypeStruct((1, planes), jnp.float32),) * 2,
        compiler_params=arb,
    )(h1p, w9)
    sc2, sh2 = _fold_bn(s2, q2, mo, p["g2"], p["b2"])

    z3_3d, s3, q3 = pl.pallas_call(
        functools.partial(_dw_apply_project_kernel, stride=stride, ho=ho, wo=wo),
        grid=(n,),
        in_specs=[img_spec, w9_spec, _acc_spec(planes), _acc_spec(planes),
                  _full_spec((planes, cout))],
        out_specs=(pl.BlockSpec((1, ho * wo, cout), lambda b: (b, 0, 0)),
                   _acc_spec(cout), _acc_spec(cout)),
        out_shape=(jax.ShapeDtypeStruct((n, ho * wo, cout), jnp.float32),
                   jax.ShapeDtypeStruct((1, cout), jnp.float32),
                   jax.ShapeDtypeStruct((1, cout), jnp.float32)),
        compiler_params=arb,
    )(h1p, w9, sc2, sh2, w3)
    sc3, sh3 = _fold_bn(s3, q3, mo, p["g3"], p["b3"])
    z3_2d = z3_3d.reshape(mo, cout)

    # ---- stage 3, pass B: folded BN3 + fused shortcut
    tile_o = _pick_tile(mo)
    go = mo // tile_o
    in_args = [z3_2d]
    in_specs = [_row_spec(tile_o, cout)]
    if add_shortcut:
        in_args.append(x2d)                       # stride==1 -> mo == m
        in_specs.append(_row_spec(tile_o, cin))
        if has_ws:
            in_args.append(ws)
            in_specs.append(_full_spec((cin, cout)))
    in_args += [sc3, sh3]
    in_specs += [_acc_spec(cout), _acc_spec(cout)]
    if add_shortcut and has_ws:
        in_args += [scs, shs]
        in_specs += [_acc_spec(cout), _acc_spec(cout)]

    out2d = pl.pallas_call(
        functools.partial(_project_apply_kernel,
                          add_shortcut=add_shortcut, has_ws=has_ws),
        grid=(go,),
        in_specs=in_specs,
        out_specs=_row_spec(tile_o, cout),
        out_shape=jax.ShapeDtypeStruct((mo, cout), jnp.float32),
        compiler_params=par,
    )(*in_args)

    out = out2d.reshape(n, ho, wo, cout)
    return jnp.transpose(out, (0, 3, 1, 2))       # NHWC -> NCHW


# ---------------------------------------------------------------- reference

def reference_block(x_nchw, p, stride):
    x = jnp.transpose(x_nchw, (0, 2, 3, 1))

    def bn(y, g, b):
        m = y.mean(axis=(0, 1, 2), keepdims=True)
        v = ((y - m) ** 2).mean(axis=(0, 1, 2), keepdims=True)
        return (y - m) / jnp.sqrt(v + EPS) * g.reshape(1, 1, 1, -1) \
            + b.reshape(1, 1, 1, -1)

    out = jax.nn.relu(bn(jnp.einsum("nhwc,cd->nhwd", x, p["w1"]),
                         p["g1"], p["b1"]))
    n, h, w, c = out.shape
    ho = (h + 2 - 3) // stride + 1
    wo = (w + 2 - 3) // stride + 1
    xp = jnp.pad(out, ((0, 0), (1, 1), (1, 1), (0, 0)))
    acc = jnp.zeros((n, ho, wo, c), jnp.float32)
    for kh in range(3):
        for kw in range(3):
            acc = acc + xp[:, kh:kh + stride * (ho - 1) + 1:stride,
                           kw:kw + stride * (wo - 1) + 1:stride, :] * p["w2"][kh, kw]
    out = jax.nn.relu(bn(acc, p["g2"], p["b2"]))
    out = bn(jnp.einsum("nhwc,cd->nhwd", out, p["w3"]), p["g3"], p["b3"])
    if stride == 1:
        if p.get("ws") is not None:
            sc = bn(jnp.einsum("nhwc,cd->nhwd", x, p["ws"]), p["gs"], p["bs"])
        else:
            sc = x
        out = out + sc
    return jnp.transpose(out, (0, 3, 1, 2))


# ---------------------------------------------------------------- params

def init_params(key, in_planes, out_planes, expansion, stride):
    planes = expansion * in_planes
    ks = jax.random.split(key, 4)
    p = {
        # conv1: (planes, in_planes, 1, 1) -> (in_planes, planes)
        "w1": 0.2 * jax.random.normal(ks[0], (in_planes, planes), jnp.float32),
        "g1": jnp.ones((1, planes), jnp.float32),
        "b1": jnp.zeros((1, planes), jnp.float32),
        # conv2 depthwise: (planes, 1, 3, 3) -> (3, 3, planes)
        "w2": 0.2 * jax.random.normal(ks[1], (3, 3, planes), jnp.float32),
        "g2": jnp.ones((1, planes), jnp.float32),
        "b2": jnp.zeros((1, planes), jnp.float32),
        # conv3: (out_planes, planes, 1, 1) -> (planes, out_planes)
        "w3": 0.2 * jax.random.normal(ks[2], (planes, out_planes), jnp.float32),
        "g3": jnp.ones((1, out_planes), jnp.float32),
        "b3": jnp.zeros((1, out_planes), jnp.float32),
        "ws": None,
    }
    if stride == 1 and in_planes != out_planes:
        p["ws"] = 0.2 * jax.random.normal(ks[3], (in_planes, out_planes),
                                          jnp.float32)
        p["gs"] = jnp.ones((1, out_planes), jnp.float32)
        p["bs"] = jnp.zeros((1, out_planes), jnp.float32)
    return p


if __name__ == "__main__":
    in_planes, out_planes, expansion, stride = 4, 8, 2, 1
    key = jax.random.PRNGKey(0)
    kx, kp = jax.random.split(key)
    x = jax.random.normal(kx, (2, in_planes, 16, 16), jnp.float32)  # NCHW
    params = init_params(kp, in_planes, out_planes, expansion, stride)

    fwd = jax.jit(block_forward, static_argnums=2)
    out = jax.block_until_ready(fwd(x, params, stride))

    ref = reference_block(x, params, stride)
    assert out.shape == (2, out_planes, 16, 16)
    assert jnp.allclose(out, ref, atol=3e-2, rtol=3e-2), float(
        jnp.max(jnp.abs(out - ref)))

    # TODO(synk): BatchNorm running-mean/var buffer updates (module state) are
    # not modeled; only the train-mode forward (batch statistics) is computed.
    print("KERNEL_OK")
</pallas_src>

<mosaic_0001>
module attributes {stable_mosaic.version = 11 : i64} {
  func.func @_expand_apply_kernel(%arg0: i32, %arg1: memref<256x4xf32, #tpu.memory_space<vmem>>, %arg2: memref<4x8xbf16, #tpu.memory_space<vmem>>, %arg3: memref<1x8xf32, #tpu.memory_space<vmem>>, %arg4: memref<1x8xf32, #tpu.memory_space<vmem>>, %arg5: memref<256x8xf32, #tpu.memory_space<vmem>>) attributes {dimension_semantics = [#tpu.dimension_semantics<parallel>], iteration_bounds = array<i64: 2>, scalar_prefetch = 0 : i64, scratch_operands = 0 : i64, tpu.core_type = #tpu.core_type<tc>, window_params = [{transform_indices = @transform_0, window_bounds = array<i64: 256, 4>}, {pipeline_mode = #tpu.pipeline_mode<synchronous>, transform_indices = @transform_1, window_bounds = array<i64: 4, 8>}, {pipeline_mode = #tpu.pipeline_mode<synchronous>, transform_indices = @transform_2, window_bounds = array<i64: 1, 8>}, {pipeline_mode = #tpu.pipeline_mode<synchronous>, transform_indices = @transform_3, window_bounds = array<i64: 1, 8>}, {transform_indices = @transform_4, window_bounds = array<i64: 256, 8>}]} {
    %c0 = arith.constant 0 : index
    %c0_0 = arith.constant 0 : index
    %0 = vector.load %arg1[%c0, %c0_0] : memref<256x4xf32, #tpu.memory_space<vmem>>, vector<256x4xf32>
    %1 = arith.truncf %0 : vector<256x4xf32> to vector<256x4xbf16>
    %c0_1 = arith.constant 0 : index
    %c0_2 = arith.constant 0 : index
    %2 = vector.load %arg2[%c0_1, %c0_2] : memref<4x8xbf16, #tpu.memory_space<vmem>>, vector<4x8xbf16>
    %cst = arith.constant dense<0.000000e+00> : vector<256x8xf32>
    %3 = tpu.matmul %1, %2, %cst {dimension_numbers = #tpu.dot_dimension_numbers<[1], [0], [0], [1], [0, 0, 1, 1], [], []>} : vector<256x4xbf16>, vector<4x8xbf16>, vector<256x8xf32> -> vector<256x8xf32>
    %c0_3 = arith.constant 0 : index
    %c0_4 = arith.constant 0 : index
    %4 = vector.load %arg3[%c0_3, %c0_4] : memref<1x8xf32, #tpu.memory_space<vmem>>, vector<1x8xf32>
    %5 = vector.broadcast %4 : vector<1x8xf32> to vector<256x8xf32>
    %6 = arith.mulf %3, %5 : vector<256x8xf32>
    %c0_5 = arith.constant 0 : index
    %c0_6 = arith.constant 0 : index
    %7 = vector.load %arg4[%c0_5, %c0_6] : memref<1x8xf32, #tpu.memory_space<vmem>>, vector<1x8xf32>
    %8 = vector.broadcast %7 : vector<1x8xf32> to vector<256x8xf32>
    %9 = arith.addf %6, %8 : vector<256x8xf32>
    %cst_7 = arith.constant 0.000000e+00 : f32
    %10 = vector.broadcast %cst_7 : f32 to vector<256x8xf32>
    %11 = arith.maximumf %9, %10 : vector<256x8xf32>
    %c0_8 = arith.constant 0 : index
    %c0_9 = arith.constant 0 : index
    %12 = vector.load %arg5[%c0_8, %c0_9] : memref<256x8xf32, #tpu.memory_space<vmem>>, vector<256x8xf32>
    tpu.vector_store %arg5[%c0_8, %c0_9], %11 {strides = array<i32>} : memref<256x8xf32, #tpu.memory_space<vmem>>, vector<256x8xf32>,
    return
  }
  func.func @transform_0(%arg0: i32) -> (i32, i32) {
    %c0_i32 = arith.constant 0 : i32
    %c0_i32_0 = arith.constant 0 : i32
    return %arg0, %c0_i32 : i32, i32
  }
  func.func @transform_1(%arg0: i32) -> (i32, i32) {
    %c0_i32 = arith.constant 0 : i32
    %c0_i32_0 = arith.constant 0 : i32
    %c0_i32_1 = arith.constant 0 : i32
    return %c0_i32, %c0_i32_0 : i32, i32
  }
  func.func @transform_2(%arg0: i32) -> (i32, i32) {
    %c0_i32 = arith.constant 0 : i32
    %c0_i32_0 = arith.constant 0 : i32
    %c0_i32_1 = arith.constant 0 : i32
    return %c0_i32, %c0_i32_0 : i32, i32
  }
  func.func @transform_3(%arg0: i32) -> (i32, i32) {
    %c0_i32 = arith.constant 0 : i32
    %c0_i32_0 = arith.constant 0 : i32
    %c0_i32_1 = arith.constant 0 : i32
    return %c0_i32, %c0_i32_0 : i32, i32
  }
  func.func @transform_4(%arg0: i32) -> (i32, i32) {
    %c0_i32 = arith.constant 0 : i32
    %c0_i32_0 = arith.constant 0 : i32
    return %arg0, %c0_i32 : i32, i32
  }
}

module attributes {stable_mosaic.version = 11 : i64} {
  func.func @_expand_stats_kernel(%arg0: i32, %arg1: memref<256x4xf32, #tpu.memory_space<vmem>>, %arg2: memref<4x8xbf16, #tpu.memory_space<vmem>>, %arg3: memref<4x8xbf16, #tpu.memory_space<vmem>>, %arg4: memref<1x8xf32, #tpu.memory_space<vmem>>, %arg5: memref<1x8xf32, #tpu.memory_space<vmem>>, %arg6: memref<1x8xf32, #tpu.memory_space<vmem>>, %arg7: memref<1x8xf32, #tpu.memory_space<vmem>>) attributes {dimension_semantics = [#tpu.dimension_semantics<arbitrary>], iteration_bounds = array<i64: 2>, scalar_prefetch = 0 : i64, scratch_operands = 0 : i64, tpu.core_type = #tpu.core_type<tc>, window_params = [{transform_indices = @transform_0, window_bounds = array<i64: 256, 4>}, {pipeline_mode = #tpu.pipeline_mode<synchronous>, transform_indices = @transform_1, window_bounds = array<i64: 4, 8>}, {pipeline_mode = #tpu.pipeline_mode<synchronous>, transform_indices = @transform_2, window_bounds = array<i64: 4, 8>}, {pipeline_mode = #tpu.pipeline_mode<synchronous>, transform_indices = @transform_3, window_bounds = array<i64: 1, 8>}, {pipeline_mode = #tpu.pipeline_mode<synchronous>, transform_indices = @transform_4, window_bounds = array<i64: 1, 8>}, {pipeline_mode = #tpu.pipeline_mode<synchronous>, transform_indices = @transform_5, window_bounds = array<i64: 1, 8>}, {pipeline_mode = #tpu.pipeline_mode<synchronous>, transform_indices = @transform_6, window_bounds = array<i64: 1, 8>}]} {
    %c0_i32 = arith.constant 0 : i32
    %0 = arith.cmpi eq, %arg0, %c0_i32 : i32
    %1 = arith.extui %0 : i1 to i32
    %c0_i32_0 = arith.constant 0 : i32
    %2 = arith.cmpi ne, %1, %c0_i32_0 : i32
    scf.if %2 {
      %cst_27 = arith.constant 0.000000e+00 : f32
      %31 = vector.broadcast %cst_27 : f32 to vector<1x8xf32>
      %c0_28 = arith.constant 0 : index
      %c0_29 = arith.constant 0 : index
      %32 = vector.load %arg4[%c0_28, %c0_29] : memref<1x8xf32, #tpu.memory_space<vmem>>, vector<1x8xf32>
      tpu.vector_store %arg4[%c0_28, %c0_29], %31 {strides = array<i32>} : memref<1x8xf32, #tpu.memory_space<vmem>>, vector<1x8xf32>,
      %cst_30 = arith.constant 0.000000e+00 : f32
      %33 = vector.broadcast %cst_30 : f32 to vector<1x8xf32>
      %c0_31 = arith.constant 0 : index
      %c0_32 = arith.constant 0 : index
      %34 = vector.load %arg5[%c0_31, %c0_32] : memref<1x8xf32, #tpu.memory_space<vmem>>, vector<1x8xf32>
      tpu.vector_store %arg5[%c0_31, %c0_32], %33 {strides = array<i32>} : memref<1x8xf32, #tpu.memory_space<vmem>>, vector<1x8xf32>,
      %cst_33 = arith.constant 0.000000e+00 : f32
      %35 = vector.broadcast %cst_33 : f32 to vector<1x8xf32>
      %c0_34 = arith.constant 0 : index
      %c0_35 = arith.constant 0 : index
      %36 = vector.load %arg6[%c0_34, %c0_35] : memref<1x8xf32, #tpu.memory_space<vmem>>, vector<1x8xf32>
      tpu.vector_store %arg6[%c0_34, %c0_35], %35 {strides = array<i32>} : memref<1x8xf32, #tpu.memory_space<vmem>>, vector<1x8xf32>,
      %cst_36 = arith.constant 0.000000e+00 : f32
      %37 = vector.broadcast %cst_36 : f32 to vector<1x8xf32>
      %c0_37 = arith.constant 0 : index
      %c0_38 = arith.constant 0 : index
      %38 = vector.load %arg7[%c0_37, %c0_38] : memref<1x8xf32, #tpu.memory_space<vmem>>, vector<1x8xf32>
      tpu.vector_store %arg7[%c0_37, %c0_38], %37 {strides = array<i32>} : memref<1x8xf32, #tpu.memory_space<vmem>>, vector<1x8xf32>,
    } else {
    }
    %c0 = arith.constant 0 : index
    %c0_1 = arith.constant 0 : index
    %3 = vector.load %arg1[%c0, %c0_1] : memref<256x4xf32, #tpu.memory_space<vmem>>, vector<256x4xf32>
    %4 = arith.truncf %3 : vector<256x4xf32> to vector<256x4xbf16>
    %c0_2 = arith.constant 0 : index
    %c0_3 = arith.constant 0 : index
    %5 = vector.load %arg2[%c0_2, %c0_3] : memref<4x8xbf16, #tpu.memory_space<vmem>>, vector<4x8xbf16>
    %cst = arith.constant dense<0.000000e+00> : vector<256x8xf32>
    %6 = tpu.matmul %4, %5, %cst {dimension_numbers = #tpu.dot_dimension_numbers<[1], [0], [0], [1], [0, 0, 1, 1], [], []>} : vector<256x4xbf16>, vector<4x8xbf16>, vector<256x8xf32> -> vector<256x8xf32>
    %c0_4 = arith.constant 0 : index
    %c0_5 = arith.constant 0 : index
    %7 = vector.load %arg4[%c0_4, %c0_5] : memref<1x8xf32, #tpu.memory_space<vmem>>, vector<1x8xf32>
    %cst_6 = arith.constant dense<0.000000e+00> : vector<8xf32>
    %8 = vector.multi_reduction <add>, %6, %cst_6 [0] : vector<256x8xf32> to vector<8xf32>
    %9 = vector.shape_cast %8 : vector<8xf32> to vector<1x8xf32>
    %10 = arith.addf %7, %9 : vector<1x8xf32>
    %c0_7 = arith.constant 0 : index
    %c0_8 = arith.constant 0 : index
    %11 = vector.load %arg4[%c0_7, %c0_8] : memref<1x8xf32, #tpu.memory_space<vmem>>, vector<1x8xf32>
    tpu.vector_store %arg4[%c0_7, %c0_8], %10 {strides = array<i32>} : memref<1x8xf32, #tpu.memory_space<vmem>>, vector<1x8xf32>,
    %c0_9 = arith.constant 0 : index
    %c0_10 = arith.constant 0 : index
    %12 = vector.load %arg5[%c0_9, %c0_10] : memref<1x8xf32, #tpu.memory_space<vmem>>, vector<1x8xf32>
    %13 = arith.mulf %6, %6 : vector<256x8xf32>
    %cst_11 = arith.constant dense<0.000000e+00> : vector<8xf32>
    %14 = vector.multi_reduction <add>, %13, %cst_11 [0] : vector<256x8xf32> to vector<8xf32>
    %15 = vector.shape_cast %14 : vector<8xf32> to vector<1x8xf32>
    %16 = arith.addf %12, %15 : vector<1x8xf32>
    %c0_12 = arith.constant 0 : index
    %c0_13 = arith.constant 0 : index
    %17 = vector.load %arg5[%c0_12, %c0_13] : memref<1x8xf32, #tpu.memory_space<vmem>>, vector<1x8xf32>
    tpu.vector_store %arg5[%c0_12, %c0_13], %16 {strides = array<i32>} : memref<1x8xf32, #tpu.memory_space<vmem>>, vector<1x8xf32>,
    %c0_14 = arith.constant 0 : index
    %c0_15 = arith.constant 0 : index
    %18 = vector.load %arg3[%c0_14, %c0_15] : memref<4x8xbf16, #tpu.memory_space<vmem>>, vector<4x8xbf16>
    %cst_16 = arith.constant dense<0.000000e+00> : vector<256x8xf32>
    %19 = tpu.matmul %4, %18, %cst_16 {dimension_numbers = #tpu.dot_dimension_numbers<[1], [0], [0], [1], [0, 0, 1, 1], [], []>} : vector<256x4xbf16>, vector<4x8xbf16>, vector<256x8xf32> -> vector<256x8xf32>
    %c0_17 = arith.constant 0 : index
    %c0_18 = arith.constant 0 : index
    %20 = vector.load %arg6[%c0_17, %c0_18] : memref<1x8xf32, #tpu.memory_space<vmem>>, vector<1x8xf32>
    %cst_19 = arith.constant dense<0.000000e+00> : vector<8xf32>
    %21 = vector.multi_reduction <add>, %19, %cst_19 [0] : vector<256x8xf32> to vector<8xf32>
    %22 = vector.shape_cast %21 : vector<8xf32> to vector<1x8xf32>
    %23 = arith.addf %20, %22 : vector<1x8xf32>
    %c0_20 = arith.constant 0 : index
    %c0_21 = arith.constant 0 : index
    %24 = vector.load %arg6[%c0_20, %c0_21] : memref<1x8xf32, #tpu.memory_space<vmem>>, vector<1x8xf32>
    tpu.vector_store %arg6[%c0_20, %c0_21], %23 {strides = array<i32>} : memref<1x8xf32, #tpu.memory_space<vmem>>, vector<1x8xf32>,
    %c0_22 = arith.constant 0 : index
    %c0_23 = arith.constant 0 : index
    %25 = vector.load %arg7[%c0_22, %c0_23] : memref<1x8xf32, #tpu.memory_space<vmem>>, vector<1x8xf32>
    %26 = arith.mulf %19, %19 : vector<256x8xf32>
    %cst_24 = arith.constant dense<0.000000e+00> : vector<8xf32>
    %27 = vector.multi_reduction <add>, %26, %cst_24 [0] : vector<256x8xf32> to vector<8xf32>
    %28 = vector.shape_cast %27 : vector<8xf32> to vector<1x8xf32>
    %29 = arith.addf %25, %28 : vector<1x8xf32>
    %c0_25 = arith.constant 0 : index
    %c0_26 = arith.constant 0 : index
    %30 = vector.load %arg7[%c0_25, %c0_26] : memref<1x8xf32, #tpu.memory_space<vmem>>, vector<1x8xf32>
    tpu.vector_store %arg7[%c0_25, %c0_26], %29 {strides = array<i32>} : memref<1x8xf32, #tpu.memory_space<vmem>>, vector<1x8xf32>,
    return
  }
  func.func @transform_0(%arg0: i32) -> (i32, i32) {
    %c0_i32 = arith.constant 0 : i32
    %c0_i32_0 = arith.constant 0 : i32
    return %arg0, %c0_i32 : i32, i32
  }
  func.func @transform_1(%arg0: i32) -> (i32, i32) {
    %c0_i32 = arith.constant 0 : i32
    %c0_i32_0 = arith.constant 0 : i32
    %c0_i32_1 = arith.constant 0 : i32
    return %c0_i32, %c0_i32_0 : i32, i32
  }
  func.func @transform_2(%arg0: i32) -> (i32, i32) {
    %c0_i32 = arith.constant 0 : i32
    %c0_i32_0 = arith.constant 0 : i32
    %c0_i32_1 = arith.constant 0 : i32
    return %c0_i32, %c0_i32_0 : i32, i32
  }
  func.func @transform_3(%arg0: i32) -> (i32, i32) {
    %c0_i32 = arith.constant 0 : i32
    %c0_i32_0 = arith.constant 0 : i32
    %c0_i32_1 = arith.constant 0 : i32
    return %c0_i32, %c0_i32_0 : i32, i32
  }
  func.func @transform_4(%arg0: i32) -> (i32, i32) {
    %c0_i32 = arith.constant 0 : i32
    %c0_i32_0 = arith.constant 0 : i32
    %c0_i32_1 = arith.constant 0 : i32
    return %c0_i32, %c0_i32_0 : i32, i32
  }
  func.func @transform_5(%arg0: i32) -> (i32, i32) {
    %c0_i32 = arith.constant 0 : i32
    %c0_i32_0 = arith.constant 0 : i32
    %c0_i32_1 = arith.constant 0 : i32
    return %c0_i32, %c0_i32_0 : i32, i32
  }
  func.func @transform_6(%arg0: i32) -> (i32, i32) {
    %c0_i32 = arith.constant 0 : i32
    %c0_i32_0 = arith.constant 0 : i32
    %c0_i32_1 = arith.constant 0 : i32
    return %c0_i32, %c0_i32_0 : i32, i32
  }
}

module attributes {stable_mosaic.version = 11 : i64} {
  func.func @_dw_stats_kernel(%arg0: i32, %arg1: memref<1x18x18x8xf32, #tpu.memory_space<vmem>>, %arg2: memref<9x8xf32, #tpu.memory_space<vmem>>, %arg3: memref<1x8xf32, #tpu.memory_space<vmem>>, %arg4: memref<1x8xf32, #tpu.memory_space<vmem>>) attributes {dimension_semantics = [#tpu.dimension_semantics<arbitrary>], iteration_bounds = array<i64: 2>, scalar_prefetch = 0 : i64, scratch_operands = 0 : i64, tpu.core_type = #tpu.core_type<tc>, window_params = [{transform_indices = @transform_0, window_bounds = array<i64: 1, 18, 18, 8>}, {pipeline_mode = #tpu.pipeline_mode<synchronous>, transform_indices = @transform_1, window_bounds = array<i64: 9, 8>}, {pipeline_mode = #tpu.pipeline_mode<synchronous>, transform_indices = @transform_2, window_bounds = array<i64: 1, 8>}, {pipeline_mode = #tpu.pipeline_mode<synchronous>, transform_indices = @transform_3, window_bounds = array<i64: 1, 8>}]} {
    %c0_i32 = arith.constant 0 : i32
    %0 = arith.cmpi eq, %arg0, %c0_i32 : i32
    %1 = arith.extui %0 : i1 to i32
    %c0_i32_0 = arith.constant 0 : i32
    %2 = arith.cmpi ne, %1, %c0_i32_0 : i32
    scf.if %2 {
      %cst_15 = arith.constant 0.000000e+00 : f32
      %80 = vector.broadcast %cst_15 : f32 to vector<1x8xf32>
      %c0_16 = arith.constant 0 : index
      %c0_17 = arith.constant 0 : index
      %81 = vector.load %arg3[%c0_16, %c0_17] : memref<1x8xf32, #tpu.memory_space<vmem>>, vector<1x8xf32>
      tpu.vector_store %arg3[%c0_16, %c0_17], %80 {strides = array<i32>} : memref<1x8xf32, #tpu.memory_space<vmem>>, vector<1x8xf32>,
      %cst_18 = arith.constant 0.000000e+00 : f32
      %82 = vector.broadcast %cst_18 : f32 to vector<1x8xf32>
      %c0_19 = arith.constant 0 : index
      %c0_20 = arith.constant 0 : index
      %83 = vector.load %arg4[%c0_19, %c0_20] : memref<1x8xf32, #tpu.memory_space<vmem>>, vector<1x8xf32>
      tpu.vector_store %arg4[%c0_19, %c0_20], %82 {strides = array<i32>} : memref<1x8xf32, #tpu.memory_space<vmem>>, vector<1x8xf32>,
    } else {
    }
    %c0 = arith.constant 0 : index
    %c0_1 = arith.constant 0 : index
    %c0_2 = arith.constant 0 : index
    %c0_3 = arith.constant 0 : index
    %3 = vector.load %arg1[%c0, %c0_1, %c0_2, %c0_3] : memref<1x18x18x8xf32, #tpu.memory_space<vmem>>, vector<1x18x18x8xf32>
    %4 = vector.shape_cast %3 : vector<1x18x18x8xf32> to vector<18x18x8xf32>
    %c0_4 = arith.constant 0 : index
    %c0_5 = arith.constant 0 : index
    %5 = vector.load %arg2[%c0_4, %c0_5] : memref<9x8xf32, #tpu.memory_space<vmem>>, vector<9x8xf32>
    %6 = vector.extract_strided_slice %4 {offsets = [0, 0, 0], sizes = [16, 16, 8], strides = [1, 1, 1]} : vector<18x18x8xf32> to vector<16x16x8xf32>
    %7 = vector.extract_strided_slice %5 {offsets = [0, 0], sizes = [1, 8], strides = [1, 1]} : vector<9x8xf32> to vector<1x8xf32>
    %8 = vector.shape_cast %7 : vector<1x8xf32> to vector<8xf32>
    %9 = vector.shape_cast %8 : vector<8xf32> to vector<1x1x8xf32>
    %10 = vector.broadcast %9 : vector<1x1x8xf32> to vector<16x16x8xf32>
    %11 = arith.mulf %6, %10 : vector<16x16x8xf32>
    %12 = vector.extract_strided_slice %4 {offsets = [0, 1, 0], sizes = [16, 16, 8], strides = [1, 1, 1]} : vector<18x18x8xf32> to vector<16x16x8xf32>
    %13 = vector.extract_strided_slice %5 {offsets = [1, 0], sizes = [1, 8], strides = [1, 1]} : vector<9x8xf32> to vector<1x8xf32>
    %14 = vector.shape_cast %13 : vector<1x8xf32> to vector<8xf32>
    %15 = vector.shape_cast %14 : vector<8xf32> to vector<1x1x8xf32>
    %16 = vector.broadcast %15 : vector<1x1x8xf32> to vector<16x16x8xf32>
    %17 = arith.mulf %12, %16 : vector<16x16x8xf32>
    %18 = arith.addf %11, %17 : vector<16x16x8xf32>
    %19 = vector.extract_strided_slice %4 {offsets = [0, 2, 0], sizes = [16, 16, 8], strides = [1, 1, 1]} : vector<18x18x8xf32> to vector<16x16x8xf32>
    %20 = vector.extract_strided_slice %5 {offsets = [2, 0], sizes = [1, 8], strides = [1, 1]} : vector<9x8xf32> to vector<1x8xf32>
    %21 = vector.shape_cast %20 : vector<1x8xf32> to vector<8xf32>
    %22 = vector.shape_cast %21 : vector<8xf32> to vector<1x1x8xf32>
    %23 = vector.broadcast %22 : vector<1x1x8xf32> to vector<16x16x8xf32>
    %24 = arith.mulf %19, %23 : vector<16x16x8xf32>
    %25 = arith.addf %18, %24 : vector<16x16x8xf32>
    %26 = vector.extract_strided_slice %4 {offsets = [1, 0, 0], sizes = [16, 16, 8], strides = [1, 1, 1]} : vector<18x18x8xf32> to vector<16x16x8xf32>
    %27 = vector.extract_strided_slice %5 {offsets = [3, 0], sizes = [1, 8], strides = [1, 1]} : vector<9x8xf32> to vector<1x8xf32>
    %28 = vector.shape_cast %27 : vector<1x8xf32> to vector<8xf32>
    %29 = vector.shape_cast %28 : vector<8xf32> to vector<1x1x8xf32>
    %30 = vector.broadcast %29 : vector<1x1x8xf32> to vector<16x16x8xf32>
    %31 = arith.mulf %26, %30 : vector<16x16x8xf32>
    %32 = arith.addf %25, %31 : vector<16x16x8xf32>
    %33 = vector.extract_strided_slice %4 {offsets = [1, 1, 0], sizes = [16, 16, 8], strides = [1, 1, 1]} : vector<18x18x8xf32> to vector<16x16x8xf32>
    %34 = vector.extract_strided_slice %5 {offsets = [4, 0], sizes = [1, 8], strides = [1, 1]} : vector<9x8xf32> to vector<1x8xf32>
    %35 = vector.shape_cast %34 : vector<1x8xf32> to vector<8xf32>
    %36 = vector.shape_cast %35 : vector<8xf32> to vector<1x1x8xf32>
    %37 = vector.broadcast %36 : vector<1x1x8xf32> to vector<16x16x8xf32>
    %38 = arith.mulf %33, %37 : vector<16x16x8xf32>
    %39 = arith.addf %32, %38 : vector<16x16x8xf32>
    %40 = vector.extract_strided_slice %4 {offsets = [1, 2, 0], sizes = [16, 16, 8], strides = [1, 1, 1]} : vector<18x18x8xf32> to vector<16x16x8xf32>
    %41 = vector.extract_strided_slice %5 {offsets = [5, 0], sizes = [1, 8], strides = [1, 1]} : vector<9x8xf32> to vector<1x8xf32>
    %42 = vector.shape_cast %41 : vector<1x8xf32> to vector<8xf32>
    %43 = vector.shape_cast %42 : vector<8xf32> to vector<1x1x8xf32>
    %44 = vector.broadcast %43 : vector<1x1x8xf32> to vector<16x16x8xf32>
    %45 = arith.mulf %40, %44 : vector<16x16x8xf32>
    %46 = arith.addf %39, %45 : vector<16x16x8xf32>
    %47 = vector.extract_strided_slice %4 {offsets = [2, 0, 0], sizes = [16, 16, 8], strides = [1, 1, 1]} : vector<18x18x8xf32> to vector<16x16x8xf32>
    %48 = vector.extract_strided_slice %5 {offsets = [6, 0], sizes = [1, 8], strides = [1, 1]} : vector<9x8xf32> to vector<1x8xf32>
    %49 = vector.shape_cast %48 : vector<1x8xf32> to vector<8xf32>
    %50 = vector.shape_cast %49 : vector<8xf32> to vector<1x1x8xf32>
    %51 = vector.broadcast %50 : vector<1x1x8xf32> to vector<16x16x8xf32>
    %52 = arith.mulf %47, %51 : vector<16x16x8xf32>
    %53 = arith.addf %46, %52 : vector<16x16x8xf32>
    %54 = vector.extract_strided_slice %4 {offsets = [2, 1, 0], sizes = [16, 16, 8], strides = [1, 1, 1]} : vector<18x18x8xf32> to vector<16x16x8xf32>
    %55 = vector.extract_strided_slice %5 {offsets = [7, 0], sizes = [1, 8], strides = [1, 1]} : vector<9x8xf32> to vector<1x8xf32>
    %56 = vector.shape_cast %55 : vector<1x8xf32> to vector<8xf32>
    %57 = vector.shape_cast %56 : vector<8xf32> to vector<1x1x8xf32>
    %58 = vector.broadcast %57 : vector<1x1x8xf32> to vector<16x16x8xf32>
    %59 = arith.mulf %54, %58 : vector<16x16x8xf32>
    %60 = arith.addf %53, %59 : vector<16x16x8xf32>
    %61 = vector.extract_strided_slice %4 {offsets = [2, 2, 0], sizes = [16, 16, 8], strides = [1, 1, 1]} : vector<18x18x8xf32> to vector<16x16x8xf32>
    %62 = vector.extract_strided_slice %5 {offsets = [8, 0], sizes = [1, 8], strides = [1, 1]} : vector<9x8xf32> to vector<1x8xf32>
    %63 = vector.shape_cast %62 : vector<1x8xf32> to vector<8xf32>
    %64 = vector.shape_cast %63 : vector<8xf32> to vector<1x1x8xf32>
    %65 = vector.broadcast %64 : vector<1x1x8xf32> to vector<16x16x8xf32>
    %66 = arith.mulf %61, %65 : vector<16x16x8xf32>
    %67 = arith.addf %60, %66 : vector<16x16x8xf32>
    %68 = vector.shape_cast %67 : vector<16x16x8xf32> to vector<256x8xf32>
    %c0_6 = arith.constant 0 : index
    %c0_7 = arith.constant 0 : index
    %69 = vector.load %arg3[%c0_6, %c0_7] : memref<1x8xf32, #tpu.memory_space<vmem>>, vector<1x8xf32>
    %cst = arith.constant dense<0.000000e+00> : vector<8xf32>
    %70 = vector.multi_reduction <add>, %68, %cst [0] : vector<256x8xf32> to vector<8xf32>
    %71 = vector.shape_cast %70 : vector<8xf32> to vector<1x8xf32>
    %72 = arith.addf %69, %71 : vector<1x8xf32>
    %c0_8 = arith.constant 0 : index
    %c0_9 = arith.constant 0 : index
    %73 = vector.load %arg3[%c0_8, %c0_9] : memref<1x8xf32, #tpu.memory_space<vmem>>, vector<1x8xf32>
    tpu.vector_store %arg3[%c0_8, %c0_9], %72 {strides = array<i32>} : memref<1x8xf32, #tpu.memory_space<vmem>>, vector<1x8xf32>,
    %c0_10 = arith.constant 0 : index
    %c0_11 = arith.constant 0 : index
    %74 = vector.load %arg4[%c0_10, %c0_11] : memref<1x8xf32, #tpu.memory_space<vmem>>, vector<1x8xf32>
    %75 = arith.mulf %68, %68 : vector<256x8xf32>
    %cst_12 = arith.constant dense<0.000000e+00> : vector<8xf32>
    %76 = vector.multi_reduction <add>, %75, %cst_12 [0] : vector<256x8xf32> to vector<8xf32>
    %77 = vector.shape_cast %76 : vector<8xf32> to vector<1x8xf32>
    %78 = arith.addf %74, %77 : vector<1x8xf32>
    %c0_13 = arith.constant 0 : index
    %c0_14 = arith.constant 0 : index
    %79 = vector.load %arg4[%c0_13, %c0_14] : memref<1x8xf32, #tpu.memory_space<vmem>>, vector<1x8xf32>
    tpu.vector_store %arg4[%c0_13, %c0_14], %78 {strides = array<i32>} : memref<1x8xf32, #tpu.memory_space<vmem>>, vector<1x8xf32>,
    return
  }
  func.func @transform_0(%arg0: i32) -> (i32, i32, i32, i32) {
    %c0_i32 = arith.constant 0 : i32
    %c0_i32_0 = arith.constant 0 : i32
    %c0_i32_1 = arith.constant 0 : i32
    %c0_i32_2 = arith.constant 0 : i32
    return %arg0, %c0_i32, %c0_i32_0, %c0_i32_1 : i32, i32, i32, i32
  }
  func.func @transform_1(%arg0: i32) -> (i32, i32) {
    %c0_i32 = arith.constant 0 : i32
    %c0_i32_0 = arith.constant 0 : i32
    %c0_i32_1 = arith.constant 0 : i32
    return %c0_i32, %c0_i32_0 : i32, i32
  }
  func.func @transform_2(%arg0: i32) -> (i32, i32) {
    %c0_i32 = arith.constant 0 : i32
    %c0_i32_0 = arith.constant 0 : i32
    %c0_i32_1 = arith.constant 0 : i32
    return %c0_i32, %c0_i32_0 : i32, i32
  }
  func.func @transform_3(%arg0: i32) -> (i32, i32) {
    %c0_i32 = arith.constant 0 : i32
    %c0_i32_0 = arith.constant 0 : i32
    %c0_i32_1 = arith.constant 0 : i32
    return %c0_i32, %c0_i32_0 : i32, i32
  }
}

module attributes {stable_mosaic.version = 11 : i64} {
  func.func @_dw_apply_project_kernel(%arg0: i32, %arg1: memref<1x18x18x8xf32, #tpu.memory_space<vmem>>, %arg2: memref<9x8xf32, #tpu.memory_space<vmem>>, %arg3: memref<1x8xf32, #tpu.memory_space<vmem>>, %arg4: memref<1x8xf32, #tpu.memory_space<vmem>>, %arg5: memref<8x8xbf16, #tpu.memory_space<vmem>>, %arg6: memref<1x256x8xf32, #tpu.memory_space<vmem>>, %arg7: memref<1x8xf32, #tpu.memory_space<vmem>>, %arg8: memref<1x8xf32, #tpu.memory_space<vmem>>) attributes {dimension_semantics = [#tpu.dimension_semantics<arbitrary>], iteration_bounds = array<i64: 2>, scalar_prefetch = 0 : i64, scratch_operands = 0 : i64, tpu.core_type = #tpu.core_type<tc>, window_params = [{transform_indices = @transform_0, window_bounds = array<i64: 1, 18, 18, 8>}, {pipeline_mode = #tpu.pipeline_mode<synchronous>, transform_indices = @transform_1, window_bounds = array<i64: 9, 8>}, {pipeline_mode = #tpu.pipeline_mode<synchronous>, transform_indices = @transform_2, window_bounds = array<i64: 1, 8>}, {pipeline_mode = #tpu.pipeline_mode<synchronous>, transform_indices = @transform_3, window_bounds = array<i64: 1, 8>}, {pipeline_mode = #tpu.pipeline_mode<synchronous>, transform_indices = @transform_4, window_bounds = array<i64: 8, 8>}, {transform_indices = @transform_5, window_bounds = array<i64: 1, 256, 8>}, {pipeline_mode = #tpu.pipeline_mode<synchronous>, transform_indices = @transform_6, window_bounds = array<i64: 1, 8>}, {pipeline_mode = #tpu.pipeline_mode<synchronous>, transform_indices = @transform_7, window_bounds = array<i64: 1, 8>}]} {
    %c0_i32 = arith.constant 0 : i32
    %0 = arith.cmpi eq, %arg0, %c0_i32 : i32
    %1 = arith.extui %0 : i1 to i32
    %c0_i32_0 = arith.constant 0 : i32
    %2 = arith.cmpi ne, %1, %c0_i32_0 : i32
    scf.if %2 {
      %cst_26 = arith.constant 0.000000e+00 : f32
      %96 = vector.broadcast %cst_26 : f32 to vector<1x8xf32>
      %c0_27 = arith.constant 0 : index
      %c0_28 = arith.constant 0 : index
      %97 = vector.load %arg7[%c0_27, %c0_28] : memref<1x8xf32, #tpu.memory_space<vmem>>, vector<1x8xf32>
      tpu.vector_store %arg7[%c0_27, %c0_28], %96 {strides = array<i32>} : memref<1x8xf32, #tpu.memory_space<vmem>>, vector<1x8xf32>,
      %cst_29 = arith.constant 0.000000e+00 : f32
      %98 = vector.broadcast %cst_29 : f32 to vector<1x8xf32>
      %c0_30 = arith.constant 0 : index
      %c0_31 = arith.constant 0 : index
      %99 = vector.load %arg8[%c0_30, %c0_31] : memref<1x8xf32, #tpu.memory_space<vmem>>, vector<1x8xf32>
      tpu.vector_store %arg8[%c0_30, %c0_31], %98 {strides = array<i32>} : memref<1x8xf32, #tpu.memory_space<vmem>>, vector<1x8xf32>,
    } else {
    }
    %c0 = arith.constant 0 : index
    %c0_1 = arith.constant 0 : index
    %c0_2 = arith.constant 0 : index
    %c0_3 = arith.constant 0 : index
    %3 = vector.load %arg1[%c0, %c0_1, %c0_2, %c0_3] : memref<1x18x18x8xf32, #tpu.memory_space<vmem>>, vector<1x18x18x8xf32>
    %4 = vector.shape_cast %3 : vector<1x18x18x8xf32> to vector<18x18x8xf32>
    %c0_4 = arith.constant 0 : index
    %c0_5 = arith.constant 0 : index
    %5 = vector.load %arg2[%c0_4, %c0_5] : memref<9x8xf32, #tpu.memory_space<vmem>>, vector<9x8xf32>
    %6 = vector.extract_strided_slice %4 {offsets = [0, 0, 0], sizes = [16, 16, 8], strides = [1, 1, 1]} : vector<18x18x8xf32> to vector<16x16x8xf32>
    %7 = vector.extract_strided_slice %5 {offsets = [0, 0], sizes = [1, 8], strides = [1, 1]} : vector<9x8xf32> to vector<1x8xf32>
    %8 = vector.shape_cast %7 : vector<1x8xf32> to vector<8xf32>
    %9 = vector.shape_cast %8 : vector<8xf32> to vector<1x1x8xf32>
    %10 = vector.broadcast %9 : vector<1x1x8xf32> to vector<16x16x8xf32>
    %11 = arith.mulf %6, %10 : vector<16x16x8xf32>
    %12 = vector.extract_strided_slice %4 {offsets = [0, 1, 0], sizes = [16, 16, 8], strides = [1, 1, 1]} : vector<18x18x8xf32> to vector<16x16x8xf32>
    %13 = vector.extract_strided_slice %5 {offsets = [1, 0], sizes = [1, 8], strides = [1, 1]} : vector<9x8xf32> to vector<1x8xf32>
    %14 = vector.shape_cast %13 : vector<1x8xf32> to vector<8xf32>
    %15 = vector.shape_cast %14 : vector<8xf32> to vector<1x1x8xf32>
    %16 = vector.broadcast %15 : vector<1x1x8xf32> to vector<16x16x8xf32>
    %17 = arith.mulf %12, %16 : vector<16x16x8xf32>
    %18 = arith.addf %11, %17 : vector<16x16x8xf32>
    %19 = vector.extract_strided_slice %4 {offsets = [0, 2, 0], sizes = [16, 16, 8], strides = [1, 1, 1]} : vector<18x18x8xf32> to vector<16x16x8xf32>
    %20 = vector.extract_strided_slice %5 {offsets = [2, 0], sizes = [1, 8], strides = [1, 1]} : vector<9x8xf32> to vector<1x8xf32>
    %21 = vector.shape_cast %20 : vector<1x8xf32> to vector<8xf32>
    %22 = vector.shape_cast %21 : vector<8xf32> to vector<1x1x8xf32>
    %23 = vector.broadcast %22 : vector<1x1x8xf32> to vector<16x16x8xf32>
    %24 = arith.mulf %19, %23 : vector<16x16x8xf32>
    %25 = arith.addf %18, %24 : vector<16x16x8xf32>
    %26 = vector.extract_strided_slice %4 {offsets = [1, 0, 0], sizes = [16, 16, 8], strides = [1, 1, 1]} : vector<18x18x8xf32> to vector<16x16x8xf32>
    %27 = vector.extract_strided_slice %5 {offsets = [3, 0], sizes = [1, 8], strides = [1, 1]} : vector<9x8xf32> to vector<1x8xf32>
    %28 = vector.shape_cast %27 : vector<1x8xf32> to vector<8xf32>
    %29 = vector.shape_cast %28 : vector<8xf32> to vector<1x1x8xf32>
    %30 = vector.broadcast %29 : vector<1x1x8xf32> to vector<16x16x8xf32>
    %31 = arith.mulf %26, %30 : vector<16x16x8xf32>
    %32 = arith.addf %25, %31 : vector<16x16x8xf32>
    %33 = vector.extract_strided_slice %4 {offsets = [1, 1, 0], sizes = [16, 16, 8], strides = [1, 1, 1]} : vector<18x18x8xf32> to vector<16x16x8xf32>
    %34 = vector.extract_strided_slice %5 {offsets = [4, 0], sizes = [1, 8], strides = [1, 1]} : vector<9x8xf32> to vector<1x8xf32>
    %35 = vector.shape_cast %34 : vector<1x8xf32> to vector<8xf32>
    %36 = vector.shape_cast %35 : vector<8xf32> to vector<1x1x8xf32>
    %37 = vector.broadcast %36 : vector<1x1x8xf32> to vector<16x16x8xf32>
    %38 = arith.mulf %33, %37 : vector<16x16x8xf32>
    %39 = arith.addf %32, %38 : vector<16x16x8xf32>
    %40 = vector.extract_strided_slice %4 {offsets = [1, 2, 0], sizes = [16, 16, 8], strides = [1, 1, 1]} : vector<18x18x8xf32> to vector<16x16x8xf32>
    %41 = vector.extract_strided_slice %5 {offsets = [5, 0], sizes = [1, 8], strides = [1, 1]} : vector<9x8xf32> to vector<1x8xf32>
    %42 = vector.shape_cast %41 : vector<1x8xf32> to vector<8xf32>
    %43 = vector.shape_cast %42 : vector<8xf32> to vector<1x1x8xf32>
    %44 = vector.broadcast %43 : vector<1x1x8xf32> to vector<16x16x8xf32>
    %45 = arith.mulf %40, %44 : vector<16x16x8xf32>
    %46 = arith.addf %39, %45 : vector<16x16x8xf32>
    %47 = vector.extract_strided_slice %4 {offsets = [2, 0, 0], sizes = [16, 16, 8], strides = [1, 1, 1]} : vector<18x18x8xf32> to vector<16x16x8xf32>
    %48 = vector.extract_strided_slice %5 {offsets = [6, 0], sizes = [1, 8], strides = [1, 1]} : vector<9x8xf32> to vector<1x8xf32>
    %49 = vector.shape_cast %48 : vector<1x8xf32> to vector<8xf32>
    %50 = vector.shape_cast %49 : vector<8xf32> to vector<1x1x8xf32>
    %51 = vector.broadcast %50 : vector<1x1x8xf32> to vector<16x16x8xf32>
    %52 = arith.mulf %47, %51 : vector<16x16x8xf32>
    %53 = arith.addf %46, %52 : vector<16x16x8xf32>
    %54 = vector.extract_strided_slice %4 {offsets = [2, 1, 0], sizes = [16, 16, 8], strides = [1, 1, 1]} : vector<18x18x8xf32> to vector<16x16x8xf32>
    %55 = vector.extract_strided_slice %5 {offsets = [7, 0], sizes = [1, 8], strides = [1, 1]} : vector<9x8xf32> to vector<1x8xf32>
    %56 = vector.shape_cast %55 : vector<1x8xf32> to vector<8xf32>
    %57 = vector.shape_cast %56 : vector<8xf32> to vector<1x1x8xf32>
    %58 = vector.broadcast %57 : vector<1x1x8xf32> to vector<16x16x8xf32>
    %59 = arith.mulf %54, %58 : vector<16x16x8xf32>
    %60 = arith.addf %53, %59 : vector<16x16x8xf32>
    %61 = vector.extract_strided_slice %4 {offsets = [2, 2, 0], sizes = [16, 16, 8], strides = [1, 1, 1]} : vector<18x18x8xf32> to vector<16x16x8xf32>
    %62 = vector.extract_strided_slice %5 {offsets = [8, 0], sizes = [1, 8], strides = [1, 1]} : vector<9x8xf32> to vector<1x8xf32>
    %63 = vector.shape_cast %62 : vector<1x8xf32> to vector<8xf32>
    %64 = vector.shape_cast %63 : vector<8xf32> to vector<1x1x8xf32>
    %65 = vector.broadcast %64 : vector<1x1x8xf32> to vector<16x16x8xf32>
    %66 = arith.mulf %61, %65 : vector<16x16x8xf32>
    %67 = arith.addf %60, %66 : vector<16x16x8xf32>
    %c0_6 = arith.constant 0 : index
    %c0_7 = arith.constant 0 : index
    %68 = vector.load %arg3[%c0_6, %c0_7] : memref<1x8xf32, #tpu.memory_space<vmem>>, vector<1x8xf32>
    %69 = vector.shape_cast %68 : vector<1x8xf32> to vector<1x1x8xf32>
    %70 = vector.broadcast %69 : vector<1x1x8xf32> to vector<16x16x8xf32>
    %71 = arith.mulf %67, %70 : vector<16x16x8xf32>
    %c0_8 = arith.constant 0 : index
    %c0_9 = arith.constant 0 : index
    %72 = vector.load %arg4[%c0_8, %c0_9] : memref<1x8xf32, #tpu.memory_space<vmem>>, vector<1x8xf32>
    %73 = vector.shape_cast %72 : vector<1x8xf32> to vector<1x1x8xf32>
    %74 = vector.broadcast %73 : vector<1x1x8xf32> to vector<16x16x8xf32>
    %75 = arith.addf %71, %74 : vector<16x16x8xf32>
    %cst = arith.constant 0.000000e+00 : f32
    %76 = vector.broadcast %cst : f32 to vector<16x16x8xf32>
    %77 = arith.maximumf %75, %76 : vector<16x16x8xf32>
    %78 = vector.shape_cast %77 : vector<16x16x8xf32> to vector<256x8xf32>
    %79 = arith.truncf %78 : vector<256x8xf32> to vector<256x8xbf16>
    %c0_10 = arith.constant 0 : index
    %c0_11 = arith.constant 0 : index
    %80 = vector.load %arg5[%c0_10, %c0_11] : memref<8x8xbf16, #tpu.memory_space<vmem>>, vector<8x8xbf16>
    %cst_12 = arith.constant dense<0.000000e+00> : vector<256x8xf32>
    %81 = tpu.matmul %79, %80, %cst_12 {dimension_numbers = #tpu.dot_dimension_numbers<[1], [0], [0], [1], [0, 0, 1, 1], [], []>} : vector<256x8xbf16>, vector<8x8xbf16>, vector<256x8xf32> -> vector<256x8xf32>
    %c0_13 = arith.constant 0 : index
    %c0_14 = arith.constant 0 : index
    %c0_15 = arith.constant 0 : index
    %82 = vector.load %arg6[%c0_13, %c0_14, %c0_15] : memref<1x256x8xf32, #tpu.memory_space<vmem>>, vector<1x256x8xf32>
    %83 = vector.shape_cast %82 : vector<1x256x8xf32> to vector<256x8xf32>
    %84 = vector.shape_cast %81 : vector<256x8xf32> to vector<1x256x8xf32>
    tpu.vector_store %arg6[%c0_13, %c0_14, %c0_15], %84 {strides = array<i32>} : memref<1x256x8xf32, #tpu.memory_space<vmem>>, vector<1x256x8xf32>,
    %c0_16 = arith.constant 0 : index
    %c0_17 = arith.constant 0 : index
    %85 = vector.load %arg7[%c0_16, %c0_17] : memref<1x8xf32, #tpu.memory_space<vmem>>, vector<1x8xf32>
    %cst_18 = arith.constant dense<0.000000e+00> : vector<8xf32>
    %86 = vector.multi_reduction <add>, %81, %cst_18 [0] : vector<256x8xf32> to vector<8xf32>
    %87 = vector.shape_cast %86 : vector<8xf32> to vector<1x8xf32>
    %88 = arith.addf %85, %87 : vector<1x8xf32>
    %c0_19 = arith.constant 0 : index
    %c0_20 = arith.constant 0 : index
    %89 = vector.load %arg7[%c0_19, %c0_20] : memref<1x8xf32, #tpu.memory_space<vmem>>, vector<1x8xf32>
    tpu.vector_store %arg7[%c0_19, %c0_20], %88 {strides = array<i32>} : memref<1x8xf32, #tpu.memory_space<vmem>>, vector<1x8xf32>,
    %c0_21 = arith.constant 0 : index
    %c0_22 = arith.constant 0 : index
    %90 = vector.load %arg8[%c0_21, %c0_22] : memref<1x8xf32, #tpu.memory_space<vmem>>, vector<1x8xf32>
    %91 = arith.mulf %81, %81 : vector<256x8xf32>
    %cst_23 = arith.constant dense<0.000000e+00> : vector<8xf32>
    %92 = vector.multi_reduction <add>, %91, %cst_23 [0] : vector<256x8xf32> to vector<8xf32>
    %93 = vector.shape_cast %92 : vector<8xf32> to vector<1x8xf32>
    %94 = arith.addf %90, %93 : vector<1x8xf32>
    %c0_24 = arith.constant 0 : index
    %c0_25 = arith.constant 0 : index
    %95 = vector.load %arg8[%c0_24, %c0_25] : memref<1x8xf32, #tpu.memory_space<vmem>>, vector<1x8xf32>
    tpu.vector_store %arg8[%c0_24, %c0_25], %94 {strides = array<i32>} : memref<1x8xf32, #tpu.memory_space<vmem>>, vector<1x8xf32>,
    return
  }
  func.func @transform_0(%arg0: i32) -> (i32, i32, i32, i32) {
    %c0_i32 = arith.constant 0 : i32
    %c0_i32_0 = arith.constant 0 : i32
    %c0_i32_1 = arith.constant 0 : i32
    %c0_i32_2 = arith.constant 0 : i32
    return %arg0, %c0_i32, %c0_i32_0, %c0_i32_1 : i32, i32, i32, i32
  }
  func.func @transform_1(%arg0: i32) -> (i32, i32) {
    %c0_i32 = arith.constant 0 : i32
    %c0_i32_0 = arith.constant 0 : i32
    %c0_i32_1 = arith.constant 0 : i32
    return %c0_i32, %c0_i32_0 : i32, i32
  }
  func.func @transform_2(%arg0: i32) -> (i32, i32) {
    %c0_i32 = arith.constant 0 : i32
    %c0_i32_0 = arith.constant 0 : i32
    %c0_i32_1 = arith.constant 0 : i32
    return %c0_i32, %c0_i32_0 : i32, i32
  }
  func.func @transform_3(%arg0: i32) -> (i32, i32) {
    %c0_i32 = arith.constant 0 : i32
    %c0_i32_0 = arith.constant 0 : i32
    %c0_i32_1 = arith.constant 0 : i32
    return %c0_i32, %c0_i32_0 : i32, i32
  }
  func.func @transform_4(%arg0: i32) -> (i32, i32) {
    %c0_i32 = arith.constant 0 : i32
    %c0_i32_0 = arith.constant 0 : i32
    %c0_i32_1 = arith.constant 0 : i32
    return %c0_i32, %c0_i32_0 : i32, i32
  }
  func.func @transform_5(%arg0: i32) -> (i32, i32, i32) {
    %c0_i32 = arith.constant 0 : i32
    %c0_i32_0 = arith.constant 0 : i32
    %c0_i32_1 = arith.constant 0 : i32
    return %arg0, %c0_i32, %c0_i32_0 : i32, i32, i32
  }
  func.func @transform_6(%arg0: i32) -> (i32, i32) {
    %c0_i32 = arith.constant 0 : i32
    %c0_i32_0 = arith.constant 0 : i32
    %c0_i32_1 = arith.constant 0 : i32
    return %c0_i32, %c0_i32_0 : i32, i32
  }
  func.func @transform_7(%arg0: i32) -> (i32, i32) {
    %c0_i32 = arith.constant 0 : i32
    %c0_i32_0 = arith.constant 0 : i32
    %c0_i32_1 = arith.constant 0 : i32
    return %c0_i32, %c0_i32_0 : i32, i32
  }
}

module attributes {stable_mosaic.version = 11 : i64} {
  func.func @_project_apply_kernel(%arg0: i32, %arg1: memref<256x8xf32, #tpu.memory_space<vmem>>, %arg2: memref<256x4xf32, #tpu.memory_space<vmem>>, %arg3: memref<4x8xbf16, #tpu.memory_space<vmem>>, %arg4: memref<1x8xf32, #tpu.memory_space<vmem>>, %arg5: memref<1x8xf32, #tpu.memory_space<vmem>>, %arg6: memref<1x8xf32, #tpu.memory_space<vmem>>, %arg7: memref<1x8xf32, #tpu.memory_space<vmem>>, %arg8: memref<256x8xf32, #tpu.memory_space<vmem>>) attributes {dimension_semantics = [#tpu.dimension_semantics<parallel>], iteration_bounds = array<i64: 2>, scalar_prefetch = 0 : i64, scratch_operands = 0 : i64, tpu.core_type = #tpu.core_type<tc>, window_params = [{transform_indices = @transform_0, window_bounds = array<i64: 256, 8>}, {transform_indices = @transform_1, window_bounds = array<i64: 256, 4>}, {pipeline_mode = #tpu.pipeline_mode<synchronous>, transform_indices = @transform_2, window_bounds = array<i64: 4, 8>}, {pipeline_mode = #tpu.pipeline_mode<synchronous>, transform_indices = @transform_3, window_bounds = array<i64: 1, 8>}, {pipeline_mode = #tpu.pipeline_mode<synchronous>, transform_indices = @transform_4, window_bounds = array<i64: 1, 8>}, {pipeline_mode = #tpu.pipeline_mode<synchronous>, transform_indices = @transform_5, window_bounds = array<i64: 1, 8>}, {pipeline_mode = #tpu.pipeline_mode<synchronous>, transform_indices = @transform_6, window_bounds = array<i64: 1, 8>}, {transform_indices = @transform_7, window_bounds = array<i64: 256, 8>}]} {
    %c0 = arith.constant 0 : index
    %c0_0 = arith.constant 0 : index
    %0 = vector.load %arg1[%c0, %c0_0] : memref<256x8xf32, #tpu.memory_space<vmem>>, vector<256x8xf32>
    %c0_1 = arith.constant 0 : index
    %c0_2 = arith.constant 0 : index
    %1 = vector.load %arg4[%c0_1, %c0_2] : memref<1x8xf32, #tpu.memory_space<vmem>>, vector<1x8xf32>
    %2 = vector.broadcast %1 : vector<1x8xf32> to vector<256x8xf32>
    %3 = arith.mulf %0, %2 : vector<256x8xf32>
    %c0_3 = arith.constant 0 : index
    %c0_4 = arith.constant 0 : index
    %4 = vector.load %arg5[%c0_3, %c0_4] : memref<1x8xf32, #tpu.memory_space<vmem>>, vector<1x8xf32>
    %5 = vector.broadcast %4 : vector<1x8xf32> to vector<256x8xf32>
    %6 = arith.addf %3, %5 : vector<256x8xf32>
    %c0_5 = arith.constant 0 : index
    %c0_6 = arith.constant 0 : index
    %7 = vector.load %arg2[%c0_5, %c0_6] : memref<256x4xf32, #tpu.memory_space<vmem>>, vector<256x4xf32>
    %8 = arith.truncf %7 : vector<256x4xf32> to vector<256x4xbf16>
    %c0_7 = arith.constant 0 : index
    %c0_8 = arith.constant 0 : index
    %9 = vector.load %arg3[%c0_7, %c0_8] : memref<4x8xbf16, #tpu.memory_space<vmem>>, vector<4x8xbf16>
    %cst = arith.constant dense<0.000000e+00> : vector<256x8xf32>
    %10 = tpu.matmul %8, %9, %cst {dimension_numbers = #tpu.dot_dimension_numbers<[1], [0], [0], [1], [0, 0, 1, 1], [], []>} : vector<256x4xbf16>, vector<4x8xbf16>, vector<256x8xf32> -> vector<256x8xf32>
    %c0_9 = arith.constant 0 : index
    %c0_10 = arith.constant 0 : index
    %11 = vector.load %arg6[%c0_9, %c0_10] : memref<1x8xf32, #tpu.memory_space<vmem>>, vector<1x8xf32>
    %12 = vector.broadcast %11 : vector<1x8xf32> to vector<256x8xf32>
    %13 = arith.mulf %10, %12 : vector<256x8xf32>
    %c0_11 = arith.constant 0 : index
    %c0_12 = arith.constant 0 : index
    %14 = vector.load %arg7[%c0_11, %c0_12] : memref<1x8xf32, #tpu.memory_space<vmem>>, vector<1x8xf32>
    %15 = vector.broadcast %14 : vector<1x8xf32> to vector<256x8xf32>
    %16 = arith.addf %13, %15 : vector<256x8xf32>
    %17 = arith.addf %6, %16 : vector<256x8xf32>
    %c0_13 = arith.constant 0 : index
    %c0_14 = arith.constant 0 : index
    %18 = vector.load %arg8[%c0_13, %c0_14] : memref<256x8xf32, #tpu.memory_space<vmem>>, vector<256x8xf32>
    tpu.vector_store %arg8[%c0_13, %c0_14], %17 {strides = array<i32>} : memref<256x8xf32, #tpu.memory_space<vmem>>, vector<256x8xf32>,
    return
  }
  func.func @transform_0(%arg0: i32) -> (i32, i32) {
    %c0_i32 = arith.constant 0 : i32
    %c0_i32_0 = arith.constant 0 : i32
    return %arg0, %c0_i32 : i32, i32
  }
  func.func @transform_1(%arg0: i32) -> (i32, i32) {
    %c0_i32 = arith.constant 0 : i32
    %c0_i32_0 = arith.constant 0 : i32
    return %arg0, %c0_i32 : i32, i32
  }
  func.func @transform_2(%arg0: i32) -> (i32, i32) {
    %c0_i32 = arith.constant 0 : i32
    %c0_i32_0 = arith.constant 0 : i32
    %c0_i32_1 = arith.constant 0 : i32
    return %c0_i32, %c0_i32_0 : i32, i32
  }
  func.func @transform_3(%arg0: i32) -> (i32, i32) {
    %c0_i32 = arith.constant 0 : i32
    %c0_i32_0 = arith.constant 0 : i32
    %c0_i32_1 = arith.constant 0 : i32
    return %c0_i32, %c0_i32_0 : i32, i32
  }
  func.func @transform_4(%arg0: i32) -> (i32, i32) {
    %c0_i32 = arith.constant 0 : i32
    %c0_i32_0 = arith.constant 0 : i32
    %c0_i32_1 = arith.constant 0 : i32
    return %c0_i32, %c0_i32_0 : i32, i32
  }
  func.func @transform_5(%arg0: i32) -> (i32, i32) {
    %c0_i32 = arith.constant 0 : i32
    %c0_i32_0 = arith.constant 0 : i32
    %c0_i32_1 = arith.constant 0 : i32
    return %c0_i32, %c0_i32_0 : i32, i32
  }
  func.func @transform_6(%arg0: i32) -> (i32, i32) {
    %c0_i32 = arith.constant 0 : i32
    %c0_i32_0 = arith.constant 0 : i32
    %c0_i32_1 = arith.constant 0 : i32
    return %c0_i32, %c0_i32_0 : i32, i32
  }
  func.func @transform_7(%arg0: i32) -> (i32, i32) {
    %c0_i32 = arith.constant 0 : i32
    %c0_i32_0 = arith.constant 0 : i32
    return %arg0, %c0_i32 : i32, i32
  }
}

</mosaic_0001>

<llo_original>
// kernel: block_forward.6
$region0: #{block_forward.6}
  #allocation0 [shape = 'u32[]', space=smem, size = 0x4, offset = 0x4, fixed_abs, tag = 'smem constant byte address 0x4 - core index']
  #allocation1 [shape = 'u32[144,128]{1,0:T(1,128)}', space=vmem, size = 0x12000, scoped, tag = 'internal scratch']
  %s0 = inlined_call_operand.vmem [shape: f32[512,4], index: 0, kind: input, shape index: {}]
  %s1 = inlined_call_operand.vmem [shape: bf16[4,8], index: 1, kind: input, shape index: {}]
  %s2 = inlined_call_operand.vmem [shape: f32[1,8], index: 2, kind: input, shape index: {}]
  %s3 = inlined_call_operand.vmem [shape: f32[1,8], index: 3, kind: input, shape index: {}]
  %s4 = inlined_call_operand.vmem [shape: f32[512,8], index: 4, kind: output, shape index: {}]
  %s5 = sld [smem:[#allocation0]]
  $region49: #{block_forward.6} parent=0
    _
  %s7 = ssub.s32 1, %s5
  %s8 = scalar_select 0, %s7, %s5
  loop: start=0, step=1, limit=4
  $region2: #{block_forward.6} parent=0 // loop_pre_header
    _
  $region3: #{block_forward.6} parent=0 // loop_header
    %s10 = sphi 0, %s14
    %p11 = scmp.ge.s32.totalorder %s10, 4
    %s20 = sphi 0, %s22
    %s23 = sphi 0, %s20
    %s24 = sphi 0, %s23
    %s40 = sphi 0, %s24
    %s44 = sphi 0, %s44
    %s46 = sphi 0, %s44
    %s47 = sphi 0, %s46
    %s61 = sphi 0, %s47
    %s65 = sphi 0, %s65
    %s67 = sphi 0, %s65
    %s68 = sphi 0, %s67
    %s82 = sphi 0, %s68
    %s86 = sphi 0, %s86
    %s88 = sphi 0, %s86
    %s89 = sphi 0, %s88
    %s103 = sphi 0, %s89
    %s109 = sphi 0, %s111
    %s112 = sphi 0, %s109
    %s113 = sphi 0, %s112
    %s129 = sphi 0, %s113
  $region4: #{block_forward.6} parent=0 // loop_header_branch
    %13 = sbr.rel (%p11) target = $region8
  $region5: #{block_forward.6} parent=0 // loop_body
    %s15 = ssub.s32 %s10, 1
    %s16 = ssub.s32 %s10, 2
    %s17 = sadd.s32 %s10, 1
    %s18 = ssub.s32 %s10, %s17
    %p19 = scmp.eq.s32.totalorder %s18, 0
    %s21 = sadd.s32 %s20, 1
    %s22 = scalar_select %p19, %s20, %s21
    %p25 = pneg %p19
    %p26 = scmp.eq.s32.totalorder %s10, 1
    %p27 = por %p25, %p26
    %p28 = scmp.ne.s32.totalorder %s20, %s23
    %p29 = scmp.eq.s32.totalorder %s10, 0
    %p30 = por %p28, %p29
    %p31 = scmp.ne.s32.totalorder %s20, %s23
    %p32 = scmp.eq.s32.totalorder %s15, 1
    %p33 = por %p31, %p32
    %p34 = scmp.ne.s32.totalorder %s23, %s24
    %p35 = scmp.eq.s32.totalorder %s15, 0
    %p36 = por %p34, %p35
    %p37 = scmp.ne.s32.totalorder %s23, %s24
    %p38 = scmp.eq.s32.totalorder %s16, 1
    %p39 = por %p37, %p38
    %p41 = scmp.ne.s32.totalorder %s24, %s40
    %p42 = scmp.eq.s32.totalorder %s16, 0
    %p43 = por %p41, %p42
    %s45 = sadd.s32 %s44, 1
    %p48 = scmp.eq.s32.totalorder %s10, 1
    %p49 = scmp.ne.s32.totalorder %s44, %s46
    %p50 = scmp.eq.s32.totalorder %s10, 0
    %p51 = por %p49, %p50
    %p52 = scmp.ne.s32.totalorder %s44, %s46
    %p53 = scmp.eq.s32.totalorder %s15, 1
    %p54 = por %p52, %p53
    %p55 = scmp.ne.s32.totalorder %s46, %s47
    %p56 = scmp.eq.s32.totalorder %s15, 0
    %p57 = por %p55, %p56
    %p58 = scmp.ne.s32.totalorder %s46, %s47
    %p59 = scmp.eq.s32.totalorder %s16, 1
    %p60 = por %p58, %p59
    %p62 = scmp.ne.s32.totalorder %s47, %s61
    %p63 = scmp.eq.s32.totalorder %s16, 0
    %p64 = por %p62, %p63
    %s66 = sadd.s32 %s65, 1
    %p69 = scmp.eq.s32.totalorder %s10, 1
    %p70 = scmp.ne.s32.totalorder %s65, %s67
    %p71 = scmp.eq.s32.totalorder %s10, 0
    %p72 = por %p70, %p71
    %p73 = scmp.ne.s32.totalorder %s65, %s67
    %p74 = scmp.eq.s32.totalorder %s15, 1
    %p75 = por %p73, %p74
    %p76 = scmp.ne.s32.totalorder %s67, %s68
    %p77 = scmp.eq.s32.totalorder %s15, 0
    %p78 = por %p76, %p77
    %p79 = scmp.ne.s32.totalorder %s67, %s68
    %p80 = scmp.eq.s32.totalorder %s16, 1
    %p81 = por %p79, %p80
    %p83 = scmp.ne.s32.totalorder %s68, %s82
    %p84 = scmp.eq.s32.totalorder %s16, 0
    %p85 = por %p83, %p84
    %s87 = sadd.s32 %s86, 1
    %p90 = scmp.eq.s32.totalorder %s10, 1
    %p91 = scmp.ne.s32.totalorder %s86, %s88
    %p92 = scmp.eq.s32.totalorder %s10, 0
    %p93 = por %p91, %p92
    %p94 = scmp.ne.s32.totalorder %s86, %s88
    %p95 = scmp.eq.s32.totalorder %s15, 1
    %p96 = por %p94, %p95
    %p97 = scmp.ne.s32.totalorder %s88, %s89
    %p98 = scmp.eq.s32.totalorder %s15, 0
    %p99 = por %p97, %p98
    %p100 = scmp.ne.s32.totalorder %s88, %s89
    %p101 = scmp.eq.s32.totalorder %s16, 1
    %p102 = por %p100, %p101
    %p104 = scmp.ne.s32.totalorder %s89, %s103
    %p105 = scmp.eq.s32.totalorder %s16, 0
    %p106 = por %p104, %p105
    %s107 = ssub.s32 %s10, %s17
    %p108 = scmp.eq.s32.totalorder %s107, 0
    %s110 = sadd.s32 %s109, 1
    %s111 = scalar_select %p108, %s109, %s110
    %p114 = pneg %p108
    %p115 = scmp.eq.s32.totalorder %s10, 1
    %p116 = por %p114, %p115
    %p117 = scmp.ne.s32.totalorder %s109, %s112
    %p118 = scmp.eq.s32.totalorder %s10, 0
    %p119 = por %p117, %p118
    %p120 = scmp.ne.s32.totalorder %s109, %s112
    %p121 = scmp.eq.s32.totalorder %s15, 1
    %p122 = por %p120, %p121
    %p123 = scmp.ne.s32.totalorder %s112, %s113
    %p124 = scmp.eq.s32.totalorder %s15, 0
    %p125 = por %p123, %p124
    %p126 = scmp.ne.s32.totalorder %s112, %s113
    %p127 = scmp.eq.s32.totalorder %s16, 1
    %p128 = por %p126, %p127
    %p130 = scmp.ne.s32.totalorder %s113, %s129
    %p131 = scmp.eq.s32.totalorder %s16, 0
    %p132 = por %p130, %p131
    %p133 = scmp.le.s32.totalorder 1, %s10
    %p134 = scmp.lt.s32.totalorder %s10, 3
    %p135 = pnand %p133, %p134
    %p136 = pneg %p135
    // Predicated region
    $region9: #{block_forward.6} parent=5 // pred_check
      _
    $region10: #{block_forward.6} parent=5 // pred_check_branch
      %138 = sbr.rel (%p135) target = $region12
    $region11: #{block_forward.6} parent=5 // pred_region
      %s139 = ssub.s32 %s10, 1
      // Predicated region
      $region13: #{block_forward.6} parent=11 // pred_check
        %p140 = pneg %p57
      $region14: #{block_forward.6} parent=11 // pred_check_branch
        %142 = sbr.rel (%p140) target = $region16
      $region15: #{block_forward.6} parent=11 // pred_region
        _
      $region16: #{block_forward.6} parent=11 // pred_fallthru
        _
      // Predicated region
      $region17: #{block_forward.6} parent=11 // pred_check
        %p143 = pneg %p78
      $region18: #{block_forward.6} parent=11 // pred_check_branch
        %145 = sbr.rel (%p143) target = $region20
      $region19: #{block_forward.6} parent=11 // pred_region
        _
      $region20: #{block_forward.6} parent=11 // pred_fallthru
        _
      // Predicated region
      $region21: #{block_forward.6} parent=11 // pred_check
        %p146 = pneg %p99
      $region22: #{block_forward.6} parent=11 // pred_check_branch
        %148 = sbr.rel (%p146) target = $region24
      $region23: #{block_forward.6} parent=11 // pred_region
        _
      $region24: #{block_forward.6} parent=11 // pred_fallthru
        _
    $region12: #{block_forward.6} parent=5 // pred_fallthru
      _
    %p149 = scmp.lt.s32.totalorder %s10, 2
    // Predicated region
    $region25: #{block_forward.6} parent=5 // pred_check
      %p150 = pneg %p149
    $region26: #{block_forward.6} parent=5 // pred_check_branch
      %152 = sbr.rel (%p150) target = $region28
    $region27: #{block_forward.6} parent=5 // pred_region
      // Predicated region
      $region29: #{block_forward.6} parent=27 // pred_check
        %p153 = pneg %p30
      $region30: #{block_forward.6} parent=27 // pred_check_branch
        %155 = sbr.rel (%p153) target = $region32
      $region31: #{block_forward.6} parent=27 // pred_region
        %s156 = smul.u32 32, %s10
        %p157 = scmp.lt.s32.totalorder %s156, 63
        %s158 = scalar_select %p157, %s156, 63
        %s159 = smul.addr %s158, 8
        %s160 = scalar_lea.vmem %s0, %s159
        %s161 = smul.u32 32, %s10
      $region32: #{block_forward.6} parent=27 // pred_fallthru
        _
    $region28: #{block_forward.6} parent=5 // pred_fallthru
      _
    %p162 = scmp.le.s32.totalorder 1, %s10
    %p163 = scmp.lt.s32.totalorder %s10, 3
    %p164 = pnand %p162, %p163
    %p165 = pneg %p164
    // Predicated region
    $region33: #{block_forward.6} parent=5 // pred_check
      _
    $region34: #{block_forward.6} parent=5 // pred_check_branch
      %167 = sbr.rel (%p164) target = $region36
    $region35: #{block_forward.6} parent=5 // pred_region
      %s168 = ssub.s32 %s10, 1
      %s169 = smul.u32 32, %s15
      %p170 = scmp.lt.s32.totalorder %s169, 63
      %s171 = scalar_select %p170, %s169, 63
      %s172 = smul.addr %s171, 8
      %s173 = scalar_lea.vmem %s0, %s172
      %p174 = pneg %p36
      %p175 = pneg %p33
      %p176 = pneg %p57
      %p177 = pneg %p54
      %p178 = pneg %p78
      %p179 = pneg %p75
      %p180 = pneg %p99
      %p181 = pneg %p96
      %p182 = pneg %p125
      %p183 = pneg %p122
      %s184 = smul.u32 32, %s15
      %p185 = scmp.lt.s32.totalorder %s184, 63
      %s186 = scalar_select %p185, %s184, 63
      %s187 = smul.addr %s186, 8
      %s188 = scalar_lea.vmem %s4, %s187
      %s189 = smul.u32 32, %s15
      %p190 = scmp.lt.s32.totalorder %s189, 63
      %s191 = scalar_select %p190, %s189, 63
      %s192 = smul.addr %s191, 8
      %s193 = scalar_lea.vmem %s0, %s192
      %s194 = smul.u32 32, %s15
      %s195 = smul.u32 32, %s15
      %p196 = scmp.lt.s32.totalorder %s195, 63
      %s197 = scalar_select %p196, %s195, 63
      %s198 = smul.addr %s197, 8
      %s199 = scalar_lea.vmem %s4, %s198
      %s200 = smul.u32 32, %s15
      %v202 = vld [vmem:[%s193] sm:$0xff]
      %v203 = vld [vmem:[%s193 + $0x8] sm:$0xff]
      %v204 = vld [vmem:[%s193 + $0x10] sm:$0xff]
      %v205 = vld [vmem:[%s193 + $0x18] sm:$0xff]
      %v206 = vld [vmem:[%s193 + $0x20] sm:$0xff]
      %v207 = vld [vmem:[%s193 + $0x28] sm:$0xff]
      %v208 = vld [vmem:[%s193 + $0x30] sm:$0xff]
      %v209 = vld [vmem:[%s193 + $0x38] sm:$0xff]
      %v210 = vld [vmem:[%s193 + $0x40] sm:$0xff]
      %v211 = vld [vmem:[%s193 + $0x48] sm:$0xff]
      %v212 = vld [vmem:[%s193 + $0x50] sm:$0xff]
      %v213 = vld [vmem:[%s193 + $0x58] sm:$0xff]
      %v214 = vld [vmem:[%s193 + $0x60] sm:$0xff]
      %v215 = vld [vmem:[%s193 + $0x68] sm:$0xff]
      %v216 = vld [vmem:[%s193 + $0x70] sm:$0xff]
      %v217 = vld [vmem:[%s193 + $0x78] sm:$0xff]
      %v218 = vld [vmem:[%s193 + $0x80] sm:$0xff]
      %v219 = vld [vmem:[%s193 + $0x88] sm:$0xff]
      %v220 = vld [vmem:[%s193 + $0x90] sm:$0xff]
      %v221 = vld [vmem:[%s193 + $0x98] sm:$0xff]
      %v222 = vld [vmem:[%s193 + $0xa0] sm:$0xff]
      %v223 = vld [vmem:[%s193 + $0xa8] sm:$0xff]
      %v224 = vld [vmem:[%s193 + $0xb0] sm:$0xff]
      %v225 = vld [vmem:[%s193 + $0xb8] sm:$0xff]
      %v226 = vld [vmem:[%s193 + $0xc0] sm:$0xff]
      %v227 = vld [vmem:[%s193 + $0xc8] sm:$0xff]
      %v228 = vld [vmem:[%s193 + $0xd0] sm:$0xff]
      %v229 = vld [vmem:[%s193 + $0xd8] sm:$0xff]
      %v230 = vld [vmem:[%s193 + $0xe0] sm:$0xff]
      %v231 = vld [vmem:[%s193 + $0xe8] sm:$0xff]
      %v232 = vld [vmem:[%s193 + $0xf0] sm:$0xff]
      %v233 = vld [vmem:[%s193 + $0xf8] sm:$0xff]
      %v234 = vpack.c.bf16 %v203, %v202
      %v235 = vpack.c.bf16 %v205, %v204
      %v236 = vpack.c.bf16 %v207, %v206
      %v237 = vpack.c.bf16 %v209, %v208
      %v238 = vpack.c.bf16 %v211, %v210
      %v239 = vpack.c.bf16 %v213, %v212
      %v240 = vpack.c.bf16 %v215, %v214
      %v241 = vpack.c.bf16 %v217, %v216
      %v242 = vpack.c.bf16 %v219, %v218
      %v243 = vpack.c.bf16 %v221, %v220
      %v244 = vpack.c.bf16 %v223, %v222
      %v245 = vpack.c.bf16 %v225, %v224
      %v246 = vpack.c.bf16 %v227, %v226
      %v247 = vpack.c.bf16 %v229, %v228
      %v248 = vpack.c.bf16 %v231, %v230
      %v249 = vpack.c.bf16 %v233, %v232
      %v250 = vld [vmem:[%s1] sm:$0x3]
      %vm251 = vcmask 31744
      %v253 = vsel %vm251, %v234, 0
      %v256 = vsel %vm251, %v235, 0
      %v259 = vsel %vm251, %v236, 0
      %v262 = vsel %vm251, %v237, 0
      %v265 = vsel %vm251, %v238, 0
      %v268 = vsel %vm251, %v239, 0
      %v271 = vsel %vm251, %v240, 0
      %v274 = vsel %vm251, %v241, 0
      %v277 = vsel %vm251, %v242, 0
      %v280 = vsel %vm251, %v243, 0
      %v283 = vsel %vm251, %v244, 0
      %v286 = vsel %vm251, %v245, 0
      %v289 = vsel %vm251, %v246, 0
      %v292 = vsel %vm251, %v247, 0
      %v295 = vsel %vm251, %v248, 0
      %v298 = vsel %vm251, %v249, 0
      %vm300 = vcmask 1041408
      %v302 = vsel %vm300, %v250, 0
      %304 = vmatprep.subr.bf16.mxu0 0
      %305 = vmatpush1.bf16.msra.mxu0 %v302
      %306 = vmatprep.subr.bf16.mxu0 0
      %307 = vmatpush1.bf16.msra.mxu0 0
      %308 = vmatprep.subr.bf16.mxu0 0
      %309 = vmatpush1.bf16.msra.mxu0 0
      %310 = vmatprep.subr.bf16.mxu0 0
      %311 = vmatpush1.bf16.msra.mxu0 0
      %312 = vmatprep.subr.bf16.mxu0 0
      %313 = vmatpush1.bf16.msra.mxu0 0
      %314 = vmatprep.subr.bf16.mxu0 0
      %315 = vmatpush1.bf16.msra.mxu0 0
      %316 = vmatprep.subr.bf16.mxu0 0
      %317 = vmatpush1.bf16.msra.mxu0 0
      %318 = vmatprep.subr.bf16.mxu0 0
      %319 = vmatpush1.bf16.msra.mxu0 0
      %320 = vmatprep.subr.bf16.mxu0 0
      %321 = vmatpush1.bf16.msra.mxu0 0
      %322 = vmatprep.subr.bf16.mxu0 0
      %323 = vmatpush1.bf16.msra.mxu0 0
      %324 = vmatprep.subr.bf16.mxu0 0
      %325 = vmatpush1.bf16.msra.mxu0 0
      %326 = vmatprep.subr.bf16.mxu0 0
      %327 = vmatpush1.bf16.msra.mxu0 0
      %328 = vmatprep.subr.bf16.mxu0 0
      %329 = vmatpush1.bf16.msra.mxu0 0
      %330 = vmatprep.subr.bf16.mxu0 0
      %331 = vmatpush1.bf16.msra.mxu0 0
      %332 = vmatprep.subr.bf16.mxu0 0
      %333 = vmatpush1.bf16.msra.mxu0 0
      %334 = vmatprep.subr.bf16.mxu0 0
      %335 = vmatpush1.bf16.msra.mxu0 0
      %336 = vmatprep.mubr.bf16.mxu0 0
      %337 = vmatmul.mubr.bf16.gmra.mrb[0].mxu0 %v253
      %v338 = vpop.f32.mrb[0].mxu0
      %v339 = vadd.f32 0.0, %v338
      %v340 = vpop.f32.mrb[0].mxu0
      %v341 = vpop.f32.mrb[0].mxu0
      %v342 = vadd.f32 0.0, %v341
      %v343 = vpop.f32.mrb[0].mxu0
      %344 = vmatprep.mubr.bf16.mxu0 0
      %345 = vmatmul.mubr.bf16.gmra.mrb[0].mxu0 %v256
      %v346 = vpop.f32.mrb[0].mxu0
      %v347 = vadd.f32 0.0, %v346
      %v348 = vpop.f32.mrb[0].mxu0
      %v349 = vpop.f32.mrb[0].mxu0
      %v350 = vadd.f32 0.0, %v349
      %v351 = vpop.f32.mrb[0].mxu0
      %352 = vmatprep.mubr.bf16.mxu0 0
      %353 = vmatmul.mubr.bf16.gmra.mrb[0].mxu0 %v259
      %v354 = vpop.f32.mrb[0].mxu0
      %v355 = vadd.f32 0.0, %v354
      %v356 = vpop.f32.mrb[0].mxu0
      %v357 = vpop.f32.mrb[0].mxu0
      %v358 = vadd.f32 0.0, %v357
      %v359 = vpop.f32.mrb[0].mxu0
      %360 = vmatprep.mubr.bf16.mxu0 0
      %361 = vmatmul.mubr.bf16.gmra.mrb[0].mxu0 %v262
      %v362 = vpop.f32.mrb[0].mxu0
      %v363 = vadd.f32 0.0, %v362
      %v364 = vpop.f32.mrb[0].mxu0
      %v365 = vpop.f32.mrb[0].mxu0
      %v366 = vadd.f32 0.0, %v365
      %v367 = vpop.f32.mrb[0].mxu0
      %368 = vmatprep.mubr.bf16.mxu0 0
      %369 = vmatmul.mubr.bf16.gmra.mrb[0].mxu0 %v265
      %v370 = vpop.f32.mrb[0].mxu0
      %v371 = vadd.f32 0.0, %v370
      %v372 = vpop.f32.mrb[0].mxu0
      %v373 = vpop.f32.mrb[0].mxu0
      %v374 = vadd.f32 0.0, %v373
      %v375 = vpop.f32.mrb[0].mxu0
      %376 = vmatprep.mubr.bf16.mxu0 0
      %377 = vmatmul.mubr.bf16.gmra.mrb[0].mxu0 %v268
      %v378 = vpop.f32.mrb[0].mxu0
      %v379 = vadd.f32 0.0, %v378
      %v380 = vpop.f32.mrb[0].mxu0
      %v381 = vpop.f32.mrb[0].mxu0
      %v382 = vadd.f32 0.0, %v381
      %v383 = vpop.f32.mrb[0].mxu0
      %384 = vmatprep.mubr.bf16.mxu0 0
      %385 = vmatmul.mubr.bf16.gmra.mrb[0].mxu0 %v271
      %v386 = vpop.f32.mrb[0].mxu0
      %v387 = vadd.f32 0.0, %v386
      %v388 = vpop.f32.mrb[0].mxu0
      %v389 = vpop.f32.mrb[0].mxu0
      %v390 = vadd.f32 0.0, %v389
      %v391 = vpop.f32.mrb[0].mxu0
      %392 = vmatprep.mubr.bf16.mxu0 0
      %393 = vmatmul.mubr.bf16.gmra.mrb[0].mxu0 %v274
      %v394 = vpop.f32.mrb[0].mxu0
      %v395 = vadd.f32 0.0, %v394
      %v396 = vpop.f32.mrb[0].mxu0
      %v397 = vpop.f32.mrb[0].mxu0
      %v398 = vadd.f32 0.0, %v397
      %v399 = vpop.f32.mrb[0].mxu0
      %400 = vmatprep.mubr.bf16.mxu0 0
      %401 = vmatmul.mubr.bf16.gmra.mrb[0].mxu0 %v277
      %v402 = vpop.f32.mrb[0].mxu0
      %v403 = vadd.f32 0.0, %v402
      %v404 = vpop.f32.mrb[0].mxu0
      %v405 = vpop.f32.mrb[0].mxu0
      %v406 = vadd.f32 0.0, %v405
      %v407 = vpop.f32.mrb[0].mxu0
      %408 = vmatprep.mubr.bf16.mxu0 0
      %409 = vmatmul.mubr.bf16.gmra.mrb[0].mxu0 %v280
      %v410 = vpop.f32.mrb[0].mxu0
      %v411 = vadd.f32 0.0, %v410
      %v412 = vpop.f32.mrb[0].mxu0
      %v413 = vpop.f32.mrb[0].mxu0
      %v414 = vadd.f32 0.0, %v413
      %v415 = vpop.f32.mrb[0].mxu0
      %416 = vmatprep.mubr.bf16.mxu0 0
      %417 = vmatmul.mubr.bf16.gmra.mrb[0].mxu0 %v283
      %v418 = vpop.f32.mrb[0].mxu0
      %v419 = vadd.f32 0.0, %v418
      %v420 = vpop.f32.mrb[0].mxu0
      %v421 = vpop.f32.mrb[0].mxu0
      %v422 = vadd.f32 0.0, %v421
      %v423 = vpop.f32.mrb[0].mxu0
      %424 = vmatprep.mubr.bf16.mxu0 0
      %425 = vmatmul.mubr.bf16.gmra.mrb[0].mxu0 %v286
      %v426 = vpop.f32.mrb[0].mxu0
      %v427 = vadd.f32 0.0, %v426
      %v428 = vpop.f32.mrb[0].mxu0
      %v429 = vpop.f32.mrb[0].mxu0
      %v430 = vadd.f32 0.0, %v429
      %v431 = vpop.f32.mrb[0].mxu0
      %432 = vmatprep.mubr.bf16.mxu0 0
      %433 = vmatmul.mubr.bf16.gmra.mrb[0].mxu0 %v289
      %v434 = vpop.f32.mrb[0].mxu0
      %v435 = vadd.f32 0.0, %v434
      %v436 = vpop.f32.mrb[0].mxu0
      %v437 = vpop.f32.mrb[0].mxu0
      %v438 = vadd.f32 0.0, %v437
      %v439 = vpop.f32.mrb[0].mxu0
      %440 = vmatprep.mubr.bf16.mxu0 0
      %441 = vmatmul.mubr.bf16.gmra.mrb[0].mxu0 %v292
      %v442 = vpop.f32.mrb[0].mxu0
      %v443 = vadd.f32 0.0, %v442
      %v444 = vpop.f32.mrb[0].mxu0
      %v445 = vpop.f32.mrb[0].mxu0
      %v446 = vadd.f32 0.0, %v445
      %v447 = vpop.f32.mrb[0].mxu0
      %448 = vmatprep.mubr.bf16.mxu0 0
      %449 = vmatmul.mubr.bf16.gmra.mrb[0].mxu0 %v295
      %v450 = vpop.f32.mrb[0].mxu0
      %v451 = vadd.f32 0.0, %v450
      %v452 = vpop.f32.mrb[0].mxu0
      %v453 = vpop.f32.mrb[0].mxu0
      %v454 = vadd.f32 0.0, %v453
      %v455 = vpop.f32.mrb[0].mxu0
      %456 = vmatprep.mubr.bf16.mxu0 0
      %457 = vmatmul.mubr.bf16.gmra.mrb[0].mxu0 %v298
      %v458 = vpop.f32.mrb[0].mxu0
      %v459 = vadd.f32 0.0, %v458
      %v460 = vpop.f32.mrb[0].mxu0
      %v461 = vpop.f32.mrb[0].mxu0
      %v462 = vadd.f32 0.0, %v461
      %v463 = vpop.f32.mrb[0].mxu0
      %464 = vdwg.mxu0
      %v465 = vld [vmem:[%s2] sm:$0x1]
      %v467 = vlaneseq
      %v468 = vshrl.u32 %v467, 7
      %v469 = vsub.s32 0, %v468
      %v470 = vrot.slane %v465, %v469
      %v472 = vmul.f32 %v339, %v470
      %v473 = vmul.f32 %v342, %v470
      %v474 = vmul.f32 %v347, %v470
      %v475 = vmul.f32 %v350, %v470
      %v476 = vmul.f32 %v355, %v470
      %v477 = vmul.f32 %v358, %v470
      %v478 = vmul.f32 %v363, %v470
      %v479 = vmul.f32 %v366, %v470
      %v480 = vmul.f32 %v371, %v470
      %v481 = vmul.f32 %v374, %v470
      %v482 = vmul.f32 %v379, %v470
      %v483 = vmul.f32 %v382, %v470
      %v484 = vmul.f32 %v387, %v470
      %v485 = vmul.f32 %v390, %v470
      %v486 = vmul.f32 %v395, %v470
      %v487 = vmul.f32 %v398, %v470
      %v488 = vmul.f32 %v403, %v470
      %v489 = vmul.f32 %v406, %v470
      %v490 = vmul.f32 %v411, %v470
      %v491 = vmul.f32 %v414, %v470
      %v492 = vmul.f32 %v419, %v470
      %v493 = vmul.f32 %v422, %v470
      %v494 = vmul.f32 %v427, %v470
      %v495 = vmul.f32 %v430, %v470
      %v496 = vmul.f32 %v435, %v470
      %v497 = vmul.f32 %v438, %v470
      %v498 = vmul.f32 %v443, %v470
      %v499 = vmul.f32 %v446, %v470
      %v500 = vmul.f32 %v451, %v470
      %v501 = vmul.f32 %v454, %v470
      %v502 = vmul.f32 %v459, %v470
      %v503 = vmul.f32 %v462, %v470
      %v504 = vld [vmem:[%s3] sm:$0x1]
      %v506 = vlaneseq
      %v507 = vshrl.u32 %v506, 7
      %v508 = vsub.s32 0, %v507
      %v509 = vrot.slane %v504, %v508
      %v511 = vadd.f32 %v472, %v509
      %v512 = vadd.f32 %v473, %v509
      %v513 = vadd.f32 %v474, %v509
      %v514 = vadd.f32 %v475, %v509
      %v515 = vadd.f32 %v476, %v509
      %v516 = vadd.f32 %v477, %v509
      %v517 = vadd.f32 %v478, %v509
      %v518 = vadd.f32 %v479, %v509
      %v519 = vadd.f32 %v480, %v509
      %v520 = vadd.f32 %v481, %v509
      %v521 = vadd.f32 %v482, %v509
      %v522 = vadd.f32 %v483, %v509
      %v523 = vadd.f32 %v484, %v509
      %v524 = vadd.f32 %v485, %v509
      %v525 = vadd.f32 %v486, %v509
      %v526 = vadd.f32 %v487, %v509
      %v527 = vadd.f32 %v488, %v509
      %v528 = vadd.f32 %v489, %v509
      %v529 = vadd.f32 %v490, %v509
      %v530 = vadd.f32 %v491, %v509
      %v531 = vadd.f32 %v492, %v509
      %v532 = vadd.f32 %v493, %v509
      %v533 = vadd.f32 %v494, %v509
      %v534 = vadd.f32 %v495, %v509
      %v535 = vadd.f32 %v496, %v509
      %v536 = vadd.f32 %v497, %v509
      %v537 = vadd.f32 %v498, %v509
      %v538 = vadd.f32 %v499, %v509
      %v539 = vadd.f32 %v500, %v509
      %v540 = vadd.f32 %v501, %v509
      %v541 = vadd.f32 %v502, %v509
      %v542 = vadd.f32 %v503, %v509
      %v543 = vmax.f32 %v511, 0.0
      %v544 = vmax.f32 %v512, 0.0
      %v545 = vmax.f32 %v513, 0.0
      %v546 = vmax.f32 %v514, 0.0
      %v547 = vmax.f32 %v515, 0.0
      %v548 = vmax.f32 %v516, 0.0
      %v549 = vmax.f32 %v517, 0.0
      %v550 = vmax.f32 %v518, 0.0
      %v551 = vmax.f32 %v519, 0.0
      %v552 = vmax.f32 %v520, 0.0
      %v553 = vmax.f32 %v521, 0.0
      %v554 = vmax.f32 %v522, 0.0
      %v555 = vmax.f32 %v523, 0.0
      %v556 = vmax.f32 %v524, 0.0
      %v557 = vmax.f32 %v525, 0.0
      %v558 = vmax.f32 %v526, 0.0
      %v559 = vmax.f32 %v527, 0.0
      %v560 = vmax.f32 %v528, 0.0
      %v561 = vmax.f32 %v529, 0.0
      %v562 = vmax.f32 %v530, 0.0
      %v563 = vmax.f32 %v531, 0.0
      %v564 = vmax.f32 %v532, 0.0
      %v565 = vmax.f32 %v533, 0.0
      %v566 = vmax.f32 %v534, 0.0
      %v567 = vmax.f32 %v535, 0.0
      %v568 = vmax.f32 %v536, 0.0
      %v569 = vmax.f32 %v537, 0.0
      %v570 = vmax.f32 %v538, 0.0
      %v571 = vmax.f32 %v539, 0.0
      %v572 = vmax.f32 %v540, 0.0
      %v573 = vmax.f32 %v541, 0.0
      %v574 = vmax.f32 %v542, 0.0
      %vm575 = vcmask 64512
      %576 = vst.msk [vmem:[%s199] sm:$0xff] %vm575, %v543
      %577 = vst.msk [vmem:[%s199 + $0x8] sm:$0xff] %vm575, %v544
      %578 = vst.msk [vmem:[%s199 + $0x10] sm:$0xff] %vm575, %v545
      %579 = vst.msk [vmem:[%s199 + $0x18] sm:$0xff] %vm575, %v546
      %580 = vst.msk [vmem:[%s199 + $0x20] sm:$0xff] %vm575, %v547
      %581 = vst.msk [vmem:[%s199 + $0x28] sm:$0xff] %vm575, %v548
      %582 = vst.msk [vmem:[%s199 + $0x30] sm:$0xff] %vm575, %v549
      %583 = vst.msk [vmem:[%s199 + $0x38] sm:$0xff] %vm575, %v550
      %584 = vst.msk [vmem:[%s199 + $0x40] sm:$0xff] %vm575, %v551
      %585 = vst.msk [vmem:[%s199 + $0x48] sm:$0xff] %vm575, %v552
      %586 = vst.msk [vmem:[%s199 + $0x50] sm:$0xff] %vm575, %v553
      %587 = vst.msk [vmem:[%s199 + $0x58] sm:$0xff] %vm575, %v554
      %588 = vst.msk [vmem:[%s199 + $0x60] sm:$0xff] %vm575, %v555
      %589 = vst.msk [vmem:[%s199 + $0x68] sm:$0xff] %vm575, %v556
      %590 = vst.msk [vmem:[%s199 + $0x70] sm:$0xff] %vm575, %v557
      %591 = vst.msk [vmem:[%s199 + $0x78] sm:$0xff] %vm575, %v558
      %592 = vst.msk [vmem:[%s199 + $0x80] sm:$0xff] %vm575, %v559
      %593 = vst.msk [vmem:[%s199 + $0x88] sm:$0xff] %vm575, %v560
      %594 = vst.msk [vmem:[%s199 + $0x90] sm:$0xff] %vm575, %v561
      %595 = vst.msk [vmem:[%s199 + $0x98] sm:$0xff] %vm575, %v562
      %596 = vst.msk [vmem:[%s199 + $0xa0] sm:$0xff] %vm575, %v563
      %597 = vst.msk [vmem:[%s199 + $0xa8] sm:$0xff] %vm575, %v564
      %598 = vst.msk [vmem:[%s199 + $0xb0] sm:$0xff] %vm575, %v565
      %599 = vst.msk [vmem:[%s199 + $0xb8] sm:$0xff] %vm575, %v566
      %600 = vst.msk [vmem:[%s199 + $0xc0] sm:$0xff] %vm575, %v567
      %601 = vst.msk [vmem:[%s199 + $0xc8] sm:$0xff] %vm575, %v568
      %602 = vst.msk [vmem:[%s199 + $0xd0] sm:$0xff] %vm575, %v569
      %603 = vst.msk [vmem:[%s199 + $0xd8] sm:$0xff] %vm575, %v570
      %604 = vst.msk [vmem:[%s199 + $0xe0] sm:$0xff] %vm575, %v571
      %605 = vst.msk [vmem:[%s199 + $0xe8] sm:$0xff] %vm575, %v572
      %606 = vst.msk [vmem:[%s199 + $0xf0] sm:$0xff] %vm575, %v573
      %607 = vst.msk [vmem:[%s199 + $0xf8] sm:$0xff] %vm575, %v574
      %s608 = smul.u32 32, %s15
      %p609 = scmp.lt.s32.totalorder %s608, 63
      %s610 = scalar_select %p609, %s608, 63
      %s611 = smul.addr %s610, 8
      %s612 = scalar_lea.vmem %s4, %s611
      // Predicated region
      $region37: #{block_forward.6} parent=35 // pred_check
        %p613 = pneg %p122
      $region38: #{block_forward.6} parent=35 // pred_check_branch
        %615 = sbr.rel (%p613) target = $region40
      $region39: #{block_forward.6} parent=35 // pred_region
        %s616 = smul.u32 32, %s15
      $region40: #{block_forward.6} parent=35 // pred_fallthru
        _
    $region36: #{block_forward.6} parent=5 // pred_fallthru
      _
    %p617 = scmp.le.s32.totalorder 2, %s10
    // Predicated region
    $region41: #{block_forward.6} parent=5 // pred_check
      %p618 = pneg %p617
    $region42: #{block_forward.6} parent=5 // pred_check_branch
      %620 = sbr.rel (%p618) target = $region44
    $region43: #{block_forward.6} parent=5 // pred_region
      %s621 = ssub.s32 %s10, 2
      // Predicated region
      $region45: #{block_forward.6} parent=43 // pred_check
        %p622 = pneg %p128
      $region46: #{block_forward.6} parent=43 // pred_check_branch
        %624 = sbr.rel (%p622) target = $region48
      $region47: #{block_forward.6} parent=43 // pred_region
        %s625 = smul.u32 32, %s16
        %p626 = scmp.lt.s32.totalorder %s625, 63
        %s627 = scalar_select %p626, %s625, 63
        %s628 = smul.addr %s627, 8
        %s629 = scalar_lea.vmem %s4, %s628
      $region48: #{block_forward.6} parent=43 // pred_fallthru
        _
    $region44: #{block_forward.6} parent=5 // pred_fallthru
      _
  $region6: #{block_forward.6} parent=0 // loop_footer
    %s14 = sadd.s32 1, %s10
  $region7: #{block_forward.6} parent=0 // loop_footer_branch
    %9 = sbr.rel target = $region3
  $region8: #{block_forward.6} parent=0 // loop_exit
    _

// kernel: block_forward.5
$region0: #{block_forward.5}
  #allocation0 [shape = 'u32[]', space=smem, size = 0x4, offset = 0x4, fixed_abs, tag = 'smem constant byte address 0x4 - core index']
  #allocation1 [shape = 'u32[144,128]{1,0:T(1,128)}', space=vmem, size = 0x12000, scoped, tag = 'internal scratch']
  %s0 = inlined_call_operand.vmem [shape: f32[512,4], index: 0, kind: input, shape index: {}]
  %s1 = inlined_call_operand.vmem [shape: bf16[4,8], index: 1, kind: input, shape index: {}]
  %s2 = inlined_call_operand.vmem [shape: bf16[4,8], index: 2, kind: input, shape index: {}]
  %s3 = inlined_call_operand.vmem [shape: f32[1,8], index: 3, kind: output, shape index: {0}]
  %s4 = inlined_call_operand.vmem [shape: f32[1,8], index: 4, kind: output, shape index: {1}]
  %s5 = inlined_call_operand.vmem [shape: f32[1,8], index: 5, kind: output, shape index: {2}]
  %s6 = inlined_call_operand.vmem [shape: f32[1,8], index: 6, kind: output, shape index: {3}]
  %7 = xla_tuple %s3, %s4, %s5, %s6
  %s8 = sld [smem:[#allocation0]]
  $region73: #{block_forward.5} parent=0
    _
  %s10 = ssub.s32 1, %s8
  %s11 = scalar_select 0, %s10, %s8
  loop: start=0, step=1, limit=4
  $region2: #{block_forward.5} parent=0 // loop_pre_header
    _
  $region3: #{block_forward.5} parent=0 // loop_header
    %s13 = sphi 0, %s17
    %p14 = scmp.ge.s32.totalorder %s13, 4
    %s23 = sphi 0, %s25
    %s26 = sphi 0, %s23
    %s27 = sphi 0, %s26
    %s43 = sphi 0, %s27
    %s47 = sphi 0, %s47
    %s49 = sphi 0, %s47
    %s50 = sphi 0, %s49
    %s64 = sphi 0, %s50
    %s68 = sphi 0, %s68
    %s70 = sphi 0, %s68
    %s71 = sphi 0, %s70
    %s85 = sphi 0, %s71
    %s89 = sphi 0, %s89
    %s91 = sphi 0, %s89
    %s92 = sphi 0, %s91
    %s106 = sphi 0, %s92
    %s110 = sphi 0, %s110
    %s112 = sphi 0, %s110
    %s113 = sphi 0, %s112
    %s127 = sphi 0, %s113
    %s131 = sphi 0, %s131
    %s133 = sphi 0, %s131
    %s134 = sphi 0, %s133
    %s148 = sphi 0, %s134
    %s152 = sphi 0, %s152
    %s154 = sphi 0, %s152
    %s155 = sphi 0, %s154
    %s169 = sphi 0, %s155
  $region4: #{block_forward.5} parent=0 // loop_header_branch
    %16 = sbr.rel (%p14) target = $region8
  $region5: #{block_forward.5} parent=0 // loop_body
    %s18 = ssub.s32 %s13, 1
    %s19 = ssub.s32 %s13, 2
    %s20 = sadd.s32 %s13, 1
    %s21 = ssub.s32 %s13, %s20
    %p22 = scmp.eq.s32.totalorder %s21, 0
    %s24 = sadd.s32 %s23, 1
    %s25 = scalar_select %p22, %s23, %s24
    %p28 = pneg %p22
    %p29 = scmp.eq.s32.totalorder %s13, 1
    %p30 = por %p28, %p29
    %p31 = scmp.ne.s32.totalorder %s23, %s26
    %p32 = scmp.eq.s32.totalorder %s13, 0
    %p33 = por %p31, %p32
    %p34 = scmp.ne.s32.totalorder %s23, %s26
    %p35 = scmp.eq.s32.totalorder %s18, 1
    %p36 = por %p34, %p35
    %p37 = scmp.ne.s32.totalorder %s26, %s27
    %p38 = scmp.eq.s32.totalorder %s18, 0
    %p39 = por %p37, %p38
    %p40 = scmp.ne.s32.totalorder %s26, %s27
    %p41 = scmp.eq.s32.totalorder %s19, 1
    %p42 = por %p40, %p41
    %p44 = scmp.ne.s32.totalorder %s27, %s43
    %p45 = scmp.eq.s32.totalorder %s19, 0
    %p46 = por %p44, %p45
    %s48 = sadd.s32 %s47, 1
    %p51 = scmp.eq.s32.totalorder %s13, 1
    %p52 = scmp.ne.s32.totalorder %s47, %s49
    %p53 = scmp.eq.s32.totalorder %s13, 0
    %p54 = por %p52, %p53
    %p55 = scmp.ne.s32.totalorder %s47, %s49
    %p56 = scmp.eq.s32.totalorder %s18, 1
    %p57 = por %p55, %p56
    %p58 = scmp.ne.s32.totalorder %s49, %s50
    %p59 = scmp.eq.s32.totalorder %s18, 0
    %p60 = por %p58, %p59
    %p61 = scmp.ne.s32.totalorder %s49, %s50
    %p62 = scmp.eq.s32.totalorder %s19, 1
    %p63 = por %p61, %p62
    %p65 = scmp.ne.s32.totalorder %s50, %s64
    %p66 = scmp.eq.s32.totalorder %s19, 0
    %p67 = por %p65, %p66
    %s69 = sadd.s32 %s68, 1
    %p72 = scmp.eq.s32.totalorder %s13, 1
    %p73 = scmp.ne.s32.totalorder %s68, %s70
    %p74 = scmp.eq.s32.totalorder %s13, 0
    %p75 = por %p73, %p74
    %p76 = scmp.ne.s32.totalorder %s68, %s70
    %p77 = scmp.eq.s32.totalorder %s18, 1
    %p78 = por %p76, %p77
    %p79 = scmp.ne.s32.totalorder %s70, %s71
    %p80 = scmp.eq.s32.totalorder %s18, 0
    %p81 = por %p79, %p80
    %p82 = scmp.ne.s32.totalorder %s70, %s71
    %p83 = scmp.eq.s32.totalorder %s19, 1
    %p84 = por %p82, %p83
    %p86 = scmp.ne.s32.totalorder %s71, %s85
    %p87 = scmp.eq.s32.totalorder %s19, 0
    %p88 = por %p86, %p87
    %s90 = sadd.s32 %s89, 1
    %p93 = scmp.eq.s32.totalorder %s13, 1
    %p94 = scmp.ne.s32.totalorder %s89, %s91
    %p95 = scmp.eq.s32.totalorder %s13, 0
    %p96 = por %p94, %p95
    %p97 = scmp.ne.s32.totalorder %s89, %s91
    %p98 = scmp.eq.s32.totalorder %s18, 1
    %p99 = por %p97, %p98
    %p100 = scmp.ne.s32.totalorder %s91, %s92
    %p101 = scmp.eq.s32.totalorder %s18, 0
    %p102 = por %p100, %p101
    %p103 = scmp.ne.s32.totalorder %s91, %s92
    %p104 = scmp.eq.s32.totalorder %s19, 1
    %p105 = por %p103, %p104
    %p107 = scmp.ne.s32.totalorder %s92, %s106
    %p108 = scmp.eq.s32.totalorder %s19, 0
    %p109 = por %p107, %p108
    %s111 = sadd.s32 %s110, 1
    %p114 = scmp.eq.s32.totalorder %s13, 1
    %p115 = scmp.ne.s32.totalorder %s110, %s112
    %p116 = scmp.eq.s32.totalorder %s13, 0
    %p117 = por %p115, %p116
    %p118 = scmp.ne.s32.totalorder %s110, %s112
    %p119 = scmp.eq.s32.totalorder %s18, 1
    %p120 = por %p118, %p119
    %p121 = scmp.ne.s32.totalorder %s112, %s113
    %p122 = scmp.eq.s32.totalorder %s18, 0
    %p123 = por %p121, %p122
    %p124 = scmp.ne.s32.totalorder %s112, %s113
    %p125 = scmp.eq.s32.totalorder %s19, 1
    %p126 = por %p124, %p125
    %p128 = scmp.ne.s32.totalorder %s113, %s127
    %p129 = scmp.eq.s32.totalorder %s19, 0
    %p130 = por %p128, %p129
    %s132 = sadd.s32 %s131, 1
    %p135 = scmp.eq.s32.totalorder %s13, 1
    %p136 = scmp.ne.s32.totalorder %s131, %s133
    %p137 = scmp.eq.s32.totalorder %s13, 0
    %p138 = por %p136, %p137
    %p139 = scmp.ne.s32.totalorder %s131, %s133
    %p140 = scmp.eq.s32.totalorder %s18, 1
    %p141 = por %p139, %p140
    %p142 = scmp.ne.s32.totalorder %s133, %s134
    %p143 = scmp.eq.s32.totalorder %s18, 0
    %p144 = por %p142, %p143
    %p145 = scmp.ne.s32.totalorder %s133, %s134
    %p146 = scmp.eq.s32.totalorder %s19, 1
    %p147 = por %p145, %p146
    %p149 = scmp.ne.s32.totalorder %s134, %s148
    %p150 = scmp.eq.s32.totalorder %s19, 0
    %p151 = por %p149, %p150
    %s153 = sadd.s32 %s152, 1
    %p156 = scmp.eq.s32.totalorder %s13, 1
    %p157 = scmp.ne.s32.totalorder %s152, %s154
    %p158 = scmp.eq.s32.totalorder %s13, 0
    %p159 = por %p157, %p158
    %p160 = scmp.ne.s32.totalorder %s152, %s154
    %p161 = scmp.eq.s32.totalorder %s18, 1
    %p162 = por %p160, %p161
    %p163 = scmp.ne.s32.totalorder %s154, %s155
    %p164 = scmp.eq.s32.totalorder %s18, 0
    %p165 = por %p163, %p164
    %p166 = scmp.ne.s32.totalorder %s154, %s155
    %p167 = scmp.eq.s32.totalorder %s19, 1
    %p168 = por %p166, %p167
    %p170 = scmp.ne.s32.totalorder %s155, %s169
    %p171 = scmp.eq.s32.totalorder %s19, 0
    %p172 = por %p170, %p171
    %p173 = scmp.le.s32.totalorder 1, %s13
    %p174 = scmp.lt.s32.totalorder %s13, 3
    %p175 = pnand %p173, %p174
    %p176 = pneg %p175
    // Predicated region
    $region9: #{block_forward.5} parent=5 // pred_check
      _
    $region10: #{block_forward.5} parent=5 // pred_check_branch
      %178 = sbr.rel (%p175) target = $region12
    $region11: #{block_forward.5} parent=5 // pred_region
      %s179 = ssub.s32 %s13, 1
      // Predicated region
      $region13: #{block_forward.5} parent=11 // pred_check
        %p180 = pneg %p60
      $region14: #{block_forward.5} parent=11 // pred_check_branch
        %182 = sbr.rel (%p180) target = $region16
      $region15: #{block_forward.5} parent=11 // pred_region
        _
      $region16: #{block_forward.5} parent=11 // pred_fallthru
        _
      // Predicated region
      $region17: #{block_forward.5} parent=11 // pred_check
        %p183 = pneg %p81
      $region18: #{block_forward.5} parent=11 // pred_check_branch
        %185 = sbr.rel (%p183) target = $region20
      $region19: #{block_forward.5} parent=11 // pred_region
        _
      $region20: #{block_forward.5} parent=11 // pred_fallthru
        _
    $region12: #{block_forward.5} parent=5 // pred_fallthru
      _
    %p186 = scmp.lt.s32.totalorder %s13, 2
    // Predicated region
    $region21: #{block_forward.5} parent=5 // pred_check
      %p187 = pneg %p186
    $region22: #{block_forward.5} parent=5 // pred_check_branch
      %189 = sbr.rel (%p187) target = $region24
    $region23: #{block_forward.5} parent=5 // pred_region
      // Predicated region
      $region25: #{block_forward.5} parent=23 // pred_check
        %p190 = pneg %p33
      $region26: #{block_forward.5} parent=23 // pred_check_branch
        %192 = sbr.rel (%p190) target = $region28
      $region27: #{block_forward.5} parent=23 // pred_region
        %s193 = smul.u32 32, %s13
        %p194 = scmp.lt.s32.totalorder %s193, 63
        %s195 = scalar_select %p194, %s193, 63
        %s196 = smul.addr %s195, 8
        %s197 = scalar_lea.vmem %s0, %s196
        %s198 = smul.u32 32, %s13
      $region28: #{block_forward.5} parent=23 // pred_fallthru
        _
    $region24: #{block_forward.5} parent=5 // pred_fallthru
      _
    %p199 = scmp.le.s32.totalorder 1, %s13
    %p200 = scmp.lt.s32.totalorder %s13, 3
    %p201 = pnand %p199, %p200
    %p202 = pneg %p201
    // Predicated region
    $region29: #{block_forward.5} parent=5 // pred_check
      _
    $region30: #{block_forward.5} parent=5 // pred_check_branch
      %204 = sbr.rel (%p201) target = $region32
    $region31: #{block_forward.5} parent=5 // pred_region
      %s205 = ssub.s32 %s13, 1
      %s206 = smul.u32 32, %s18
      %p207 = scmp.lt.s32.totalorder %s206, 63
      %s208 = scalar_select %p207, %s206, 63
      %s209 = smul.addr %s208, 8
      %s210 = scalar_lea.vmem %s0, %s209
      %p211 = pneg %p39
      %p212 = pneg %p36
      %p213 = pneg %p60
      %p214 = pneg %p57
      %p215 = pneg %p81
      %p216 = pneg %p78
      %p217 = pneg %p102
      %p218 = pneg %p99
      %p219 = pneg %p123
      %p220 = pneg %p120
      %p221 = pneg %p144
      %p222 = pneg %p141
      %p223 = pneg %p165
      %p224 = pneg %p162
      %s225 = smul.u32 32, %s18
      %p226 = scmp.lt.s32.totalorder %s225, 63
      %s227 = scalar_select %p226, %s225, 63
      %s228 = smul.addr %s227, 8
      %s229 = scalar_lea.vmem %s0, %s228
      %s230 = smul.u32 32, %s18
      %p232 = scmp.eq.s32.totalorder %s18, 0
      // Predicated region
      $region33: #{block_forward.5} parent=31 // pred_check
        %p233 = pneg %p232
      $region34: #{block_forward.5} parent=31 // pred_check_branch
        %235 = sbr.rel (%p233) target = $region36
      $region35: #{block_forward.5} parent=31 // pred_region
        %vm236 = vcmask 57344
        %237 = vst.msk [vmem:[%s3] sm:$0x1] %vm236, 0.0
        %238 = vst.msk [vmem:[%s4] sm:$0x1] %vm236, 0.0
        %239 = vst.msk [vmem:[%s5] sm:$0x1] %vm236, 0.0
        %240 = vst.msk [vmem:[%s6] sm:$0x1] %vm236, 0.0
      $region36: #{block_forward.5} parent=31 // pred_fallthru
        _
      %v241 = vld [vmem:[%s229] sm:$0xff]
      %v242 = vld [vmem:[%s229 + $0x8] sm:$0xff]
      %v243 = vld [vmem:[%s229 + $0x10] sm:$0xff]
      %v244 = vld [vmem:[%s229 + $0x18] sm:$0xff]
      %v245 = vld [vmem:[%s229 + $0x20] sm:$0xff]
      %v246 = vld [vmem:[%s229 + $0x28] sm:$0xff]
      %v247 = vld [vmem:[%s229 + $0x30] sm:$0xff]
      %v248 = vld [vmem:[%s229 + $0x38] sm:$0xff]
      %v249 = vld [vmem:[%s229 + $0x40] sm:$0xff]
      %v250 = vld [vmem:[%s229 + $0x48] sm:$0xff]
      %v251 = vld [vmem:[%s229 + $0x50] sm:$0xff]
      %v252 = vld [vmem:[%s229 + $0x58] sm:$0xff]
      %v253 = vld [vmem:[%s229 + $0x60] sm:$0xff]
      %v254 = vld [vmem:[%s229 + $0x68] sm:$0xff]
      %v255 = vld [vmem:[%s229 + $0x70] sm:$0xff]
      %v256 = vld [vmem:[%s229 + $0x78] sm:$0xff]
      %v257 = vld [vmem:[%s229 + $0x80] sm:$0xff]
      %v258 = vld [vmem:[%s229 + $0x88] sm:$0xff]
      %v259 = vld [vmem:[%s229 + $0x90] sm:$0xff]
      %v260 = vld [vmem:[%s229 + $0x98] sm:$0xff]
      %v261 = vld [vmem:[%s229 + $0xa0] sm:$0xff]
      %v262 = vld [vmem:[%s229 + $0xa8] sm:$0xff]
      %v263 = vld [vmem:[%s229 + $0xb0] sm:$0xff]
      %v264 = vld [vmem:[%s229 + $0xb8] sm:$0xff]
      %v265 = vld [vmem:[%s229 + $0xc0] sm:$0xff]
      %v266 = vld [vmem:[%s229 + $0xc8] sm:$0xff]
      %v267 = vld [vmem:[%s229 + $0xd0] sm:$0xff]
      %v268 = vld [vmem:[%s229 + $0xd8] sm:$0xff]
      %v269 = vld [vmem:[%s229 + $0xe0] sm:$0xff]
      %v270 = vld [vmem:[%s229 + $0xe8] sm:$0xff]
      %v271 = vld [vmem:[%s229 + $0xf0] sm:$0xff]
      %v272 = vld [vmem:[%s229 + $0xf8] sm:$0xff]
      %v273 = vpack.c.bf16 %v242, %v241
      %v274 = vpack.c.bf16 %v244, %v243
      %v275 = vpack.c.bf16 %v246, %v245
      %v276 = vpack.c.bf16 %v248, %v247
      %v277 = vpack.c.bf16 %v250, %v249
      %v278 = vpack.c.bf16 %v252, %v251
      %v279 = vpack.c.bf16 %v254, %v253
      %v280 = vpack.c.bf16 %v256, %v255
      %v281 = vpack.c.bf16 %v258, %v257
      %v282 = vpack.c.bf16 %v260, %v259
      %v283 = vpack.c.bf16 %v262, %v261
      %v284 = vpack.c.bf16 %v264, %v263
      %v285 = vpack.c.bf16 %v266, %v265
      %v286 = vpack.c.bf16 %v268, %v267
      %v287 = vpack.c.bf16 %v270, %v269
      %v288 = vpack.c.bf16 %v272, %v271
      %v289 = vld [vmem:[%s1] sm:$0x3]
      %vm290 = vcmask 31744
      %v292 = vsel %vm290, %v273, 0
      %v295 = vsel %vm290, %v274, 0
      %v298 = vsel %vm290, %v275, 0
      %v301 = vsel %vm290, %v276, 0
      %v304 = vsel %vm290, %v277, 0
      %v307 = vsel %vm290, %v278, 0
      %v310 = vsel %vm290, %v279, 0
      %v313 = vsel %vm290, %v280, 0
      %v316 = vsel %vm290, %v281, 0
      %v319 = vsel %vm290, %v282, 0
      %v322 = vsel %vm290, %v283, 0
      %v325 = vsel %vm290, %v284, 0
      %v328 = vsel %vm290, %v285, 0
      %v331 = vsel %vm290, %v286, 0
      %v334 = vsel %vm290, %v287, 0
      %v337 = vsel %vm290, %v288, 0
      %vm339 = vcmask 1041408
      %v341 = vsel %vm339, %v289, 0
      %343 = vmatprep.subr.bf16.mxu0 0
      %344 = vmatpush1.bf16.msra.mxu0 %v341
      %345 = vmatprep.subr.bf16.mxu0 0
      %346 = vmatpush1.bf16.msra.mxu0 0
      %347 = vmatprep.subr.bf16.mxu0 0
      %348 = vmatpush1.bf16.msra.mxu0 0
      %349 = vmatprep.subr.bf16.mxu0 0
      %350 = vmatpush1.bf16.msra.mxu0 0
      %351 = vmatprep.subr.bf16.mxu0 0
      %352 = vmatpush1.bf16.msra.mxu0 0
      %353 = vmatprep.subr.bf16.mxu0 0
      %354 = vmatpush1.bf16.msra.mxu0 0
      %355 = vmatprep.subr.bf16.mxu0 0
      %356 = vmatpush1.bf16.msra.mxu0 0
      %357 = vmatprep.subr.bf16.mxu0 0
      %358 = vmatpush1.bf16.msra.mxu0 0
      %359 = vmatprep.subr.bf16.mxu0 0
      %360 = vmatpush1.bf16.msra.mxu0 0
      %361 = vmatprep.subr.bf16.mxu0 0
      %362 = vmatpush1.bf16.msra.mxu0 0
      %363 = vmatprep.subr.bf16.mxu0 0
      %364 = vmatpush1.bf16.msra.mxu0 0
      %365 = vmatprep.subr.bf16.mxu0 0
      %366 = vmatpush1.bf16.msra.mxu0 0
      %367 = vmatprep.subr.bf16.mxu0 0
      %368 = vmatpush1.bf16.msra.mxu0 0
      %369 = vmatprep.subr.bf16.mxu0 0
      %370 = vmatpush1.bf16.msra.mxu0 0
      %371 = vmatprep.subr.bf16.mxu0 0
      %372 = vmatpush1.bf16.msra.mxu0 0
      %373 = vmatprep.subr.bf16.mxu0 0
      %374 = vmatpush1.bf16.msra.mxu0 0
      %375 = vmatprep.mubr.bf16.mxu0 0
      %376 = vmatmul.mubr.bf16.gmra.mrb[0].mxu0 %v292
      %v377 = vpop.f32.mrb[0].mxu0
      %v378 = vadd.f32 0.0, %v377
      %v379 = vpop.f32.mrb[0].mxu0
      %v380 = vpop.f32.mrb[0].mxu0
      %v381 = vadd.f32 0.0, %v380
      %v382 = vpop.f32.mrb[0].mxu0
      %383 = vmatprep.mubr.bf16.mxu0 0
      %384 = vmatmul.mubr.bf16.gmra.mrb[0].mxu0 %v295
      %v385 = vpop.f32.mrb[0].mxu0
      %v386 = vadd.f32 0.0, %v385
      %v387 = vpop.f32.mrb[0].mxu0
      %v388 = vpop.f32.mrb[0].mxu0
      %v389 = vadd.f32 0.0, %v388
      %v390 = vpop.f32.mrb[0].mxu0
      %391 = vmatprep.mubr.bf16.mxu0 0
      %392 = vmatmul.mubr.bf16.gmra.mrb[0].mxu0 %v298
      %v393 = vpop.f32.mrb[0].mxu0
      %v394 = vadd.f32 0.0, %v393
      %v395 = vpop.f32.mrb[0].mxu0
      %v396 = vpop.f32.mrb[0].mxu0
      %v397 = vadd.f32 0.0, %v396
      %v398 = vpop.f32.mrb[0].mxu0
      %399 = vmatprep.mubr.bf16.mxu0 0
      %400 = vmatmul.mubr.bf16.gmra.mrb[0].mxu0 %v301
      %v401 = vpop.f32.mrb[0].mxu0
      %v402 = vadd.f32 0.0, %v401
      %v403 = vpop.f32.mrb[0].mxu0
      %v404 = vpop.f32.mrb[0].mxu0
      %v405 = vadd.f32 0.0, %v404
      %v406 = vpop.f32.mrb[0].mxu0
      %407 = vmatprep.mubr.bf16.mxu0 0
      %408 = vmatmul.mubr.bf16.gmra.mrb[0].mxu0 %v304
      %v409 = vpop.f32.mrb[0].mxu0
      %v410 = vadd.f32 0.0, %v409
      %v411 = vpop.f32.mrb[0].mxu0
      %v412 = vpop.f32.mrb[0].mxu0
      %v413 = vadd.f32 0.0, %v412
      %v414 = vpop.f32.mrb[0].mxu0
      %415 = vmatprep.mubr.bf16.mxu0 0
      %416 = vmatmul.mubr.bf16.gmra.mrb[0].mxu0 %v307
      %v417 = vpop.f32.mrb[0].mxu0
      %v418 = vadd.f32 0.0, %v417
      %v419 = vpop.f32.mrb[0].mxu0
      %v420 = vpop.f32.mrb[0].mxu0
      %v421 = vadd.f32 0.0, %v420
      %v422 = vpop.f32.mrb[0].mxu0
      %423 = vmatprep.mubr.bf16.mxu0 0
      %424 = vmatmul.mubr.bf16.gmra.mrb[0].mxu0 %v310
      %v425 = vpop.f32.mrb[0].mxu0
      %v426 = vadd.f32 0.0, %v425
      %v427 = vpop.f32.mrb[0].mxu0
      %v428 = vpop.f32.mrb[0].mxu0
      %v429 = vadd.f32 0.0, %v428
      %v430 = vpop.f32.mrb[0].mxu0
      %431 = vmatprep.mubr.bf16.mxu0 0
      %432 = vmatmul.mubr.bf16.gmra.mrb[0].mxu0 %v313
      %v433 = vpop.f32.mrb[0].mxu0
      %v434 = vadd.f32 0.0, %v433
      %v435 = vpop.f32.mrb[0].mxu0
      %v436 = vpop.f32.mrb[0].mxu0
      %v437 = vadd.f32 0.0, %v436
      %v438 = vpop.f32.mrb[0].mxu0
      %439 = vmatprep.mubr.bf16.mxu0 0
      %440 = vmatmul.mubr.bf16.gmra.mrb[0].mxu0 %v316
      %v441 = vpop.f32.mrb[0].mxu0
      %v442 = vadd.f32 0.0, %v441
      %v443 = vpop.f32.mrb[0].mxu0
      %v444 = vpop.f32.mrb[0].mxu0
      %v445 = vadd.f32 0.0, %v444
      %v446 = vpop.f32.mrb[0].mxu0
      %447 = vmatprep.mubr.bf16.mxu0 0
      %448 = vmatmul.mubr.bf16.gmra.mrb[0].mxu0 %v319
      %v449 = vpop.f32.mrb[0].mxu0
      %v450 = vadd.f32 0.0, %v449
      %v451 = vpop.f32.mrb[0].mxu0
      %v452 = vpop.f32.mrb[0].mxu0
      %v453 = vadd.f32 0.0, %v452
      %v454 = vpop.f32.mrb[0].mxu0
      %455 = vmatprep.mubr.bf16.mxu0 0
      %456 = vmatmul.mubr.bf16.gmra.mrb[0].mxu0 %v322
      %v457 = vpop.f32.mrb[0].mxu0
      %v458 = vadd.f32 0.0, %v457
      %v459 = vpop.f32.mrb[0].mxu0
      %v460 = vpop.f32.mrb[0].mxu0
      %v461 = vadd.f32 0.0, %v460
      %v462 = vpop.f32.mrb[0].mxu0
      %463 = vmatprep.mubr.bf16.mxu0 0
      %464 = vmatmul.mubr.bf16.gmra.mrb[0].mxu0 %v325
      %v465 = vpop.f32.mrb[0].mxu0
      %v466 = vadd.f32 0.0, %v465
      %v467 = vpop.f32.mrb[0].mxu0
      %v468 = vpop.f32.mrb[0].mxu0
      %v469 = vadd.f32 0.0, %v468
      %v470 = vpop.f32.mrb[0].mxu0
      %471 = vmatprep.mubr.bf16.mxu0 0
      %472 = vmatmul.mubr.bf16.gmra.mrb[0].mxu0 %v328
      %v473 = vpop.f32.mrb[0].mxu0
      %v474 = vadd.f32 0.0, %v473
      %v475 = vpop.f32.mrb[0].mxu0
      %v476 = vpop.f32.mrb[0].mxu0
      %v477 = vadd.f32 0.0, %v476
      %v478 = vpop.f32.mrb[0].mxu0
      %479 = vmatprep.mubr.bf16.mxu0 0
      %480 = vmatmul.mubr.bf16.gmra.mrb[0].mxu0 %v331
      %v481 = vpop.f32.mrb[0].mxu0
      %v482 = vadd.f32 0.0, %v481
      %v483 = vpop.f32.mrb[0].mxu0
      %v484 = vpop.f32.mrb[0].mxu0
      %v485 = vadd.f32 0.0, %v484
      %v486 = vpop.f32.mrb[0].mxu0
      %487 = vmatprep.mubr.bf16.mxu0 0
      %488 = vmatmul.mubr.bf16.gmra.mrb[0].mxu0 %v334
      %v489 = vpop.f32.mrb[0].mxu0
      %v490 = vadd.f32 0.0, %v489
      %v491 = vpop.f32.mrb[0].mxu0
      %v492 = vpop.f32.mrb[0].mxu0
      %v493 = vadd.f32 0.0, %v492
      %v494 = vpop.f32.mrb[0].mxu0
      %495 = vmatprep.mubr.bf16.mxu0 0
      %496 = vmatmul.mubr.bf16.gmra.mrb[0].mxu0 %v337
      %v497 = vpop.f32.mrb[0].mxu0
      %v498 = vadd.f32 0.0, %v497
      %v499 = vpop.f32.mrb[0].mxu0
      %v500 = vpop.f32.mrb[0].mxu0
      %v501 = vadd.f32 0.0, %v500
      %v502 = vpop.f32.mrb[0].mxu0
      %503 = vdwg.mxu0
      %v504 = vld [vmem:[%s3] sm:$0x1]
      %vm505 = vcmask 64512
      %v506 = vsel %vm505, %v378, 0.0
      %v507 = vsel %vm505, %v381, 0.0
      %v508 = vadd.f32 %v506, %v507
      %v509 = vsel %vm505, %v386, 0.0
      %v510 = vadd.f32 %v508, %v509
      %v511 = vsel %vm505, %v389, 0.0
      %v512 = vadd.f32 %v510, %v511
      %v513 = vsel %vm505, %v394, 0.0
      %v514 = vadd.f32 %v512, %v513
      %v515 = vsel %vm505, %v397, 0.0
      %v516 = vadd.f32 %v514, %v515
      %v517 = vsel %vm505, %v402, 0.0
      %v518 = vadd.f32 %v516, %v517
      %v519 = vsel %vm505, %v405, 0.0
      %v520 = vadd.f32 %v518, %v519
      %v521 = vsel %vm505, %v410, 0.0
      %v522 = vadd.f32 %v520, %v521
      %v523 = vsel %vm505, %v413, 0.0
      %v524 = vadd.f32 %v522, %v523
      %v525 = vsel %vm505, %v418, 0.0
      %v526 = vadd.f32 %v524, %v525
      %v527 = vsel %vm505, %v421, 0.0
      %v528 = vadd.f32 %v526, %v527
      %v529 = vsel %vm505, %v426, 0.0
      %v530 = vadd.f32 %v528, %v529
      %v531 = vsel %vm505, %v429, 0.0
      %v532 = vadd.f32 %v530, %v531
      %v533 = vsel %vm505, %v434, 0.0
      %v534 = vadd.f32 %v532, %v533
      %v535 = vsel %vm505, %v437, 0.0
      %v536 = vadd.f32 %v534, %v535
      %v537 = vsel %vm505, %v442, 0.0
      %v538 = vadd.f32 %v536, %v537
      %v539 = vsel %vm505, %v445, 0.0
      %v540 = vadd.f32 %v538, %v539
      %v541 = vsel %vm505, %v450, 0.0
      %v542 = vadd.f32 %v540, %v541
      %v543 = vsel %vm505, %v453, 0.0
      %v544 = vadd.f32 %v542, %v543
      %v545 = vsel %vm505, %v458, 0.0
      %v546 = vadd.f32 %v544, %v545
      %v547 = vsel %vm505, %v461, 0.0
      %v548 = vadd.f32 %v546, %v547
      %v549 = vsel %vm505, %v466, 0.0
      %v550 = vadd.f32 %v548, %v549
      %v551 = vsel %vm505, %v469, 0.0
      %v552 = vadd.f32 %v550, %v551
      %v553 = vsel %vm505, %v474, 0.0
      %v554 = vadd.f32 %v552, %v553
      %v555 = vsel %vm505, %v477, 0.0
      %v556 = vadd.f32 %v554, %v555
      %v557 = vsel %vm505, %v482, 0.0
      %v558 = vadd.f32 %v556, %v557
      %v559 = vsel %vm505, %v485, 0.0
      %v560 = vadd.f32 %v558, %v559
      %v561 = vsel %vm505, %v490, 0.0
      %v562 = vadd.f32 %v560, %v561
      %v563 = vsel %vm505, %v493, 0.0
      %v564 = vadd.f32 %v562, %v563
      %v565 = vsel %vm505, %v498, 0.0
      %v566 = vadd.f32 %v564, %v565
      %v567 = vsel %vm505, %v501, 0.0
      %v568 = vadd.f32 %v566, %v567
      %v569 = vrot.slane %v568, 4
      %v570 = vadd.f32 %v568, %v569
      %v571 = vrot.slane %v570, 2
      %v572 = vadd.f32 %v570, %v571
      %v573 = vrot.slane %v572, 1
      %v574 = vadd.f32 %v572, %v573
      %v575 = vadd.f32 %v504, %v574
      %vm576 = vcmask 57344
      %577 = vst.msk [vmem:[%s3] sm:$0x1] %vm576, %v575
      %v578 = vld [vmem:[%s4] sm:$0x1]
      %v579 = vmul.f32 %v378, %v378
      %v580 = vmul.f32 %v381, %v381
      %v581 = vmul.f32 %v386, %v386
      %v582 = vmul.f32 %v389, %v389
      %v583 = vmul.f32 %v394, %v394
      %v584 = vmul.f32 %v397, %v397
      %v585 = vmul.f32 %v402, %v402
      %v586 = vmul.f32 %v405, %v405
      %v587 = vmul.f32 %v410, %v410
      %v588 = vmul.f32 %v413, %v413
      %v589 = vmul.f32 %v418, %v418
      %v590 = vmul.f32 %v421, %v421
      %v591 = vmul.f32 %v426, %v426
      %v592 = vmul.f32 %v429, %v429
      %v593 = vmul.f32 %v434, %v434
      %v594 = vmul.f32 %v437, %v437
      %v595 = vmul.f32 %v442, %v442
      %v596 = vmul.f32 %v445, %v445
      %v597 = vmul.f32 %v450, %v450
      %v598 = vmul.f32 %v453, %v453
      %v599 = vmul.f32 %v458, %v458
      %v600 = vmul.f32 %v461, %v461
      %v601 = vmul.f32 %v466, %v466
      %v602 = vmul.f32 %v469, %v469
      %v603 = vmul.f32 %v474, %v474
      %v604 = vmul.f32 %v477, %v477
      %v605 = vmul.f32 %v482, %v482
      %v606 = vmul.f32 %v485, %v485
      %v607 = vmul.f32 %v490, %v490
      %v608 = vmul.f32 %v493, %v493
      %v609 = vmul.f32 %v498, %v498
      %v610 = vmul.f32 %v501, %v501
      %v611 = vsel %vm505, %v579, 0.0
      %v612 = vsel %vm505, %v580, 0.0
      %v613 = vadd.f32 %v611, %v612
      %v614 = vsel %vm505, %v581, 0.0
      %v615 = vadd.f32 %v613, %v614
      %v616 = vsel %vm505, %v582, 0.0
      %v617 = vadd.f32 %v615, %v616
      %v618 = vsel %vm505, %v583, 0.0
      %v619 = vadd.f32 %v617, %v618
      %v620 = vsel %vm505, %v584, 0.0
      %v621 = vadd.f32 %v619, %v620
      %v622 = vsel %vm505, %v585, 0.0
      %v623 = vadd.f32 %v621, %v622
      %v624 = vsel %vm505, %v586, 0.0
      %v625 = vadd.f32 %v623, %v624
      %v626 = vsel %vm505, %v587, 0.0
      %v627 = vadd.f32 %v625, %v626
      %v628 = vsel %vm505, %v588, 0.0
      %v629 = vadd.f32 %v627, %v628
      %v630 = vsel %vm505, %v589, 0.0
      %v631 = vadd.f32 %v629, %v630
      %v632 = vsel %vm505, %v590, 0.0
      %v633 = vadd.f32 %v631, %v632
      %v634 = vsel %vm505, %v591, 0.0
      %v635 = vadd.f32 %v633, %v634
      %v636 = vsel %vm505, %v592, 0.0
      %v637 = vadd.f32 %v635, %v636
      %v638 = vsel %vm505, %v593, 0.0
      %v639 = vadd.f32 %v637, %v638
      %v640 = vsel %vm505, %v594, 0.0
      %v641 = vadd.f32 %v639, %v640
      %v642 = vsel %vm505, %v595, 0.0
      %v643 = vadd.f32 %v641, %v642
      %v644 = vsel %vm505, %v596, 0.0
      %v645 = vadd.f32 %v643, %v644
      %v646 = vsel %vm505, %v597, 0.0
      %v647 = vadd.f32 %v645, %v646
      %v648 = vsel %vm505, %v598, 0.0
      %v649 = vadd.f32 %v647, %v648
      %v650 = vsel %vm505, %v599, 0.0
      %v651 = vadd.f32 %v649, %v650
      %v652 = vsel %vm505, %v600, 0.0
      %v653 = vadd.f32 %v651, %v652
      %v654 = vsel %vm505, %v601, 0.0
      %v655 = vadd.f32 %v653, %v654
      %v656 = vsel %vm505, %v602, 0.0
      %v657 = vadd.f32 %v655, %v656
      %v658 = vsel %vm505, %v603, 0.0
      %v659 = vadd.f32 %v657, %v658
      %v660 = vsel %vm505, %v604, 0.0
      %v661 = vadd.f32 %v659, %v660
      %v662 = vsel %vm505, %v605, 0.0
      %v663 = vadd.f32 %v661, %v662
      %v664 = vsel %vm505, %v606, 0.0
      %v665 = vadd.f32 %v663, %v664
      %v666 = vsel %vm505, %v607, 0.0
      %v667 = vadd.f32 %v665, %v666
      %v668 = vsel %vm505, %v608, 0.0
      %v669 = vadd.f32 %v667, %v668
      %v670 = vsel %vm505, %v609, 0.0
      %v671 = vadd.f32 %v669, %v670
      %v672 = vsel %vm505, %v610, 0.0
      %v673 = vadd.f32 %v671, %v672
      %v674 = vrot.slane %v673, 4
      %v675 = vadd.f32 %v673, %v674
      %v676 = vrot.slane %v675, 2
      %v677 = vadd.f32 %v675, %v676
      %v678 = vrot.slane %v677, 1
      %v679 = vadd.f32 %v677, %v678
      %v680 = vadd.f32 %v578, %v679
      %681 = vst.msk [vmem:[%s4] sm:$0x1] %vm576, %v680
      %v682 = vld [vmem:[%s2] sm:$0x3]
      %v684 = vsel %vm339, %v682, 0
      %686 = vmatprep.subr.bf16.mxu0 0
      %687 = vmatpush1.bf16.msra.mxu0 %v684
      %688 = vmatprep.subr.bf16.mxu0 0
      %689 = vmatpush1.bf16.msra.mxu0 0
      %690 = vmatprep.subr.bf16.mxu0 0
      %691 = vmatpush1.bf16.msra.mxu0 0
      %692 = vmatprep.subr.bf16.mxu0 0
      %693 = vmatpush1.bf16.msra.mxu0 0
      %694 = vmatprep.subr.bf16.mxu0 0
      %695 = vmatpush1.bf16.msra.mxu0 0
      %696 = vmatprep.subr.bf16.mxu0 0
      %697 = vmatpush1.bf16.msra.mxu0 0
      %698 = vmatprep.subr.bf16.mxu0 0
      %699 = vmatpush1.bf16.msra.mxu0 0
      %700 = vmatprep.subr.bf16.mxu0 0
      %701 = vmatpush1.bf16.msra.mxu0 0
      %702 = vmatprep.subr.bf16.mxu0 0
      %703 = vmatpush1.bf16.msra.mxu0 0
      %704 = vmatprep.subr.bf16.mxu0 0
      %705 = vmatpush1.bf16.msra.mxu0 0
      %706 = vmatprep.subr.bf16.mxu0 0
      %707 = vmatpush1.bf16.msra.mxu0 0
      %708 = vmatprep.subr.bf16.mxu0 0
      %709 = vmatpush1.bf16.msra.mxu0 0
      %710 = vmatprep.subr.bf16.mxu0 0
      %711 = vmatpush1.bf16.msra.mxu0 0
      %712 = vmatprep.subr.bf16.mxu0 0
      %713 = vmatpush1.bf16.msra.mxu0 0
      %714 = vmatprep.subr.bf16.mxu0 0
      %715 = vmatpush1.bf16.msra.mxu0 0
      %716 = vmatprep.subr.bf16.mxu0 0
      %717 = vmatpush1.bf16.msra.mxu0 0
      %718 = vmatprep.mubr.bf16.mxu0 0
      %719 = vmatmul.mubr.bf16.gmra.mrb[0].mxu0 %v292
      %v720 = vpop.f32.mrb[0].mxu0
      %v721 = vadd.f32 0.0, %v720
      %v722 = vpop.f32.mrb[0].mxu0
      %v723 = vpop.f32.mrb[0].mxu0
      %v724 = vadd.f32 0.0, %v723
      %v725 = vpop.f32.mrb[0].mxu0
      %726 = vmatprep.mubr.bf16.mxu0 0
      %727 = vmatmul.mubr.bf16.gmra.mrb[0].mxu0 %v295
      %v728 = vpop.f32.mrb[0].mxu0
      %v729 = vadd.f32 0.0, %v728
      %v730 = vpop.f32.mrb[0].mxu0
      %v731 = vpop.f32.mrb[0].mxu0
      %v732 = vadd.f32 0.0, %v731
      %v733 = vpop.f32.mrb[0].mxu0
      %734 = vmatprep.mubr.bf16.mxu0 0
      %735 = vmatmul.mubr.bf16.gmra.mrb[0].mxu0 %v298
      %v736 = vpop.f32.mrb[0].mxu0
      %v737 = vadd.f32 0.0, %v736
      %v738 = vpop.f32.mrb[0].mxu0
      %v739 = vpop.f32.mrb[0].mxu0
      %v740 = vadd.f32 0.0, %v739
      %v741 = vpop.f32.mrb[0].mxu0
      %742 = vmatprep.mubr.bf16.mxu0 0
      %743 = vmatmul.mubr.bf16.gmra.mrb[0].mxu0 %v301
      %v744 = vpop.f32.mrb[0].mxu0
      %v745 = vadd.f32 0.0, %v744
      %v746 = vpop.f32.mrb[0].mxu0
      %v747 = vpop.f32.mrb[0].mxu0
      %v748 = vadd.f32 0.0, %v747
      %v749 = vpop.f32.mrb[0].mxu0
      %750 = vmatprep.mubr.bf16.mxu0 0
      %751 = vmatmul.mubr.bf16.gmra.mrb[0].mxu0 %v304
      %v752 = vpop.f32.mrb[0].mxu0
      %v753 = vadd.f32 0.0, %v752
      %v754 = vpop.f32.mrb[0].mxu0
      %v755 = vpop.f32.mrb[0].mxu0
      %v756 = vadd.f32 0.0, %v755
      %v757 = vpop.f32.mrb[0].mxu0
      %758 = vmatprep.mubr.bf16.mxu0 0
      %759 = vmatmul.mubr.bf16.gmra.mrb[0].mxu0 %v307
      %v760 = vpop.f32.mrb[0].mxu0
      %v761 = vadd.f32 0.0, %v760
      %v762 = vpop.f32.mrb[0].mxu0
      %v763 = vpop.f32.mrb[0].mxu0
      %v764 = vadd.f32 0.0, %v763
      %v765 = vpop.f32.mrb[0].mxu0
      %766 = vmatprep.mubr.bf16.mxu0 0
      %767 = vmatmul.mubr.bf16.gmra.mrb[0].mxu0 %v310
      %v768 = vpop.f32.mrb[0].mxu0
      %v769 = vadd.f32 0.0, %v768
      %v770 = vpop.f32.mrb[0].mxu0
      %v771 = vpop.f32.mrb[0].mxu0
      %v772 = vadd.f32 0.0, %v771
      %v773 = vpop.f32.mrb[0].mxu0
      %774 = vmatprep.mubr.bf16.mxu0 0
      %775 = vmatmul.mubr.bf16.gmra.mrb[0].mxu0 %v313
      %v776 = vpop.f32.mrb[0].mxu0
      %v777 = vadd.f32 0.0, %v776
      %v778 = vpop.f32.mrb[0].mxu0
      %v779 = vpop.f32.mrb[0].mxu0
      %v780 = vadd.f32 0.0, %v779
      %v781 = vpop.f32.mrb[0].mxu0
      %782 = vmatprep.mubr.bf16.mxu0 0
      %783 = vmatmul.mubr.bf16.gmra.mrb[0].mxu0 %v316
      %v784 = vpop.f32.mrb[0].mxu0
      %v785 = vadd.f32 0.0, %v784
      %v786 = vpop.f32.mrb[0].mxu0
      %v787 = vpop.f32.mrb[0].mxu0
      %v788 = vadd.f32 0.0, %v787
      %v789 = vpop.f32.mrb[0].mxu0
      %790 = vmatprep.mubr.bf16.mxu0 0
      %791 = vmatmul.mubr.bf16.gmra.mrb[0].mxu0 %v319
      %v792 = vpop.f32.mrb[0].mxu0
      %v793 = vadd.f32 0.0, %v792
      %v794 = vpop.f32.mrb[0].mxu0
      %v795 = vpop.f32.mrb[0].mxu0
      %v796 = vadd.f32 0.0, %v795
      %v797 = vpop.f32.mrb[0].mxu0
      %798 = vmatprep.mubr.bf16.mxu0 0
      %799 = vmatmul.mubr.bf16.gmra.mrb[0].mxu0 %v322
      %v800 = vpop.f32.mrb[0].mxu0
      %v801 = vadd.f32 0.0, %v800
      %v802 = vpop.f32.mrb[0].mxu0
      %v803 = vpop.f32.mrb[0].mxu0
      %v804 = vadd.f32 0.0, %v803
      %v805 = vpop.f32.mrb[0].mxu0
      %806 = vmatprep.mubr.bf16.mxu0 0
      %807 = vmatmul.mubr.bf16.gmra.mrb[0].mxu0 %v325
      %v808 = vpop.f32.mrb[0].mxu0
      %v809 = vadd.f32 0.0, %v808
      %v810 = vpop.f32.mrb[0].mxu0
      %v811 = vpop.f32.mrb[0].mxu0
      %v812 = vadd.f32 0.0, %v811
      %v813 = vpop.f32.mrb[0].mxu0
      %814 = vmatprep.mubr.bf16.mxu0 0
      %815 = vmatmul.mubr.bf16.gmra.mrb[0].mxu0 %v328
      %v816 = vpop.f32.mrb[0].mxu0
      %v817 = vadd.f32 0.0, %v816
      %v818 = vpop.f32.mrb[0].mxu0
      %v819 = vpop.f32.mrb[0].mxu0
      %v820 = vadd.f32 0.0, %v819
      %v821 = vpop.f32.mrb[0].mxu0
      %822 = vmatprep.mubr.bf16.mxu0 0
      %823 = vmatmul.mubr.bf16.gmra.mrb[0].mxu0 %v331
      %v824 = vpop.f32.mrb[0].mxu0
      %v825 = vadd.f32 0.0, %v824
      %v826 = vpop.f32.mrb[0].mxu0
      %v827 = vpop.f32.mrb[0].mxu0
      %v828 = vadd.f32 0.0, %v827
      %v829 = vpop.f32.mrb[0].mxu0
      %830 = vmatprep.mubr.bf16.mxu0 0
      %831 = vmatmul.mubr.bf16.gmra.mrb[0].mxu0 %v334
      %v832 = vpop.f32.mrb[0].mxu0
      %v833 = vadd.f32 0.0, %v832
      %v834 = vpop.f32.mrb[0].mxu0
      %v835 = vpop.f32.mrb[0].mxu0
      %v836 = vadd.f32 0.0, %v835
      %v837 = vpop.f32.mrb[0].mxu0
      %838 = vmatprep.mubr.bf16.mxu0 0
      %839 = vmatmul.mubr.bf16.gmra.mrb[0].mxu0 %v337
      %v840 = vpop.f32.mrb[0].mxu0
      %v841 = vadd.f32 0.0, %v840
      %v842 = vpop.f32.mrb[0].mxu0
      %v843 = vpop.f32.mrb[0].mxu0
      %v844 = vadd.f32 0.0, %v843
      %v845 = vpop.f32.mrb[0].mxu0
      %846 = vdwg.mxu0
      %v847 = vld [vmem:[%s5] sm:$0x1]
      %v848 = vsel %vm505, %v721, 0.0
      %v849 = vsel %vm505, %v724, 0.0
      %v850 = vadd.f32 %v848, %v849
      %v851 = vsel %vm505, %v729, 0.0
      %v852 = vadd.f32 %v850, %v851
      %v853 = vsel %vm505, %v732, 0.0
      %v854 = vadd.f32 %v852, %v853
      %v855 = vsel %vm505, %v737, 0.0
      %v856 = vadd.f32 %v854, %v855
      %v857 = vsel %vm505, %v740, 0.0
      %v858 = vadd.f32 %v856, %v857
      %v859 = vsel %vm505, %v745, 0.0
      %v860 = vadd.f32 %v858, %v859
      %v861 = vsel %vm505, %v748, 0.0
      %v862 = vadd.f32 %v860, %v861
      %v863 = vsel %vm505, %v753, 0.0
      %v864 = vadd.f32 %v862, %v863
      %v865 = vsel %vm505, %v756, 0.0
      %v866 = vadd.f32 %v864, %v865
      %v867 = vsel %vm505, %v761, 0.0
      %v868 = vadd.f32 %v866, %v867
      %v869 = vsel %vm505, %v764, 0.0
      %v870 = vadd.f32 %v868, %v869
      %v871 = vsel %vm505, %v769, 0.0
      %v872 = vadd.f32 %v870, %v871
      %v873 = vsel %vm505, %v772, 0.0
      %v874 = vadd.f32 %v872, %v873
      %v875 = vsel %vm505, %v777, 0.0
      %v876 = vadd.f32 %v874, %v875
      %v877 = vsel %vm505, %v780, 0.0
      %v878 = vadd.f32 %v876, %v877
      %v879 = vsel %vm505, %v785, 0.0
      %v880 = vadd.f32 %v878, %v879
      %v881 = vsel %vm505, %v788, 0.0
      %v882 = vadd.f32 %v880, %v881
      %v883 = vsel %vm505, %v793, 0.0
      %v884 = vadd.f32 %v882, %v883
      %v885 = vsel %vm505, %v796, 0.0
      %v886 = vadd.f32 %v884, %v885
      %v887 = vsel %vm505, %v801, 0.0
      %v888 = vadd.f32 %v886, %v887
      %v889 = vsel %vm505, %v804, 0.0
      %v890 = vadd.f32 %v888, %v889
      %v891 = vsel %vm505, %v809, 0.0
      %v892 = vadd.f32 %v890, %v891
      %v893 = vsel %vm505, %v812, 0.0
      %v894 = vadd.f32 %v892, %v893
      %v895 = vsel %vm505, %v817, 0.0
      %v896 = vadd.f32 %v894, %v895
      %v897 = vsel %vm505, %v820, 0.0
      %v898 = vadd.f32 %v896, %v897
      %v899 = vsel %vm505, %v825, 0.0
      %v900 = vadd.f32 %v898, %v899
      %v901 = vsel %vm505, %v828, 0.0
      %v902 = vadd.f32 %v900, %v901
      %v903 = vsel %vm505, %v833, 0.0
      %v904 = vadd.f32 %v902, %v903
      %v905 = vsel %vm505, %v836, 0.0
      %v906 = vadd.f32 %v904, %v905
      %v907 = vsel %vm505, %v841, 0.0
      %v908 = vadd.f32 %v906, %v907
      %v909 = vsel %vm505, %v844, 0.0
      %v910 = vadd.f32 %v908, %v909
      %v911 = vrot.slane %v910, 4
      %v912 = vadd.f32 %v910, %v911
      %v913 = vrot.slane %v912, 2
      %v914 = vadd.f32 %v912, %v913
      %v915 = vrot.slane %v914, 1
      %v916 = vadd.f32 %v914, %v915
      %v917 = vadd.f32 %v847, %v916
      %918 = vst.msk [vmem:[%s5] sm:$0x1] %vm576, %v917
      %v919 = vld [vmem:[%s6] sm:$0x1]
      %v920 = vmul.f32 %v721, %v721
      %v921 = vmul.f32 %v724, %v724
      %v922 = vmul.f32 %v729, %v729
      %v923 = vmul.f32 %v732, %v732
      %v924 = vmul.f32 %v737, %v737
      %v925 = vmul.f32 %v740, %v740
      %v926 = vmul.f32 %v745, %v745
      %v927 = vmul.f32 %v748, %v748
      %v928 = vmul.f32 %v753, %v753
      %v929 = vmul.f32 %v756, %v756
      %v930 = vmul.f32 %v761, %v761
      %v931 = vmul.f32 %v764, %v764
      %v932 = vmul.f32 %v769, %v769
      %v933 = vmul.f32 %v772, %v772
      %v934 = vmul.f32 %v777, %v777
      %v935 = vmul.f32 %v780, %v780
      %v936 = vmul.f32 %v785, %v785
      %v937 = vmul.f32 %v788, %v788
      %v938 = vmul.f32 %v793, %v793
      %v939 = vmul.f32 %v796, %v796
      %v940 = vmul.f32 %v801, %v801
      %v941 = vmul.f32 %v804, %v804
      %v942 = vmul.f32 %v809, %v809
      %v943 = vmul.f32 %v812, %v812
      %v944 = vmul.f32 %v817, %v817
      %v945 = vmul.f32 %v820, %v820
      %v946 = vmul.f32 %v825, %v825
      %v947 = vmul.f32 %v828, %v828
      %v948 = vmul.f32 %v833, %v833
      %v949 = vmul.f32 %v836, %v836
      %v950 = vmul.f32 %v841, %v841
      %v951 = vmul.f32 %v844, %v844
      %v952 = vsel %vm505, %v920, 0.0
      %v953 = vsel %vm505, %v921, 0.0
      %v954 = vadd.f32 %v952, %v953
      %v955 = vsel %vm505, %v922, 0.0
      %v956 = vadd.f32 %v954, %v955
      %v957 = vsel %vm505, %v923, 0.0
      %v958 = vadd.f32 %v956, %v957
      %v959 = vsel %vm505, %v924, 0.0
      %v960 = vadd.f32 %v958, %v959
      %v961 = vsel %vm505, %v925, 0.0
      %v962 = vadd.f32 %v960, %v961
      %v963 = vsel %vm505, %v926, 0.0
      %v964 = vadd.f32 %v962, %v963
      %v965 = vsel %vm505, %v927, 0.0
      %v966 = vadd.f32 %v964, %v965
      %v967 = vsel %vm505, %v928, 0.0
      %v968 = vadd.f32 %v966, %v967
      %v969 = vsel %vm505, %v929, 0.0
      %v970 = vadd.f32 %v968, %v969
      %v971 = vsel %vm505, %v930, 0.0
      %v972 = vadd.f32 %v970, %v971
      %v973 = vsel %vm505, %v931, 0.0
      %v974 = vadd.f32 %v972, %v973
      %v975 = vsel %vm505, %v932, 0.0
      %v976 = vadd.f32 %v974, %v975
      %v977 = vsel %vm505, %v933, 0.0
      %v978 = vadd.f32 %v976, %v977
      %v979 = vsel %vm505, %v934, 0.0
      %v980 = vadd.f32 %v978, %v979
      %v981 = vsel %vm505, %v935, 0.0
      %v982 = vadd.f32 %v980, %v981
      %v983 = vsel %vm505, %v936, 0.0
      %v984 = vadd.f32 %v982, %v983
      %v985 = vsel %vm505, %v937, 0.0
      %v986 = vadd.f32 %v984, %v985
      %v987 = vsel %vm505, %v938, 0.0
      %v988 = vadd.f32 %v986, %v987
      %v989 = vsel %vm505, %v939, 0.0
      %v990 = vadd.f32 %v988, %v989
      %v991 = vsel %vm505, %v940, 0.0
      %v992 = vadd.f32 %v990, %v991
      %v993 = vsel %vm505, %v941, 0.0
      %v994 = vadd.f32 %v992, %v993
      %v995 = vsel %vm505, %v942, 0.0
      %v996 = vadd.f32 %v994, %v995
      %v997 = vsel %vm505, %v943, 0.0
      %v998 = vadd.f32 %v996, %v997
      %v999 = vsel %vm505, %v944, 0.0
      %v1000 = vadd.f32 %v998, %v999
      %v1001 = vsel %vm505, %v945, 0.0
      %v1002 = vadd.f32 %v1000, %v1001
      %v1003 = vsel %vm505, %v946, 0.0
      %v1004 = vadd.f32 %v1002, %v1003
      %v1005 = vsel %vm505, %v947, 0.0
      %v1006 = vadd.f32 %v1004, %v1005
      %v1007 = vsel %vm505, %v948, 0.0
      %v1008 = vadd.f32 %v1006, %v1007
      %v1009 = vsel %vm505, %v949, 0.0
      %v1010 = vadd.f32 %v1008, %v1009
      %v1011 = vsel %vm505, %v950, 0.0
      %v1012 = vadd.f32 %v1010, %v1011
      %v1013 = vsel %vm505, %v951, 0.0
      %v1014 = vadd.f32 %v1012, %v1013
      %v1015 = vrot.slane %v1014, 4
      %v1016 = vadd.f32 %v1014, %v1015
      %v1017 = vrot.slane %v1016, 2
      %v1018 = vadd.f32 %v1016, %v1017
      %v1019 = vrot.slane %v1018, 1
      %v1020 = vadd.f32 %v1018, %v1019
      %v1021 = vadd.f32 %v919, %v1020
      %1022 = vst.msk [vmem:[%s6] sm:$0x1] %vm576, %v1021
      // Predicated region
      $region37: #{block_forward.5} parent=31 // pred_check
        %p1023 = pneg %p99
      $region38: #{block_forward.5} parent=31 // pred_check_branch
        %1025 = sbr.rel (%p1023) target = $region40
      $region39: #{block_forward.5} parent=31 // pred_region
        _
      $region40: #{block_forward.5} parent=31 // pred_fallthru
        _
      // Predicated region
      $region41: #{block_forward.5} parent=31 // pred_check
        %p1026 = pneg %p120
      $region42: #{block_forward.5} parent=31 // pred_check_branch
        %1028 = sbr.rel (%p1026) target = $region44
      $region43: #{block_forward.5} parent=31 // pred_region
        _
      $region44: #{block_forward.5} parent=31 // pred_fallthru
        _
      // Predicated region
      $region45: #{block_forward.5} parent=31 // pred_check
        %p1029 = pneg %p141
      $region46: #{block_forward.5} parent=31 // pred_check_branch
        %1031 = sbr.rel (%p1029) target = $region48
      $region47: #{block_forward.5} parent=31 // pred_region
        _
      $region48: #{block_forward.5} parent=31 // pred_fallthru
        _
      // Predicated region
      $region49: #{block_forward.5} parent=31 // pred_check
        %p1032 = pneg %p162
      $region50: #{block_forward.5} parent=31 // pred_check_branch
        %1034 = sbr.rel (%p1032) target = $region52
      $region51: #{block_forward.5} parent=31 // pred_region
        _
      $region52: #{block_forward.5} parent=31 // pred_fallthru
        _
      // Predicated region
      $region53: #{block_forward.5} parent=31 // pred_check
        %p1035 = pneg %p99
      $region54: #{block_forward.5} parent=31 // pred_check_branch
        %1037 = sbr.rel (%p1035) target = $region56
      $region55: #{block_forward.5} parent=31 // pred_region
        _
      $region56: #{block_forward.5} parent=31 // pred_fallthru
        _
      // Predicated region
      $region57: #{block_forward.5} parent=31 // pred_check
        %p1038 = pneg %p120
      $region58: #{block_forward.5} parent=31 // pred_check_branch
        %1040 = sbr.rel (%p1038) target = $region60
      $region59: #{block_forward.5} parent=31 // pred_region
        _
      $region60: #{block_forward.5} parent=31 // pred_fallthru
        _
      // Predicated region
      $region61: #{block_forward.5} parent=31 // pred_check
        %p1041 = pneg %p141
      $region62: #{block_forward.5} parent=31 // pred_check_branch
        %1043 = sbr.rel (%p1041) target = $region64
      $region63: #{block_forward.5} parent=31 // pred_region
        _
      $region64: #{block_forward.5} parent=31 // pred_fallthru
        _
      // Predicated region
      $region65: #{block_forward.5} parent=31 // pred_check
        %p1044 = pneg %p162
      $region66: #{block_forward.5} parent=31 // pred_check_branch
        %1046 = sbr.rel (%p1044) target = $region68
      $region67: #{block_forward.5} parent=31 // pred_region
        _
      $region68: #{block_forward.5} parent=31 // pred_fallthru
        _
    $region32: #{block_forward.5} parent=5 // pred_fallthru
      _
    %p1047 = scmp.le.s32.totalorder 2, %s13
    // Predicated region
    $region69: #{block_forward.5} parent=5 // pred_check
      %p1048 = pneg %p1047
    $region70: #{block_forward.5} parent=5 // pred_check_branch
      %1050 = sbr.rel (%p1048) target = $region72
    $region71: #{block_forward.5} parent=5 // pred_region
      %s1051 = ssub.s32 %s13, 2
    $region72: #{block_forward.5} parent=5 // pred_fallthru
      _
  $region6: #{block_forward.5} parent=0 // loop_footer
    %s17 = sadd.s32 1, %s13
  $region7: #{block_forward.5} parent=0 // loop_footer_branch
    %12 = sbr.rel target = $region3
  $region8: #{block_forward.5} parent=0 // loop_exit
    _

// kernel: block_forward.8
$region0: #{block_forward.8}
  #allocation0 [shape = 'u32[]', space=smem, size = 0x4, offset = 0x4, fixed_abs, tag = 'smem constant byte address 0x4 - core index']
  #allocation1 [shape = 'u32[144,128]{1,0:T(1,128)}', space=vmem, size = 0x12000, scoped, tag = 'internal scratch']
  %s0 = inlined_call_operand.vmem [shape: f32[2,18,18,8], index: 0, kind: input, shape index: {}]
  %s1 = inlined_call_operand.vmem [shape: f32[9,8], index: 1, kind: input, shape index: {}]
  %s2 = inlined_call_operand.vmem [shape: f32[1,8], index: 2, kind: input, shape index: {}]
  %s3 = inlined_call_operand.vmem [shape: f32[1,8], index: 3, kind: input, shape index: {}]
  %s4 = inlined_call_operand.vmem [shape: bf16[8,8], index: 4, kind: input, shape index: {}]
  %s5 = inlined_call_operand.vmem [shape: f32[2,256,8], index: 5, kind: output, shape index: {0}]
  %s6 = inlined_call_operand.vmem [shape: f32[1,8], index: 6, kind: output, shape index: {1}]
  %s7 = inlined_call_operand.vmem [shape: f32[1,8], index: 7, kind: output, shape index: {2}]
  %8 = xla_tuple %s5, %s6, %s7
  %s9 = sld [smem:[#allocation0]]
  $region73: #{block_forward.8} parent=0
    _
  %s11 = ssub.s32 1, %s9
  %s12 = scalar_select 0, %s11, %s9
  loop: start=0, step=1, limit=4
  $region2: #{block_forward.8} parent=0 // loop_pre_header
    _
  $region3: #{block_forward.8} parent=0 // loop_header
    %s14 = sphi 0, %s18
    %p15 = scmp.ge.s32.totalorder %s14, 4
    %s24 = sphi 0, %s26
    %s27 = sphi 0, %s24
    %s28 = sphi 0, %s27
    %s44 = sphi 0, %s28
    %s48 = sphi 0, %s48
    %s50 = sphi 0, %s48
    %s51 = sphi 0, %s50
    %s65 = sphi 0, %s51
    %s69 = sphi 0, %s69
    %s71 = sphi 0, %s69
    %s72 = sphi 0, %s71
    %s86 = sphi 0, %s72
    %s90 = sphi 0, %s90
    %s92 = sphi 0, %s90
    %s93 = sphi 0, %s92
    %s107 = sphi 0, %s93
    %s111 = sphi 0, %s111
    %s113 = sphi 0, %s111
    %s114 = sphi 0, %s113
    %s128 = sphi 0, %s114
    %s134 = sphi 0, %s136
    %s137 = sphi 0, %s134
    %s138 = sphi 0, %s137
    %s154 = sphi 0, %s138
    %s158 = sphi 0, %s158
    %s160 = sphi 0, %s158
    %s161 = sphi 0, %s160
    %s175 = sphi 0, %s161
    %s179 = sphi 0, %s179
    %s181 = sphi 0, %s179
    %s182 = sphi 0, %s181
    %s196 = sphi 0, %s182
  $region4: #{block_forward.8} parent=0 // loop_header_branch
    %17 = sbr.rel (%p15) target = $region8
  $region5: #{block_forward.8} parent=0 // loop_body
    %s19 = ssub.s32 %s14, 1
    %s20 = ssub.s32 %s14, 2
    %s21 = sadd.s32 %s14, 1
    %s22 = ssub.s32 %s14, %s21
    %p23 = scmp.eq.s32.totalorder %s22, 0
    %s25 = sadd.s32 %s24, 1
    %s26 = scalar_select %p23, %s24, %s25
    %p29 = pneg %p23
    %p30 = scmp.eq.s32.totalorder %s14, 1
    %p31 = por %p29, %p30
    %p32 = scmp.ne.s32.totalorder %s24, %s27
    %p33 = scmp.eq.s32.totalorder %s14, 0
    %p34 = por %p32, %p33
    %p35 = scmp.ne.s32.totalorder %s24, %s27
    %p36 = scmp.eq.s32.totalorder %s19, 1
    %p37 = por %p35, %p36
    %p38 = scmp.ne.s32.totalorder %s27, %s28
    %p39 = scmp.eq.s32.totalorder %s19, 0
    %p40 = por %p38, %p39
    %p41 = scmp.ne.s32.totalorder %s27, %s28
    %p42 = scmp.eq.s32.totalorder %s20, 1
    %p43 = por %p41, %p42
    %p45 = scmp.ne.s32.totalorder %s28, %s44
    %p46 = scmp.eq.s32.totalorder %s20, 0
    %p47 = por %p45, %p46
    %s49 = sadd.s32 %s48, 1
    %p52 = scmp.eq.s32.totalorder %s14, 1
    %p53 = scmp.ne.s32.totalorder %s48, %s50
    %p54 = scmp.eq.s32.totalorder %s14, 0
    %p55 = por %p53, %p54
    %p56 = scmp.ne.s32.totalorder %s48, %s50
    %p57 = scmp.eq.s32.totalorder %s19, 1
    %p58 = por %p56, %p57
    %p59 = scmp.ne.s32.totalorder %s50, %s51
    %p60 = scmp.eq.s32.totalorder %s19, 0
    %p61 = por %p59, %p60
    %p62 = scmp.ne.s32.totalorder %s50, %s51
    %p63 = scmp.eq.s32.totalorder %s20, 1
    %p64 = por %p62, %p63
    %p66 = scmp.ne.s32.totalorder %s51, %s65
    %p67 = scmp.eq.s32.totalorder %s20, 0
    %p68 = por %p66, %p67
    %s70 = sadd.s32 %s69, 1
    %p73 = scmp.eq.s32.totalorder %s14, 1
    %p74 = scmp.ne.s32.totalorder %s69, %s71
    %p75 = scmp.eq.s32.totalorder %s14, 0
    %p76 = por %p74, %p75
    %p77 = scmp.ne.s32.totalorder %s69, %s71
    %p78 = scmp.eq.s32.totalorder %s19, 1
    %p79 = por %p77, %p78
    %p80 = scmp.ne.s32.totalorder %s71, %s72
    %p81 = scmp.eq.s32.totalorder %s19, 0
    %p82 = por %p80, %p81
    %p83 = scmp.ne.s32.totalorder %s71, %s72
    %p84 = scmp.eq.s32.totalorder %s20, 1
    %p85 = por %p83, %p84
    %p87 = scmp.ne.s32.totalorder %s72, %s86
    %p88 = scmp.eq.s32.totalorder %s20, 0
    %p89 = por %p87, %p88
    %s91 = sadd.s32 %s90, 1
    %p94 = scmp.eq.s32.totalorder %s14, 1
    %p95 = scmp.ne.s32.totalorder %s90, %s92
    %p96 = scmp.eq.s32.totalorder %s14, 0
    %p97 = por %p95, %p96
    %p98 = scmp.ne.s32.totalorder %s90, %s92
    %p99 = scmp.eq.s32.totalorder %s19, 1
    %p100 = por %p98, %p99
    %p101 = scmp.ne.s32.totalorder %s92, %s93
    %p102 = scmp.eq.s32.totalorder %s19, 0
    %p103 = por %p101, %p102
    %p104 = scmp.ne.s32.totalorder %s92, %s93
    %p105 = scmp.eq.s32.totalorder %s20, 1
    %p106 = por %p104, %p105
    %p108 = scmp.ne.s32.totalorder %s93, %s107
    %p109 = scmp.eq.s32.totalorder %s20, 0
    %p110 = por %p108, %p109
    %s112 = sadd.s32 %s111, 1
    %p115 = scmp.eq.s32.totalorder %s14, 1
    %p116 = scmp.ne.s32.totalorder %s111, %s113
    %p117 = scmp.eq.s32.totalorder %s14, 0
    %p118 = por %p116, %p117
    %p119 = scmp.ne.s32.totalorder %s111, %s113
    %p120 = scmp.eq.s32.totalorder %s19, 1
    %p121 = por %p119, %p120
    %p122 = scmp.ne.s32.totalorder %s113, %s114
    %p123 = scmp.eq.s32.totalorder %s19, 0
    %p124 = por %p122, %p123
    %p125 = scmp.ne.s32.totalorder %s113, %s114
    %p126 = scmp.eq.s32.totalorder %s20, 1
    %p127 = por %p125, %p126
    %p129 = scmp.ne.s32.totalorder %s114, %s128
    %p130 = scmp.eq.s32.totalorder %s20, 0
    %p131 = por %p129, %p130
    %s132 = ssub.s32 %s14, %s21
    %p133 = scmp.eq.s32.totalorder %s132, 0
    %s135 = sadd.s32 %s134, 1
    %s136 = scalar_select %p133, %s134, %s135
    %p139 = pneg %p133
    %p140 = scmp.eq.s32.totalorder %s14, 1
    %p141 = por %p139, %p140
    %p142 = scmp.ne.s32.totalorder %s134, %s137
    %p143 = scmp.eq.s32.totalorder %s14, 0
    %p144 = por %p142, %p143
    %p145 = scmp.ne.s32.totalorder %s134, %s137
    %p146 = scmp.eq.s32.totalorder %s19, 1
    %p147 = por %p145, %p146
    %p148 = scmp.ne.s32.totalorder %s137, %s138
    %p149 = scmp.eq.s32.totalorder %s19, 0
    %p150 = por %p148, %p149
    %p151 = scmp.ne.s32.totalorder %s137, %s138
    %p152 = scmp.eq.s32.totalorder %s20, 1
    %p153 = por %p151, %p152
    %p155 = scmp.ne.s32.totalorder %s138, %s154
    %p156 = scmp.eq.s32.totalorder %s20, 0
    %p157 = por %p155, %p156
    %s159 = sadd.s32 %s158, 1
    %p162 = scmp.eq.s32.totalorder %s14, 1
    %p163 = scmp.ne.s32.totalorder %s158, %s160
    %p164 = scmp.eq.s32.totalorder %s14, 0
    %p165 = por %p163, %p164
    %p166 = scmp.ne.s32.totalorder %s158, %s160
    %p167 = scmp.eq.s32.totalorder %s19, 1
    %p168 = por %p166, %p167
    %p169 = scmp.ne.s32.totalorder %s160, %s161
    %p170 = scmp.eq.s32.totalorder %s19, 0
    %p171 = por %p169, %p170
    %p172 = scmp.ne.s32.totalorder %s160, %s161
    %p173 = scmp.eq.s32.totalorder %s20, 1
    %p174 = por %p172, %p173
    %p176 = scmp.ne.s32.totalorder %s161, %s175
    %p177 = scmp.eq.s32.totalorder %s20, 0
    %p178 = por %p176, %p177
    %s180 = sadd.s32 %s179, 1
    %p183 = scmp.eq.s32.totalorder %s14, 1
    %p184 = scmp.ne.s32.totalorder %s179, %s181
    %p185 = scmp.eq.s32.totalorder %s14, 0
    %p186 = por %p184, %p185
    %p187 = scmp.ne.s32.totalorder %s179, %s181
    %p188 = scmp.eq.s32.totalorder %s19, 1
    %p189 = por %p187, %p188
    %p190 = scmp.ne.s32.totalorder %s181, %s182
    %p191 = scmp.eq.s32.totalorder %s19, 0
    %p192 = por %p190, %p191
    %p193 = scmp.ne.s32.totalorder %s181, %s182
    %p194 = scmp.eq.s32.totalorder %s20, 1
    %p195 = por %p193, %p194
    %p197 = scmp.ne.s32.totalorder %s182, %s196
    %p198 = scmp.eq.s32.totalorder %s20, 0
    %p199 = por %p197, %p198
    %p200 = scmp.le.s32.totalorder 1, %s14
    %p201 = scmp.lt.s32.totalorder %s14, 3
    %p202 = pnand %p200, %p201
    %p203 = pneg %p202
    // Predicated region
    $region9: #{block_forward.8} parent=5 // pred_check
      _
    $region10: #{block_forward.8} parent=5 // pred_check_branch
      %205 = sbr.rel (%p202) target = $region12
    $region11: #{block_forward.8} parent=5 // pred_region
      %s206 = ssub.s32 %s14, 1
      // Predicated region
      $region13: #{block_forward.8} parent=11 // pred_check
        %p207 = pneg %p61
      $region14: #{block_forward.8} parent=11 // pred_check_branch
        %209 = sbr.rel (%p207) target = $region16
      $region15: #{block_forward.8} parent=11 // pred_region
        _
      $region16: #{block_forward.8} parent=11 // pred_fallthru
        _
      // Predicated region
      $region17: #{block_forward.8} parent=11 // pred_check
        %p210 = pneg %p82
      $region18: #{block_forward.8} parent=11 // pred_check_branch
        %212 = sbr.rel (%p210) target = $region20
      $region19: #{block_forward.8} parent=11 // pred_region
        _
      $region20: #{block_forward.8} parent=11 // pred_fallthru
        _
      // Predicated region
      $region21: #{block_forward.8} parent=11 // pred_check
        %p213 = pneg %p103
      $region22: #{block_forward.8} parent=11 // pred_check_branch
        %215 = sbr.rel (%p213) target = $region24
      $region23: #{block_forward.8} parent=11 // pred_region
        _
      $region24: #{block_forward.8} parent=11 // pred_fallthru
        _
      // Predicated region
      $region25: #{block_forward.8} parent=11 // pred_check
        %p216 = pneg %p124
      $region26: #{block_forward.8} parent=11 // pred_check_branch
        %218 = sbr.rel (%p216) target = $region28
      $region27: #{block_forward.8} parent=11 // pred_region
        _
      $region28: #{block_forward.8} parent=11 // pred_fallthru
        _
    $region12: #{block_forward.8} parent=5 // pred_fallthru
      _
    %p219 = scmp.lt.s32.totalorder %s14, 2
    // Predicated region
    $region29: #{block_forward.8} parent=5 // pred_check
      %p220 = pneg %p219
    $region30: #{block_forward.8} parent=5 // pred_check_branch
      %222 = sbr.rel (%p220) target = $region32
    $region31: #{block_forward.8} parent=5 // pred_region
      // Predicated region
      $region33: #{block_forward.8} parent=31 // pred_check
        %p223 = pneg %p34
      $region34: #{block_forward.8} parent=31 // pred_check_branch
        %225 = sbr.rel (%p223) target = $region36
      $region35: #{block_forward.8} parent=31 // pred_region
        %p226 = scmp.lt.s32.totalorder %s14, 1
        %s227 = scalar_select %p226, %s14, 1
        %s228 = smul.addr %s227, 54
        %s229 = smul.addr %s228, 8
        %s230 = scalar_lea.vmem %s0, %s229
      $region36: #{block_forward.8} parent=31 // pred_fallthru
        _
    $region32: #{block_forward.8} parent=5 // pred_fallthru
      _
    %p231 = scmp.le.s32.totalorder 1, %s14
    %p232 = scmp.lt.s32.totalorder %s14, 3
    %p233 = pnand %p231, %p232
    %p234 = pneg %p233
    // Predicated region
    $region37: #{block_forward.8} parent=5 // pred_check
      _
    $region38: #{block_forward.8} parent=5 // pred_check_branch
      %236 = sbr.rel (%p233) target = $region40
    $region39: #{block_forward.8} parent=5 // pred_region
      %s237 = ssub.s32 %s14, 1
      %p238 = scmp.lt.s32.totalorder %s19, 1
      %s239 = scalar_select %p238, %s19, 1
      %s240 = smul.addr %s239, 54
      %s241 = smul.addr %s240, 8
      %s242 = scalar_lea.vmem %s0, %s241
      %p243 = pneg %p40
      %p244 = pneg %p37
      %p245 = pneg %p61
      %p246 = pneg %p58
      %p247 = pneg %p82
      %p248 = pneg %p79
      %p249 = pneg %p103
      %p250 = pneg %p100
      %p251 = pneg %p124
      %p252 = pneg %p121
      %p253 = pneg %p150
      %p254 = pneg %p147
      %p255 = scmp.lt.s32.totalorder %s19, 1
      %s256 = scalar_select %p255, %s19, 1
      %s257 = smul.addr %s256, 32
      %s258 = smul.addr %s257, 8
      %s259 = scalar_lea.vmem %s5, %s258
      %p260 = pneg %p171
      %p261 = pneg %p168
      %p262 = pneg %p192
      %p263 = pneg %p189
      %p264 = scmp.lt.s32.totalorder %s19, 1
      %s265 = scalar_select %p264, %s19, 1
      %s266 = smul.addr %s265, 54
      %s267 = smul.addr %s266, 8
      %s268 = scalar_lea.vmem %s0, %s267
      %p269 = scmp.lt.s32.totalorder %s19, 1
      %s270 = scalar_select %p269, %s19, 1
      %s271 = smul.addr %s270, 32
      %s272 = smul.addr %s271, 8
      %s273 = scalar_lea.vmem %s5, %s272
      %p275 = scmp.eq.s32.totalorder %s19, 0
      // Predicated region
      $region41: #{block_forward.8} parent=39 // pred_check
        %p276 = pneg %p275
      $region42: #{block_forward.8} parent=39 // pred_check_branch
        %278 = sbr.rel (%p276) target = $region44
      $region43: #{block_forward.8} parent=39 // pred_region
        %vm279 = vcmask 57344
        %280 = vst.msk [vmem:[%s6] sm:$0x1] %vm279, 0.0
        %281 = vst.msk [vmem:[%s7] sm:$0x1] %vm279, 0.0
      $region44: #{block_forward.8} parent=39 // pred_fallthru
        _
      %v282 = vld [vmem:[%s268] sm:$0xff]
      %v283 = vld [vmem:[%s268 + $0x8] sm:$0xff]
      %v284 = vld [vmem:[%s268 + $0x10] sm:$0x3]
      %v285 = vld [vmem:[%s268 + $0x18] sm:$0xff]
      %v286 = vld [vmem:[%s268 + $0x20] sm:$0xff]
      %v287 = vld [vmem:[%s268 + $0x28] sm:$0x3]
      %v288 = vld [vmem:[%s268 + $0x30] sm:$0xff]
      %v289 = vld [vmem:[%s268 + $0x38] sm:$0xff]
      %v290 = vld [vmem:[%s268 + $0x40] sm:$0x3]
      %v291 = vld [vmem:[%s268 + $0x48] sm:$0xff]
      %v292 = vld [vmem:[%s268 + $0x50] sm:$0xff]
      %v293 = vld [vmem:[%s268 + $0x58] sm:$0x3]
      %v294 = vld [vmem:[%s268 + $0x60] sm:$0xff]
      %v295 = vld [vmem:[%s268 + $0x68] sm:$0xff]
      %v296 = vld [vmem:[%s268 + $0x70] sm:$0x3]
      %v297 = vld [vmem:[%s268 + $0x78] sm:$0xff]
      %v298 = vld [vmem:[%s268 + $0x80] sm:$0xff]
      %v299 = vld [vmem:[%s268 + $0x88] sm:$0x3]
      %v300 = vld [vmem:[%s268 + $0x90] sm:$0xff]
      %v301 = vld [vmem:[%s268 + $0x98] sm:$0xff]
      %v302 = vld [vmem:[%s268 + $0xa0] sm:$0x3]
      %v303 = vld [vmem:[%s268 + $0xa8] sm:$0xff]
      %v304 = vld [vmem:[%s268 + $0xb0] sm:$0xff]
      %v305 = vld [vmem:[%s268 + $0xb8] sm:$0x3]
      %v306 = vld [vmem:[%s268 + $0xc0] sm:$0xff]
      %v307 = vld [vmem:[%s268 + $0xc8] sm:$0xff]
      %v308 = vld [vmem:[%s268 + $0xd0] sm:$0x3]
      %v309 = vld [vmem:[%s268 + $0xd8] sm:$0xff]
      %v310 = vld [vmem:[%s268 + $0xe0] sm:$0xff]
      %v311 = vld [vmem:[%s268 + $0xe8] sm:$0x3]
      %v312 = vld [vmem:[%s268 + $0xf0] sm:$0xff]
      %v313 = vld [vmem:[%s268 + $0xf8] sm:$0xff]
      %v314 = vld [vmem:[%s268 + $0x100] sm:$0x3]
      %v315 = vld [vmem:[%s268 + $0x108] sm:$0xff]
      %v316 = vld [vmem:[%s268 + $0x110] sm:$0xff]
      %v317 = vld [vmem:[%s268 + $0x118] sm:$0x3]
      %v318 = vld [vmem:[%s268 + $0x120] sm:$0xff]
      %v319 = vld [vmem:[%s268 + $0x128] sm:$0xff]
      %v320 = vld [vmem:[%s268 + $0x130] sm:$0x3]
      %v321 = vld [vmem:[%s268 + $0x138] sm:$0xff]
      %v322 = vld [vmem:[%s268 + $0x140] sm:$0xff]
      %v323 = vld [vmem:[%s268 + $0x148] sm:$0x3]
      %v324 = vld [vmem:[%s268 + $0x150] sm:$0xff]
      %v325 = vld [vmem:[%s268 + $0x158] sm:$0xff]
      %v326 = vld [vmem:[%s268 + $0x160] sm:$0x3]
      %v327 = vld [vmem:[%s268 + $0x168] sm:$0xff]
      %v328 = vld [vmem:[%s268 + $0x170] sm:$0xff]
      %v329 = vld [vmem:[%s268 + $0x178] sm:$0x3]
      %v330 = vld [vmem:[%s268 + $0x180] sm:$0xff]
      %v331 = vld [vmem:[%s268 + $0x188] sm:$0xff]
      %v332 = vld [vmem:[%s268 + $0x190] sm:$0x3]
      %v333 = vld [vmem:[%s268 + $0x198] sm:$0xff]
      %v334 = vld [vmem:[%s268 + $0x1a0] sm:$0xff]
      %v335 = vld [vmem:[%s268 + $0x1a8] sm:$0x3]
      %v336 = vld [vmem:[%s1] sm:$0xff]
      %v337 = vld [vmem:[%s1 + $0x8] sm:$0x1]
      %v338 = vlaneseq
      %v339 = vshrl.u32 %v338, 7
      %v340 = vsub.s32 0, %v339
      %v341 = vrot.slane %v336, %v340
      %v342 = vmul.f32 %v282, %v341
      %v343 = vmul.f32 %v283, %v341
      %v344 = vmul.f32 %v285, %v341
      %v345 = vmul.f32 %v286, %v341
      %v346 = vmul.f32 %v288, %v341
      %v347 = vmul.f32 %v289, %v341
      %v348 = vmul.f32 %v291, %v341
      %v349 = vmul.f32 %v292, %v341
      %v350 = vmul.f32 %v294, %v341
      %v351 = vmul.f32 %v295, %v341
      %v352 = vmul.f32 %v297, %v341
      %v353 = vmul.f32 %v298, %v341
      %v354 = vmul.f32 %v300, %v341
      %v355 = vmul.f32 %v301, %v341
      %v356 = vmul.f32 %v303, %v341
      %v357 = vmul.f32 %v304, %v341
      %v358 = vmul.f32 %v306, %v341
      %v359 = vmul.f32 %v307, %v341
      %v360 = vmul.f32 %v309, %v341
      %v361 = vmul.f32 %v310, %v341
      %v362 = vmul.f32 %v312, %v341
      %v363 = vmul.f32 %v313, %v341
      %v364 = vmul.f32 %v315, %v341
      %v365 = vmul.f32 %v316, %v341
      %v366 = vmul.f32 %v318, %v341
      %v367 = vmul.f32 %v319, %v341
      %v368 = vmul.f32 %v321, %v341
      %v369 = vmul.f32 %v322, %v341
      %v370 = vmul.f32 %v324, %v341
      %v371 = vmul.f32 %v325, %v341
      %v372 = vmul.f32 %v327, %v341
      %v373 = vmul.f32 %v328, %v341
      %v374 = vlaneseq
      %v375 = vshrl.u32 %v374, 7
      %v376 = vsub.s32 1, %v375
      %v377 = vrot.slane %v336, %v376
      %v378 = vmul.f32 %v282, %v377
      %v379 = vmul.f32 %v283, %v377
      %v380 = vmul.f32 %v284, %v377
      %v381 = vmul.f32 %v285, %v377
      %v382 = vmul.f32 %v286, %v377
      %v383 = vmul.f32 %v287, %v377
      %v384 = vmul.f32 %v288, %v377
      %v385 = vmul.f32 %v289, %v377
      %v386 = vmul.f32 %v290, %v377
      %v387 = vmul.f32 %v291, %v377
      %v388 = vmul.f32 %v292, %v377
      %v389 = vmul.f32 %v293, %v377
      %v390 = vmul.f32 %v294, %v377
      %v391 = vmul.f32 %v295, %v377
      %v392 = vmul.f32 %v296, %v377
      %v393 = vmul.f32 %v297, %v377
      %v394 = vmul.f32 %v298, %v377
      %v395 = vmul.f32 %v299, %v377
      %v396 = vmul.f32 %v300, %v377
      %v397 = vmul.f32 %v301, %v377
      %v398 = vmul.f32 %v302, %v377
      %v399 = vmul.f32 %v303, %v377
      %v400 = vmul.f32 %v304, %v377
      %v401 = vmul.f32 %v305, %v377
      %v402 = vmul.f32 %v306, %v377
      %v403 = vmul.f32 %v307, %v377
      %v404 = vmul.f32 %v308, %v377
      %v405 = vmul.f32 %v309, %v377
      %v406 = vmul.f32 %v310, %v377
      %v407 = vmul.f32 %v311, %v377
      %v408 = vmul.f32 %v312, %v377
      %v409 = vmul.f32 %v313, %v377
      %v410 = vmul.f32 %v314, %v377
      %v411 = vmul.f32 %v315, %v377
      %v412 = vmul.f32 %v316, %v377
      %v413 = vmul.f32 %v317, %v377
      %v414 = vmul.f32 %v318, %v377
      %v415 = vmul.f32 %v319, %v377
      %v416 = vmul.f32 %v320, %v377
      %v417 = vmul.f32 %v321, %v377
      %v418 = vmul.f32 %v322, %v377
      %v419 = vmul.f32 %v323, %v377
      %v420 = vmul.f32 %v324, %v377
      %v421 = vmul.f32 %v325, %v377
      %v422 = vmul.f32 %v326, %v377
      %v423 = vmul.f32 %v327, %v377
      %v424 = vmul.f32 %v328, %v377
      %v425 = vmul.f32 %v329, %v377
      %vm474 = vcmask 1046528
      %v475 = vrot.slane %v378, 1
      %v476 = vrot.slane %v379, 1
      %v477 = vsel %vm474, %v475, %v476
      %v478 = vrot.slane %v380, 1
      %v479 = vsel %vm474, %v476, %v478
      %v480 = vrot.slane %v381, 1
      %v481 = vrot.slane %v382, 1
      %v482 = vsel %vm474, %v480, %v481
      %v483 = vrot.slane %v383, 1
      %v484 = vsel %vm474, %v481, %v483
      %v485 = vrot.slane %v384, 1
      %v486 = vrot.slane %v385, 1
      %v487 = vsel %vm474, %v485, %v486
      %v488 = vrot.slane %v386, 1
      %v489 = vsel %vm474, %v486, %v488
      %v490 = vrot.slane %v387, 1
      %v491 = vrot.slane %v388, 1
      %v492 = vsel %vm474, %v490, %v491
      %v493 = vrot.slane %v389, 1
      %v494 = vsel %vm474, %v491, %v493
      %v495 = vrot.slane %v390, 1
      %v496 = vrot.slane %v391, 1
      %v497 = vsel %vm474, %v495, %v496
      %v498 = vrot.slane %v392, 1
      %v499 = vsel %vm474, %v496, %v498
      %v500 = vrot.slane %v393, 1
      %v501 = vrot.slane %v394, 1
      %v502 = vsel %vm474, %v500, %v501
      %v503 = vrot.slane %v395, 1
      %v504 = vsel %vm474, %v501, %v503
      %v505 = vrot.slane %v396, 1
      %v506 = vrot.slane %v397, 1
      %v507 = vsel %vm474, %v505, %v506
      %v508 = vrot.slane %v398, 1
      %v509 = vsel %vm474, %v506, %v508
      %v510 = vrot.slane %v399, 1
      %v511 = vrot.slane %v400, 1
      %v512 = vsel %vm474, %v510, %v511
      %v513 = vrot.slane %v401, 1
      %v514 = vsel %vm474, %v511, %v513
      %v515 = vrot.slane %v402, 1
      %v516 = vrot.slane %v403, 1
      %v517 = vsel %vm474, %v515, %v516
      %v518 = vrot.slane %v404, 1
      %v519 = vsel %vm474, %v516, %v518
      %v520 = vrot.slane %v405, 1
      %v521 = vrot.slane %v406, 1
      %v522 = vsel %vm474, %v520, %v521
      %v523 = vrot.slane %v407, 1
      %v524 = vsel %vm474, %v521, %v523
      %v525 = vrot.slane %v408, 1
      %v526 = vrot.slane %v409, 1
      %v527 = vsel %vm474, %v525, %v526
      %v528 = vrot.slane %v410, 1
      %v529 = vsel %vm474, %v526, %v528
      %v530 = vrot.slane %v411, 1
      %v531 = vrot.slane %v412, 1
      %v532 = vsel %vm474, %v530, %v531
      %v533 = vrot.slane %v413, 1
      %v534 = vsel %vm474, %v531, %v533
      %v535 = vrot.slane %v414, 1
      %v536 = vrot.slane %v415, 1
      %v537 = vsel %vm474, %v535, %v536
      %v538 = vrot.slane %v416, 1
      %v539 = vsel %vm474, %v536, %v538
      %v540 = vrot.slane %v417, 1
      %v541 = vrot.slane %v418, 1
      %v542 = vsel %vm474, %v540, %v541
      %v543 = vrot.slane %v419, 1
      %v544 = vsel %vm474, %v541, %v543
      %v545 = vrot.slane %v420, 1
      %v546 = vrot.slane %v421, 1
      %v547 = vsel %vm474, %v545, %v546
      %v548 = vrot.slane %v422, 1
      %v549 = vsel %vm474, %v546, %v548
      %v550 = vrot.slane %v423, 1
      %v551 = vrot.slane %v424, 1
      %v552 = vsel %vm474, %v550, %v551
      %v553 = vrot.slane %v425, 1
      %v554 = vsel %vm474, %v551, %v553
      %v587 = vadd.f32 %v342, %v477
      %v588 = vadd.f32 %v343, %v479
      %v589 = vadd.f32 %v344, %v482
      %v590 = vadd.f32 %v345, %v484
      %v591 = vadd.f32 %v346, %v487
      %v592 = vadd.f32 %v347, %v489
      %v593 = vadd.f32 %v348, %v492
      %v594 = vadd.f32 %v349, %v494
      %v595 = vadd.f32 %v350, %v497
      %v596 = vadd.f32 %v351, %v499
      %v597 = vadd.f32 %v352, %v502
      %v598 = vadd.f32 %v353, %v504
      %v599 = vadd.f32 %v354, %v507
      %v600 = vadd.f32 %v355, %v509
      %v601 = vadd.f32 %v356, %v512
      %v602 = vadd.f32 %v357, %v514
      %v603 = vadd.f32 %v358, %v517
      %v604 = vadd.f32 %v359, %v519
      %v605 = vadd.f32 %v360, %v522
      %v606 = vadd.f32 %v361, %v524
      %v607 = vadd.f32 %v362, %v527
      %v608 = vadd.f32 %v363, %v529
      %v609 = vadd.f32 %v364, %v532
      %v610 = vadd.f32 %v365, %v534
      %v611 = vadd.f32 %v366, %v537
      %v612 = vadd.f32 %v367, %v539
      %v613 = vadd.f32 %v368, %v542
      %v614 = vadd.f32 %v369, %v544
      %v615 = vadd.f32 %v370, %v547
      %v616 = vadd.f32 %v371, %v549
      %v617 = vadd.f32 %v372, %v552
      %v618 = vadd.f32 %v373, %v554
      %v619 = vlaneseq
      %v620 = vshrl.u32 %v619, 7
      %v621 = vsub.s32 2, %v620
      %v622 = vrot.slane %v336, %v621
      %v623 = vmul.f32 %v282, %v622
      %v624 = vmul.f32 %v283, %v622
      %v625 = vmul.f32 %v284, %v622
      %v626 = vmul.f32 %v285, %v622
      %v627 = vmul.f32 %v286, %v622
      %v628 = vmul.f32 %v287, %v622
      %v629 = vmul.f32 %v288, %v622
      %v630 = vmul.f32 %v289, %v622
      %v631 = vmul.f32 %v290, %v622
      %v632 = vmul.f32 %v291, %v622
      %v633 = vmul.f32 %v292, %v622
      %v634 = vmul.f32 %v293, %v622
      %v635 = vmul.f32 %v294, %v622
      %v636 = vmul.f32 %v295, %v622
      %v637 = vmul.f32 %v296, %v622
      %v638 = vmul.f32 %v297, %v622
      %v639 = vmul.f32 %v298, %v622
      %v640 = vmul.f32 %v299, %v622
      %v641 = vmul.f32 %v300, %v622
      %v642 = vmul.f32 %v301, %v622
      %v643 = vmul.f32 %v302, %v622
      %v644 = vmul.f32 %v303, %v622
      %v645 = vmul.f32 %v304, %v622
      %v646 = vmul.f32 %v305, %v622
      %v647 = vmul.f32 %v306, %v622
      %v648 = vmul.f32 %v307, %v622
      %v649 = vmul.f32 %v308, %v622
      %v650 = vmul.f32 %v309, %v622
      %v651 = vmul.f32 %v310, %v622
      %v652 = vmul.f32 %v311, %v622
      %v653 = vmul.f32 %v312, %v622
      %v654 = vmul.f32 %v313, %v622
      %v655 = vmul.f32 %v314, %v622
      %v656 = vmul.f32 %v315, %v622
      %v657 = vmul.f32 %v316, %v622
      %v658 = vmul.f32 %v317, %v622
      %v659 = vmul.f32 %v318, %v622
      %v660 = vmul.f32 %v319, %v622
      %v661 = vmul.f32 %v320, %v622
      %v662 = vmul.f32 %v321, %v622
      %v663 = vmul.f32 %v322, %v622
      %v664 = vmul.f32 %v323, %v622
      %v665 = vmul.f32 %v324, %v622
      %v666 = vmul.f32 %v325, %v622
      %v667 = vmul.f32 %v326, %v622
      %v668 = vmul.f32 %v327, %v622
      %v669 = vmul.f32 %v328, %v622
      %v670 = vmul.f32 %v329, %v622
      %vm719 = vcmask 1045504
      %v720 = vrot.slane %v623, 2
      %v721 = vrot.slane %v624, 2
      %v722 = vsel %vm719, %v720, %v721
      %v723 = vrot.slane %v625, 2
      %v724 = vsel %vm719, %v721, %v723
      %v725 = vrot.slane %v626, 2
      %v726 = vrot.slane %v627, 2
      %v727 = vsel %vm719, %v725, %v726
      %v728 = vrot.slane %v628, 2
      %v729 = vsel %vm719, %v726, %v728
      %v730 = vrot.slane %v629, 2
      %v731 = vrot.slane %v630, 2
      %v732 = vsel %vm719, %v730, %v731
      %v733 = vrot.slane %v631, 2
      %v734 = vsel %vm719, %v731, %v733
      %v735 = vrot.slane %v632, 2
      %v736 = vrot.slane %v633, 2
      %v737 = vsel %vm719, %v735, %v736
      %v738 = vrot.slane %v634, 2
      %v739 = vsel %vm719, %v736, %v738
      %v740 = vrot.slane %v635, 2
      %v741 = vrot.slane %v636, 2
      %v742 = vsel %vm719, %v740, %v741
      %v743 = vrot.slane %v637, 2
      %v744 = vsel %vm719, %v741, %v743
      %v745 = vrot.slane %v638, 2
      %v746 = vrot.slane %v639, 2
      %v747 = vsel %vm719, %v745, %v746
      %v748 = vrot.slane %v640, 2
      %v749 = vsel %vm719, %v746, %v748
      %v750 = vrot.slane %v641, 2
      %v751 = vrot.slane %v642, 2
      %v752 = vsel %vm719, %v750, %v751
      %v753 = vrot.slane %v643, 2
      %v754 = vsel %vm719, %v751, %v753
      %v755 = vrot.slane %v644, 2
      %v756 = vrot.slane %v645, 2
      %v757 = vsel %vm719, %v755, %v756
      %v758 = vrot.slane %v646, 2
      %v759 = vsel %vm719, %v756, %v758
      %v760 = vrot.slane %v647, 2
      %v761 = vrot.slane %v648, 2
      %v762 = vsel %vm719, %v760, %v761
      %v763 = vrot.slane %v649, 2
      %v764 = vsel %vm719, %v761, %v763
      %v765 = vrot.slane %v650, 2
      %v766 = vrot.slane %v651, 2
      %v767 = vsel %vm719, %v765, %v766
      %v768 = vrot.slane %v652, 2
      %v769 = vsel %vm719, %v766, %v768
      %v770 = vrot.slane %v653, 2
      %v771 = vrot.slane %v654, 2
      %v772 = vsel %vm719, %v770, %v771
      %v773 = vrot.slane %v655, 2
      %v774 = vsel %vm719, %v771, %v773
      %v775 = vrot.slane %v656, 2
      %v776 = vrot.slane %v657, 2
      %v777 = vsel %vm719, %v775, %v776
      %v778 = vrot.slane %v658, 2
      %v779 = vsel %vm719, %v776, %v778
      %v780 = vrot.slane %v659, 2
      %v781 = vrot.slane %v660, 2
      %v782 = vsel %vm719, %v780, %v781
      %v783 = vrot.slane %v661, 2
      %v784 = vsel %vm719, %v781, %v783
      %v785 = vrot.slane %v662, 2
      %v786 = vrot.slane %v663, 2
      %v787 = vsel %vm719, %v785, %v786
      %v788 = vrot.slane %v664, 2
      %v789 = vsel %vm719, %v786, %v788
      %v790 = vrot.slane %v665, 2
      %v791 = vrot.slane %v666, 2
      %v792 = vsel %vm719, %v790, %v791
      %v793 = vrot.slane %v667, 2
      %v794 = vsel %vm719, %v791, %v793
      %v795 = vrot.slane %v668, 2
      %v796 = vrot.slane %v669, 2
      %v797 = vsel %vm719, %v795, %v796
      %v798 = vrot.slane %v670, 2
      %v799 = vsel %vm719, %v796, %v798
      %v832 = vadd.f32 %v587, %v722
      %v833 = vadd.f32 %v588, %v724
      %v834 = vadd.f32 %v589, %v727
      %v835 = vadd.f32 %v590, %v729
      %v836 = vadd.f32 %v591, %v732
      %v837 = vadd.f32 %v592, %v734
      %v838 = vadd.f32 %v593, %v737
      %v839 = vadd.f32 %v594, %v739
      %v840 = vadd.f32 %v595, %v742
      %v841 = vadd.f32 %v596, %v744
      %v842 = vadd.f32 %v597, %v747
      %v843 = vadd.f32 %v598, %v749
      %v844 = vadd.f32 %v599, %v752
      %v845 = vadd.f32 %v600, %v754
      %v846 = vadd.f32 %v601, %v757
      %v847 = vadd.f32 %v602, %v759
      %v848 = vadd.f32 %v603, %v762
      %v849 = vadd.f32 %v604, %v764
      %v850 = vadd.f32 %v605, %v767
      %v851 = vadd.f32 %v606, %v769
      %v852 = vadd.f32 %v607, %v772
      %v853 = vadd.f32 %v608, %v774
      %v854 = vadd.f32 %v609, %v777
      %v855 = vadd.f32 %v610, %v779
      %v856 = vadd.f32 %v611, %v782
      %v857 = vadd.f32 %v612, %v784
      %v858 = vadd.f32 %v613, %v787
      %v859 = vadd.f32 %v614, %v789
      %v860 = vadd.f32 %v615, %v792
      %v861 = vadd.f32 %v616, %v794
      %v862 = vadd.f32 %v617, %v797
      %v863 = vadd.f32 %v618, %v799
      %v864 = vlaneseq
      %v865 = vshrl.u32 %v864, 7
      %v866 = vsub.s32 3, %v865
      %v867 = vrot.slane %v336, %v866
      %v868 = vmul.f32 %v285, %v867
      %v869 = vmul.f32 %v286, %v867
      %v870 = vmul.f32 %v288, %v867
      %v871 = vmul.f32 %v289, %v867
      %v872 = vmul.f32 %v291, %v867
      %v873 = vmul.f32 %v292, %v867
      %v874 = vmul.f32 %v294, %v867
      %v875 = vmul.f32 %v295, %v867
      %v876 = vmul.f32 %v297, %v867
      %v877 = vmul.f32 %v298, %v867
      %v878 = vmul.f32 %v300, %v867
      %v879 = vmul.f32 %v301, %v867
      %v880 = vmul.f32 %v303, %v867
      %v881 = vmul.f32 %v304, %v867
      %v882 = vmul.f32 %v306, %v867
      %v883 = vmul.f32 %v307, %v867
      %v884 = vmul.f32 %v309, %v867
      %v885 = vmul.f32 %v310, %v867
      %v886 = vmul.f32 %v312, %v867
      %v887 = vmul.f32 %v313, %v867
      %v888 = vmul.f32 %v315, %v867
      %v889 = vmul.f32 %v316, %v867
      %v890 = vmul.f32 %v318, %v867
      %v891 = vmul.f32 %v319, %v867
      %v892 = vmul.f32 %v321, %v867
      %v893 = vmul.f32 %v322, %v867
      %v894 = vmul.f32 %v324, %v867
      %v895 = vmul.f32 %v325, %v867
      %v896 = vmul.f32 %v327, %v867
      %v897 = vmul.f32 %v328, %v867
      %v898 = vmul.f32 %v330, %v867
      %v899 = vmul.f32 %v331, %v867
      %v900 = vadd.f32 %v832, %v868
      %v901 = vadd.f32 %v833, %v869
      %v902 = vadd.f32 %v834, %v870
      %v903 = vadd.f32 %v835, %v871
      %v904 = vadd.f32 %v836, %v872
      %v905 = vadd.f32 %v837, %v873
      %v906 = vadd.f32 %v838, %v874
      %v907 = vadd.f32 %v839, %v875
      %v908 = vadd.f32 %v840, %v876
      %v909 = vadd.f32 %v841, %v877
      %v910 = vadd.f32 %v842, %v878
      %v911 = vadd.f32 %v843, %v879
      %v912 = vadd.f32 %v844, %v880
      %v913 = vadd.f32 %v845, %v881
      %v914 = vadd.f32 %v846, %v882
      %v915 = vadd.f32 %v847, %v883
      %v916 = vadd.f32 %v848, %v884
      %v917 = vadd.f32 %v849, %v885
      %v918 = vadd.f32 %v850, %v886
      %v919 = vadd.f32 %v851, %v887
      %v920 = vadd.f32 %v852, %v888
      %v921 = vadd.f32 %v853, %v889
      %v922 = vadd.f32 %v854, %v890
      %v923 = vadd.f32 %v855, %v891
      %v924 = vadd.f32 %v856, %v892
      %v925 = vadd.f32 %v857, %v893
      %v926 = vadd.f32 %v858, %v894
      %v927 = vadd.f32 %v859, %v895
      %v928 = vadd.f32 %v860, %v896
      %v929 = vadd.f32 %v861, %v897
      %v930 = vadd.f32 %v862, %v898
      %v931 = vadd.f32 %v863, %v899
      %v932 = vlaneseq
      %v933 = vshrl.u32 %v932, 7
      %v934 = vsub.s32 4, %v933
      %v935 = vrot.slane %v336, %v934
      %v936 = vmul.f32 %v285, %v935
      %v937 = vmul.f32 %v286, %v935
      %v938 = vmul.f32 %v287, %v935
      %v939 = vmul.f32 %v288, %v935
      %v940 = vmul.f32 %v289, %v935
      %v941 = vmul.f32 %v290, %v935
      %v942 = vmul.f32 %v291, %v935
      %v943 = vmul.f32 %v292, %v935
      %v944 = vmul.f32 %v293, %v935
      %v945 = vmul.f32 %v294, %v935
      %v946 = vmul.f32 %v295, %v935
      %v947 = vmul.f32 %v296, %v935
      %v948 = vmul.f32 %v297, %v935
      %v949 = vmul.f32 %v298, %v935
      %v950 = vmul.f32 %v299, %v935
      %v951 = vmul.f32 %v300, %v935
      %v952 = vmul.f32 %v301, %v935
      %v953 = vmul.f32 %v302, %v935
      %v954 = vmul.f32 %v303, %v935
      %v955 = vmul.f32 %v304, %v935
      %v956 = vmul.f32 %v305, %v935
      %v957 = vmul.f32 %v306, %v935
      %v958 = vmul.f32 %v307, %v935
      %v959 = vmul.f32 %v308, %v935
      %v960 = vmul.f32 %v309, %v935
      %v961 = vmul.f32 %v310, %v935
      %v962 = vmul.f32 %v311, %v935
      %v963 = vmul.f32 %v312, %v935
      %v964 = vmul.f32 %v313, %v935
      %v965 = vmul.f32 %v314, %v935
      %v966 = vmul.f32 %v315, %v935
      %v967 = vmul.f32 %v316, %v935
      %v968 = vmul.f32 %v317, %v935
      %v969 = vmul.f32 %v318, %v935
      %v970 = vmul.f32 %v319, %v935
      %v971 = vmul.f32 %v320, %v935
      %v972 = vmul.f32 %v321, %v935
      %v973 = vmul.f32 %v322, %v935
      %v974 = vmul.f32 %v323, %v935
      %v975 = vmul.f32 %v324, %v935
      %v976 = vmul.f32 %v325, %v935
      %v977 = vmul.f32 %v326, %v935
      %v978 = vmul.f32 %v327, %v935
      %v979 = vmul.f32 %v328, %v935
      %v980 = vmul.f32 %v329, %v935
      %v981 = vmul.f32 %v330, %v935
      %v982 = vmul.f32 %v331, %v935
      %v983 = vmul.f32 %v332, %v935
      %v1032 = vrot.slane %v936, 1
      %v1033 = vrot.slane %v937, 1
      %v1034 = vsel %vm474, %v1032, %v1033
      %v1035 = vrot.slane %v938, 1
      %v1036 = vsel %vm474, %v1033, %v1035
      %v1037 = vrot.slane %v939, 1
      %v1038 = vrot.slane %v940, 1
      %v1039 = vsel %vm474, %v1037, %v1038
      %v1040 = vrot.slane %v941, 1
      %v1041 = vsel %vm474, %v1038, %v1040
      %v1042 = vrot.slane %v942, 1
      %v1043 = vrot.slane %v943, 1
      %v1044 = vsel %vm474, %v1042, %v1043
      %v1045 = vrot.slane %v944, 1
      %v1046 = vsel %vm474, %v1043, %v1045
      %v1047 = vrot.slane %v945, 1
      %v1048 = vrot.slane %v946, 1
      %v1049 = vsel %vm474, %v1047, %v1048
      %v1050 = vrot.slane %v947, 1
      %v1051 = vsel %vm474, %v1048, %v1050
      %v1052 = vrot.slane %v948, 1
      %v1053 = vrot.slane %v949, 1
      %v1054 = vsel %vm474, %v1052, %v1053
      %v1055 = vrot.slane %v950, 1
      %v1056 = vsel %vm474, %v1053, %v1055
      %v1057 = vrot.slane %v951, 1
      %v1058 = vrot.slane %v952, 1
      %v1059 = vsel %vm474, %v1057, %v1058
      %v1060 = vrot.slane %v953, 1
      %v1061 = vsel %vm474, %v1058, %v1060
      %v1062 = vrot.slane %v954, 1
      %v1063 = vrot.slane %v955, 1
      %v1064 = vsel %vm474, %v1062, %v1063
      %v1065 = vrot.slane %v956, 1
      %v1066 = vsel %vm474, %v1063, %v1065
      %v1067 = vrot.slane %v957, 1
      %v1068 = vrot.slane %v958, 1
      %v1069 = vsel %vm474, %v1067, %v1068
      %v1070 = vrot.slane %v959, 1
      %v1071 = vsel %vm474, %v1068, %v1070
      %v1072 = vrot.slane %v960, 1
      %v1073 = vrot.slane %v961, 1
      %v1074 = vsel %vm474, %v1072, %v1073
      %v1075 = vrot.slane %v962, 1
      %v1076 = vsel %vm474, %v1073, %v1075
      %v1077 = vrot.slane %v963, 1
      %v1078 = vrot.slane %v964, 1
      %v1079 = vsel %vm474, %v1077, %v1078
      %v1080 = vrot.slane %v965, 1
      %v1081 = vsel %vm474, %v1078, %v1080
      %v1082 = vrot.slane %v966, 1
      %v1083 = vrot.slane %v967, 1
      %v1084 = vsel %vm474, %v1082, %v1083
      %v1085 = vrot.slane %v968, 1
      %v1086 = vsel %vm474, %v1083, %v1085
      %v1087 = vrot.slane %v969, 1
      %v1088 = vrot.slane %v970, 1
      %v1089 = vsel %vm474, %v1087, %v1088
      %v1090 = vrot.slane %v971, 1
      %v1091 = vsel %vm474, %v1088, %v1090
      %v1092 = vrot.slane %v972, 1
      %v1093 = vrot.slane %v973, 1
      %v1094 = vsel %vm474, %v1092, %v1093
      %v1095 = vrot.slane %v974, 1
      %v1096 = vsel %vm474, %v1093, %v1095
      %v1097 = vrot.slane %v975, 1
      %v1098 = vrot.slane %v976, 1
      %v1099 = vsel %vm474, %v1097, %v1098
      %v1100 = vrot.slane %v977, 1
      %v1101 = vsel %vm474, %v1098, %v1100
      %v1102 = vrot.slane %v978, 1
      %v1103 = vrot.slane %v979, 1
      %v1104 = vsel %vm474, %v1102, %v1103
      %v1105 = vrot.slane %v980, 1
      %v1106 = vsel %vm474, %v1103, %v1105
      %v1107 = vrot.slane %v981, 1
      %v1108 = vrot.slane %v982, 1
      %v1109 = vsel %vm474, %v1107, %v1108
      %v1110 = vrot.slane %v983, 1
      %v1111 = vsel %vm474, %v1108, %v1110
      %v1144 = vadd.f32 %v900, %v1034
      %v1145 = vadd.f32 %v901, %v1036
      %v1146 = vadd.f32 %v902, %v1039
      %v1147 = vadd.f32 %v903, %v1041
      %v1148 = vadd.f32 %v904, %v1044
      %v1149 = vadd.f32 %v905, %v1046
      %v1150 = vadd.f32 %v906, %v1049
      %v1151 = vadd.f32 %v907, %v1051
      %v1152 = vadd.f32 %v908, %v1054
      %v1153 = vadd.f32 %v909, %v1056
      %v1154 = vadd.f32 %v910, %v1059
      %v1155 = vadd.f32 %v911, %v1061
      %v1156 = vadd.f32 %v912, %v1064
      %v1157 = vadd.f32 %v913, %v1066
      %v1158 = vadd.f32 %v914, %v1069
      %v1159 = vadd.f32 %v915, %v1071
      %v1160 = vadd.f32 %v916, %v1074
      %v1161 = vadd.f32 %v917, %v1076
      %v1162 = vadd.f32 %v918, %v1079
      %v1163 = vadd.f32 %v919, %v1081
      %v1164 = vadd.f32 %v920, %v1084
      %v1165 = vadd.f32 %v921, %v1086
      %v1166 = vadd.f32 %v922, %v1089
      %v1167 = vadd.f32 %v923, %v1091
      %v1168 = vadd.f32 %v924, %v1094
      %v1169 = vadd.f32 %v925, %v1096
      %v1170 = vadd.f32 %v926, %v1099
      %v1171 = vadd.f32 %v927, %v1101
      %v1172 = vadd.f32 %v928, %v1104
      %v1173 = vadd.f32 %v929, %v1106
      %v1174 = vadd.f32 %v930, %v1109
      %v1175 = vadd.f32 %v931, %v1111
      %v1176 = vlaneseq
      %v1177 = vshrl.u32 %v1176, 7
      %v1178 = vsub.s32 5, %v1177
      %v1179 = vrot.slane %v336, %v1178
      %v1180 = vmul.f32 %v285, %v1179
      %v1181 = vmul.f32 %v286, %v1179
      %v1182 = vmul.f32 %v287, %v1179
      %v1183 = vmul.f32 %v288, %v1179
      %v1184 = vmul.f32 %v289, %v1179
      %v1185 = vmul.f32 %v290, %v1179
      %v1186 = vmul.f32 %v291, %v1179
      %v1187 = vmul.f32 %v292, %v1179
      %v1188 = vmul.f32 %v293, %v1179
      %v1189 = vmul.f32 %v294, %v1179
      %v1190 = vmul.f32 %v295, %v1179
      %v1191 = vmul.f32 %v296, %v1179
      %v1192 = vmul.f32 %v297, %v1179
      %v1193 = vmul.f32 %v298, %v1179
      %v1194 = vmul.f32 %v299, %v1179
      %v1195 = vmul.f32 %v300, %v1179
      %v1196 = vmul.f32 %v301, %v1179
      %v1197 = vmul.f32 %v302, %v1179
      %v1198 = vmul.f32 %v303, %v1179
      %v1199 = vmul.f32 %v304, %v1179
      %v1200 = vmul.f32 %v305, %v1179
      %v1201 = vmul.f32 %v306, %v1179
      %v1202 = vmul.f32 %v307, %v1179
      %v1203 = vmul.f32 %v308, %v1179
      %v1204 = vmul.f32 %v309, %v1179
      %v1205 = vmul.f32 %v310, %v1179
      %v1206 = vmul.f32 %v311, %v1179
      %v1207 = vmul.f32 %v312, %v1179
      %v1208 = vmul.f32 %v313, %v1179
      %v1209 = vmul.f32 %v314, %v1179
      %v1210 = vmul.f32 %v315, %v1179
      %v1211 = vmul.f32 %v316, %v1179
      %v1212 = vmul.f32 %v317, %v1179
      %v1213 = vmul.f32 %v318, %v1179
      %v1214 = vmul.f32 %v319, %v1179
      %v1215 = vmul.f32 %v320, %v1179
      %v1216 = vmul.f32 %v321, %v1179
      %v1217 = vmul.f32 %v322, %v1179
      %v1218 = vmul.f32 %v323, %v1179
      %v1219 = vmul.f32 %v324, %v1179
      %v1220 = vmul.f32 %v325, %v1179
      %v1221 = vmul.f32 %v326, %v1179
      %v1222 = vmul.f32 %v327, %v1179
      %v1223 = vmul.f32 %v328, %v1179
      %v1224 = vmul.f32 %v329, %v1179
      %v1225 = vmul.f32 %v330, %v1179
      %v1226 = vmul.f32 %v331, %v1179
      %v1227 = vmul.f32 %v332, %v1179
      %v1276 = vrot.slane %v1180, 2
      %v1277 = vrot.slane %v1181, 2
      %v1278 = vsel %vm719, %v1276, %v1277
      %v1279 = vrot.slane %v1182, 2
      %v1280 = vsel %vm719, %v1277, %v1279
      %v1281 = vrot.slane %v1183, 2
      %v1282 = vrot.slane %v1184, 2
      %v1283 = vsel %vm719, %v1281, %v1282
      %v1284 = vrot.slane %v1185, 2
      %v1285 = vsel %vm719, %v1282, %v1284
      %v1286 = vrot.slane %v1186, 2
      %v1287 = vrot.slane %v1187, 2
      %v1288 = vsel %vm719, %v1286, %v1287
      %v1289 = vrot.slane %v1188, 2
      %v1290 = vsel %vm719, %v1287, %v1289
      %v1291 = vrot.slane %v1189, 2
      %v1292 = vrot.slane %v1190, 2
      %v1293 = vsel %vm719, %v1291, %v1292
      %v1294 = vrot.slane %v1191, 2
      %v1295 = vsel %vm719, %v1292, %v1294
      %v1296 = vrot.slane %v1192, 2
      %v1297 = vrot.slane %v1193, 2
      %v1298 = vsel %vm719, %v1296, %v1297
      %v1299 = vrot.slane %v1194, 2
      %v1300 = vsel %vm719, %v1297, %v1299
      %v1301 = vrot.slane %v1195, 2
      %v1302 = vrot.slane %v1196, 2
      %v1303 = vsel %vm719, %v1301, %v1302
      %v1304 = vrot.slane %v1197, 2
      %v1305 = vsel %vm719, %v1302, %v1304
      %v1306 = vrot.slane %v1198, 2
      %v1307 = vrot.slane %v1199, 2
      %v1308 = vsel %vm719, %v1306, %v1307
      %v1309 = vrot.slane %v1200, 2
      %v1310 = vsel %vm719, %v1307, %v1309
      %v1311 = vrot.slane %v1201, 2
      %v1312 = vrot.slane %v1202, 2
      %v1313 = vsel %vm719, %v1311, %v1312
      %v1314 = vrot.slane %v1203, 2
      %v1315 = vsel %vm719, %v1312, %v1314
      %v1316 = vrot.slane %v1204, 2
      %v1317 = vrot.slane %v1205, 2
      %v1318 = vsel %vm719, %v1316, %v1317
      %v1319 = vrot.slane %v1206, 2
      %v1320 = vsel %vm719, %v1317, %v1319
      %v1321 = vrot.slane %v1207, 2
      %v1322 = vrot.slane %v1208, 2
      %v1323 = vsel %vm719, %v1321, %v1322
      %v1324 = vrot.slane %v1209, 2
      %v1325 = vsel %vm719, %v1322, %v1324
      %v1326 = vrot.slane %v1210, 2
      %v1327 = vrot.slane %v1211, 2
      %v1328 = vsel %vm719, %v1326, %v1327
      %v1329 = vrot.slane %v1212, 2
      %v1330 = vsel %vm719, %v1327, %v1329
      %v1331 = vrot.slane %v1213, 2
      %v1332 = vrot.slane %v1214, 2
      %v1333 = vsel %vm719, %v1331, %v1332
      %v1334 = vrot.slane %v1215, 2
      %v1335 = vsel %vm719, %v1332, %v1334
      %v1336 = vrot.slane %v1216, 2
      %v1337 = vrot.slane %v1217, 2
      %v1338 = vsel %vm719, %v1336, %v1337
      %v1339 = vrot.slane %v1218, 2
      %v1340 = vsel %vm719, %v1337, %v1339
      %v1341 = vrot.slane %v1219, 2
      %v1342 = vrot.slane %v1220, 2
      %v1343 = vsel %vm719, %v1341, %v1342
      %v1344 = vrot.slane %v1221, 2
      %v1345 = vsel %vm719, %v1342, %v1344
      %v1346 = vrot.slane %v1222, 2
      %v1347 = vrot.slane %v1223, 2
      %v1348 = vsel %vm719, %v1346, %v1347
      %v1349 = vrot.slane %v1224, 2
      %v1350 = vsel %vm719, %v1347, %v1349
      %v1351 = vrot.slane %v1225, 2
      %v1352 = vrot.slane %v1226, 2
      %v1353 = vsel %vm719, %v1351, %v1352
      %v1354 = vrot.slane %v1227, 2
      %v1355 = vsel %vm719, %v1352, %v1354
      %v1388 = vadd.f32 %v1144, %v1278
      %v1389 = vadd.f32 %v1145, %v1280
      %v1390 = vadd.f32 %v1146, %v1283
      %v1391 = vadd.f32 %v1147, %v1285
      %v1392 = vadd.f32 %v1148, %v1288
      %v1393 = vadd.f32 %v1149, %v1290
      %v1394 = vadd.f32 %v1150, %v1293
      %v1395 = vadd.f32 %v1151, %v1295
      %v1396 = vadd.f32 %v1152, %v1298
      %v1397 = vadd.f32 %v1153, %v1300
      %v1398 = vadd.f32 %v1154, %v1303
      %v1399 = vadd.f32 %v1155, %v1305
      %v1400 = vadd.f32 %v1156, %v1308
      %v1401 = vadd.f32 %v1157, %v1310
      %v1402 = vadd.f32 %v1158, %v1313
      %v1403 = vadd.f32 %v1159, %v1315
      %v1404 = vadd.f32 %v1160, %v1318
      %v1405 = vadd.f32 %v1161, %v1320
      %v1406 = vadd.f32 %v1162, %v1323
      %v1407 = vadd.f32 %v1163, %v1325
      %v1408 = vadd.f32 %v1164, %v1328
      %v1409 = vadd.f32 %v1165, %v1330
      %v1410 = vadd.f32 %v1166, %v1333
      %v1411 = vadd.f32 %v1167, %v1335
      %v1412 = vadd.f32 %v1168, %v1338
      %v1413 = vadd.f32 %v1169, %v1340
      %v1414 = vadd.f32 %v1170, %v1343
      %v1415 = vadd.f32 %v1171, %v1345
      %v1416 = vadd.f32 %v1172, %v1348
      %v1417 = vadd.f32 %v1173, %v1350
      %v1418 = vadd.f32 %v1174, %v1353
      %v1419 = vadd.f32 %v1175, %v1355
      %v1420 = vlaneseq
      %v1421 = vshrl.u32 %v1420, 7
      %v1422 = vsub.s32 6, %v1421
      %v1423 = vrot.slane %v336, %v1422
      %v1424 = vmul.f32 %v288, %v1423
      %v1425 = vmul.f32 %v289, %v1423
      %v1426 = vmul.f32 %v291, %v1423
      %v1427 = vmul.f32 %v292, %v1423
      %v1428 = vmul.f32 %v294, %v1423
      %v1429 = vmul.f32 %v295, %v1423
      %v1430 = vmul.f32 %v297, %v1423
      %v1431 = vmul.f32 %v298, %v1423
      %v1432 = vmul.f32 %v300, %v1423
      %v1433 = vmul.f32 %v301, %v1423
      %v1434 = vmul.f32 %v303, %v1423
      %v1435 = vmul.f32 %v304, %v1423
      %v1436 = vmul.f32 %v306, %v1423
      %v1437 = vmul.f32 %v307, %v1423
      %v1438 = vmul.f32 %v309, %v1423
      %v1439 = vmul.f32 %v310, %v1423
      %v1440 = vmul.f32 %v312, %v1423
      %v1441 = vmul.f32 %v313, %v1423
      %v1442 = vmul.f32 %v315, %v1423
      %v1443 = vmul.f32 %v316, %v1423
      %v1444 = vmul.f32 %v318, %v1423
      %v1445 = vmul.f32 %v319, %v1423
      %v1446 = vmul.f32 %v321, %v1423
      %v1447 = vmul.f32 %v322, %v1423
      %v1448 = vmul.f32 %v324, %v1423
      %v1449 = vmul.f32 %v325, %v1423
      %v1450 = vmul.f32 %v327, %v1423
      %v1451 = vmul.f32 %v328, %v1423
      %v1452 = vmul.f32 %v330, %v1423
      %v1453 = vmul.f32 %v331, %v1423
      %v1454 = vmul.f32 %v333, %v1423
      %v1455 = vmul.f32 %v334, %v1423
      %v1456 = vadd.f32 %v1388, %v1424
      %v1457 = vadd.f32 %v1389, %v1425
      %v1458 = vadd.f32 %v1390, %v1426
      %v1459 = vadd.f32 %v1391, %v1427
      %v1460 = vadd.f32 %v1392, %v1428
      %v1461 = vadd.f32 %v1393, %v1429
      %v1462 = vadd.f32 %v1394, %v1430
      %v1463 = vadd.f32 %v1395, %v1431
      %v1464 = vadd.f32 %v1396, %v1432
      %v1465 = vadd.f32 %v1397, %v1433
      %v1466 = vadd.f32 %v1398, %v1434
      %v1467 = vadd.f32 %v1399, %v1435
      %v1468 = vadd.f32 %v1400, %v1436
      %v1469 = vadd.f32 %v1401, %v1437
      %v1470 = vadd.f32 %v1402, %v1438
      %v1471 = vadd.f32 %v1403, %v1439
      %v1472 = vadd.f32 %v1404, %v1440
      %v1473 = vadd.f32 %v1405, %v1441
      %v1474 = vadd.f32 %v1406, %v1442
      %v1475 = vadd.f32 %v1407, %v1443
      %v1476 = vadd.f32 %v1408, %v1444
      %v1477 = vadd.f32 %v1409, %v1445
      %v1478 = vadd.f32 %v1410, %v1446
      %v1479 = vadd.f32 %v1411, %v1447
      %v1480 = vadd.f32 %v1412, %v1448
      %v1481 = vadd.f32 %v1413, %v1449
      %v1482 = vadd.f32 %v1414, %v1450
      %v1483 = vadd.f32 %v1415, %v1451
      %v1484 = vadd.f32 %v1416, %v1452
      %v1485 = vadd.f32 %v1417, %v1453
      %v1486 = vadd.f32 %v1418, %v1454
      %v1487 = vadd.f32 %v1419, %v1455
      %v1488 = vlaneseq
      %v1489 = vshrl.u32 %v1488, 7
      %v1490 = vsub.s32 7, %v1489
      %v1491 = vrot.slane %v336, %v1490
      %v1492 = vmul.f32 %v288, %v1491
      %v1493 = vmul.f32 %v289, %v1491
      %v1494 = vmul.f32 %v290, %v1491
      %v1495 = vmul.f32 %v291, %v1491
      %v1496 = vmul.f32 %v292, %v1491
      %v1497 = vmul.f32 %v293, %v1491
      %v1498 = vmul.f32 %v294, %v1491
      %v1499 = vmul.f32 %v295, %v1491
      %v1500 = vmul.f32 %v296, %v1491
      %v1501 = vmul.f32 %v297, %v1491
      %v1502 = vmul.f32 %v298, %v1491
      %v1503 = vmul.f32 %v299, %v1491
      %v1504 = vmul.f32 %v300, %v1491
      %v1505 = vmul.f32 %v301, %v1491
      %v1506 = vmul.f32 %v302, %v1491
      %v1507 = vmul.f32 %v303, %v1491
      %v1508 = vmul.f32 %v304, %v1491
      %v1509 = vmul.f32 %v305, %v1491
      %v1510 = vmul.f32 %v306, %v1491
      %v1511 = vmul.f32 %v307, %v1491
      %v1512 = vmul.f32 %v308, %v1491
      %v1513 = vmul.f32 %v309, %v1491
      %v1514 = vmul.f32 %v310, %v1491
      %v1515 = vmul.f32 %v311, %v1491
      %v1516 = vmul.f32 %v312, %v1491
      %v1517 = vmul.f32 %v313, %v1491
      %v1518 = vmul.f32 %v314, %v1491
      %v1519 = vmul.f32 %v315, %v1491
      %v1520 = vmul.f32 %v316, %v1491
      %v1521 = vmul.f32 %v317, %v1491
      %v1522 = vmul.f32 %v318, %v1491
      %v1523 = vmul.f32 %v319, %v1491
      %v1524 = vmul.f32 %v320, %v1491
      %v1525 = vmul.f32 %v321, %v1491
      %v1526 = vmul.f32 %v322, %v1491
      %v1527 = vmul.f32 %v323, %v1491
      %v1528 = vmul.f32 %v324, %v1491
      %v1529 = vmul.f32 %v325, %v1491
      %v1530 = vmul.f32 %v326, %v1491
      %v1531 = vmul.f32 %v327, %v1491
      %v1532 = vmul.f32 %v328, %v1491
      %v1533 = vmul.f32 %v329, %v1491
      %v1534 = vmul.f32 %v330, %v1491
      %v1535 = vmul.f32 %v331, %v1491
      %v1536 = vmul.f32 %v332, %v1491
      %v1537 = vmul.f32 %v333, %v1491
      %v1538 = vmul.f32 %v334, %v1491
      %v1539 = vmul.f32 %v335, %v1491
      %v1588 = vrot.slane %v1492, 1
      %v1589 = vrot.slane %v1493, 1
      %v1590 = vsel %vm474, %v1588, %v1589
      %v1591 = vrot.slane %v1494, 1
      %v1592 = vsel %vm474, %v1589, %v1591
      %v1593 = vrot.slane %v1495, 1
      %v1594 = vrot.slane %v1496, 1
      %v1595 = vsel %vm474, %v1593, %v1594
      %v1596 = vrot.slane %v1497, 1
      %v1597 = vsel %vm474, %v1594, %v1596
      %v1598 = vrot.slane %v1498, 1
      %v1599 = vrot.slane %v1499, 1
      %v1600 = vsel %vm474, %v1598, %v1599
      %v1601 = vrot.slane %v1500, 1
      %v1602 = vsel %vm474, %v1599, %v1601
      %v1603 = vrot.slane %v1501, 1
      %v1604 = vrot.slane %v1502, 1
      %v1605 = vsel %vm474, %v1603, %v1604
      %v1606 = vrot.slane %v1503, 1
      %v1607 = vsel %vm474, %v1604, %v1606
      %v1608 = vrot.slane %v1504, 1
      %v1609 = vrot.slane %v1505, 1
      %v1610 = vsel %vm474, %v1608, %v1609
      %v1611 = vrot.slane %v1506, 1
      %v1612 = vsel %vm474, %v1609, %v1611
      %v1613 = vrot.slane %v1507, 1
      %v1614 = vrot.slane %v1508, 1
      %v1615 = vsel %vm474, %v1613, %v1614
      %v1616 = vrot.slane %v1509, 1
      %v1617 = vsel %vm474, %v1614, %v1616
      %v1618 = vrot.slane %v1510, 1
      %v1619 = vrot.slane %v1511, 1
      %v1620 = vsel %vm474, %v1618, %v1619
      %v1621 = vrot.slane %v1512, 1
      %v1622 = vsel %vm474, %v1619, %v1621
      %v1623 = vrot.slane %v1513, 1
      %v1624 = vrot.slane %v1514, 1
      %v1625 = vsel %vm474, %v1623, %v1624
      %v1626 = vrot.slane %v1515, 1
      %v1627 = vsel %vm474, %v1624, %v1626
      %v1628 = vrot.slane %v1516, 1
      %v1629 = vrot.slane %v1517, 1
      %v1630 = vsel %vm474, %v1628, %v1629
      %v1631 = vrot.slane %v1518, 1
      %v1632 = vsel %vm474, %v1629, %v1631
      %v1633 = vrot.slane %v1519, 1
      %v1634 = vrot.slane %v1520, 1
      %v1635 = vsel %vm474, %v1633, %v1634
      %v1636 = vrot.slane %v1521, 1
      %v1637 = vsel %vm474, %v1634, %v1636
      %v1638 = vrot.slane %v1522, 1
      %v1639 = vrot.slane %v1523, 1
      %v1640 = vsel %vm474, %v1638, %v1639
      %v1641 = vrot.slane %v1524, 1
      %v1642 = vsel %vm474, %v1639, %v1641
      %v1643 = vrot.slane %v1525, 1
      %v1644 = vrot.slane %v1526, 1
      %v1645 = vsel %vm474, %v1643, %v1644
      %v1646 = vrot.slane %v1527, 1
      %v1647 = vsel %vm474, %v1644, %v1646
      %v1648 = vrot.slane %v1528, 1
      %v1649 = vrot.slane %v1529, 1
      %v1650 = vsel %vm474, %v1648, %v1649
      %v1651 = vrot.slane %v1530, 1
      %v1652 = vsel %vm474, %v1649, %v1651
      %v1653 = vrot.slane %v1531, 1
      %v1654 = vrot.slane %v1532, 1
      %v1655 = vsel %vm474, %v1653, %v1654
      %v1656 = vrot.slane %v1533, 1
      %v1657 = vsel %vm474, %v1654, %v1656
      %v1658 = vrot.slane %v1534, 1
      %v1659 = vrot.slane %v1535, 1
      %v1660 = vsel %vm474, %v1658, %v1659
      %v1661 = vrot.slane %v1536, 1
      %v1662 = vsel %vm474, %v1659, %v1661
      %v1663 = vrot.slane %v1537, 1
      %v1664 = vrot.slane %v1538, 1
      %v1665 = vsel %vm474, %v1663, %v1664
      %v1666 = vrot.slane %v1539, 1
      %v1667 = vsel %vm474, %v1664, %v1666
      %v1700 = vadd.f32 %v1456, %v1590
      %v1701 = vadd.f32 %v1457, %v1592
      %v1702 = vadd.f32 %v1458, %v1595
      %v1703 = vadd.f32 %v1459, %v1597
      %v1704 = vadd.f32 %v1460, %v1600
      %v1705 = vadd.f32 %v1461, %v1602
      %v1706 = vadd.f32 %v1462, %v1605
      %v1707 = vadd.f32 %v1463, %v1607
      %v1708 = vadd.f32 %v1464, %v1610
      %v1709 = vadd.f32 %v1465, %v1612
      %v1710 = vadd.f32 %v1466, %v1615
      %v1711 = vadd.f32 %v1467, %v1617
      %v1712 = vadd.f32 %v1468, %v1620
      %v1713 = vadd.f32 %v1469, %v1622
      %v1714 = vadd.f32 %v1470, %v1625
      %v1715 = vadd.f32 %v1471, %v1627
      %v1716 = vadd.f32 %v1472, %v1630
      %v1717 = vadd.f32 %v1473, %v1632
      %v1718 = vadd.f32 %v1474, %v1635
      %v1719 = vadd.f32 %v1475, %v1637
      %v1720 = vadd.f32 %v1476, %v1640
      %v1721 = vadd.f32 %v1477, %v1642
      %v1722 = vadd.f32 %v1478, %v1645
      %v1723 = vadd.f32 %v1479, %v1647
      %v1724 = vadd.f32 %v1480, %v1650
      %v1725 = vadd.f32 %v1481, %v1652
      %v1726 = vadd.f32 %v1482, %v1655
      %v1727 = vadd.f32 %v1483, %v1657
      %v1728 = vadd.f32 %v1484, %v1660
      %v1729 = vadd.f32 %v1485, %v1662
      %v1730 = vadd.f32 %v1486, %v1665
      %v1731 = vadd.f32 %v1487, %v1667
      %v1732 = vlaneseq
      %v1733 = vshrl.u32 %v1732, 7
      %v1734 = vsub.s32 0, %v1733
      %v1735 = vrot.slane %v337, %v1734
      %v1736 = vmul.f32 %v288, %v1735
      %v1737 = vmul.f32 %v289, %v1735
      %v1738 = vmul.f32 %v290, %v1735
      %v1739 = vmul.f32 %v291, %v1735
      %v1740 = vmul.f32 %v292, %v1735
      %v1741 = vmul.f32 %v293, %v1735
      %v1742 = vmul.f32 %v294, %v1735
      %v1743 = vmul.f32 %v295, %v1735
      %v1744 = vmul.f32 %v296, %v1735
      %v1745 = vmul.f32 %v297, %v1735
      %v1746 = vmul.f32 %v298, %v1735
      %v1747 = vmul.f32 %v299, %v1735
      %v1748 = vmul.f32 %v300, %v1735
      %v1749 = vmul.f32 %v301, %v1735
      %v1750 = vmul.f32 %v302, %v1735
      %v1751 = vmul.f32 %v303, %v1735
      %v1752 = vmul.f32 %v304, %v1735
      %v1753 = vmul.f32 %v305, %v1735
      %v1754 = vmul.f32 %v306, %v1735
      %v1755 = vmul.f32 %v307, %v1735
      %v1756 = vmul.f32 %v308, %v1735
      %v1757 = vmul.f32 %v309, %v1735
      %v1758 = vmul.f32 %v310, %v1735
      %v1759 = vmul.f32 %v311, %v1735
      %v1760 = vmul.f32 %v312, %v1735
      %v1761 = vmul.f32 %v313, %v1735
      %v1762 = vmul.f32 %v314, %v1735
      %v1763 = vmul.f32 %v315, %v1735
      %v1764 = vmul.f32 %v316, %v1735
      %v1765 = vmul.f32 %v317, %v1735
      %v1766 = vmul.f32 %v318, %v1735
      %v1767 = vmul.f32 %v319, %v1735
      %v1768 = vmul.f32 %v320, %v1735
      %v1769 = vmul.f32 %v321, %v1735
      %v1770 = vmul.f32 %v322, %v1735
      %v1771 = vmul.f32 %v323, %v1735
      %v1772 = vmul.f32 %v324, %v1735
      %v1773 = vmul.f32 %v325, %v1735
      %v1774 = vmul.f32 %v326, %v1735
      %v1775 = vmul.f32 %v327, %v1735
      %v1776 = vmul.f32 %v328, %v1735
      %v1777 = vmul.f32 %v329, %v1735
      %v1778 = vmul.f32 %v330, %v1735
      %v1779 = vmul.f32 %v331, %v1735
      %v1780 = vmul.f32 %v332, %v1735
      %v1781 = vmul.f32 %v333, %v1735
      %v1782 = vmul.f32 %v334, %v1735
      %v1783 = vmul.f32 %v335, %v1735
      %v1832 = vrot.slane %v1736, 2
      %v1833 = vrot.slane %v1737, 2
      %v1834 = vsel %vm719, %v1832, %v1833
      %v1835 = vrot.slane %v1738, 2
      %v1836 = vsel %vm719, %v1833, %v1835
      %v1837 = vrot.slane %v1739, 2
      %v1838 = vrot.slane %v1740, 2
      %v1839 = vsel %vm719, %v1837, %v1838
      %v1840 = vrot.slane %v1741, 2
      %v1841 = vsel %vm719, %v1838, %v1840
      %v1842 = vrot.slane %v1742, 2
      %v1843 = vrot.slane %v1743, 2
      %v1844 = vsel %vm719, %v1842, %v1843
      %v1845 = vrot.slane %v1744, 2
      %v1846 = vsel %vm719, %v1843, %v1845
      %v1847 = vrot.slane %v1745, 2
      %v1848 = vrot.slane %v1746, 2
      %v1849 = vsel %vm719, %v1847, %v1848
      %v1850 = vrot.slane %v1747, 2
      %v1851 = vsel %vm719, %v1848, %v1850
      %v1852 = vrot.slane %v1748, 2
      %v1853 = vrot.slane %v1749, 2
      %v1854 = vsel %vm719, %v1852, %v1853
      %v1855 = vrot.slane %v1750, 2
      %v1856 = vsel %vm719, %v1853, %v1855
      %v1857 = vrot.slane %v1751, 2
      %v1858 = vrot.slane %v1752, 2
      %v1859 = vsel %vm719, %v1857, %v1858
      %v1860 = vrot.slane %v1753, 2
      %v1861 = vsel %vm719, %v1858, %v1860
      %v1862 = vrot.slane %v1754, 2
      %v1863 = vrot.slane %v1755, 2
      %v1864 = vsel %vm719, %v1862, %v1863
      %v1865 = vrot.slane %v1756, 2
      %v1866 = vsel %vm719, %v1863, %v1865
      %v1867 = vrot.slane %v1757, 2
      %v1868 = vrot.slane %v1758, 2
      %v1869 = vsel %vm719, %v1867, %v1868
      %v1870 = vrot.slane %v1759, 2
      %v1871 = vsel %vm719, %v1868, %v1870
      %v1872 = vrot.slane %v1760, 2
      %v1873 = vrot.slane %v1761, 2
      %v1874 = vsel %vm719, %v1872, %v1873
      %v1875 = vrot.slane %v1762, 2
      %v1876 = vsel %vm719, %v1873, %v1875
      %v1877 = vrot.slane %v1763, 2
      %v1878 = vrot.slane %v1764, 2
      %v1879 = vsel %vm719, %v1877, %v1878
      %v1880 = vrot.slane %v1765, 2
      %v1881 = vsel %vm719, %v1878, %v1880
      %v1882 = vrot.slane %v1766, 2
      %v1883 = vrot.slane %v1767, 2
      %v1884 = vsel %vm719, %v1882, %v1883
      %v1885 = vrot.slane %v1768, 2
      %v1886 = vsel %vm719, %v1883, %v1885
      %v1887 = vrot.slane %v1769, 2
      %v1888 = vrot.slane %v1770, 2
      %v1889 = vsel %vm719, %v1887, %v1888
      %v1890 = vrot.slane %v1771, 2
      %v1891 = vsel %vm719, %v1888, %v1890
      %v1892 = vrot.slane %v1772, 2
      %v1893 = vrot.slane %v1773, 2
      %v1894 = vsel %vm719, %v1892, %v1893
      %v1895 = vrot.slane %v1774, 2
      %v1896 = vsel %vm719, %v1893, %v1895
      %v1897 = vrot.slane %v1775, 2
      %v1898 = vrot.slane %v1776, 2
      %v1899 = vsel %vm719, %v1897, %v1898
      %v1900 = vrot.slane %v1777, 2
      %v1901 = vsel %vm719, %v1898, %v1900
      %v1902 = vrot.slane %v1778, 2
      %v1903 = vrot.slane %v1779, 2
      %v1904 = vsel %vm719, %v1902, %v1903
      %v1905 = vrot.slane %v1780, 2
      %v1906 = vsel %vm719, %v1903, %v1905
      %v1907 = vrot.slane %v1781, 2
      %v1908 = vrot.slane %v1782, 2
      %v1909 = vsel %vm719, %v1907, %v1908
      %v1910 = vrot.slane %v1783, 2
      %v1911 = vsel %vm719, %v1908, %v1910
      %v1944 = vadd.f32 %v1700, %v1834
      %v1945 = vadd.f32 %v1701, %v1836
      %v1946 = vadd.f32 %v1702, %v1839
      %v1947 = vadd.f32 %v1703, %v1841
      %v1948 = vadd.f32 %v1704, %v1844
      %v1949 = vadd.f32 %v1705, %v1846
      %v1950 = vadd.f32 %v1706, %v1849
      %v1951 = vadd.f32 %v1707, %v1851
      %v1952 = vadd.f32 %v1708, %v1854
      %v1953 = vadd.f32 %v1709, %v1856
      %v1954 = vadd.f32 %v1710, %v1859
      %v1955 = vadd.f32 %v1711, %v1861
      %v1956 = vadd.f32 %v1712, %v1864
      %v1957 = vadd.f32 %v1713, %v1866
      %v1958 = vadd.f32 %v1714, %v1869
      %v1959 = vadd.f32 %v1715, %v1871
      %v1960 = vadd.f32 %v1716, %v1874
      %v1961 = vadd.f32 %v1717, %v1876
      %v1962 = vadd.f32 %v1718, %v1879
      %v1963 = vadd.f32 %v1719, %v1881
      %v1964 = vadd.f32 %v1720, %v1884
      %v1965 = vadd.f32 %v1721, %v1886
      %v1966 = vadd.f32 %v1722, %v1889
      %v1967 = vadd.f32 %v1723, %v1891
      %v1968 = vadd.f32 %v1724, %v1894
      %v1969 = vadd.f32 %v1725, %v1896
      %v1970 = vadd.f32 %v1726, %v1899
      %v1971 = vadd.f32 %v1727, %v1901
      %v1972 = vadd.f32 %v1728, %v1904
      %v1973 = vadd.f32 %v1729, %v1906
      %v1974 = vadd.f32 %v1730, %v1909
      %v1975 = vadd.f32 %v1731, %v1911
      %v1976 = vld [vmem:[%s2] sm:$0x1]
      %v1978 = vlaneseq
      %v1979 = vshrl.u32 %v1978, 7
      %v1980 = vsub.s32 0, %v1979
      %v1981 = vrot.slane %v1976, %v1980
      %v1983 = vmul.f32 %v1944, %v1981
      %v1984 = vmul.f32 %v1945, %v1981
      %v1985 = vmul.f32 %v1946, %v1981
      %v1986 = vmul.f32 %v1947, %v1981
      %v1987 = vmul.f32 %v1948, %v1981
      %v1988 = vmul.f32 %v1949, %v1981
      %v1989 = vmul.f32 %v1950, %v1981
      %v1990 = vmul.f32 %v1951, %v1981
      %v1991 = vmul.f32 %v1952, %v1981
      %v1992 = vmul.f32 %v1953, %v1981
      %v1993 = vmul.f32 %v1954, %v1981
      %v1994 = vmul.f32 %v1955, %v1981
      %v1995 = vmul.f32 %v1956, %v1981
      %v1996 = vmul.f32 %v1957, %v1981
      %v1997 = vmul.f32 %v1958, %v1981
      %v1998 = vmul.f32 %v1959, %v1981
      %v1999 = vmul.f32 %v1960, %v1981
      %v2000 = vmul.f32 %v1961, %v1981
      %v2001 = vmul.f32 %v1962, %v1981
      %v2002 = vmul.f32 %v1963, %v1981
      %v2003 = vmul.f32 %v1964, %v1981
      %v2004 = vmul.f32 %v1965, %v1981
      %v2005 = vmul.f32 %v1966, %v1981
      %v2006 = vmul.f32 %v1967, %v1981
      %v2007 = vmul.f32 %v1968, %v1981
      %v2008 = vmul.f32 %v1969, %v1981
      %v2009 = vmul.f32 %v1970, %v1981
      %v2010 = vmul.f32 %v1971, %v1981
      %v2011 = vmul.f32 %v1972, %v1981
      %v2012 = vmul.f32 %v1973, %v1981
      %v2013 = vmul.f32 %v1974, %v1981
      %v2014 = vmul.f32 %v1975, %v1981
      %v2015 = vld [vmem:[%s3] sm:$0x1]
      %v2017 = vlaneseq
      %v2018 = vshrl.u32 %v2017, 7
      %v2019 = vsub.s32 0, %v2018
      %v2020 = vrot.slane %v2015, %v2019
      %v2022 = vadd.f32 %v1983, %v2020
      %v2023 = vadd.f32 %v1984, %v2020
      %v2024 = vadd.f32 %v1985, %v2020
      %v2025 = vadd.f32 %v1986, %v2020
      %v2026 = vadd.f32 %v1987, %v2020
      %v2027 = vadd.f32 %v1988, %v2020
      %v2028 = vadd.f32 %v1989, %v2020
      %v2029 = vadd.f32 %v1990, %v2020
      %v2030 = vadd.f32 %v1991, %v2020
      %v2031 = vadd.f32 %v1992, %v2020
      %v2032 = vadd.f32 %v1993, %v2020
      %v2033 = vadd.f32 %v1994, %v2020
      %v2034 = vadd.f32 %v1995, %v2020
      %v2035 = vadd.f32 %v1996, %v2020
      %v2036 = vadd.f32 %v1997, %v2020
      %v2037 = vadd.f32 %v1998, %v2020
      %v2038 = vadd.f32 %v1999, %v2020
      %v2039 = vadd.f32 %v2000, %v2020
      %v2040 = vadd.f32 %v2001, %v2020
      %v2041 = vadd.f32 %v2002, %v2020
      %v2042 = vadd.f32 %v2003, %v2020
      %v2043 = vadd.f32 %v2004, %v2020
      %v2044 = vadd.f32 %v2005, %v2020
      %v2045 = vadd.f32 %v2006, %v2020
      %v2046 = vadd.f32 %v2007, %v2020
      %v2047 = vadd.f32 %v2008, %v2020
      %v2048 = vadd.f32 %v2009, %v2020
      %v2049 = vadd.f32 %v2010, %v2020
      %v2050 = vadd.f32 %v2011, %v2020
      %v2051 = vadd.f32 %v2012, %v2020
      %v2052 = vadd.f32 %v2013, %v2020
      %v2053 = vadd.f32 %v2014, %v2020
      %v2054 = vmax.f32 %v2022, 0.0
      %v2055 = vmax.f32 %v2023, 0.0
      %v2056 = vmax.f32 %v2024, 0.0
      %v2057 = vmax.f32 %v2025, 0.0
      %v2058 = vmax.f32 %v2026, 0.0
      %v2059 = vmax.f32 %v2027, 0.0
      %v2060 = vmax.f32 %v2028, 0.0
      %v2061 = vmax.f32 %v2029, 0.0
      %v2062 = vmax.f32 %v2030, 0.0
      %v2063 = vmax.f32 %v2031, 0.0
      %v2064 = vmax.f32 %v2032, 0.0
      %v2065 = vmax.f32 %v2033, 0.0
      %v2066 = vmax.f32 %v2034, 0.0
      %v2067 = vmax.f32 %v2035, 0.0
      %v2068 = vmax.f32 %v2036, 0.0
      %v2069 = vmax.f32 %v2037, 0.0
      %v2070 = vmax.f32 %v2038, 0.0
      %v2071 = vmax.f32 %v2039, 0.0
      %v2072 = vmax.f32 %v2040, 0.0
      %v2073 = vmax.f32 %v2041, 0.0
      %v2074 = vmax.f32 %v2042, 0.0
      %v2075 = vmax.f32 %v2043, 0.0
      %v2076 = vmax.f32 %v2044, 0.0
      %v2077 = vmax.f32 %v2045, 0.0
      %v2078 = vmax.f32 %v2046, 0.0
      %v2079 = vmax.f32 %v2047, 0.0
      %v2080 = vmax.f32 %v2048, 0.0
      %v2081 = vmax.f32 %v2049, 0.0
      %v2082 = vmax.f32 %v2050, 0.0
      %v2083 = vmax.f32 %v2051, 0.0
      %v2084 = vmax.f32 %v2052, 0.0
      %v2085 = vmax.f32 %v2053, 0.0
      %v2086 = vpack.c.bf16 %v2055, %v2054
      %v2087 = vpack.c.bf16 %v2057, %v2056
      %v2088 = vpack.c.bf16 %v2059, %v2058
      %v2089 = vpack.c.bf16 %v2061, %v2060
      %v2090 = vpack.c.bf16 %v2063, %v2062
      %v2091 = vpack.c.bf16 %v2065, %v2064
      %v2092 = vpack.c.bf16 %v2067, %v2066
      %v2093 = vpack.c.bf16 %v2069, %v2068
      %v2094 = vpack.c.bf16 %v2071, %v2070
      %v2095 = vpack.c.bf16 %v2073, %v2072
      %v2096 = vpack.c.bf16 %v2075, %v2074
      %v2097 = vpack.c.bf16 %v2077, %v2076
      %v2098 = vpack.c.bf16 %v2079, %v2078
      %v2099 = vpack.c.bf16 %v2081, %v2080
      %v2100 = vpack.c.bf16 %v2083, %v2082
      %v2101 = vpack.c.bf16 %v2085, %v2084
      %v2102 = vld [vmem:[%s4] sm:$0xf]
      %vm2103 = vcmask 64512
      %v2105 = vsel %vm2103, %v2086, 0
      %v2108 = vsel %vm2103, %v2087, 0
      %v2111 = vsel %vm2103, %v2088, 0
      %v2114 = vsel %vm2103, %v2089, 0
      %v2117 = vsel %vm2103, %v2090, 0
      %v2120 = vsel %vm2103, %v2091, 0
      %v2123 = vsel %vm2103, %v2092, 0
      %v2126 = vsel %vm2103, %v2093, 0
      %v2129 = vsel %vm2103, %v2094, 0
      %v2132 = vsel %vm2103, %v2095, 0
      %v2135 = vsel %vm2103, %v2096, 0
      %v2138 = vsel %vm2103, %v2097, 0
      %v2141 = vsel %vm2103, %v2098, 0
      %v2144 = vsel %vm2103, %v2099, 0
      %v2147 = vsel %vm2103, %v2100, 0
      %v2150 = vsel %vm2103, %v2101, 0
      %vm2152 = vcmask 1043456
      %v2154 = vsel %vm2152, %v2102, 0
      %2156 = vmatprep.subr.bf16.mxu0 0
      %2157 = vmatpush1.bf16.msra.mxu0 %v2154
      %2158 = vmatprep.subr.bf16.mxu0 0
      %2159 = vmatpush1.bf16.msra.mxu0 0
      %2160 = vmatprep.subr.bf16.mxu0 0
      %2161 = vmatpush1.bf16.msra.mxu0 0
      %2162 = vmatprep.subr.bf16.mxu0 0
      %2163 = vmatpush1.bf16.msra.mxu0 0
      %2164 = vmatprep.subr.bf16.mxu0 0
      %2165 = vmatpush1.bf16.msra.mxu0 0
      %2166 = vmatprep.subr.bf16.mxu0 0
      %2167 = vmatpush1.bf16.msra.mxu0 0
      %2168 = vmatprep.subr.bf16.mxu0 0
      %2169 = vmatpush1.bf16.msra.mxu0 0
      %2170 = vmatprep.subr.bf16.mxu0 0
      %2171 = vmatpush1.bf16.msra.mxu0 0
      %2172 = vmatprep.subr.bf16.mxu0 0
      %2173 = vmatpush1.bf16.msra.mxu0 0
      %2174 = vmatprep.subr.bf16.mxu0 0
      %2175 = vmatpush1.bf16.msra.mxu0 0
      %2176 = vmatprep.subr.bf16.mxu0 0
      %2177 = vmatpush1.bf16.msra.mxu0 0
      %2178 = vmatprep.subr.bf16.mxu0 0
      %2179 = vmatpush1.bf16.msra.mxu0 0
      %2180 = vmatprep.subr.bf16.mxu0 0
      %2181 = vmatpush1.bf16.msra.mxu0 0
      %2182 = vmatprep.subr.bf16.mxu0 0
      %2183 = vmatpush1.bf16.msra.mxu0 0
      %2184 = vmatprep.subr.bf16.mxu0 0
      %2185 = vmatpush1.bf16.msra.mxu0 0
      %2186 = vmatprep.subr.bf16.mxu0 0
      %2187 = vmatpush1.bf16.msra.mxu0 0
      %2188 = vmatprep.mubr.bf16.mxu0 0
      %2189 = vmatmul.mubr.bf16.gmra.mrb[0].mxu0 %v2105
      %v2190 = vpop.f32.mrb[0].mxu0
      %v2191 = vadd.f32 0.0, %v2190
      %v2192 = vpop.f32.mrb[0].mxu0
      %v2193 = vpop.f32.mrb[0].mxu0
      %v2194 = vadd.f32 0.0, %v2193
      %v2195 = vpop.f32.mrb[0].mxu0
      %2196 = vmatprep.mubr.bf16.mxu0 0
      %2197 = vmatmul.mubr.bf16.gmra.mrb[0].mxu0 %v2108
      %v2198 = vpop.f32.mrb[0].mxu0
      %v2199 = vadd.f32 0.0, %v2198
      %v2200 = vpop.f32.mrb[0].mxu0
      %v2201 = vpop.f32.mrb[0].mxu0
      %v2202 = vadd.f32 0.0, %v2201
      %v2203 = vpop.f32.mrb[0].mxu0
      %2204 = vmatprep.mubr.bf16.mxu0 0
      %2205 = vmatmul.mubr.bf16.gmra.mrb[0].mxu0 %v2111
      %v2206 = vpop.f32.mrb[0].mxu0
      %v2207 = vadd.f32 0.0, %v2206
      %v2208 = vpop.f32.mrb[0].mxu0
      %v2209 = vpop.f32.mrb[0].mxu0
      %v2210 = vadd.f32 0.0, %v2209
      %v2211 = vpop.f32.mrb[0].mxu0
      %2212 = vmatprep.mubr.bf16.mxu0 0
      %2213 = vmatmul.mubr.bf16.gmra.mrb[0].mxu0 %v2114
      %v2214 = vpop.f32.mrb[0].mxu0
      %v2215 = vadd.f32 0.0, %v2214
      %v2216 = vpop.f32.mrb[0].mxu0
      %v2217 = vpop.f32.mrb[0].mxu0
      %v2218 = vadd.f32 0.0, %v2217
      %v2219 = vpop.f32.mrb[0].mxu0
      %2220 = vmatprep.mubr.bf16.mxu0 0
      %2221 = vmatmul.mubr.bf16.gmra.mrb[0].mxu0 %v2117
      %v2222 = vpop.f32.mrb[0].mxu0
      %v2223 = vadd.f32 0.0, %v2222
      %v2224 = vpop.f32.mrb[0].mxu0
      %v2225 = vpop.f32.mrb[0].mxu0
      %v2226 = vadd.f32 0.0, %v2225
      %v2227 = vpop.f32.mrb[0].mxu0
      %2228 = vmatprep.mubr.bf16.mxu0 0
      %2229 = vmatmul.mubr.bf16.gmra.mrb[0].mxu0 %v2120
      %v2230 = vpop.f32.mrb[0].mxu0
      %v2231 = vadd.f32 0.0, %v2230
      %v2232 = vpop.f32.mrb[0].mxu0
      %v2233 = vpop.f32.mrb[0].mxu0
      %v2234 = vadd.f32 0.0, %v2233
      %v2235 = vpop.f32.mrb[0].mxu0
      %2236 = vmatprep.mubr.bf16.mxu0 0
      %2237 = vmatmul.mubr.bf16.gmra.mrb[0].mxu0 %v2123
      %v2238 = vpop.f32.mrb[0].mxu0
      %v2239 = vadd.f32 0.0, %v2238
      %v2240 = vpop.f32.mrb[0].mxu0
      %v2241 = vpop.f32.mrb[0].mxu0
      %v2242 = vadd.f32 0.0, %v2241
      %v2243 = vpop.f32.mrb[0].mxu0
      %2244 = vmatprep.mubr.bf16.mxu0 0
      %2245 = vmatmul.mubr.bf16.gmra.mrb[0].mxu0 %v2126
      %v2246 = vpop.f32.mrb[0].mxu0
      %v2247 = vadd.f32 0.0, %v2246
      %v2248 = vpop.f32.mrb[0].mxu0
      %v2249 = vpop.f32.mrb[0].mxu0
      %v2250 = vadd.f32 0.0, %v2249
      %v2251 = vpop.f32.mrb[0].mxu0
      %2252 = vmatprep.mubr.bf16.mxu0 0
      %2253 = vmatmul.mubr.bf16.gmra.mrb[0].mxu0 %v2129
      %v2254 = vpop.f32.mrb[0].mxu0
      %v2255 = vadd.f32 0.0, %v2254
      %v2256 = vpop.f32.mrb[0].mxu0
      %v2257 = vpop.f32.mrb[0].mxu0
      %v2258 = vadd.f32 0.0, %v2257
      %v2259 = vpop.f32.mrb[0].mxu0
      %2260 = vmatprep.mubr.bf16.mxu0 0
      %2261 = vmatmul.mubr.bf16.gmra.mrb[0].mxu0 %v2132
      %v2262 = vpop.f32.mrb[0].mxu0
      %v2263 = vadd.f32 0.0, %v2262
      %v2264 = vpop.f32.mrb[0].mxu0
      %v2265 = vpop.f32.mrb[0].mxu0
      %v2266 = vadd.f32 0.0, %v2265
      %v2267 = vpop.f32.mrb[0].mxu0
      %2268 = vmatprep.mubr.bf16.mxu0 0
      %2269 = vmatmul.mubr.bf16.gmra.mrb[0].mxu0 %v2135
      %v2270 = vpop.f32.mrb[0].mxu0
      %v2271 = vadd.f32 0.0, %v2270
      %v2272 = vpop.f32.mrb[0].mxu0
      %v2273 = vpop.f32.mrb[0].mxu0
      %v2274 = vadd.f32 0.0, %v2273
      %v2275 = vpop.f32.mrb[0].mxu0
      %2276 = vmatprep.mubr.bf16.mxu0 0
      %2277 = vmatmul.mubr.bf16.gmra.mrb[0].mxu0 %v2138
      %v2278 = vpop.f32.mrb[0].mxu0
      %v2279 = vadd.f32 0.0, %v2278
      %v2280 = vpop.f32.mrb[0].mxu0
      %v2281 = vpop.f32.mrb[0].mxu0
      %v2282 = vadd.f32 0.0, %v2281
      %v2283 = vpop.f32.mrb[0].mxu0
      %2284 = vmatprep.mubr.bf16.mxu0 0
      %2285 = vmatmul.mubr.bf16.gmra.mrb[0].mxu0 %v2141
      %v2286 = vpop.f32.mrb[0].mxu0
      %v2287 = vadd.f32 0.0, %v2286
      %v2288 = vpop.f32.mrb[0].mxu0
      %v2289 = vpop.f32.mrb[0].mxu0
      %v2290 = vadd.f32 0.0, %v2289
      %v2291 = vpop.f32.mrb[0].mxu0
      %2292 = vmatprep.mubr.bf16.mxu0 0
      %2293 = vmatmul.mubr.bf16.gmra.mrb[0].mxu0 %v2144
      %v2294 = vpop.f32.mrb[0].mxu0
      %v2295 = vadd.f32 0.0, %v2294
      %v2296 = vpop.f32.mrb[0].mxu0
      %v2297 = vpop.f32.mrb[0].mxu0
      %v2298 = vadd.f32 0.0, %v2297
      %v2299 = vpop.f32.mrb[0].mxu0
      %2300 = vmatprep.mubr.bf16.mxu0 0
      %2301 = vmatmul.mubr.bf16.gmra.mrb[0].mxu0 %v2147
      %v2302 = vpop.f32.mrb[0].mxu0
      %v2303 = vadd.f32 0.0, %v2302
      %v2304 = vpop.f32.mrb[0].mxu0
      %v2305 = vpop.f32.mrb[0].mxu0
      %v2306 = vadd.f32 0.0, %v2305
      %v2307 = vpop.f32.mrb[0].mxu0
      %2308 = vmatprep.mubr.bf16.mxu0 0
      %2309 = vmatmul.mubr.bf16.gmra.mrb[0].mxu0 %v2150
      %v2310 = vpop.f32.mrb[0].mxu0
      %v2311 = vadd.f32 0.0, %v2310
      %v2312 = vpop.f32.mrb[0].mxu0
      %v2313 = vpop.f32.mrb[0].mxu0
      %v2314 = vadd.f32 0.0, %v2313
      %v2315 = vpop.f32.mrb[0].mxu0
      %2316 = vdwg.mxu0
      %2317 = vst.msk [vmem:[%s273] sm:$0xff] %vm2103, %v2191
      %2318 = vst.msk [vmem:[%s273 + $0x8] sm:$0xff] %vm2103, %v2194
      %2319 = vst.msk [vmem:[%s273 + $0x10] sm:$0xff] %vm2103, %v2199
      %2320 = vst.msk [vmem:[%s273 + $0x18] sm:$0xff] %vm2103, %v2202
      %2321 = vst.msk [vmem:[%s273 + $0x20] sm:$0xff] %vm2103, %v2207
      %2322 = vst.msk [vmem:[%s273 + $0x28] sm:$0xff] %vm2103, %v2210
      %2323 = vst.msk [vmem:[%s273 + $0x30] sm:$0xff] %vm2103, %v2215
      %2324 = vst.msk [vmem:[%s273 + $0x38] sm:$0xff] %vm2103, %v2218
      %2325 = vst.msk [vmem:[%s273 + $0x40] sm:$0xff] %vm2103, %v2223
      %2326 = vst.msk [vmem:[%s273 + $0x48] sm:$0xff] %vm2103, %v2226
      %2327 = vst.msk [vmem:[%s273 + $0x50] sm:$0xff] %vm2103, %v2231
      %2328 = vst.msk [vmem:[%s273 + $0x58] sm:$0xff] %vm2103, %v2234
      %2329 = vst.msk [vmem:[%s273 + $0x60] sm:$0xff] %vm2103, %v2239
      %2330 = vst.msk [vmem:[%s273 + $0x68] sm:$0xff] %vm2103, %v2242
      %2331 = vst.msk [vmem:[%s273 + $0x70] sm:$0xff] %vm2103, %v2247
      %2332 = vst.msk [vmem:[%s273 + $0x78] sm:$0xff] %vm2103, %v2250
      %2333 = vst.msk [vmem:[%s273 + $0x80] sm:$0xff] %vm2103, %v2255
      %2334 = vst.msk [vmem:[%s273 + $0x88] sm:$0xff] %vm2103, %v2258
      %2335 = vst.msk [vmem:[%s273 + $0x90] sm:$0xff] %vm2103, %v2263
      %2336 = vst.msk [vmem:[%s273 + $0x98] sm:$0xff] %vm2103, %v2266
      %2337 = vst.msk [vmem:[%s273 + $0xa0] sm:$0xff] %vm2103, %v2271
      %2338 = vst.msk [vmem:[%s273 + $0xa8] sm:$0xff] %vm2103, %v2274
      %2339 = vst.msk [vmem:[%s273 + $0xb0] sm:$0xff] %vm2103, %v2279
      %2340 = vst.msk [vmem:[%s273 + $0xb8] sm:$0xff] %vm2103, %v2282
      %2341 = vst.msk [vmem:[%s273 + $0xc0] sm:$0xff] %vm2103, %v2287
      %2342 = vst.msk [vmem:[%s273 + $0xc8] sm:$0xff] %vm2103, %v2290
      %2343 = vst.msk [vmem:[%s273 + $0xd0] sm:$0xff] %vm2103, %v2295
      %2344 = vst.msk [vmem:[%s273 + $0xd8] sm:$0xff] %vm2103, %v2298
      %2345 = vst.msk [vmem:[%s273 + $0xe0] sm:$0xff] %vm2103, %v2303
      %2346 = vst.msk [vmem:[%s273 + $0xe8] sm:$0xff] %vm2103, %v2306
      %2347 = vst.msk [vmem:[%s273 + $0xf0] sm:$0xff] %vm2103, %v2311
      %2348 = vst.msk [vmem:[%s273 + $0xf8] sm:$0xff] %vm2103, %v2314
      %v2349 = vld [vmem:[%s6] sm:$0x1]
      %v2350 = vsel %vm2103, %v2191, 0.0
      %v2351 = vsel %vm2103, %v2194, 0.0
      %v2352 = vadd.f32 %v2350, %v2351
      %v2353 = vsel %vm2103, %v2199, 0.0
      %v2354 = vadd.f32 %v2352, %v2353
      %v2355 = vsel %vm2103, %v2202, 0.0
      %v2356 = vadd.f32 %v2354, %v2355
      %v2357 = vsel %vm2103, %v2207, 0.0
      %v2358 = vadd.f32 %v2356, %v2357
      %v2359 = vsel %vm2103, %v2210, 0.0
      %v2360 = vadd.f32 %v2358, %v2359
      %v2361 = vsel %vm2103, %v2215, 0.0
      %v2362 = vadd.f32 %v2360, %v2361
      %v2363 = vsel %vm2103, %v2218, 0.0
      %v2364 = vadd.f32 %v2362, %v2363
      %v2365 = vsel %vm2103, %v2223, 0.0
      %v2366 = vadd.f32 %v2364, %v2365
      %v2367 = vsel %vm2103, %v2226, 0.0
      %v2368 = vadd.f32 %v2366, %v2367
      %v2369 = vsel %vm2103, %v2231, 0.0
      %v2370 = vadd.f32 %v2368, %v2369
      %v2371 = vsel %vm2103, %v2234, 0.0
      %v2372 = vadd.f32 %v2370, %v2371
      %v2373 = vsel %vm2103, %v2239, 0.0
      %v2374 = vadd.f32 %v2372, %v2373
      %v2375 = vsel %vm2103, %v2242, 0.0
      %v2376 = vadd.f32 %v2374, %v2375
      %v2377 = vsel %vm2103, %v2247, 0.0
      %v2378 = vadd.f32 %v2376, %v2377
      %v2379 = vsel %vm2103, %v2250, 0.0
      %v2380 = vadd.f32 %v2378, %v2379
      %v2381 = vsel %vm2103, %v2255, 0.0
      %v2382 = vadd.f32 %v2380, %v2381
      %v2383 = vsel %vm2103, %v2258, 0.0
      %v2384 = vadd.f32 %v2382, %v2383
      %v2385 = vsel %vm2103, %v2263, 0.0
      %v2386 = vadd.f32 %v2384, %v2385
      %v2387 = vsel %vm2103, %v2266, 0.0
      %v2388 = vadd.f32 %v2386, %v2387
      %v2389 = vsel %vm2103, %v2271, 0.0
      %v2390 = vadd.f32 %v2388, %v2389
      %v2391 = vsel %vm2103, %v2274, 0.0
      %v2392 = vadd.f32 %v2390, %v2391
      %v2393 = vsel %vm2103, %v2279, 0.0
      %v2394 = vadd.f32 %v2392, %v2393
      %v2395 = vsel %vm2103, %v2282, 0.0
      %v2396 = vadd.f32 %v2394, %v2395
      %v2397 = vsel %vm2103, %v2287, 0.0
      %v2398 = vadd.f32 %v2396, %v2397
      %v2399 = vsel %vm2103, %v2290, 0.0
      %v2400 = vadd.f32 %v2398, %v2399
      %v2401 = vsel %vm2103, %v2295, 0.0
      %v2402 = vadd.f32 %v2400, %v2401
      %v2403 = vsel %vm2103, %v2298, 0.0
      %v2404 = vadd.f32 %v2402, %v2403
      %v2405 = vsel %vm2103, %v2303, 0.0
      %v2406 = vadd.f32 %v2404, %v2405
      %v2407 = vsel %vm2103, %v2306, 0.0
      %v2408 = vadd.f32 %v2406, %v2407
      %v2409 = vsel %vm2103, %v2311, 0.0
      %v2410 = vadd.f32 %v2408, %v2409
      %v2411 = vsel %vm2103, %v2314, 0.0
      %v2412 = vadd.f32 %v2410, %v2411
      %v2413 = vrot.slane %v2412, 4
      %v2414 = vadd.f32 %v2412, %v2413
      %v2415 = vrot.slane %v2414, 2
      %v2416 = vadd.f32 %v2414, %v2415
      %v2417 = vrot.slane %v2416, 1
      %v2418 = vadd.f32 %v2416, %v2417
      %v2419 = vadd.f32 %v2349, %v2418
      %vm2420 = vcmask 57344
      %2421 = vst.msk [vmem:[%s6] sm:$0x1] %vm2420, %v2419
      %v2422 = vld [vmem:[%s7] sm:$0x1]
      %v2423 = vmul.f32 %v2191, %v2191
      %v2424 = vmul.f32 %v2194, %v2194
      %v2425 = vmul.f32 %v2199, %v2199
      %v2426 = vmul.f32 %v2202, %v2202
      %v2427 = vmul.f32 %v2207, %v2207
      %v2428 = vmul.f32 %v2210, %v2210
      %v2429 = vmul.f32 %v2215, %v2215
      %v2430 = vmul.f32 %v2218, %v2218
      %v2431 = vmul.f32 %v2223, %v2223
      %v2432 = vmul.f32 %v2226, %v2226
      %v2433 = vmul.f32 %v2231, %v2231
      %v2434 = vmul.f32 %v2234, %v2234
      %v2435 = vmul.f32 %v2239, %v2239
      %v2436 = vmul.f32 %v2242, %v2242
      %v2437 = vmul.f32 %v2247, %v2247
      %v2438 = vmul.f32 %v2250, %v2250
      %v2439 = vmul.f32 %v2255, %v2255
      %v2440 = vmul.f32 %v2258, %v2258
      %v2441 = vmul.f32 %v2263, %v2263
      %v2442 = vmul.f32 %v2266, %v2266
      %v2443 = vmul.f32 %v2271, %v2271
      %v2444 = vmul.f32 %v2274, %v2274
      %v2445 = vmul.f32 %v2279, %v2279
      %v2446 = vmul.f32 %v2282, %v2282
      %v2447 = vmul.f32 %v2287, %v2287
      %v2448 = vmul.f32 %v2290, %v2290
      %v2449 = vmul.f32 %v2295, %v2295
      %v2450 = vmul.f32 %v2298, %v2298
      %v2451 = vmul.f32 %v2303, %v2303
      %v2452 = vmul.f32 %v2306, %v2306
      %v2453 = vmul.f32 %v2311, %v2311
      %v2454 = vmul.f32 %v2314, %v2314
      %v2455 = vsel %vm2103, %v2423, 0.0
      %v2456 = vsel %vm2103, %v2424, 0.0
      %v2457 = vadd.f32 %v2455, %v2456
      %v2458 = vsel %vm2103, %v2425, 0.0
      %v2459 = vadd.f32 %v2457, %v2458
      %v2460 = vsel %vm2103, %v2426, 0.0
      %v2461 = vadd.f32 %v2459, %v2460
      %v2462 = vsel %vm2103, %v2427, 0.0
      %v2463 = vadd.f32 %v2461, %v2462
      %v2464 = vsel %vm2103, %v2428, 0.0
      %v2465 = vadd.f32 %v2463, %v2464
      %v2466 = vsel %vm2103, %v2429, 0.0
      %v2467 = vadd.f32 %v2465, %v2466
      %v2468 = vsel %vm2103, %v2430, 0.0
      %v2469 = vadd.f32 %v2467, %v2468
      %v2470 = vsel %vm2103, %v2431, 0.0
      %v2471 = vadd.f32 %v2469, %v2470
      %v2472 = vsel %vm2103, %v2432, 0.0
      %v2473 = vadd.f32 %v2471, %v2472
      %v2474 = vsel %vm2103, %v2433, 0.0
      %v2475 = vadd.f32 %v2473, %v2474
      %v2476 = vsel %vm2103, %v2434, 0.0
      %v2477 = vadd.f32 %v2475, %v2476
      %v2478 = vsel %vm2103, %v2435, 0.0
      %v2479 = vadd.f32 %v2477, %v2478
      %v2480 = vsel %vm2103, %v2436, 0.0
      %v2481 = vadd.f32 %v2479, %v2480
      %v2482 = vsel %vm2103, %v2437, 0.0
      %v2483 = vadd.f32 %v2481, %v2482
      %v2484 = vsel %vm2103, %v2438, 0.0
      %v2485 = vadd.f32 %v2483, %v2484
      %v2486 = vsel %vm2103, %v2439, 0.0
      %v2487 = vadd.f32 %v2485, %v2486
      %v2488 = vsel %vm2103, %v2440, 0.0
      %v2489 = vadd.f32 %v2487, %v2488
      %v2490 = vsel %vm2103, %v2441, 0.0
      %v2491 = vadd.f32 %v2489, %v2490
      %v2492 = vsel %vm2103, %v2442, 0.0
      %v2493 = vadd.f32 %v2491, %v2492
      %v2494 = vsel %vm2103, %v2443, 0.0
      %v2495 = vadd.f32 %v2493, %v2494
      %v2496 = vsel %vm2103, %v2444, 0.0
      %v2497 = vadd.f32 %v2495, %v2496
      %v2498 = vsel %vm2103, %v2445, 0.0
      %v2499 = vadd.f32 %v2497, %v2498
      %v2500 = vsel %vm2103, %v2446, 0.0
      %v2501 = vadd.f32 %v2499, %v2500
      %v2502 = vsel %vm2103, %v2447, 0.0
      %v2503 = vadd.f32 %v2501, %v2502
      %v2504 = vsel %vm2103, %v2448, 0.0
      %v2505 = vadd.f32 %v2503, %v2504
      %v2506 = vsel %vm2103, %v2449, 0.0
      %v2507 = vadd.f32 %v2505, %v2506
      %v2508 = vsel %vm2103, %v2450, 0.0
      %v2509 = vadd.f32 %v2507, %v2508
      %v2510 = vsel %vm2103, %v2451, 0.0
      %v2511 = vadd.f32 %v2509, %v2510
      %v2512 = vsel %vm2103, %v2452, 0.0
      %v2513 = vadd.f32 %v2511, %v2512
      %v2514 = vsel %vm2103, %v2453, 0.0
      %v2515 = vadd.f32 %v2513, %v2514
      %v2516 = vsel %vm2103, %v2454, 0.0
      %v2517 = vadd.f32 %v2515, %v2516
      %v2518 = vrot.slane %v2517, 4
      %v2519 = vadd.f32 %v2517, %v2518
      %v2520 = vrot.slane %v2519, 2
      %v2521 = vadd.f32 %v2519, %v2520
      %v2522 = vrot.slane %v2521, 1
      %v2523 = vadd.f32 %v2521, %v2522
      %v2524 = vadd.f32 %v2422, %v2523
      %2525 = vst.msk [vmem:[%s7] sm:$0x1] %vm2420, %v2524
      %p2526 = scmp.lt.s32.totalorder %s19, 1
      %s2527 = scalar_select %p2526, %s19, 1
      %s2528 = smul.addr %s2527, 32
      %s2529 = smul.addr %s2528, 8
      %s2530 = scalar_lea.vmem %s5, %s2529
      // Predicated region
      $region45: #{block_forward.8} parent=39 // pred_check
        %p2531 = pneg %p147
      $region46: #{block_forward.8} parent=39 // pred_check_branch
        %2533 = sbr.rel (%p2531) target = $region48
      $region47: #{block_forward.8} parent=39 // pred_region
        _
      $region48: #{block_forward.8} parent=39 // pred_fallthru
        _
      // Predicated region
      $region49: #{block_forward.8} parent=39 // pred_check
        %p2534 = pneg %p168
      $region50: #{block_forward.8} parent=39 // pred_check_branch
        %2536 = sbr.rel (%p2534) target = $region52
      $region51: #{block_forward.8} parent=39 // pred_region
        _
      $region52: #{block_forward.8} parent=39 // pred_fallthru
        _
      // Predicated region
      $region53: #{block_forward.8} parent=39 // pred_check
        %p2537 = pneg %p189
      $region54: #{block_forward.8} parent=39 // pred_check_branch
        %2539 = sbr.rel (%p2537) target = $region56
      $region55: #{block_forward.8} parent=39 // pred_region
        _
      $region56: #{block_forward.8} parent=39 // pred_fallthru
        _
      // Predicated region
      $region57: #{block_forward.8} parent=39 // pred_check
        %p2540 = pneg %p168
      $region58: #{block_forward.8} parent=39 // pred_check_branch
        %2542 = sbr.rel (%p2540) target = $region60
      $region59: #{block_forward.8} parent=39 // pred_region
        _
      $region60: #{block_forward.8} parent=39 // pred_fallthru
        _
      // Predicated region
      $region61: #{block_forward.8} parent=39 // pred_check
        %p2543 = pneg %p189
      $region62: #{block_forward.8} parent=39 // pred_check_branch
        %2545 = sbr.rel (%p2543) target = $region64
      $region63: #{block_forward.8} parent=39 // pred_region
        _
      $region64: #{block_forward.8} parent=39 // pred_fallthru
        _
    $region40: #{block_forward.8} parent=5 // pred_fallthru
      _
    %p2546 = scmp.le.s32.totalorder 2, %s14
    // Predicated region
    $region65: #{block_forward.8} parent=5 // pred_check
      %p2547 = pneg %p2546
    $region66: #{block_forward.8} parent=5 // pred_check_branch
      %2549 = sbr.rel (%p2547) target = $region68
    $region67: #{block_forward.8} parent=5 // pred_region
      %s2550 = ssub.s32 %s14, 2
      // Predicated region
      $region69: #{block_forward.8} parent=67 // pred_check
        %p2551 = pneg %p153
      $region70: #{block_forward.8} parent=67 // pred_check_branch
        %2553 = sbr.rel (%p2551) target = $region72
      $region71: #{block_forward.8} parent=67 // pred_region
        %p2554 = scmp.lt.s32.totalorder %s20, 1
        %s2555 = scalar_select %p2554, %s20, 1
        %s2556 = smul.addr %s2555, 32
        %s2557 = smul.addr %s2556, 8
        %s2558 = scalar_lea.vmem %s5, %s2557
      $region72: #{block_forward.8} parent=67 // pred_fallthru
        _
    $region68: #{block_forward.8} parent=5 // pred_fallthru
      _
  $region6: #{block_forward.8} parent=0 // loop_footer
    %s18 = sadd.s32 1, %s14
  $region7: #{block_forward.8} parent=0 // loop_footer_branch
    %13 = sbr.rel target = $region3
  $region8: #{block_forward.8} parent=0 // loop_exit
    _

// kernel: block_forward.7
$region0: #{block_forward.7}
  #allocation0 [shape = 'u32[]', space=smem, size = 0x4, offset = 0x4, fixed_abs, tag = 'smem constant byte address 0x4 - core index']
  #allocation1 [shape = 'u32[144,128]{1,0:T(1,128)}', space=vmem, size = 0x12000, scoped, tag = 'internal scratch']
  %s0 = inlined_call_operand.vmem [shape: f32[2,18,18,8], index: 0, kind: input, shape index: {}]
  %s1 = inlined_call_operand.vmem [shape: f32[9,8], index: 1, kind: input, shape index: {}]
  %s2 = inlined_call_operand.vmem [shape: f32[1,8], index: 2, kind: output, shape index: {0}]
  %s3 = inlined_call_operand.vmem [shape: f32[1,8], index: 3, kind: output, shape index: {1}]
  %4 = xla_tuple %s2, %s3
  %s5 = sld [smem:[#allocation0]]
  $region53: #{block_forward.7} parent=0
    _
  %s7 = ssub.s32 1, %s5
  %s8 = scalar_select 0, %s7, %s5
  loop: start=0, step=1, limit=4
  $region2: #{block_forward.7} parent=0 // loop_pre_header
    _
  $region3: #{block_forward.7} parent=0 // loop_header
    %s10 = sphi 0, %s14
    %p11 = scmp.ge.s32.totalorder %s10, 4
    %s20 = sphi 0, %s22
    %s23 = sphi 0, %s20
    %s24 = sphi 0, %s23
    %s40 = sphi 0, %s24
    %s44 = sphi 0, %s44
    %s46 = sphi 0, %s44
    %s47 = sphi 0, %s46
    %s61 = sphi 0, %s47
    %s65 = sphi 0, %s65
    %s67 = sphi 0, %s65
    %s68 = sphi 0, %s67
    %s82 = sphi 0, %s68
    %s86 = sphi 0, %s86
    %s88 = sphi 0, %s86
    %s89 = sphi 0, %s88
    %s103 = sphi 0, %s89
  $region4: #{block_forward.7} parent=0 // loop_header_branch
    %13 = sbr.rel (%p11) target = $region8
  $region5: #{block_forward.7} parent=0 // loop_body
    %s15 = ssub.s32 %s10, 1
    %s16 = ssub.s32 %s10, 2
    %s17 = sadd.s32 %s10, 1
    %s18 = ssub.s32 %s10, %s17
    %p19 = scmp.eq.s32.totalorder %s18, 0
    %s21 = sadd.s32 %s20, 1
    %s22 = scalar_select %p19, %s20, %s21
    %p25 = pneg %p19
    %p26 = scmp.eq.s32.totalorder %s10, 1
    %p27 = por %p25, %p26
    %p28 = scmp.ne.s32.totalorder %s20, %s23
    %p29 = scmp.eq.s32.totalorder %s10, 0
    %p30 = por %p28, %p29
    %p31 = scmp.ne.s32.totalorder %s20, %s23
    %p32 = scmp.eq.s32.totalorder %s15, 1
    %p33 = por %p31, %p32
    %p34 = scmp.ne.s32.totalorder %s23, %s24
    %p35 = scmp.eq.s32.totalorder %s15, 0
    %p36 = por %p34, %p35
    %p37 = scmp.ne.s32.totalorder %s23, %s24
    %p38 = scmp.eq.s32.totalorder %s16, 1
    %p39 = por %p37, %p38
    %p41 = scmp.ne.s32.totalorder %s24, %s40
    %p42 = scmp.eq.s32.totalorder %s16, 0
    %p43 = por %p41, %p42
    %s45 = sadd.s32 %s44, 1
    %p48 = scmp.eq.s32.totalorder %s10, 1
    %p49 = scmp.ne.s32.totalorder %s44, %s46
    %p50 = scmp.eq.s32.totalorder %s10, 0
    %p51 = por %p49, %p50
    %p52 = scmp.ne.s32.totalorder %s44, %s46
    %p53 = scmp.eq.s32.totalorder %s15, 1
    %p54 = por %p52, %p53
    %p55 = scmp.ne.s32.totalorder %s46, %s47
    %p56 = scmp.eq.s32.totalorder %s15, 0
    %p57 = por %p55, %p56
    %p58 = scmp.ne.s32.totalorder %s46, %s47
    %p59 = scmp.eq.s32.totalorder %s16, 1
    %p60 = por %p58, %p59
    %p62 = scmp.ne.s32.totalorder %s47, %s61
    %p63 = scmp.eq.s32.totalorder %s16, 0
    %p64 = por %p62, %p63
    %s66 = sadd.s32 %s65, 1
    %p69 = scmp.eq.s32.totalorder %s10, 1
    %p70 = scmp.ne.s32.totalorder %s65, %s67
    %p71 = scmp.eq.s32.totalorder %s10, 0
    %p72 = por %p70, %p71
    %p73 = scmp.ne.s32.totalorder %s65, %s67
    %p74 = scmp.eq.s32.totalorder %s15, 1
    %p75 = por %p73, %p74
    %p76 = scmp.ne.s32.totalorder %s67, %s68
    %p77 = scmp.eq.s32.totalorder %s15, 0
    %p78 = por %p76, %p77
    %p79 = scmp.ne.s32.totalorder %s67, %s68
    %p80 = scmp.eq.s32.totalorder %s16, 1
    %p81 = por %p79, %p80
    %p83 = scmp.ne.s32.totalorder %s68, %s82
    %p84 = scmp.eq.s32.totalorder %s16, 0
    %p85 = por %p83, %p84
    %s87 = sadd.s32 %s86, 1
    %p90 = scmp.eq.s32.totalorder %s10, 1
    %p91 = scmp.ne.s32.totalorder %s86, %s88
    %p92 = scmp.eq.s32.totalorder %s10, 0
    %p93 = por %p91, %p92
    %p94 = scmp.ne.s32.totalorder %s86, %s88
    %p95 = scmp.eq.s32.totalorder %s15, 1
    %p96 = por %p94, %p95
    %p97 = scmp.ne.s32.totalorder %s88, %s89
    %p98 = scmp.eq.s32.totalorder %s15, 0
    %p99 = por %p97, %p98
    %p100 = scmp.ne.s32.totalorder %s88, %s89
    %p101 = scmp.eq.s32.totalorder %s16, 1
    %p102 = por %p100, %p101
    %p104 = scmp.ne.s32.totalorder %s89, %s103
    %p105 = scmp.eq.s32.totalorder %s16, 0
    %p106 = por %p104, %p105
    %p107 = scmp.le.s32.totalorder 1, %s10
    %p108 = scmp.lt.s32.totalorder %s10, 3
    %p109 = pnand %p107, %p108
    %p110 = pneg %p109
    // Predicated region
    $region9: #{block_forward.7} parent=5 // pred_check
      _
    $region10: #{block_forward.7} parent=5 // pred_check_branch
      %112 = sbr.rel (%p109) target = $region12
    $region11: #{block_forward.7} parent=5 // pred_region
      %s113 = ssub.s32 %s10, 1
      // Predicated region
      $region13: #{block_forward.7} parent=11 // pred_check
        %p114 = pneg %p57
      $region14: #{block_forward.7} parent=11 // pred_check_branch
        %116 = sbr.rel (%p114) target = $region16
      $region15: #{block_forward.7} parent=11 // pred_region
        _
      $region16: #{block_forward.7} parent=11 // pred_fallthru
        _
    $region12: #{block_forward.7} parent=5 // pred_fallthru
      _
    %p117 = scmp.lt.s32.totalorder %s10, 2
    // Predicated region
    $region17: #{block_forward.7} parent=5 // pred_check
      %p118 = pneg %p117
    $region18: #{block_forward.7} parent=5 // pred_check_branch
      %120 = sbr.rel (%p118) target = $region20
    $region19: #{block_forward.7} parent=5 // pred_region
      // Predicated region
      $region21: #{block_forward.7} parent=19 // pred_check
        %p121 = pneg %p30
      $region22: #{block_forward.7} parent=19 // pred_check_branch
        %123 = sbr.rel (%p121) target = $region24
      $region23: #{block_forward.7} parent=19 // pred_region
        %p124 = scmp.lt.s32.totalorder %s10, 1
        %s125 = scalar_select %p124, %s10, 1
        %s126 = smul.addr %s125, 54
        %s127 = smul.addr %s126, 8
        %s128 = scalar_lea.vmem %s0, %s127
      $region24: #{block_forward.7} parent=19 // pred_fallthru
        _
    $region20: #{block_forward.7} parent=5 // pred_fallthru
      _
    %p129 = scmp.le.s32.totalorder 1, %s10
    %p130 = scmp.lt.s32.totalorder %s10, 3
    %p131 = pnand %p129, %p130
    %p132 = pneg %p131
    // Predicated region
    $region25: #{block_forward.7} parent=5 // pred_check
      _
    $region26: #{block_forward.7} parent=5 // pred_check_branch
      %134 = sbr.rel (%p131) target = $region28
    $region27: #{block_forward.7} parent=5 // pred_region
      %s135 = ssub.s32 %s10, 1
      %p136 = scmp.lt.s32.totalorder %s15, 1
      %s137 = scalar_select %p136, %s15, 1
      %s138 = smul.addr %s137, 54
      %s139 = smul.addr %s138, 8
      %s140 = scalar_lea.vmem %s0, %s139
      %p141 = pneg %p36
      %p142 = pneg %p33
      %p143 = pneg %p57
      %p144 = pneg %p54
      %p145 = pneg %p78
      %p146 = pneg %p75
      %p147 = pneg %p99
      %p148 = pneg %p96
      %p149 = scmp.lt.s32.totalorder %s15, 1
      %s150 = scalar_select %p149, %s15, 1
      %s151 = smul.addr %s150, 54
      %s152 = smul.addr %s151, 8
      %s153 = scalar_lea.vmem %s0, %s152
      %p154 = scmp.eq.s32.totalorder %s15, 0
      // Predicated region
      $region29: #{block_forward.7} parent=27 // pred_check
        %p155 = pneg %p154
      $region30: #{block_forward.7} parent=27 // pred_check_branch
        %157 = sbr.rel (%p155) target = $region32
      $region31: #{block_forward.7} parent=27 // pred_region
        %vm158 = vcmask 57344
        %159 = vst.msk [vmem:[%s2] sm:$0x1] %vm158, 0.0
        %160 = vst.msk [vmem:[%s3] sm:$0x1] %vm158, 0.0
      $region32: #{block_forward.7} parent=27 // pred_fallthru
        _
      %v161 = vld [vmem:[%s153] sm:$0xff]
      %v162 = vld [vmem:[%s153 + $0x8] sm:$0xff]
      %v163 = vld [vmem:[%s153 + $0x10] sm:$0x3]
      %v164 = vld [vmem:[%s153 + $0x18] sm:$0xff]
      %v165 = vld [vmem:[%s153 + $0x20] sm:$0xff]
      %v166 = vld [vmem:[%s153 + $0x28] sm:$0x3]
      %v167 = vld [vmem:[%s153 + $0x30] sm:$0xff]
      %v168 = vld [vmem:[%s153 + $0x38] sm:$0xff]
      %v169 = vld [vmem:[%s153 + $0x40] sm:$0x3]
      %v170 = vld [vmem:[%s153 + $0x48] sm:$0xff]
      %v171 = vld [vmem:[%s153 + $0x50] sm:$0xff]
      %v172 = vld [vmem:[%s153 + $0x58] sm:$0x3]
      %v173 = vld [vmem:[%s153 + $0x60] sm:$0xff]
      %v174 = vld [vmem:[%s153 + $0x68] sm:$0xff]
      %v175 = vld [vmem:[%s153 + $0x70] sm:$0x3]
      %v176 = vld [vmem:[%s153 + $0x78] sm:$0xff]
      %v177 = vld [vmem:[%s153 + $0x80] sm:$0xff]
      %v178 = vld [vmem:[%s153 + $0x88] sm:$0x3]
      %v179 = vld [vmem:[%s153 + $0x90] sm:$0xff]
      %v180 = vld [vmem:[%s153 + $0x98] sm:$0xff]
      %v181 = vld [vmem:[%s153 + $0xa0] sm:$0x3]
      %v182 = vld [vmem:[%s153 + $0xa8] sm:$0xff]
      %v183 = vld [vmem:[%s153 + $0xb0] sm:$0xff]
      %v184 = vld [vmem:[%s153 + $0xb8] sm:$0x3]
      %v185 = vld [vmem:[%s153 + $0xc0] sm:$0xff]
      %v186 = vld [vmem:[%s153 + $0xc8] sm:$0xff]
      %v187 = vld [vmem:[%s153 + $0xd0] sm:$0x3]
      %v188 = vld [vmem:[%s153 + $0xd8] sm:$0xff]
      %v189 = vld [vmem:[%s153 + $0xe0] sm:$0xff]
      %v190 = vld [vmem:[%s153 + $0xe8] sm:$0x3]
      %v191 = vld [vmem:[%s153 + $0xf0] sm:$0xff]
      %v192 = vld [vmem:[%s153 + $0xf8] sm:$0xff]
      %v193 = vld [vmem:[%s153 + $0x100] sm:$0x3]
      %v194 = vld [vmem:[%s153 + $0x108] sm:$0xff]
      %v195 = vld [vmem:[%s153 + $0x110] sm:$0xff]
      %v196 = vld [vmem:[%s153 + $0x118] sm:$0x3]
      %v197 = vld [vmem:[%s153 + $0x120] sm:$0xff]
      %v198 = vld [vmem:[%s153 + $0x128] sm:$0xff]
      %v199 = vld [vmem:[%s153 + $0x130] sm:$0x3]
      %v200 = vld [vmem:[%s153 + $0x138] sm:$0xff]
      %v201 = vld [vmem:[%s153 + $0x140] sm:$0xff]
      %v202 = vld [vmem:[%s153 + $0x148] sm:$0x3]
      %v203 = vld [vmem:[%s153 + $0x150] sm:$0xff]
      %v204 = vld [vmem:[%s153 + $0x158] sm:$0xff]
      %v205 = vld [vmem:[%s153 + $0x160] sm:$0x3]
      %v206 = vld [vmem:[%s153 + $0x168] sm:$0xff]
      %v207 = vld [vmem:[%s153 + $0x170] sm:$0xff]
      %v208 = vld [vmem:[%s153 + $0x178] sm:$0x3]
      %v209 = vld [vmem:[%s153 + $0x180] sm:$0xff]
      %v210 = vld [vmem:[%s153 + $0x188] sm:$0xff]
      %v211 = vld [vmem:[%s153 + $0x190] sm:$0x3]
      %v212 = vld [vmem:[%s153 + $0x198] sm:$0xff]
      %v213 = vld [vmem:[%s153 + $0x1a0] sm:$0xff]
      %v214 = vld [vmem:[%s153 + $0x1a8] sm:$0x3]
      %v215 = vld [vmem:[%s1] sm:$0xff]
      %v216 = vld [vmem:[%s1 + $0x8] sm:$0x1]
      %v217 = vlaneseq
      %v218 = vshrl.u32 %v217, 7
      %v219 = vsub.s32 0, %v218
      %v220 = vrot.slane %v215, %v219
      %v221 = vmul.f32 %v161, %v220
      %v222 = vmul.f32 %v162, %v220
      %v223 = vmul.f32 %v164, %v220
      %v224 = vmul.f32 %v165, %v220
      %v225 = vmul.f32 %v167, %v220
      %v226 = vmul.f32 %v168, %v220
      %v227 = vmul.f32 %v170, %v220
      %v228 = vmul.f32 %v171, %v220
      %v229 = vmul.f32 %v173, %v220
      %v230 = vmul.f32 %v174, %v220
      %v231 = vmul.f32 %v176, %v220
      %v232 = vmul.f32 %v177, %v220
      %v233 = vmul.f32 %v179, %v220
      %v234 = vmul.f32 %v180, %v220
      %v235 = vmul.f32 %v182, %v220
      %v236 = vmul.f32 %v183, %v220
      %v237 = vmul.f32 %v185, %v220
      %v238 = vmul.f32 %v186, %v220
      %v239 = vmul.f32 %v188, %v220
      %v240 = vmul.f32 %v189, %v220
      %v241 = vmul.f32 %v191, %v220
      %v242 = vmul.f32 %v192, %v220
      %v243 = vmul.f32 %v194, %v220
      %v244 = vmul.f32 %v195, %v220
      %v245 = vmul.f32 %v197, %v220
      %v246 = vmul.f32 %v198, %v220
      %v247 = vmul.f32 %v200, %v220
      %v248 = vmul.f32 %v201, %v220
      %v249 = vmul.f32 %v203, %v220
      %v250 = vmul.f32 %v204, %v220
      %v251 = vmul.f32 %v206, %v220
      %v252 = vmul.f32 %v207, %v220
      %v253 = vlaneseq
      %v254 = vshrl.u32 %v253, 7
      %v255 = vsub.s32 1, %v254
      %v256 = vrot.slane %v215, %v255
      %v257 = vmul.f32 %v161, %v256
      %v258 = vmul.f32 %v162, %v256
      %v259 = vmul.f32 %v163, %v256
      %v260 = vmul.f32 %v164, %v256
      %v261 = vmul.f32 %v165, %v256
      %v262 = vmul.f32 %v166, %v256
      %v263 = vmul.f32 %v167, %v256
      %v264 = vmul.f32 %v168, %v256
      %v265 = vmul.f32 %v169, %v256
      %v266 = vmul.f32 %v170, %v256
      %v267 = vmul.f32 %v171, %v256
      %v268 = vmul.f32 %v172, %v256
      %v269 = vmul.f32 %v173, %v256
      %v270 = vmul.f32 %v174, %v256
      %v271 = vmul.f32 %v175, %v256
      %v272 = vmul.f32 %v176, %v256
      %v273 = vmul.f32 %v177, %v256
      %v274 = vmul.f32 %v178, %v256
      %v275 = vmul.f32 %v179, %v256
      %v276 = vmul.f32 %v180, %v256
      %v277 = vmul.f32 %v181, %v256
      %v278 = vmul.f32 %v182, %v256
      %v279 = vmul.f32 %v183, %v256
      %v280 = vmul.f32 %v184, %v256
      %v281 = vmul.f32 %v185, %v256
      %v282 = vmul.f32 %v186, %v256
      %v283 = vmul.f32 %v187, %v256
      %v284 = vmul.f32 %v188, %v256
      %v285 = vmul.f32 %v189, %v256
      %v286 = vmul.f32 %v190, %v256
      %v287 = vmul.f32 %v191, %v256
      %v288 = vmul.f32 %v192, %v256
      %v289 = vmul.f32 %v193, %v256
      %v290 = vmul.f32 %v194, %v256
      %v291 = vmul.f32 %v195, %v256
      %v292 = vmul.f32 %v196, %v256
      %v293 = vmul.f32 %v197, %v256
      %v294 = vmul.f32 %v198, %v256
      %v295 = vmul.f32 %v199, %v256
      %v296 = vmul.f32 %v200, %v256
      %v297 = vmul.f32 %v201, %v256
      %v298 = vmul.f32 %v202, %v256
      %v299 = vmul.f32 %v203, %v256
      %v300 = vmul.f32 %v204, %v256
      %v301 = vmul.f32 %v205, %v256
      %v302 = vmul.f32 %v206, %v256
      %v303 = vmul.f32 %v207, %v256
      %v304 = vmul.f32 %v208, %v256
      %vm353 = vcmask 1046528
      %v354 = vrot.slane %v257, 1
      %v355 = vrot.slane %v258, 1
      %v356 = vsel %vm353, %v354, %v355
      %v357 = vrot.slane %v259, 1
      %v358 = vsel %vm353, %v355, %v357
      %v359 = vrot.slane %v260, 1
      %v360 = vrot.slane %v261, 1
      %v361 = vsel %vm353, %v359, %v360
      %v362 = vrot.slane %v262, 1
      %v363 = vsel %vm353, %v360, %v362
      %v364 = vrot.slane %v263, 1
      %v365 = vrot.slane %v264, 1
      %v366 = vsel %vm353, %v364, %v365
      %v367 = vrot.slane %v265, 1
      %v368 = vsel %vm353, %v365, %v367
      %v369 = vrot.slane %v266, 1
      %v370 = vrot.slane %v267, 1
      %v371 = vsel %vm353, %v369, %v370
      %v372 = vrot.slane %v268, 1
      %v373 = vsel %vm353, %v370, %v372
      %v374 = vrot.slane %v269, 1
      %v375 = vrot.slane %v270, 1
      %v376 = vsel %vm353, %v374, %v375
      %v377 = vrot.slane %v271, 1
      %v378 = vsel %vm353, %v375, %v377
      %v379 = vrot.slane %v272, 1
      %v380 = vrot.slane %v273, 1
      %v381 = vsel %vm353, %v379, %v380
      %v382 = vrot.slane %v274, 1
      %v383 = vsel %vm353, %v380, %v382
      %v384 = vrot.slane %v275, 1
      %v385 = vrot.slane %v276, 1
      %v386 = vsel %vm353, %v384, %v385
      %v387 = vrot.slane %v277, 1
      %v388 = vsel %vm353, %v385, %v387
      %v389 = vrot.slane %v278, 1
      %v390 = vrot.slane %v279, 1
      %v391 = vsel %vm353, %v389, %v390
      %v392 = vrot.slane %v280, 1
      %v393 = vsel %vm353, %v390, %v392
      %v394 = vrot.slane %v281, 1
      %v395 = vrot.slane %v282, 1
      %v396 = vsel %vm353, %v394, %v395
      %v397 = vrot.slane %v283, 1
      %v398 = vsel %vm353, %v395, %v397
      %v399 = vrot.slane %v284, 1
      %v400 = vrot.slane %v285, 1
      %v401 = vsel %vm353, %v399, %v400
      %v402 = vrot.slane %v286, 1
      %v403 = vsel %vm353, %v400, %v402
      %v404 = vrot.slane %v287, 1
      %v405 = vrot.slane %v288, 1
      %v406 = vsel %vm353, %v404, %v405
      %v407 = vrot.slane %v289, 1
      %v408 = vsel %vm353, %v405, %v407
      %v409 = vrot.slane %v290, 1
      %v410 = vrot.slane %v291, 1
      %v411 = vsel %vm353, %v409, %v410
      %v412 = vrot.slane %v292, 1
      %v413 = vsel %vm353, %v410, %v412
      %v414 = vrot.slane %v293, 1
      %v415 = vrot.slane %v294, 1
      %v416 = vsel %vm353, %v414, %v415
      %v417 = vrot.slane %v295, 1
      %v418 = vsel %vm353, %v415, %v417
      %v419 = vrot.slane %v296, 1
      %v420 = vrot.slane %v297, 1
      %v421 = vsel %vm353, %v419, %v420
      %v422 = vrot.slane %v298, 1
      %v423 = vsel %vm353, %v420, %v422
      %v424 = vrot.slane %v299, 1
      %v425 = vrot.slane %v300, 1
      %v426 = vsel %vm353, %v424, %v425
      %v427 = vrot.slane %v301, 1
      %v428 = vsel %vm353, %v425, %v427
      %v429 = vrot.slane %v302, 1
      %v430 = vrot.slane %v303, 1
      %v431 = vsel %vm353, %v429, %v430
      %v432 = vrot.slane %v304, 1
      %v433 = vsel %vm353, %v430, %v432
      %v466 = vadd.f32 %v221, %v356
      %v467 = vadd.f32 %v222, %v358
      %v468 = vadd.f32 %v223, %v361
      %v469 = vadd.f32 %v224, %v363
      %v470 = vadd.f32 %v225, %v366
      %v471 = vadd.f32 %v226, %v368
      %v472 = vadd.f32 %v227, %v371
      %v473 = vadd.f32 %v228, %v373
      %v474 = vadd.f32 %v229, %v376
      %v475 = vadd.f32 %v230, %v378
      %v476 = vadd.f32 %v231, %v381
      %v477 = vadd.f32 %v232, %v383
      %v478 = vadd.f32 %v233, %v386
      %v479 = vadd.f32 %v234, %v388
      %v480 = vadd.f32 %v235, %v391
      %v481 = vadd.f32 %v236, %v393
      %v482 = vadd.f32 %v237, %v396
      %v483 = vadd.f32 %v238, %v398
      %v484 = vadd.f32 %v239, %v401
      %v485 = vadd.f32 %v240, %v403
      %v486 = vadd.f32 %v241, %v406
      %v487 = vadd.f32 %v242, %v408
      %v488 = vadd.f32 %v243, %v411
      %v489 = vadd.f32 %v244, %v413
      %v490 = vadd.f32 %v245, %v416
      %v491 = vadd.f32 %v246, %v418
      %v492 = vadd.f32 %v247, %v421
      %v493 = vadd.f32 %v248, %v423
      %v494 = vadd.f32 %v249, %v426
      %v495 = vadd.f32 %v250, %v428
      %v496 = vadd.f32 %v251, %v431
      %v497 = vadd.f32 %v252, %v433
      %v498 = vlaneseq
      %v499 = vshrl.u32 %v498, 7
      %v500 = vsub.s32 2, %v499
      %v501 = vrot.slane %v215, %v500
      %v502 = vmul.f32 %v161, %v501
      %v503 = vmul.f32 %v162, %v501
      %v504 = vmul.f32 %v163, %v501
      %v505 = vmul.f32 %v164, %v501
      %v506 = vmul.f32 %v165, %v501
      %v507 = vmul.f32 %v166, %v501
      %v508 = vmul.f32 %v167, %v501
      %v509 = vmul.f32 %v168, %v501
      %v510 = vmul.f32 %v169, %v501
      %v511 = vmul.f32 %v170, %v501
      %v512 = vmul.f32 %v171, %v501
      %v513 = vmul.f32 %v172, %v501
      %v514 = vmul.f32 %v173, %v501
      %v515 = vmul.f32 %v174, %v501
      %v516 = vmul.f32 %v175, %v501
      %v517 = vmul.f32 %v176, %v501
      %v518 = vmul.f32 %v177, %v501
      %v519 = vmul.f32 %v178, %v501
      %v520 = vmul.f32 %v179, %v501
      %v521 = vmul.f32 %v180, %v501
      %v522 = vmul.f32 %v181, %v501
      %v523 = vmul.f32 %v182, %v501
      %v524 = vmul.f32 %v183, %v501
      %v525 = vmul.f32 %v184, %v501
      %v526 = vmul.f32 %v185, %v501
      %v527 = vmul.f32 %v186, %v501
      %v528 = vmul.f32 %v187, %v501
      %v529 = vmul.f32 %v188, %v501
      %v530 = vmul.f32 %v189, %v501
      %v531 = vmul.f32 %v190, %v501
      %v532 = vmul.f32 %v191, %v501
      %v533 = vmul.f32 %v192, %v501
      %v534 = vmul.f32 %v193, %v501
      %v535 = vmul.f32 %v194, %v501
      %v536 = vmul.f32 %v195, %v501
      %v537 = vmul.f32 %v196, %v501
      %v538 = vmul.f32 %v197, %v501
      %v539 = vmul.f32 %v198, %v501
      %v540 = vmul.f32 %v199, %v501
      %v541 = vmul.f32 %v200, %v501
      %v542 = vmul.f32 %v201, %v501
      %v543 = vmul.f32 %v202, %v501
      %v544 = vmul.f32 %v203, %v501
      %v545 = vmul.f32 %v204, %v501
      %v546 = vmul.f32 %v205, %v501
      %v547 = vmul.f32 %v206, %v501
      %v548 = vmul.f32 %v207, %v501
      %v549 = vmul.f32 %v208, %v501
      %vm598 = vcmask 1045504
      %v599 = vrot.slane %v502, 2
      %v600 = vrot.slane %v503, 2
      %v601 = vsel %vm598, %v599, %v600
      %v602 = vrot.slane %v504, 2
      %v603 = vsel %vm598, %v600, %v602
      %v604 = vrot.slane %v505, 2
      %v605 = vrot.slane %v506, 2
      %v606 = vsel %vm598, %v604, %v605
      %v607 = vrot.slane %v507, 2
      %v608 = vsel %vm598, %v605, %v607
      %v609 = vrot.slane %v508, 2
      %v610 = vrot.slane %v509, 2
      %v611 = vsel %vm598, %v609, %v610
      %v612 = vrot.slane %v510, 2
      %v613 = vsel %vm598, %v610, %v612
      %v614 = vrot.slane %v511, 2
      %v615 = vrot.slane %v512, 2
      %v616 = vsel %vm598, %v614, %v615
      %v617 = vrot.slane %v513, 2
      %v618 = vsel %vm598, %v615, %v617
      %v619 = vrot.slane %v514, 2
      %v620 = vrot.slane %v515, 2
      %v621 = vsel %vm598, %v619, %v620
      %v622 = vrot.slane %v516, 2
      %v623 = vsel %vm598, %v620, %v622
      %v624 = vrot.slane %v517, 2
      %v625 = vrot.slane %v518, 2
      %v626 = vsel %vm598, %v624, %v625
      %v627 = vrot.slane %v519, 2
      %v628 = vsel %vm598, %v625, %v627
      %v629 = vrot.slane %v520, 2
      %v630 = vrot.slane %v521, 2
      %v631 = vsel %vm598, %v629, %v630
      %v632 = vrot.slane %v522, 2
      %v633 = vsel %vm598, %v630, %v632
      %v634 = vrot.slane %v523, 2
      %v635 = vrot.slane %v524, 2
      %v636 = vsel %vm598, %v634, %v635
      %v637 = vrot.slane %v525, 2
      %v638 = vsel %vm598, %v635, %v637
      %v639 = vrot.slane %v526, 2
      %v640 = vrot.slane %v527, 2
      %v641 = vsel %vm598, %v639, %v640
      %v642 = vrot.slane %v528, 2
      %v643 = vsel %vm598, %v640, %v642
      %v644 = vrot.slane %v529, 2
      %v645 = vrot.slane %v530, 2
      %v646 = vsel %vm598, %v644, %v645
      %v647 = vrot.slane %v531, 2
      %v648 = vsel %vm598, %v645, %v647
      %v649 = vrot.slane %v532, 2
      %v650 = vrot.slane %v533, 2
      %v651 = vsel %vm598, %v649, %v650
      %v652 = vrot.slane %v534, 2
      %v653 = vsel %vm598, %v650, %v652
      %v654 = vrot.slane %v535, 2
      %v655 = vrot.slane %v536, 2
      %v656 = vsel %vm598, %v654, %v655
      %v657 = vrot.slane %v537, 2
      %v658 = vsel %vm598, %v655, %v657
      %v659 = vrot.slane %v538, 2
      %v660 = vrot.slane %v539, 2
      %v661 = vsel %vm598, %v659, %v660
      %v662 = vrot.slane %v540, 2
      %v663 = vsel %vm598, %v660, %v662
      %v664 = vrot.slane %v541, 2
      %v665 = vrot.slane %v542, 2
      %v666 = vsel %vm598, %v664, %v665
      %v667 = vrot.slane %v543, 2
      %v668 = vsel %vm598, %v665, %v667
      %v669 = vrot.slane %v544, 2
      %v670 = vrot.slane %v545, 2
      %v671 = vsel %vm598, %v669, %v670
      %v672 = vrot.slane %v546, 2
      %v673 = vsel %vm598, %v670, %v672
      %v674 = vrot.slane %v547, 2
      %v675 = vrot.slane %v548, 2
      %v676 = vsel %vm598, %v674, %v675
      %v677 = vrot.slane %v549, 2
      %v678 = vsel %vm598, %v675, %v677
      %v711 = vadd.f32 %v466, %v601
      %v712 = vadd.f32 %v467, %v603
      %v713 = vadd.f32 %v468, %v606
      %v714 = vadd.f32 %v469, %v608
      %v715 = vadd.f32 %v470, %v611
      %v716 = vadd.f32 %v471, %v613
      %v717 = vadd.f32 %v472, %v616
      %v718 = vadd.f32 %v473, %v618
      %v719 = vadd.f32 %v474, %v621
      %v720 = vadd.f32 %v475, %v623
      %v721 = vadd.f32 %v476, %v626
      %v722 = vadd.f32 %v477, %v628
      %v723 = vadd.f32 %v478, %v631
      %v724 = vadd.f32 %v479, %v633
      %v725 = vadd.f32 %v480, %v636
      %v726 = vadd.f32 %v481, %v638
      %v727 = vadd.f32 %v482, %v641
      %v728 = vadd.f32 %v483, %v643
      %v729 = vadd.f32 %v484, %v646
      %v730 = vadd.f32 %v485, %v648
      %v731 = vadd.f32 %v486, %v651
      %v732 = vadd.f32 %v487, %v653
      %v733 = vadd.f32 %v488, %v656
      %v734 = vadd.f32 %v489, %v658
      %v735 = vadd.f32 %v490, %v661
      %v736 = vadd.f32 %v491, %v663
      %v737 = vadd.f32 %v492, %v666
      %v738 = vadd.f32 %v493, %v668
      %v739 = vadd.f32 %v494, %v671
      %v740 = vadd.f32 %v495, %v673
      %v741 = vadd.f32 %v496, %v676
      %v742 = vadd.f32 %v497, %v678
      %v743 = vlaneseq
      %v744 = vshrl.u32 %v743, 7
      %v745 = vsub.s32 3, %v744
      %v746 = vrot.slane %v215, %v745
      %v747 = vmul.f32 %v164, %v746
      %v748 = vmul.f32 %v165, %v746
      %v749 = vmul.f32 %v167, %v746
      %v750 = vmul.f32 %v168, %v746
      %v751 = vmul.f32 %v170, %v746
      %v752 = vmul.f32 %v171, %v746
      %v753 = vmul.f32 %v173, %v746
      %v754 = vmul.f32 %v174, %v746
      %v755 = vmul.f32 %v176, %v746
      %v756 = vmul.f32 %v177, %v746
      %v757 = vmul.f32 %v179, %v746
      %v758 = vmul.f32 %v180, %v746
      %v759 = vmul.f32 %v182, %v746
      %v760 = vmul.f32 %v183, %v746
      %v761 = vmul.f32 %v185, %v746
      %v762 = vmul.f32 %v186, %v746
      %v763 = vmul.f32 %v188, %v746
      %v764 = vmul.f32 %v189, %v746
      %v765 = vmul.f32 %v191, %v746
      %v766 = vmul.f32 %v192, %v746
      %v767 = vmul.f32 %v194, %v746
      %v768 = vmul.f32 %v195, %v746
      %v769 = vmul.f32 %v197, %v746
      %v770 = vmul.f32 %v198, %v746
      %v771 = vmul.f32 %v200, %v746
      %v772 = vmul.f32 %v201, %v746
      %v773 = vmul.f32 %v203, %v746
      %v774 = vmul.f32 %v204, %v746
      %v775 = vmul.f32 %v206, %v746
      %v776 = vmul.f32 %v207, %v746
      %v777 = vmul.f32 %v209, %v746
      %v778 = vmul.f32 %v210, %v746
      %v779 = vadd.f32 %v711, %v747
      %v780 = vadd.f32 %v712, %v748
      %v781 = vadd.f32 %v713, %v749
      %v782 = vadd.f32 %v714, %v750
      %v783 = vadd.f32 %v715, %v751
      %v784 = vadd.f32 %v716, %v752
      %v785 = vadd.f32 %v717, %v753
      %v786 = vadd.f32 %v718, %v754
      %v787 = vadd.f32 %v719, %v755
      %v788 = vadd.f32 %v720, %v756
      %v789 = vadd.f32 %v721, %v757
      %v790 = vadd.f32 %v722, %v758
      %v791 = vadd.f32 %v723, %v759
      %v792 = vadd.f32 %v724, %v760
      %v793 = vadd.f32 %v725, %v761
      %v794 = vadd.f32 %v726, %v762
      %v795 = vadd.f32 %v727, %v763
      %v796 = vadd.f32 %v728, %v764
      %v797 = vadd.f32 %v729, %v765
      %v798 = vadd.f32 %v730, %v766
      %v799 = vadd.f32 %v731, %v767
      %v800 = vadd.f32 %v732, %v768
      %v801 = vadd.f32 %v733, %v769
      %v802 = vadd.f32 %v734, %v770
      %v803 = vadd.f32 %v735, %v771
      %v804 = vadd.f32 %v736, %v772
      %v805 = vadd.f32 %v737, %v773
      %v806 = vadd.f32 %v738, %v774
      %v807 = vadd.f32 %v739, %v775
      %v808 = vadd.f32 %v740, %v776
      %v809 = vadd.f32 %v741, %v777
      %v810 = vadd.f32 %v742, %v778
      %v811 = vlaneseq
      %v812 = vshrl.u32 %v811, 7
      %v813 = vsub.s32 4, %v812
      %v814 = vrot.slane %v215, %v813
      %v815 = vmul.f32 %v164, %v814
      %v816 = vmul.f32 %v165, %v814
      %v817 = vmul.f32 %v166, %v814
      %v818 = vmul.f32 %v167, %v814
      %v819 = vmul.f32 %v168, %v814
      %v820 = vmul.f32 %v169, %v814
      %v821 = vmul.f32 %v170, %v814
      %v822 = vmul.f32 %v171, %v814
      %v823 = vmul.f32 %v172, %v814
      %v824 = vmul.f32 %v173, %v814
      %v825 = vmul.f32 %v174, %v814
      %v826 = vmul.f32 %v175, %v814
      %v827 = vmul.f32 %v176, %v814
      %v828 = vmul.f32 %v177, %v814
      %v829 = vmul.f32 %v178, %v814
      %v830 = vmul.f32 %v179, %v814
      %v831 = vmul.f32 %v180, %v814
      %v832 = vmul.f32 %v181, %v814
      %v833 = vmul.f32 %v182, %v814
      %v834 = vmul.f32 %v183, %v814
      %v835 = vmul.f32 %v184, %v814
      %v836 = vmul.f32 %v185, %v814
      %v837 = vmul.f32 %v186, %v814
      %v838 = vmul.f32 %v187, %v814
      %v839 = vmul.f32 %v188, %v814
      %v840 = vmul.f32 %v189, %v814
      %v841 = vmul.f32 %v190, %v814
      %v842 = vmul.f32 %v191, %v814
      %v843 = vmul.f32 %v192, %v814
      %v844 = vmul.f32 %v193, %v814
      %v845 = vmul.f32 %v194, %v814
      %v846 = vmul.f32 %v195, %v814
      %v847 = vmul.f32 %v196, %v814
      %v848 = vmul.f32 %v197, %v814
      %v849 = vmul.f32 %v198, %v814
      %v850 = vmul.f32 %v199, %v814
      %v851 = vmul.f32 %v200, %v814
      %v852 = vmul.f32 %v201, %v814
      %v853 = vmul.f32 %v202, %v814
      %v854 = vmul.f32 %v203, %v814
      %v855 = vmul.f32 %v204, %v814
      %v856 = vmul.f32 %v205, %v814
      %v857 = vmul.f32 %v206, %v814
      %v858 = vmul.f32 %v207, %v814
      %v859 = vmul.f32 %v208, %v814
      %v860 = vmul.f32 %v209, %v814
      %v861 = vmul.f32 %v210, %v814
      %v862 = vmul.f32 %v211, %v814
      %v911 = vrot.slane %v815, 1
      %v912 = vrot.slane %v816, 1
      %v913 = vsel %vm353, %v911, %v912
      %v914 = vrot.slane %v817, 1
      %v915 = vsel %vm353, %v912, %v914
      %v916 = vrot.slane %v818, 1
      %v917 = vrot.slane %v819, 1
      %v918 = vsel %vm353, %v916, %v917
      %v919 = vrot.slane %v820, 1
      %v920 = vsel %vm353, %v917, %v919
      %v921 = vrot.slane %v821, 1
      %v922 = vrot.slane %v822, 1
      %v923 = vsel %vm353, %v921, %v922
      %v924 = vrot.slane %v823, 1
      %v925 = vsel %vm353, %v922, %v924
      %v926 = vrot.slane %v824, 1
      %v927 = vrot.slane %v825, 1
      %v928 = vsel %vm353, %v926, %v927
      %v929 = vrot.slane %v826, 1
      %v930 = vsel %vm353, %v927, %v929
      %v931 = vrot.slane %v827, 1
      %v932 = vrot.slane %v828, 1
      %v933 = vsel %vm353, %v931, %v932
      %v934 = vrot.slane %v829, 1
      %v935 = vsel %vm353, %v932, %v934
      %v936 = vrot.slane %v830, 1
      %v937 = vrot.slane %v831, 1
      %v938 = vsel %vm353, %v936, %v937
      %v939 = vrot.slane %v832, 1
      %v940 = vsel %vm353, %v937, %v939
      %v941 = vrot.slane %v833, 1
      %v942 = vrot.slane %v834, 1
      %v943 = vsel %vm353, %v941, %v942
      %v944 = vrot.slane %v835, 1
      %v945 = vsel %vm353, %v942, %v944
      %v946 = vrot.slane %v836, 1
      %v947 = vrot.slane %v837, 1
      %v948 = vsel %vm353, %v946, %v947
      %v949 = vrot.slane %v838, 1
      %v950 = vsel %vm353, %v947, %v949
      %v951 = vrot.slane %v839, 1
      %v952 = vrot.slane %v840, 1
      %v953 = vsel %vm353, %v951, %v952
      %v954 = vrot.slane %v841, 1
      %v955 = vsel %vm353, %v952, %v954
      %v956 = vrot.slane %v842, 1
      %v957 = vrot.slane %v843, 1
      %v958 = vsel %vm353, %v956, %v957
      %v959 = vrot.slane %v844, 1
      %v960 = vsel %vm353, %v957, %v959
      %v961 = vrot.slane %v845, 1
      %v962 = vrot.slane %v846, 1
      %v963 = vsel %vm353, %v961, %v962
      %v964 = vrot.slane %v847, 1
      %v965 = vsel %vm353, %v962, %v964
      %v966 = vrot.slane %v848, 1
      %v967 = vrot.slane %v849, 1
      %v968 = vsel %vm353, %v966, %v967
      %v969 = vrot.slane %v850, 1
      %v970 = vsel %vm353, %v967, %v969
      %v971 = vrot.slane %v851, 1
      %v972 = vrot.slane %v852, 1
      %v973 = vsel %vm353, %v971, %v972
      %v974 = vrot.slane %v853, 1
      %v975 = vsel %vm353, %v972, %v974
      %v976 = vrot.slane %v854, 1
      %v977 = vrot.slane %v855, 1
      %v978 = vsel %vm353, %v976, %v977
      %v979 = vrot.slane %v856, 1
      %v980 = vsel %vm353, %v977, %v979
      %v981 = vrot.slane %v857, 1
      %v982 = vrot.slane %v858, 1
      %v983 = vsel %vm353, %v981, %v982
      %v984 = vrot.slane %v859, 1
      %v985 = vsel %vm353, %v982, %v984
      %v986 = vrot.slane %v860, 1
      %v987 = vrot.slane %v861, 1
      %v988 = vsel %vm353, %v986, %v987
      %v989 = vrot.slane %v862, 1
      %v990 = vsel %vm353, %v987, %v989
      %v1023 = vadd.f32 %v779, %v913
      %v1024 = vadd.f32 %v780, %v915
      %v1025 = vadd.f32 %v781, %v918
      %v1026 = vadd.f32 %v782, %v920
      %v1027 = vadd.f32 %v783, %v923
      %v1028 = vadd.f32 %v784, %v925
      %v1029 = vadd.f32 %v785, %v928
      %v1030 = vadd.f32 %v786, %v930
      %v1031 = vadd.f32 %v787, %v933
      %v1032 = vadd.f32 %v788, %v935
      %v1033 = vadd.f32 %v789, %v938
      %v1034 = vadd.f32 %v790, %v940
      %v1035 = vadd.f32 %v791, %v943
      %v1036 = vadd.f32 %v792, %v945
      %v1037 = vadd.f32 %v793, %v948
      %v1038 = vadd.f32 %v794, %v950
      %v1039 = vadd.f32 %v795, %v953
      %v1040 = vadd.f32 %v796, %v955
      %v1041 = vadd.f32 %v797, %v958
      %v1042 = vadd.f32 %v798, %v960
      %v1043 = vadd.f32 %v799, %v963
      %v1044 = vadd.f32 %v800, %v965
      %v1045 = vadd.f32 %v801, %v968
      %v1046 = vadd.f32 %v802, %v970
      %v1047 = vadd.f32 %v803, %v973
      %v1048 = vadd.f32 %v804, %v975
      %v1049 = vadd.f32 %v805, %v978
      %v1050 = vadd.f32 %v806, %v980
      %v1051 = vadd.f32 %v807, %v983
      %v1052 = vadd.f32 %v808, %v985
      %v1053 = vadd.f32 %v809, %v988
      %v1054 = vadd.f32 %v810, %v990
      %v1055 = vlaneseq
      %v1056 = vshrl.u32 %v1055, 7
      %v1057 = vsub.s32 5, %v1056
      %v1058 = vrot.slane %v215, %v1057
      %v1059 = vmul.f32 %v164, %v1058
      %v1060 = vmul.f32 %v165, %v1058
      %v1061 = vmul.f32 %v166, %v1058
      %v1062 = vmul.f32 %v167, %v1058
      %v1063 = vmul.f32 %v168, %v1058
      %v1064 = vmul.f32 %v169, %v1058
      %v1065 = vmul.f32 %v170, %v1058
      %v1066 = vmul.f32 %v171, %v1058
      %v1067 = vmul.f32 %v172, %v1058
      %v1068 = vmul.f32 %v173, %v1058
      %v1069 = vmul.f32 %v174, %v1058
      %v1070 = vmul.f32 %v175, %v1058
      %v1071 = vmul.f32 %v176, %v1058
      %v1072 = vmul.f32 %v177, %v1058
      %v1073 = vmul.f32 %v178, %v1058
      %v1074 = vmul.f32 %v179, %v1058
      %v1075 = vmul.f32 %v180, %v1058
      %v1076 = vmul.f32 %v181, %v1058
      %v1077 = vmul.f32 %v182, %v1058
      %v1078 = vmul.f32 %v183, %v1058
      %v1079 = vmul.f32 %v184, %v1058
      %v1080 = vmul.f32 %v185, %v1058
      %v1081 = vmul.f32 %v186, %v1058
      %v1082 = vmul.f32 %v187, %v1058
      %v1083 = vmul.f32 %v188, %v1058
      %v1084 = vmul.f32 %v189, %v1058
      %v1085 = vmul.f32 %v190, %v1058
      %v1086 = vmul.f32 %v191, %v1058
      %v1087 = vmul.f32 %v192, %v1058
      %v1088 = vmul.f32 %v193, %v1058
      %v1089 = vmul.f32 %v194, %v1058
      %v1090 = vmul.f32 %v195, %v1058
      %v1091 = vmul.f32 %v196, %v1058
      %v1092 = vmul.f32 %v197, %v1058
      %v1093 = vmul.f32 %v198, %v1058
      %v1094 = vmul.f32 %v199, %v1058
      %v1095 = vmul.f32 %v200, %v1058
      %v1096 = vmul.f32 %v201, %v1058
      %v1097 = vmul.f32 %v202, %v1058
      %v1098 = vmul.f32 %v203, %v1058
      %v1099 = vmul.f32 %v204, %v1058
      %v1100 = vmul.f32 %v205, %v1058
      %v1101 = vmul.f32 %v206, %v1058
      %v1102 = vmul.f32 %v207, %v1058
      %v1103 = vmul.f32 %v208, %v1058
      %v1104 = vmul.f32 %v209, %v1058
      %v1105 = vmul.f32 %v210, %v1058
      %v1106 = vmul.f32 %v211, %v1058
      %v1155 = vrot.slane %v1059, 2
      %v1156 = vrot.slane %v1060, 2
      %v1157 = vsel %vm598, %v1155, %v1156
      %v1158 = vrot.slane %v1061, 2
      %v1159 = vsel %vm598, %v1156, %v1158
      %v1160 = vrot.slane %v1062, 2
      %v1161 = vrot.slane %v1063, 2
      %v1162 = vsel %vm598, %v1160, %v1161
      %v1163 = vrot.slane %v1064, 2
      %v1164 = vsel %vm598, %v1161, %v1163
      %v1165 = vrot.slane %v1065, 2
      %v1166 = vrot.slane %v1066, 2
      %v1167 = vsel %vm598, %v1165, %v1166
      %v1168 = vrot.slane %v1067, 2
      %v1169 = vsel %vm598, %v1166, %v1168
      %v1170 = vrot.slane %v1068, 2
      %v1171 = vrot.slane %v1069, 2
      %v1172 = vsel %vm598, %v1170, %v1171
      %v1173 = vrot.slane %v1070, 2
      %v1174 = vsel %vm598, %v1171, %v1173
      %v1175 = vrot.slane %v1071, 2
      %v1176 = vrot.slane %v1072, 2
      %v1177 = vsel %vm598, %v1175, %v1176
      %v1178 = vrot.slane %v1073, 2
      %v1179 = vsel %vm598, %v1176, %v1178
      %v1180 = vrot.slane %v1074, 2
      %v1181 = vrot.slane %v1075, 2
      %v1182 = vsel %vm598, %v1180, %v1181
      %v1183 = vrot.slane %v1076, 2
      %v1184 = vsel %vm598, %v1181, %v1183
      %v1185 = vrot.slane %v1077, 2
      %v1186 = vrot.slane %v1078, 2
      %v1187 = vsel %vm598, %v1185, %v1186
      %v1188 = vrot.slane %v1079, 2
      %v1189 = vsel %vm598, %v1186, %v1188
      %v1190 = vrot.slane %v1080, 2
      %v1191 = vrot.slane %v1081, 2
      %v1192 = vsel %vm598, %v1190, %v1191
      %v1193 = vrot.slane %v1082, 2
      %v1194 = vsel %vm598, %v1191, %v1193
      %v1195 = vrot.slane %v1083, 2
      %v1196 = vrot.slane %v1084, 2
      %v1197 = vsel %vm598, %v1195, %v1196
      %v1198 = vrot.slane %v1085, 2
      %v1199 = vsel %vm598, %v1196, %v1198
      %v1200 = vrot.slane %v1086, 2
      %v1201 = vrot.slane %v1087, 2
      %v1202 = vsel %vm598, %v1200, %v1201
      %v1203 = vrot.slane %v1088, 2
      %v1204 = vsel %vm598, %v1201, %v1203
      %v1205 = vrot.slane %v1089, 2
      %v1206 = vrot.slane %v1090, 2
      %v1207 = vsel %vm598, %v1205, %v1206
      %v1208 = vrot.slane %v1091, 2
      %v1209 = vsel %vm598, %v1206, %v1208
      %v1210 = vrot.slane %v1092, 2
      %v1211 = vrot.slane %v1093, 2
      %v1212 = vsel %vm598, %v1210, %v1211
      %v1213 = vrot.slane %v1094, 2
      %v1214 = vsel %vm598, %v1211, %v1213
      %v1215 = vrot.slane %v1095, 2
      %v1216 = vrot.slane %v1096, 2
      %v1217 = vsel %vm598, %v1215, %v1216
      %v1218 = vrot.slane %v1097, 2
      %v1219 = vsel %vm598, %v1216, %v1218
      %v1220 = vrot.slane %v1098, 2
      %v1221 = vrot.slane %v1099, 2
      %v1222 = vsel %vm598, %v1220, %v1221
      %v1223 = vrot.slane %v1100, 2
      %v1224 = vsel %vm598, %v1221, %v1223
      %v1225 = vrot.slane %v1101, 2
      %v1226 = vrot.slane %v1102, 2
      %v1227 = vsel %vm598, %v1225, %v1226
      %v1228 = vrot.slane %v1103, 2
      %v1229 = vsel %vm598, %v1226, %v1228
      %v1230 = vrot.slane %v1104, 2
      %v1231 = vrot.slane %v1105, 2
      %v1232 = vsel %vm598, %v1230, %v1231
      %v1233 = vrot.slane %v1106, 2
      %v1234 = vsel %vm598, %v1231, %v1233
      %v1267 = vadd.f32 %v1023, %v1157
      %v1268 = vadd.f32 %v1024, %v1159
      %v1269 = vadd.f32 %v1025, %v1162
      %v1270 = vadd.f32 %v1026, %v1164
      %v1271 = vadd.f32 %v1027, %v1167
      %v1272 = vadd.f32 %v1028, %v1169
      %v1273 = vadd.f32 %v1029, %v1172
      %v1274 = vadd.f32 %v1030, %v1174
      %v1275 = vadd.f32 %v1031, %v1177
      %v1276 = vadd.f32 %v1032, %v1179
      %v1277 = vadd.f32 %v1033, %v1182
      %v1278 = vadd.f32 %v1034, %v1184
      %v1279 = vadd.f32 %v1035, %v1187
      %v1280 = vadd.f32 %v1036, %v1189
      %v1281 = vadd.f32 %v1037, %v1192
      %v1282 = vadd.f32 %v1038, %v1194
      %v1283 = vadd.f32 %v1039, %v1197
      %v1284 = vadd.f32 %v1040, %v1199
      %v1285 = vadd.f32 %v1041, %v1202
      %v1286 = vadd.f32 %v1042, %v1204
      %v1287 = vadd.f32 %v1043, %v1207
      %v1288 = vadd.f32 %v1044, %v1209
      %v1289 = vadd.f32 %v1045, %v1212
      %v1290 = vadd.f32 %v1046, %v1214
      %v1291 = vadd.f32 %v1047, %v1217
      %v1292 = vadd.f32 %v1048, %v1219
      %v1293 = vadd.f32 %v1049, %v1222
      %v1294 = vadd.f32 %v1050, %v1224
      %v1295 = vadd.f32 %v1051, %v1227
      %v1296 = vadd.f32 %v1052, %v1229
      %v1297 = vadd.f32 %v1053, %v1232
      %v1298 = vadd.f32 %v1054, %v1234
      %v1299 = vlaneseq
      %v1300 = vshrl.u32 %v1299, 7
      %v1301 = vsub.s32 6, %v1300
      %v1302 = vrot.slane %v215, %v1301
      %v1303 = vmul.f32 %v167, %v1302
      %v1304 = vmul.f32 %v168, %v1302
      %v1305 = vmul.f32 %v170, %v1302
      %v1306 = vmul.f32 %v171, %v1302
      %v1307 = vmul.f32 %v173, %v1302
      %v1308 = vmul.f32 %v174, %v1302
      %v1309 = vmul.f32 %v176, %v1302
      %v1310 = vmul.f32 %v177, %v1302
      %v1311 = vmul.f32 %v179, %v1302
      %v1312 = vmul.f32 %v180, %v1302
      %v1313 = vmul.f32 %v182, %v1302
      %v1314 = vmul.f32 %v183, %v1302
      %v1315 = vmul.f32 %v185, %v1302
      %v1316 = vmul.f32 %v186, %v1302
      %v1317 = vmul.f32 %v188, %v1302
      %v1318 = vmul.f32 %v189, %v1302
      %v1319 = vmul.f32 %v191, %v1302
      %v1320 = vmul.f32 %v192, %v1302
      %v1321 = vmul.f32 %v194, %v1302
      %v1322 = vmul.f32 %v195, %v1302
      %v1323 = vmul.f32 %v197, %v1302
      %v1324 = vmul.f32 %v198, %v1302
      %v1325 = vmul.f32 %v200, %v1302
      %v1326 = vmul.f32 %v201, %v1302
      %v1327 = vmul.f32 %v203, %v1302
      %v1328 = vmul.f32 %v204, %v1302
      %v1329 = vmul.f32 %v206, %v1302
      %v1330 = vmul.f32 %v207, %v1302
      %v1331 = vmul.f32 %v209, %v1302
      %v1332 = vmul.f32 %v210, %v1302
      %v1333 = vmul.f32 %v212, %v1302
      %v1334 = vmul.f32 %v213, %v1302
      %v1335 = vadd.f32 %v1267, %v1303
      %v1336 = vadd.f32 %v1268, %v1304
      %v1337 = vadd.f32 %v1269, %v1305
      %v1338 = vadd.f32 %v1270, %v1306
      %v1339 = vadd.f32 %v1271, %v1307
      %v1340 = vadd.f32 %v1272, %v1308
      %v1341 = vadd.f32 %v1273, %v1309
      %v1342 = vadd.f32 %v1274, %v1310
      %v1343 = vadd.f32 %v1275, %v1311
      %v1344 = vadd.f32 %v1276, %v1312
      %v1345 = vadd.f32 %v1277, %v1313
      %v1346 = vadd.f32 %v1278, %v1314
      %v1347 = vadd.f32 %v1279, %v1315
      %v1348 = vadd.f32 %v1280, %v1316
      %v1349 = vadd.f32 %v1281, %v1317
      %v1350 = vadd.f32 %v1282, %v1318
      %v1351 = vadd.f32 %v1283, %v1319
      %v1352 = vadd.f32 %v1284, %v1320
      %v1353 = vadd.f32 %v1285, %v1321
      %v1354 = vadd.f32 %v1286, %v1322
      %v1355 = vadd.f32 %v1287, %v1323
      %v1356 = vadd.f32 %v1288, %v1324
      %v1357 = vadd.f32 %v1289, %v1325
      %v1358 = vadd.f32 %v1290, %v1326
      %v1359 = vadd.f32 %v1291, %v1327
      %v1360 = vadd.f32 %v1292, %v1328
      %v1361 = vadd.f32 %v1293, %v1329
      %v1362 = vadd.f32 %v1294, %v1330
      %v1363 = vadd.f32 %v1295, %v1331
      %v1364 = vadd.f32 %v1296, %v1332
      %v1365 = vadd.f32 %v1297, %v1333
      %v1366 = vadd.f32 %v1298, %v1334
      %v1367 = vlaneseq
      %v1368 = vshrl.u32 %v1367, 7
      %v1369 = vsub.s32 7, %v1368
      %v1370 = vrot.slane %v215, %v1369
      %v1371 = vmul.f32 %v167, %v1370
      %v1372 = vmul.f32 %v168, %v1370
      %v1373 = vmul.f32 %v169, %v1370
      %v1374 = vmul.f32 %v170, %v1370
      %v1375 = vmul.f32 %v171, %v1370
      %v1376 = vmul.f32 %v172, %v1370
      %v1377 = vmul.f32 %v173, %v1370
      %v1378 = vmul.f32 %v174, %v1370
      %v1379 = vmul.f32 %v175, %v1370
      %v1380 = vmul.f32 %v176, %v1370
      %v1381 = vmul.f32 %v177, %v1370
      %v1382 = vmul.f32 %v178, %v1370
      %v1383 = vmul.f32 %v179, %v1370
      %v1384 = vmul.f32 %v180, %v1370
      %v1385 = vmul.f32 %v181, %v1370
      %v1386 = vmul.f32 %v182, %v1370
      %v1387 = vmul.f32 %v183, %v1370
      %v1388 = vmul.f32 %v184, %v1370
      %v1389 = vmul.f32 %v185, %v1370
      %v1390 = vmul.f32 %v186, %v1370
      %v1391 = vmul.f32 %v187, %v1370
      %v1392 = vmul.f32 %v188, %v1370
      %v1393 = vmul.f32 %v189, %v1370
      %v1394 = vmul.f32 %v190, %v1370
      %v1395 = vmul.f32 %v191, %v1370
      %v1396 = vmul.f32 %v192, %v1370
      %v1397 = vmul.f32 %v193, %v1370
      %v1398 = vmul.f32 %v194, %v1370
      %v1399 = vmul.f32 %v195, %v1370
      %v1400 = vmul.f32 %v196, %v1370
      %v1401 = vmul.f32 %v197, %v1370
      %v1402 = vmul.f32 %v198, %v1370
      %v1403 = vmul.f32 %v199, %v1370
      %v1404 = vmul.f32 %v200, %v1370
      %v1405 = vmul.f32 %v201, %v1370
      %v1406 = vmul.f32 %v202, %v1370
      %v1407 = vmul.f32 %v203, %v1370
      %v1408 = vmul.f32 %v204, %v1370
      %v1409 = vmul.f32 %v205, %v1370
      %v1410 = vmul.f32 %v206, %v1370
      %v1411 = vmul.f32 %v207, %v1370
      %v1412 = vmul.f32 %v208, %v1370
      %v1413 = vmul.f32 %v209, %v1370
      %v1414 = vmul.f32 %v210, %v1370
      %v1415 = vmul.f32 %v211, %v1370
      %v1416 = vmul.f32 %v212, %v1370
      %v1417 = vmul.f32 %v213, %v1370
      %v1418 = vmul.f32 %v214, %v1370
      %v1467 = vrot.slane %v1371, 1
      %v1468 = vrot.slane %v1372, 1
      %v1469 = vsel %vm353, %v1467, %v1468
      %v1470 = vrot.slane %v1373, 1
      %v1471 = vsel %vm353, %v1468, %v1470
      %v1472 = vrot.slane %v1374, 1
      %v1473 = vrot.slane %v1375, 1
      %v1474 = vsel %vm353, %v1472, %v1473
      %v1475 = vrot.slane %v1376, 1
      %v1476 = vsel %vm353, %v1473, %v1475
      %v1477 = vrot.slane %v1377, 1
      %v1478 = vrot.slane %v1378, 1
      %v1479 = vsel %vm353, %v1477, %v1478
      %v1480 = vrot.slane %v1379, 1
      %v1481 = vsel %vm353, %v1478, %v1480
      %v1482 = vrot.slane %v1380, 1
      %v1483 = vrot.slane %v1381, 1
      %v1484 = vsel %vm353, %v1482, %v1483
      %v1485 = vrot.slane %v1382, 1
      %v1486 = vsel %vm353, %v1483, %v1485
      %v1487 = vrot.slane %v1383, 1
      %v1488 = vrot.slane %v1384, 1
      %v1489 = vsel %vm353, %v1487, %v1488
      %v1490 = vrot.slane %v1385, 1
      %v1491 = vsel %vm353, %v1488, %v1490
      %v1492 = vrot.slane %v1386, 1
      %v1493 = vrot.slane %v1387, 1
      %v1494 = vsel %vm353, %v1492, %v1493
      %v1495 = vrot.slane %v1388, 1
      %v1496 = vsel %vm353, %v1493, %v1495
      %v1497 = vrot.slane %v1389, 1
      %v1498 = vrot.slane %v1390, 1
      %v1499 = vsel %vm353, %v1497, %v1498
      %v1500 = vrot.slane %v1391, 1
      %v1501 = vsel %vm353, %v1498, %v1500
      %v1502 = vrot.slane %v1392, 1
      %v1503 = vrot.slane %v1393, 1
      %v1504 = vsel %vm353, %v1502, %v1503
      %v1505 = vrot.slane %v1394, 1
      %v1506 = vsel %vm353, %v1503, %v1505
      %v1507 = vrot.slane %v1395, 1
      %v1508 = vrot.slane %v1396, 1
      %v1509 = vsel %vm353, %v1507, %v1508
      %v1510 = vrot.slane %v1397, 1
      %v1511 = vsel %vm353, %v1508, %v1510
      %v1512 = vrot.slane %v1398, 1
      %v1513 = vrot.slane %v1399, 1
      %v1514 = vsel %vm353, %v1512, %v1513
      %v1515 = vrot.slane %v1400, 1
      %v1516 = vsel %vm353, %v1513, %v1515
      %v1517 = vrot.slane %v1401, 1
      %v1518 = vrot.slane %v1402, 1
      %v1519 = vsel %vm353, %v1517, %v1518
      %v1520 = vrot.slane %v1403, 1
      %v1521 = vsel %vm353, %v1518, %v1520
      %v1522 = vrot.slane %v1404, 1
      %v1523 = vrot.slane %v1405, 1
      %v1524 = vsel %vm353, %v1522, %v1523
      %v1525 = vrot.slane %v1406, 1
      %v1526 = vsel %vm353, %v1523, %v1525
      %v1527 = vrot.slane %v1407, 1
      %v1528 = vrot.slane %v1408, 1
      %v1529 = vsel %vm353, %v1527, %v1528
      %v1530 = vrot.slane %v1409, 1
      %v1531 = vsel %vm353, %v1528, %v1530
      %v1532 = vrot.slane %v1410, 1
      %v1533 = vrot.slane %v1411, 1
      %v1534 = vsel %vm353, %v1532, %v1533
      %v1535 = vrot.slane %v1412, 1
      %v1536 = vsel %vm353, %v1533, %v1535
      %v1537 = vrot.slane %v1413, 1
      %v1538 = vrot.slane %v1414, 1
      %v1539 = vsel %vm353, %v1537, %v1538
      %v1540 = vrot.slane %v1415, 1
      %v1541 = vsel %vm353, %v1538, %v1540
      %v1542 = vrot.slane %v1416, 1
      %v1543 = vrot.slane %v1417, 1
      %v1544 = vsel %vm353, %v1542, %v1543
      %v1545 = vrot.slane %v1418, 1
      %v1546 = vsel %vm353, %v1543, %v1545
      %v1579 = vadd.f32 %v1335, %v1469
      %v1580 = vadd.f32 %v1336, %v1471
      %v1581 = vadd.f32 %v1337, %v1474
      %v1582 = vadd.f32 %v1338, %v1476
      %v1583 = vadd.f32 %v1339, %v1479
      %v1584 = vadd.f32 %v1340, %v1481
      %v1585 = vadd.f32 %v1341, %v1484
      %v1586 = vadd.f32 %v1342, %v1486
      %v1587 = vadd.f32 %v1343, %v1489
      %v1588 = vadd.f32 %v1344, %v1491
      %v1589 = vadd.f32 %v1345, %v1494
      %v1590 = vadd.f32 %v1346, %v1496
      %v1591 = vadd.f32 %v1347, %v1499
      %v1592 = vadd.f32 %v1348, %v1501
      %v1593 = vadd.f32 %v1349, %v1504
      %v1594 = vadd.f32 %v1350, %v1506
      %v1595 = vadd.f32 %v1351, %v1509
      %v1596 = vadd.f32 %v1352, %v1511
      %v1597 = vadd.f32 %v1353, %v1514
      %v1598 = vadd.f32 %v1354, %v1516
      %v1599 = vadd.f32 %v1355, %v1519
      %v1600 = vadd.f32 %v1356, %v1521
      %v1601 = vadd.f32 %v1357, %v1524
      %v1602 = vadd.f32 %v1358, %v1526
      %v1603 = vadd.f32 %v1359, %v1529
      %v1604 = vadd.f32 %v1360, %v1531
      %v1605 = vadd.f32 %v1361, %v1534
      %v1606 = vadd.f32 %v1362, %v1536
      %v1607 = vadd.f32 %v1363, %v1539
      %v1608 = vadd.f32 %v1364, %v1541
      %v1609 = vadd.f32 %v1365, %v1544
      %v1610 = vadd.f32 %v1366, %v1546
      %v1611 = vlaneseq
      %v1612 = vshrl.u32 %v1611, 7
      %v1613 = vsub.s32 0, %v1612
      %v1614 = vrot.slane %v216, %v1613
      %v1615 = vmul.f32 %v167, %v1614
      %v1616 = vmul.f32 %v168, %v1614
      %v1617 = vmul.f32 %v169, %v1614
      %v1618 = vmul.f32 %v170, %v1614
      %v1619 = vmul.f32 %v171, %v1614
      %v1620 = vmul.f32 %v172, %v1614
      %v1621 = vmul.f32 %v173, %v1614
      %v1622 = vmul.f32 %v174, %v1614
      %v1623 = vmul.f32 %v175, %v1614
      %v1624 = vmul.f32 %v176, %v1614
      %v1625 = vmul.f32 %v177, %v1614
      %v1626 = vmul.f32 %v178, %v1614
      %v1627 = vmul.f32 %v179, %v1614
      %v1628 = vmul.f32 %v180, %v1614
      %v1629 = vmul.f32 %v181, %v1614
      %v1630 = vmul.f32 %v182, %v1614
      %v1631 = vmul.f32 %v183, %v1614
      %v1632 = vmul.f32 %v184, %v1614
      %v1633 = vmul.f32 %v185, %v1614
      %v1634 = vmul.f32 %v186, %v1614
      %v1635 = vmul.f32 %v187, %v1614
      %v1636 = vmul.f32 %v188, %v1614
      %v1637 = vmul.f32 %v189, %v1614
      %v1638 = vmul.f32 %v190, %v1614
      %v1639 = vmul.f32 %v191, %v1614
      %v1640 = vmul.f32 %v192, %v1614
      %v1641 = vmul.f32 %v193, %v1614
      %v1642 = vmul.f32 %v194, %v1614
      %v1643 = vmul.f32 %v195, %v1614
      %v1644 = vmul.f32 %v196, %v1614
      %v1645 = vmul.f32 %v197, %v1614
      %v1646 = vmul.f32 %v198, %v1614
      %v1647 = vmul.f32 %v199, %v1614
      %v1648 = vmul.f32 %v200, %v1614
      %v1649 = vmul.f32 %v201, %v1614
      %v1650 = vmul.f32 %v202, %v1614
      %v1651 = vmul.f32 %v203, %v1614
      %v1652 = vmul.f32 %v204, %v1614
      %v1653 = vmul.f32 %v205, %v1614
      %v1654 = vmul.f32 %v206, %v1614
      %v1655 = vmul.f32 %v207, %v1614
      %v1656 = vmul.f32 %v208, %v1614
      %v1657 = vmul.f32 %v209, %v1614
      %v1658 = vmul.f32 %v210, %v1614
      %v1659 = vmul.f32 %v211, %v1614
      %v1660 = vmul.f32 %v212, %v1614
      %v1661 = vmul.f32 %v213, %v1614
      %v1662 = vmul.f32 %v214, %v1614
      %v1711 = vrot.slane %v1615, 2
      %v1712 = vrot.slane %v1616, 2
      %v1713 = vsel %vm598, %v1711, %v1712
      %v1714 = vrot.slane %v1617, 2
      %v1715 = vsel %vm598, %v1712, %v1714
      %v1716 = vrot.slane %v1618, 2
      %v1717 = vrot.slane %v1619, 2
      %v1718 = vsel %vm598, %v1716, %v1717
      %v1719 = vrot.slane %v1620, 2
      %v1720 = vsel %vm598, %v1717, %v1719
      %v1721 = vrot.slane %v1621, 2
      %v1722 = vrot.slane %v1622, 2
      %v1723 = vsel %vm598, %v1721, %v1722
      %v1724 = vrot.slane %v1623, 2
      %v1725 = vsel %vm598, %v1722, %v1724
      %v1726 = vrot.slane %v1624, 2
      %v1727 = vrot.slane %v1625, 2
      %v1728 = vsel %vm598, %v1726, %v1727
      %v1729 = vrot.slane %v1626, 2
      %v1730 = vsel %vm598, %v1727, %v1729
      %v1731 = vrot.slane %v1627, 2
      %v1732 = vrot.slane %v1628, 2
      %v1733 = vsel %vm598, %v1731, %v1732
      %v1734 = vrot.slane %v1629, 2
      %v1735 = vsel %vm598, %v1732, %v1734
      %v1736 = vrot.slane %v1630, 2
      %v1737 = vrot.slane %v1631, 2
      %v1738 = vsel %vm598, %v1736, %v1737
      %v1739 = vrot.slane %v1632, 2
      %v1740 = vsel %vm598, %v1737, %v1739
      %v1741 = vrot.slane %v1633, 2
      %v1742 = vrot.slane %v1634, 2
      %v1743 = vsel %vm598, %v1741, %v1742
      %v1744 = vrot.slane %v1635, 2
      %v1745 = vsel %vm598, %v1742, %v1744
      %v1746 = vrot.slane %v1636, 2
      %v1747 = vrot.slane %v1637, 2
      %v1748 = vsel %vm598, %v1746, %v1747
      %v1749 = vrot.slane %v1638, 2
      %v1750 = vsel %vm598, %v1747, %v1749
      %v1751 = vrot.slane %v1639, 2
      %v1752 = vrot.slane %v1640, 2
      %v1753 = vsel %vm598, %v1751, %v1752
      %v1754 = vrot.slane %v1641, 2
      %v1755 = vsel %vm598, %v1752, %v1754
      %v1756 = vrot.slane %v1642, 2
      %v1757 = vrot.slane %v1643, 2
      %v1758 = vsel %vm598, %v1756, %v1757
      %v1759 = vrot.slane %v1644, 2
      %v1760 = vsel %vm598, %v1757, %v1759
      %v1761 = vrot.slane %v1645, 2
      %v1762 = vrot.slane %v1646, 2
      %v1763 = vsel %vm598, %v1761, %v1762
      %v1764 = vrot.slane %v1647, 2
      %v1765 = vsel %vm598, %v1762, %v1764
      %v1766 = vrot.slane %v1648, 2
      %v1767 = vrot.slane %v1649, 2
      %v1768 = vsel %vm598, %v1766, %v1767
      %v1769 = vrot.slane %v1650, 2
      %v1770 = vsel %vm598, %v1767, %v1769
      %v1771 = vrot.slane %v1651, 2
      %v1772 = vrot.slane %v1652, 2
      %v1773 = vsel %vm598, %v1771, %v1772
      %v1774 = vrot.slane %v1653, 2
      %v1775 = vsel %vm598, %v1772, %v1774
      %v1776 = vrot.slane %v1654, 2
      %v1777 = vrot.slane %v1655, 2
      %v1778 = vsel %vm598, %v1776, %v1777
      %v1779 = vrot.slane %v1656, 2
      %v1780 = vsel %vm598, %v1777, %v1779
      %v1781 = vrot.slane %v1657, 2
      %v1782 = vrot.slane %v1658, 2
      %v1783 = vsel %vm598, %v1781, %v1782
      %v1784 = vrot.slane %v1659, 2
      %v1785 = vsel %vm598, %v1782, %v1784
      %v1786 = vrot.slane %v1660, 2
      %v1787 = vrot.slane %v1661, 2
      %v1788 = vsel %vm598, %v1786, %v1787
      %v1789 = vrot.slane %v1662, 2
      %v1790 = vsel %vm598, %v1787, %v1789
      %v1823 = vadd.f32 %v1579, %v1713
      %v1824 = vadd.f32 %v1580, %v1715
      %v1825 = vadd.f32 %v1581, %v1718
      %v1826 = vadd.f32 %v1582, %v1720
      %v1827 = vadd.f32 %v1583, %v1723
      %v1828 = vadd.f32 %v1584, %v1725
      %v1829 = vadd.f32 %v1585, %v1728
      %v1830 = vadd.f32 %v1586, %v1730
      %v1831 = vadd.f32 %v1587, %v1733
      %v1832 = vadd.f32 %v1588, %v1735
      %v1833 = vadd.f32 %v1589, %v1738
      %v1834 = vadd.f32 %v1590, %v1740
      %v1835 = vadd.f32 %v1591, %v1743
      %v1836 = vadd.f32 %v1592, %v1745
      %v1837 = vadd.f32 %v1593, %v1748
      %v1838 = vadd.f32 %v1594, %v1750
      %v1839 = vadd.f32 %v1595, %v1753
      %v1840 = vadd.f32 %v1596, %v1755
      %v1841 = vadd.f32 %v1597, %v1758
      %v1842 = vadd.f32 %v1598, %v1760
      %v1843 = vadd.f32 %v1599, %v1763
      %v1844 = vadd.f32 %v1600, %v1765
      %v1845 = vadd.f32 %v1601, %v1768
      %v1846 = vadd.f32 %v1602, %v1770
      %v1847 = vadd.f32 %v1603, %v1773
      %v1848 = vadd.f32 %v1604, %v1775
      %v1849 = vadd.f32 %v1605, %v1778
      %v1850 = vadd.f32 %v1606, %v1780
      %v1851 = vadd.f32 %v1607, %v1783
      %v1852 = vadd.f32 %v1608, %v1785
      %v1853 = vadd.f32 %v1609, %v1788
      %v1854 = vadd.f32 %v1610, %v1790
      %v1855 = vld [vmem:[%s2] sm:$0x1]
      %vm1856 = vcmask 64512
      %v1857 = vsel %vm1856, %v1823, 0.0
      %v1858 = vsel %vm1856, %v1824, 0.0
      %v1859 = vadd.f32 %v1857, %v1858
      %v1860 = vsel %vm1856, %v1825, 0.0
      %v1861 = vadd.f32 %v1859, %v1860
      %v1862 = vsel %vm1856, %v1826, 0.0
      %v1863 = vadd.f32 %v1861, %v1862
      %v1864 = vsel %vm1856, %v1827, 0.0
      %v1865 = vadd.f32 %v1863, %v1864
      %v1866 = vsel %vm1856, %v1828, 0.0
      %v1867 = vadd.f32 %v1865, %v1866
      %v1868 = vsel %vm1856, %v1829, 0.0
      %v1869 = vadd.f32 %v1867, %v1868
      %v1870 = vsel %vm1856, %v1830, 0.0
      %v1871 = vadd.f32 %v1869, %v1870
      %v1872 = vsel %vm1856, %v1831, 0.0
      %v1873 = vadd.f32 %v1871, %v1872
      %v1874 = vsel %vm1856, %v1832, 0.0
      %v1875 = vadd.f32 %v1873, %v1874
      %v1876 = vsel %vm1856, %v1833, 0.0
      %v1877 = vadd.f32 %v1875, %v1876
      %v1878 = vsel %vm1856, %v1834, 0.0
      %v1879 = vadd.f32 %v1877, %v1878
      %v1880 = vsel %vm1856, %v1835, 0.0
      %v1881 = vadd.f32 %v1879, %v1880
      %v1882 = vsel %vm1856, %v1836, 0.0
      %v1883 = vadd.f32 %v1881, %v1882
      %v1884 = vsel %vm1856, %v1837, 0.0
      %v1885 = vadd.f32 %v1883, %v1884
      %v1886 = vsel %vm1856, %v1838, 0.0
      %v1887 = vadd.f32 %v1885, %v1886
      %v1888 = vsel %vm1856, %v1839, 0.0
      %v1889 = vadd.f32 %v1887, %v1888
      %v1890 = vsel %vm1856, %v1840, 0.0
      %v1891 = vadd.f32 %v1889, %v1890
      %v1892 = vsel %vm1856, %v1841, 0.0
      %v1893 = vadd.f32 %v1891, %v1892
      %v1894 = vsel %vm1856, %v1842, 0.0
      %v1895 = vadd.f32 %v1893, %v1894
      %v1896 = vsel %vm1856, %v1843, 0.0
      %v1897 = vadd.f32 %v1895, %v1896
      %v1898 = vsel %vm1856, %v1844, 0.0
      %v1899 = vadd.f32 %v1897, %v1898
      %v1900 = vsel %vm1856, %v1845, 0.0
      %v1901 = vadd.f32 %v1899, %v1900
      %v1902 = vsel %vm1856, %v1846, 0.0
      %v1903 = vadd.f32 %v1901, %v1902
      %v1904 = vsel %vm1856, %v1847, 0.0
      %v1905 = vadd.f32 %v1903, %v1904
      %v1906 = vsel %vm1856, %v1848, 0.0
      %v1907 = vadd.f32 %v1905, %v1906
      %v1908 = vsel %vm1856, %v1849, 0.0
      %v1909 = vadd.f32 %v1907, %v1908
      %v1910 = vsel %vm1856, %v1850, 0.0
      %v1911 = vadd.f32 %v1909, %v1910
      %v1912 = vsel %vm1856, %v1851, 0.0
      %v1913 = vadd.f32 %v1911, %v1912
      %v1914 = vsel %vm1856, %v1852, 0.0
      %v1915 = vadd.f32 %v1913, %v1914
      %v1916 = vsel %vm1856, %v1853, 0.0
      %v1917 = vadd.f32 %v1915, %v1916
      %v1918 = vsel %vm1856, %v1854, 0.0
      %v1919 = vadd.f32 %v1917, %v1918
      %v1920 = vrot.slane %v1919, 4
      %v1921 = vadd.f32 %v1919, %v1920
      %v1922 = vrot.slane %v1921, 2
      %v1923 = vadd.f32 %v1921, %v1922
      %v1924 = vrot.slane %v1923, 1
      %v1925 = vadd.f32 %v1923, %v1924
      %v1926 = vadd.f32 %v1855, %v1925
      %vm1927 = vcmask 57344
      %1928 = vst.msk [vmem:[%s2] sm:$0x1] %vm1927, %v1926
      %v1929 = vld [vmem:[%s3] sm:$0x1]
      %v1930 = vmul.f32 %v1823, %v1823
      %v1931 = vmul.f32 %v1824, %v1824
      %v1932 = vmul.f32 %v1825, %v1825
      %v1933 = vmul.f32 %v1826, %v1826
      %v1934 = vmul.f32 %v1827, %v1827
      %v1935 = vmul.f32 %v1828, %v1828
      %v1936 = vmul.f32 %v1829, %v1829
      %v1937 = vmul.f32 %v1830, %v1830
      %v1938 = vmul.f32 %v1831, %v1831
      %v1939 = vmul.f32 %v1832, %v1832
      %v1940 = vmul.f32 %v1833, %v1833
      %v1941 = vmul.f32 %v1834, %v1834
      %v1942 = vmul.f32 %v1835, %v1835
      %v1943 = vmul.f32 %v1836, %v1836
      %v1944 = vmul.f32 %v1837, %v1837
      %v1945 = vmul.f32 %v1838, %v1838
      %v1946 = vmul.f32 %v1839, %v1839
      %v1947 = vmul.f32 %v1840, %v1840
      %v1948 = vmul.f32 %v1841, %v1841
      %v1949 = vmul.f32 %v1842, %v1842
      %v1950 = vmul.f32 %v1843, %v1843
      %v1951 = vmul.f32 %v1844, %v1844
      %v1952 = vmul.f32 %v1845, %v1845
      %v1953 = vmul.f32 %v1846, %v1846
      %v1954 = vmul.f32 %v1847, %v1847
      %v1955 = vmul.f32 %v1848, %v1848
      %v1956 = vmul.f32 %v1849, %v1849
      %v1957 = vmul.f32 %v1850, %v1850
      %v1958 = vmul.f32 %v1851, %v1851
      %v1959 = vmul.f32 %v1852, %v1852
      %v1960 = vmul.f32 %v1853, %v1853
      %v1961 = vmul.f32 %v1854, %v1854
      %v1962 = vsel %vm1856, %v1930, 0.0
      %v1963 = vsel %vm1856, %v1931, 0.0
      %v1964 = vadd.f32 %v1962, %v1963
      %v1965 = vsel %vm1856, %v1932, 0.0
      %v1966 = vadd.f32 %v1964, %v1965
      %v1967 = vsel %vm1856, %v1933, 0.0
      %v1968 = vadd.f32 %v1966, %v1967
      %v1969 = vsel %vm1856, %v1934, 0.0
      %v1970 = vadd.f32 %v1968, %v1969
      %v1971 = vsel %vm1856, %v1935, 0.0
      %v1972 = vadd.f32 %v1970, %v1971
      %v1973 = vsel %vm1856, %v1936, 0.0
      %v1974 = vadd.f32 %v1972, %v1973
      %v1975 = vsel %vm1856, %v1937, 0.0
      %v1976 = vadd.f32 %v1974, %v1975
      %v1977 = vsel %vm1856, %v1938, 0.0
      %v1978 = vadd.f32 %v1976, %v1977
      %v1979 = vsel %vm1856, %v1939, 0.0
      %v1980 = vadd.f32 %v1978, %v1979
      %v1981 = vsel %vm1856, %v1940, 0.0
      %v1982 = vadd.f32 %v1980, %v1981
      %v1983 = vsel %vm1856, %v1941, 0.0
      %v1984 = vadd.f32 %v1982, %v1983
      %v1985 = vsel %vm1856, %v1942, 0.0
      %v1986 = vadd.f32 %v1984, %v1985
      %v1987 = vsel %vm1856, %v1943, 0.0
      %v1988 = vadd.f32 %v1986, %v1987
      %v1989 = vsel %vm1856, %v1944, 0.0
      %v1990 = vadd.f32 %v1988, %v1989
      %v1991 = vsel %vm1856, %v1945, 0.0
      %v1992 = vadd.f32 %v1990, %v1991
      %v1993 = vsel %vm1856, %v1946, 0.0
      %v1994 = vadd.f32 %v1992, %v1993
      %v1995 = vsel %vm1856, %v1947, 0.0
      %v1996 = vadd.f32 %v1994, %v1995
      %v1997 = vsel %vm1856, %v1948, 0.0
      %v1998 = vadd.f32 %v1996, %v1997
      %v1999 = vsel %vm1856, %v1949, 0.0
      %v2000 = vadd.f32 %v1998, %v1999
      %v2001 = vsel %vm1856, %v1950, 0.0
      %v2002 = vadd.f32 %v2000, %v2001
      %v2003 = vsel %vm1856, %v1951, 0.0
      %v2004 = vadd.f32 %v2002, %v2003
      %v2005 = vsel %vm1856, %v1952, 0.0
      %v2006 = vadd.f32 %v2004, %v2005
      %v2007 = vsel %vm1856, %v1953, 0.0
      %v2008 = vadd.f32 %v2006, %v2007
      %v2009 = vsel %vm1856, %v1954, 0.0
      %v2010 = vadd.f32 %v2008, %v2009
      %v2011 = vsel %vm1856, %v1955, 0.0
      %v2012 = vadd.f32 %v2010, %v2011
      %v2013 = vsel %vm1856, %v1956, 0.0
      %v2014 = vadd.f32 %v2012, %v2013
      %v2015 = vsel %vm1856, %v1957, 0.0
      %v2016 = vadd.f32 %v2014, %v2015
      %v2017 = vsel %vm1856, %v1958, 0.0
      %v2018 = vadd.f32 %v2016, %v2017
      %v2019 = vsel %vm1856, %v1959, 0.0
      %v2020 = vadd.f32 %v2018, %v2019
      %v2021 = vsel %vm1856, %v1960, 0.0
      %v2022 = vadd.f32 %v2020, %v2021
      %v2023 = vsel %vm1856, %v1961, 0.0
      %v2024 = vadd.f32 %v2022, %v2023
      %v2025 = vrot.slane %v2024, 4
      %v2026 = vadd.f32 %v2024, %v2025
      %v2027 = vrot.slane %v2026, 2
      %v2028 = vadd.f32 %v2026, %v2027
      %v2029 = vrot.slane %v2028, 1
      %v2030 = vadd.f32 %v2028, %v2029
      %v2031 = vadd.f32 %v1929, %v2030
      %2032 = vst.msk [vmem:[%s3] sm:$0x1] %vm1927, %v2031
      // Predicated region
      $region33: #{block_forward.7} parent=27 // pred_check
        %p2033 = pneg %p75
      $region34: #{block_forward.7} parent=27 // pred_check_branch
        %2035 = sbr.rel (%p2033) target = $region36
      $region35: #{block_forward.7} parent=27 // pred_region
        _
      $region36: #{block_forward.7} parent=27 // pred_fallthru
        _
      // Predicated region
      $region37: #{block_forward.7} parent=27 // pred_check
        %p2036 = pneg %p96
      $region38: #{block_forward.7} parent=27 // pred_check_branch
        %2038 = sbr.rel (%p2036) target = $region40
      $region39: #{block_forward.7} parent=27 // pred_region
        _
      $region40: #{block_forward.7} parent=27 // pred_fallthru
        _
      // Predicated region
      $region41: #{block_forward.7} parent=27 // pred_check
        %p2039 = pneg %p75
      $region42: #{block_forward.7} parent=27 // pred_check_branch
        %2041 = sbr.rel (%p2039) target = $region44
      $region43: #{block_forward.7} parent=27 // pred_region
        _
      $region44: #{block_forward.7} parent=27 // pred_fallthru
        _
      // Predicated region
      $region45: #{block_forward.7} parent=27 // pred_check
        %p2042 = pneg %p96
      $region46: #{block_forward.7} parent=27 // pred_check_branch
        %2044 = sbr.rel (%p2042) target = $region48
      $region47: #{block_forward.7} parent=27 // pred_region
        _
      $region48: #{block_forward.7} parent=27 // pred_fallthru
        _
    $region28: #{block_forward.7} parent=5 // pred_fallthru
      _
    %p2045 = scmp.le.s32.totalorder 2, %s10
    // Predicated region
    $region49: #{block_forward.7} parent=5 // pred_check
      %p2046 = pneg %p2045
    $region50: #{block_forward.7} parent=5 // pred_check_branch
      %2048 = sbr.rel (%p2046) target = $region52
    $region51: #{block_forward.7} parent=5 // pred_region
      %s2049 = ssub.s32 %s10, 2
    $region52: #{block_forward.7} parent=5 // pred_fallthru
      _
  $region6: #{block_forward.7} parent=0 // loop_footer
    %s14 = sadd.s32 1, %s10
  $region7: #{block_forward.7} parent=0 // loop_footer_branch
    %9 = sbr.rel target = $region3
  $region8: #{block_forward.7} parent=0 // loop_exit
    _

// kernel: block_forward.9
$region0: #{block_forward.9}
  #allocation0 [shape = 'u32[]', space=smem, size = 0x4, offset = 0x4, fixed_abs, tag = 'smem constant byte address 0x4 - core index']
  #allocation1 [shape = 'u32[144,128]{1,0:T(1,128)}', space=vmem, size = 0x12000, scoped, tag = 'internal scratch']
  %s0 = inlined_call_operand.vmem [shape: f32[512,8], index: 0, kind: input, shape index: {}]
  %s1 = inlined_call_operand.vmem [shape: f32[512,4], index: 1, kind: input, shape index: {}]
  %s2 = inlined_call_operand.vmem [shape: bf16[4,8], index: 2, kind: input, shape index: {}]
  %s3 = inlined_call_operand.vmem [shape: f32[1,8], index: 3, kind: input, shape index: {}]
  %s4 = inlined_call_operand.vmem [shape: f32[1,8], index: 4, kind: input, shape index: {}]
  %s5 = inlined_call_operand.vmem [shape: f32[1,8], index: 5, kind: input, shape index: {}]
  %s6 = inlined_call_operand.vmem [shape: f32[1,8], index: 6, kind: input, shape index: {}]
  %s7 = inlined_call_operand.vmem [shape: f32[512,8], index: 7, kind: output, shape index: {}]
  %s8 = sld [smem:[#allocation0]]
  $region61: #{block_forward.9} parent=0
    _
  %s10 = ssub.s32 1, %s8
  %s11 = scalar_select 0, %s10, %s8
  loop: start=0, step=1, limit=4
  $region2: #{block_forward.9} parent=0 // loop_pre_header
    _
  $region3: #{block_forward.9} parent=0 // loop_header
    %s13 = sphi 0, %s17
    %p14 = scmp.ge.s32.totalorder %s13, 4
    %s23 = sphi 0, %s25
    %s26 = sphi 0, %s23
    %s27 = sphi 0, %s26
    %s43 = sphi 0, %s27
    %s49 = sphi 0, %s51
    %s52 = sphi 0, %s49
    %s53 = sphi 0, %s52
    %s69 = sphi 0, %s53
    %s73 = sphi 0, %s73
    %s75 = sphi 0, %s73
    %s76 = sphi 0, %s75
    %s90 = sphi 0, %s76
    %s94 = sphi 0, %s94
    %s96 = sphi 0, %s94
    %s97 = sphi 0, %s96
    %s111 = sphi 0, %s97
    %s115 = sphi 0, %s115
    %s117 = sphi 0, %s115
    %s118 = sphi 0, %s117
    %s132 = sphi 0, %s118
    %s136 = sphi 0, %s136
    %s138 = sphi 0, %s136
    %s139 = sphi 0, %s138
    %s153 = sphi 0, %s139
    %s157 = sphi 0, %s157
    %s159 = sphi 0, %s157
    %s160 = sphi 0, %s159
    %s174 = sphi 0, %s160
    %s180 = sphi 0, %s182
    %s183 = sphi 0, %s180
    %s184 = sphi 0, %s183
    %s200 = sphi 0, %s184
  $region4: #{block_forward.9} parent=0 // loop_header_branch
    %16 = sbr.rel (%p14) target = $region8
  $region5: #{block_forward.9} parent=0 // loop_body
    %s18 = ssub.s32 %s13, 1
    %s19 = ssub.s32 %s13, 2
    %s20 = sadd.s32 %s13, 1
    %s21 = ssub.s32 %s13, %s20
    %p22 = scmp.eq.s32.totalorder %s21, 0
    %s24 = sadd.s32 %s23, 1
    %s25 = scalar_select %p22, %s23, %s24
    %p28 = pneg %p22
    %p29 = scmp.eq.s32.totalorder %s13, 1
    %p30 = por %p28, %p29
    %p31 = scmp.ne.s32.totalorder %s23, %s26
    %p32 = scmp.eq.s32.totalorder %s13, 0
    %p33 = por %p31, %p32
    %p34 = scmp.ne.s32.totalorder %s23, %s26
    %p35 = scmp.eq.s32.totalorder %s18, 1
    %p36 = por %p34, %p35
    %p37 = scmp.ne.s32.totalorder %s26, %s27
    %p38 = scmp.eq.s32.totalorder %s18, 0
    %p39 = por %p37, %p38
    %p40 = scmp.ne.s32.totalorder %s26, %s27
    %p41 = scmp.eq.s32.totalorder %s19, 1
    %p42 = por %p40, %p41
    %p44 = scmp.ne.s32.totalorder %s27, %s43
    %p45 = scmp.eq.s32.totalorder %s19, 0
    %p46 = por %p44, %p45
    %s47 = ssub.s32 %s13, %s20
    %p48 = scmp.eq.s32.totalorder %s47, 0
    %s50 = sadd.s32 %s49, 1
    %s51 = scalar_select %p48, %s49, %s50
    %p54 = pneg %p48
    %p55 = scmp.eq.s32.totalorder %s13, 1
    %p56 = por %p54, %p55
    %p57 = scmp.ne.s32.totalorder %s49, %s52
    %p58 = scmp.eq.s32.totalorder %s13, 0
    %p59 = por %p57, %p58
    %p60 = scmp.ne.s32.totalorder %s49, %s52
    %p61 = scmp.eq.s32.totalorder %s18, 1
    %p62 = por %p60, %p61
    %p63 = scmp.ne.s32.totalorder %s52, %s53
    %p64 = scmp.eq.s32.totalorder %s18, 0
    %p65 = por %p63, %p64
    %p66 = scmp.ne.s32.totalorder %s52, %s53
    %p67 = scmp.eq.s32.totalorder %s19, 1
    %p68 = por %p66, %p67
    %p70 = scmp.ne.s32.totalorder %s53, %s69
    %p71 = scmp.eq.s32.totalorder %s19, 0
    %p72 = por %p70, %p71
    %s74 = sadd.s32 %s73, 1
    %p77 = scmp.eq.s32.totalorder %s13, 1
    %p78 = scmp.ne.s32.totalorder %s73, %s75
    %p79 = scmp.eq.s32.totalorder %s13, 0
    %p80 = por %p78, %p79
    %p81 = scmp.ne.s32.totalorder %s73, %s75
    %p82 = scmp.eq.s32.totalorder %s18, 1
    %p83 = por %p81, %p82
    %p84 = scmp.ne.s32.totalorder %s75, %s76
    %p85 = scmp.eq.s32.totalorder %s18, 0
    %p86 = por %p84, %p85
    %p87 = scmp.ne.s32.totalorder %s75, %s76
    %p88 = scmp.eq.s32.totalorder %s19, 1
    %p89 = por %p87, %p88
    %p91 = scmp.ne.s32.totalorder %s76, %s90
    %p92 = scmp.eq.s32.totalorder %s19, 0
    %p93 = por %p91, %p92
    %s95 = sadd.s32 %s94, 1
    %p98 = scmp.eq.s32.totalorder %s13, 1
    %p99 = scmp.ne.s32.totalorder %s94, %s96
    %p100 = scmp.eq.s32.totalorder %s13, 0
    %p101 = por %p99, %p100
    %p102 = scmp.ne.s32.totalorder %s94, %s96
    %p103 = scmp.eq.s32.totalorder %s18, 1
    %p104 = por %p102, %p103
    %p105 = scmp.ne.s32.totalorder %s96, %s97
    %p106 = scmp.eq.s32.totalorder %s18, 0
    %p107 = por %p105, %p106
    %p108 = scmp.ne.s32.totalorder %s96, %s97
    %p109 = scmp.eq.s32.totalorder %s19, 1
    %p110 = por %p108, %p109
    %p112 = scmp.ne.s32.totalorder %s97, %s111
    %p113 = scmp.eq.s32.totalorder %s19, 0
    %p114 = por %p112, %p113
    %s116 = sadd.s32 %s115, 1
    %p119 = scmp.eq.s32.totalorder %s13, 1
    %p120 = scmp.ne.s32.totalorder %s115, %s117
    %p121 = scmp.eq.s32.totalorder %s13, 0
    %p122 = por %p120, %p121
    %p123 = scmp.ne.s32.totalorder %s115, %s117
    %p124 = scmp.eq.s32.totalorder %s18, 1
    %p125 = por %p123, %p124
    %p126 = scmp.ne.s32.totalorder %s117, %s118
    %p127 = scmp.eq.s32.totalorder %s18, 0
    %p128 = por %p126, %p127
    %p129 = scmp.ne.s32.totalorder %s117, %s118
    %p130 = scmp.eq.s32.totalorder %s19, 1
    %p131 = por %p129, %p130
    %p133 = scmp.ne.s32.totalorder %s118, %s132
    %p134 = scmp.eq.s32.totalorder %s19, 0
    %p135 = por %p133, %p134
    %s137 = sadd.s32 %s136, 1
    %p140 = scmp.eq.s32.totalorder %s13, 1
    %p141 = scmp.ne.s32.totalorder %s136, %s138
    %p142 = scmp.eq.s32.totalorder %s13, 0
    %p143 = por %p141, %p142
    %p144 = scmp.ne.s32.totalorder %s136, %s138
    %p145 = scmp.eq.s32.totalorder %s18, 1
    %p146 = por %p144, %p145
    %p147 = scmp.ne.s32.totalorder %s138, %s139
    %p148 = scmp.eq.s32.totalorder %s18, 0
    %p149 = por %p147, %p148
    %p150 = scmp.ne.s32.totalorder %s138, %s139
    %p151 = scmp.eq.s32.totalorder %s19, 1
    %p152 = por %p150, %p151
    %p154 = scmp.ne.s32.totalorder %s139, %s153
    %p155 = scmp.eq.s32.totalorder %s19, 0
    %p156 = por %p154, %p155
    %s158 = sadd.s32 %s157, 1
    %p161 = scmp.eq.s32.totalorder %s13, 1
    %p162 = scmp.ne.s32.totalorder %s157, %s159
    %p163 = scmp.eq.s32.totalorder %s13, 0
    %p164 = por %p162, %p163
    %p165 = scmp.ne.s32.totalorder %s157, %s159
    %p166 = scmp.eq.s32.totalorder %s18, 1
    %p167 = por %p165, %p166
    %p168 = scmp.ne.s32.totalorder %s159, %s160
    %p169 = scmp.eq.s32.totalorder %s18, 0
    %p170 = por %p168, %p169
    %p171 = scmp.ne.s32.totalorder %s159, %s160
    %p172 = scmp.eq.s32.totalorder %s19, 1
    %p173 = por %p171, %p172
    %p175 = scmp.ne.s32.totalorder %s160, %s174
    %p176 = scmp.eq.s32.totalorder %s19, 0
    %p177 = por %p175, %p176
    %s178 = ssub.s32 %s13, %s20
    %p179 = scmp.eq.s32.totalorder %s178, 0
    %s181 = sadd.s32 %s180, 1
    %s182 = scalar_select %p179, %s180, %s181
    %p185 = pneg %p179
    %p186 = scmp.eq.s32.totalorder %s13, 1
    %p187 = por %p185, %p186
    %p188 = scmp.ne.s32.totalorder %s180, %s183
    %p189 = scmp.eq.s32.totalorder %s13, 0
    %p190 = por %p188, %p189
    %p191 = scmp.ne.s32.totalorder %s180, %s183
    %p192 = scmp.eq.s32.totalorder %s18, 1
    %p193 = por %p191, %p192
    %p194 = scmp.ne.s32.totalorder %s183, %s184
    %p195 = scmp.eq.s32.totalorder %s18, 0
    %p196 = por %p194, %p195
    %p197 = scmp.ne.s32.totalorder %s183, %s184
    %p198 = scmp.eq.s32.totalorder %s19, 1
    %p199 = por %p197, %p198
    %p201 = scmp.ne.s32.totalorder %s184, %s200
    %p202 = scmp.eq.s32.totalorder %s19, 0
    %p203 = por %p201, %p202
    %p204 = scmp.le.s32.totalorder 1, %s13
    %p205 = scmp.lt.s32.totalorder %s13, 3
    %p206 = pnand %p204, %p205
    %p207 = pneg %p206
    // Predicated region
    $region9: #{block_forward.9} parent=5 // pred_check
      _
    $region10: #{block_forward.9} parent=5 // pred_check_branch
      %209 = sbr.rel (%p206) target = $region12
    $region11: #{block_forward.9} parent=5 // pred_region
      %s210 = ssub.s32 %s13, 1
      // Predicated region
      $region13: #{block_forward.9} parent=11 // pred_check
        %p211 = pneg %p86
      $region14: #{block_forward.9} parent=11 // pred_check_branch
        %213 = sbr.rel (%p211) target = $region16
      $region15: #{block_forward.9} parent=11 // pred_region
        _
      $region16: #{block_forward.9} parent=11 // pred_fallthru
        _
      // Predicated region
      $region17: #{block_forward.9} parent=11 // pred_check
        %p214 = pneg %p107
      $region18: #{block_forward.9} parent=11 // pred_check_branch
        %216 = sbr.rel (%p214) target = $region20
      $region19: #{block_forward.9} parent=11 // pred_region
        _
      $region20: #{block_forward.9} parent=11 // pred_fallthru
        _
      // Predicated region
      $region21: #{block_forward.9} parent=11 // pred_check
        %p217 = pneg %p128
      $region22: #{block_forward.9} parent=11 // pred_check_branch
        %219 = sbr.rel (%p217) target = $region24
      $region23: #{block_forward.9} parent=11 // pred_region
        _
      $region24: #{block_forward.9} parent=11 // pred_fallthru
        _
      // Predicated region
      $region25: #{block_forward.9} parent=11 // pred_check
        %p220 = pneg %p149
      $region26: #{block_forward.9} parent=11 // pred_check_branch
        %222 = sbr.rel (%p220) target = $region28
      $region27: #{block_forward.9} parent=11 // pred_region
        _
      $region28: #{block_forward.9} parent=11 // pred_fallthru
        _
      // Predicated region
      $region29: #{block_forward.9} parent=11 // pred_check
        %p223 = pneg %p170
      $region30: #{block_forward.9} parent=11 // pred_check_branch
        %225 = sbr.rel (%p223) target = $region32
      $region31: #{block_forward.9} parent=11 // pred_region
        _
      $region32: #{block_forward.9} parent=11 // pred_fallthru
        _
    $region12: #{block_forward.9} parent=5 // pred_fallthru
      _
    %p226 = scmp.lt.s32.totalorder %s13, 2
    // Predicated region
    $region33: #{block_forward.9} parent=5 // pred_check
      %p227 = pneg %p226
    $region34: #{block_forward.9} parent=5 // pred_check_branch
      %229 = sbr.rel (%p227) target = $region36
    $region35: #{block_forward.9} parent=5 // pred_region
      // Predicated region
      $region37: #{block_forward.9} parent=35 // pred_check
        %p230 = pneg %p33
      $region38: #{block_forward.9} parent=35 // pred_check_branch
        %232 = sbr.rel (%p230) target = $region40
      $region39: #{block_forward.9} parent=35 // pred_region
        %s233 = smul.u32 32, %s13
        %p234 = scmp.lt.s32.totalorder %s233, 63
        %s235 = scalar_select %p234, %s233, 63
        %s236 = smul.addr %s235, 8
        %s237 = scalar_lea.vmem %s0, %s236
        %s238 = smul.u32 32, %s13
      $region40: #{block_forward.9} parent=35 // pred_fallthru
        _
      // Predicated region
      $region41: #{block_forward.9} parent=35 // pred_check
        %p239 = pneg %p59
      $region42: #{block_forward.9} parent=35 // pred_check_branch
        %241 = sbr.rel (%p239) target = $region44
      $region43: #{block_forward.9} parent=35 // pred_region
        %s242 = smul.u32 32, %s13
        %p243 = scmp.lt.s32.totalorder %s242, 63
        %s244 = scalar_select %p243, %s242, 63
        %s245 = smul.addr %s244, 8
        %s246 = scalar_lea.vmem %s1, %s245
        %s247 = smul.u32 32, %s13
      $region44: #{block_forward.9} parent=35 // pred_fallthru
        _
    $region36: #{block_forward.9} parent=5 // pred_fallthru
      _
    %p248 = scmp.le.s32.totalorder 1, %s13
    %p249 = scmp.lt.s32.totalorder %s13, 3
    %p250 = pnand %p248, %p249
    %p251 = pneg %p250
    // Predicated region
    $region45: #{block_forward.9} parent=5 // pred_check
      _
    $region46: #{block_forward.9} parent=5 // pred_check_branch
      %253 = sbr.rel (%p250) target = $region48
    $region47: #{block_forward.9} parent=5 // pred_region
      %s254 = ssub.s32 %s13, 1
      %s255 = smul.u32 32, %s18
      %p256 = scmp.lt.s32.totalorder %s255, 63
      %s257 = scalar_select %p256, %s255, 63
      %s258 = smul.addr %s257, 8
      %s259 = scalar_lea.vmem %s0, %s258
      %p260 = pneg %p39
      %p261 = pneg %p36
      %s262 = smul.u32 32, %s18
      %p263 = scmp.lt.s32.totalorder %s262, 63
      %s264 = scalar_select %p263, %s262, 63
      %s265 = smul.addr %s264, 8
      %s266 = scalar_lea.vmem %s1, %s265
      %p267 = pneg %p65
      %p268 = pneg %p62
      %p269 = pneg %p86
      %p270 = pneg %p83
      %p271 = pneg %p107
      %p272 = pneg %p104
      %p273 = pneg %p128
      %p274 = pneg %p125
      %p275 = pneg %p149
      %p276 = pneg %p146
      %p277 = pneg %p170
      %p278 = pneg %p167
      %p279 = pneg %p196
      %p280 = pneg %p193
      %s281 = smul.u32 32, %s18
      %p282 = scmp.lt.s32.totalorder %s281, 63
      %s283 = scalar_select %p282, %s281, 63
      %s284 = smul.addr %s283, 8
      %s285 = scalar_lea.vmem %s7, %s284
      %s286 = smul.u32 32, %s18
      %p287 = scmp.lt.s32.totalorder %s286, 63
      %s288 = scalar_select %p287, %s286, 63
      %s289 = smul.addr %s288, 8
      %s290 = scalar_lea.vmem %s0, %s289
      %s291 = smul.u32 32, %s18
      %s292 = smul.u32 32, %s18
      %p293 = scmp.lt.s32.totalorder %s292, 63
      %s294 = scalar_select %p293, %s292, 63
      %s295 = smul.addr %s294, 8
      %s296 = scalar_lea.vmem %s1, %s295
      %s297 = smul.u32 32, %s18
      %s298 = smul.u32 32, %s18
      %p299 = scmp.lt.s32.totalorder %s298, 63
      %s300 = scalar_select %p299, %s298, 63
      %s301 = smul.addr %s300, 8
      %s302 = scalar_lea.vmem %s7, %s301
      %s303 = smul.u32 32, %s18
      %v305 = vld [vmem:[%s290] sm:$0xff]
      %v306 = vld [vmem:[%s290 + $0x8] sm:$0xff]
      %v307 = vld [vmem:[%s290 + $0x10] sm:$0xff]
      %v308 = vld [vmem:[%s290 + $0x18] sm:$0xff]
      %v309 = vld [vmem:[%s290 + $0x20] sm:$0xff]
      %v310 = vld [vmem:[%s290 + $0x28] sm:$0xff]
      %v311 = vld [vmem:[%s290 + $0x30] sm:$0xff]
      %v312 = vld [vmem:[%s290 + $0x38] sm:$0xff]
      %v313 = vld [vmem:[%s290 + $0x40] sm:$0xff]
      %v314 = vld [vmem:[%s290 + $0x48] sm:$0xff]
      %v315 = vld [vmem:[%s290 + $0x50] sm:$0xff]
      %v316 = vld [vmem:[%s290 + $0x58] sm:$0xff]
      %v317 = vld [vmem:[%s290 + $0x60] sm:$0xff]
      %v318 = vld [vmem:[%s290 + $0x68] sm:$0xff]
      %v319 = vld [vmem:[%s290 + $0x70] sm:$0xff]
      %v320 = vld [vmem:[%s290 + $0x78] sm:$0xff]
      %v321 = vld [vmem:[%s290 + $0x80] sm:$0xff]
      %v322 = vld [vmem:[%s290 + $0x88] sm:$0xff]
      %v323 = vld [vmem:[%s290 + $0x90] sm:$0xff]
      %v324 = vld [vmem:[%s290 + $0x98] sm:$0xff]
      %v325 = vld [vmem:[%s290 + $0xa0] sm:$0xff]
      %v326 = vld [vmem:[%s290 + $0xa8] sm:$0xff]
      %v327 = vld [vmem:[%s290 + $0xb0] sm:$0xff]
      %v328 = vld [vmem:[%s290 + $0xb8] sm:$0xff]
      %v329 = vld [vmem:[%s290 + $0xc0] sm:$0xff]
      %v330 = vld [vmem:[%s290 + $0xc8] sm:$0xff]
      %v331 = vld [vmem:[%s290 + $0xd0] sm:$0xff]
      %v332 = vld [vmem:[%s290 + $0xd8] sm:$0xff]
      %v333 = vld [vmem:[%s290 + $0xe0] sm:$0xff]
      %v334 = vld [vmem:[%s290 + $0xe8] sm:$0xff]
      %v335 = vld [vmem:[%s290 + $0xf0] sm:$0xff]
      %v336 = vld [vmem:[%s290 + $0xf8] sm:$0xff]
      %v337 = vld [vmem:[%s3] sm:$0x1]
      %v339 = vlaneseq
      %v340 = vshrl.u32 %v339, 7
      %v341 = vsub.s32 0, %v340
      %v342 = vrot.slane %v337, %v341
      %v344 = vmul.f32 %v305, %v342
      %v345 = vmul.f32 %v306, %v342
      %v346 = vmul.f32 %v307, %v342
      %v347 = vmul.f32 %v308, %v342
      %v348 = vmul.f32 %v309, %v342
      %v349 = vmul.f32 %v310, %v342
      %v350 = vmul.f32 %v311, %v342
      %v351 = vmul.f32 %v312, %v342
      %v352 = vmul.f32 %v313, %v342
      %v353 = vmul.f32 %v314, %v342
      %v354 = vmul.f32 %v315, %v342
      %v355 = vmul.f32 %v316, %v342
      %v356 = vmul.f32 %v317, %v342
      %v357 = vmul.f32 %v318, %v342
      %v358 = vmul.f32 %v319, %v342
      %v359 = vmul.f32 %v320, %v342
      %v360 = vmul.f32 %v321, %v342
      %v361 = vmul.f32 %v322, %v342
      %v362 = vmul.f32 %v323, %v342
      %v363 = vmul.f32 %v324, %v342
      %v364 = vmul.f32 %v325, %v342
      %v365 = vmul.f32 %v326, %v342
      %v366 = vmul.f32 %v327, %v342
      %v367 = vmul.f32 %v328, %v342
      %v368 = vmul.f32 %v329, %v342
      %v369 = vmul.f32 %v330, %v342
      %v370 = vmul.f32 %v331, %v342
      %v371 = vmul.f32 %v332, %v342
      %v372 = vmul.f32 %v333, %v342
      %v373 = vmul.f32 %v334, %v342
      %v374 = vmul.f32 %v335, %v342
      %v375 = vmul.f32 %v336, %v342
      %v376 = vld [vmem:[%s4] sm:$0x1]
      %v378 = vlaneseq
      %v379 = vshrl.u32 %v378, 7
      %v380 = vsub.s32 0, %v379
      %v381 = vrot.slane %v376, %v380
      %v383 = vadd.f32 %v344, %v381
      %v384 = vadd.f32 %v345, %v381
      %v385 = vadd.f32 %v346, %v381
      %v386 = vadd.f32 %v347, %v381
      %v387 = vadd.f32 %v348, %v381
      %v388 = vadd.f32 %v349, %v381
      %v389 = vadd.f32 %v350, %v381
      %v390 = vadd.f32 %v351, %v381
      %v391 = vadd.f32 %v352, %v381
      %v392 = vadd.f32 %v353, %v381
      %v393 = vadd.f32 %v354, %v381
      %v394 = vadd.f32 %v355, %v381
      %v395 = vadd.f32 %v356, %v381
      %v396 = vadd.f32 %v357, %v381
      %v397 = vadd.f32 %v358, %v381
      %v398 = vadd.f32 %v359, %v381
      %v399 = vadd.f32 %v360, %v381
      %v400 = vadd.f32 %v361, %v381
      %v401 = vadd.f32 %v362, %v381
      %v402 = vadd.f32 %v363, %v381
      %v403 = vadd.f32 %v364, %v381
      %v404 = vadd.f32 %v365, %v381
      %v405 = vadd.f32 %v366, %v381
      %v406 = vadd.f32 %v367, %v381
      %v407 = vadd.f32 %v368, %v381
      %v408 = vadd.f32 %v369, %v381
      %v409 = vadd.f32 %v370, %v381
      %v410 = vadd.f32 %v371, %v381
      %v411 = vadd.f32 %v372, %v381
      %v412 = vadd.f32 %v373, %v381
      %v413 = vadd.f32 %v374, %v381
      %v414 = vadd.f32 %v375, %v381
      %v415 = vld [vmem:[%s296] sm:$0xff]
      %v416 = vld [vmem:[%s296 + $0x8] sm:$0xff]
      %v417 = vld [vmem:[%s296 + $0x10] sm:$0xff]
      %v418 = vld [vmem:[%s296 + $0x18] sm:$0xff]
      %v419 = vld [vmem:[%s296 + $0x20] sm:$0xff]
      %v420 = vld [vmem:[%s296 + $0x28] sm:$0xff]
      %v421 = vld [vmem:[%s296 + $0x30] sm:$0xff]
      %v422 = vld [vmem:[%s296 + $0x38] sm:$0xff]
      %v423 = vld [vmem:[%s296 + $0x40] sm:$0xff]
      %v424 = vld [vmem:[%s296 + $0x48] sm:$0xff]
      %v425 = vld [vmem:[%s296 + $0x50] sm:$0xff]
      %v426 = vld [vmem:[%s296 + $0x58] sm:$0xff]
      %v427 = vld [vmem:[%s296 + $0x60] sm:$0xff]
      %v428 = vld [vmem:[%s296 + $0x68] sm:$0xff]
      %v429 = vld [vmem:[%s296 + $0x70] sm:$0xff]
      %v430 = vld [vmem:[%s296 + $0x78] sm:$0xff]
      %v431 = vld [vmem:[%s296 + $0x80] sm:$0xff]
      %v432 = vld [vmem:[%s296 + $0x88] sm:$0xff]
      %v433 = vld [vmem:[%s296 + $0x90] sm:$0xff]
      %v434 = vld [vmem:[%s296 + $0x98] sm:$0xff]
      %v435 = vld [vmem:[%s296 + $0xa0] sm:$0xff]
      %v436 = vld [vmem:[%s296 + $0xa8] sm:$0xff]
      %v437 = vld [vmem:[%s296 + $0xb0] sm:$0xff]
      %v438 = vld [vmem:[%s296 + $0xb8] sm:$0xff]
      %v439 = vld [vmem:[%s296 + $0xc0] sm:$0xff]
      %v440 = vld [vmem:[%s296 + $0xc8] sm:$0xff]
      %v441 = vld [vmem:[%s296 + $0xd0] sm:$0xff]
      %v442 = vld [vmem:[%s296 + $0xd8] sm:$0xff]
      %v443 = vld [vmem:[%s296 + $0xe0] sm:$0xff]
      %v444 = vld [vmem:[%s296 + $0xe8] sm:$0xff]
      %v445 = vld [vmem:[%s296 + $0xf0] sm:$0xff]
      %v446 = vld [vmem:[%s296 + $0xf8] sm:$0xff]
      %v447 = vpack.c.bf16 %v416, %v415
      %v448 = vpack.c.bf16 %v418, %v417
      %v449 = vpack.c.bf16 %v420, %v419
      %v450 = vpack.c.bf16 %v422, %v421
      %v451 = vpack.c.bf16 %v424, %v423
      %v452 = vpack.c.bf16 %v426, %v425
      %v453 = vpack.c.bf16 %v428, %v427
      %v454 = vpack.c.bf16 %v430, %v429
      %v455 = vpack.c.bf16 %v432, %v431
      %v456 = vpack.c.bf16 %v434, %v433
      %v457 = vpack.c.bf16 %v436, %v435
      %v458 = vpack.c.bf16 %v438, %v437
      %v459 = vpack.c.bf16 %v440, %v439
      %v460 = vpack.c.bf16 %v442, %v441
      %v461 = vpack.c.bf16 %v444, %v443
      %v462 = vpack.c.bf16 %v446, %v445
      %v463 = vld [vmem:[%s2] sm:$0x3]
      %vm464 = vcmask 31744
      %v466 = vsel %vm464, %v447, 0
      %v469 = vsel %vm464, %v448, 0
      %v472 = vsel %vm464, %v449, 0
      %v475 = vsel %vm464, %v450, 0
      %v478 = vsel %vm464, %v451, 0
      %v481 = vsel %vm464, %v452, 0
      %v484 = vsel %vm464, %v453, 0
      %v487 = vsel %vm464, %v454, 0
      %v490 = vsel %vm464, %v455, 0
      %v493 = vsel %vm464, %v456, 0
      %v496 = vsel %vm464, %v457, 0
      %v499 = vsel %vm464, %v458, 0
      %v502 = vsel %vm464, %v459, 0
      %v505 = vsel %vm464, %v460, 0
      %v508 = vsel %vm464, %v461, 0
      %v511 = vsel %vm464, %v462, 0
      %vm513 = vcmask 1041408
      %v515 = vsel %vm513, %v463, 0
      %517 = vmatprep.subr.bf16.mxu0 0
      %518 = vmatpush1.bf16.msra.mxu0 %v515
      %519 = vmatprep.subr.bf16.mxu0 0
      %520 = vmatpush1.bf16.msra.mxu0 0
      %521 = vmatprep.subr.bf16.mxu0 0
      %522 = vmatpush1.bf16.msra.mxu0 0
      %523 = vmatprep.subr.bf16.mxu0 0
      %524 = vmatpush1.bf16.msra.mxu0 0
      %525 = vmatprep.subr.bf16.mxu0 0
      %526 = vmatpush1.bf16.msra.mxu0 0
      %527 = vmatprep.subr.bf16.mxu0 0
      %528 = vmatpush1.bf16.msra.mxu0 0
      %529 = vmatprep.subr.bf16.mxu0 0
      %530 = vmatpush1.bf16.msra.mxu0 0
      %531 = vmatprep.subr.bf16.mxu0 0
      %532 = vmatpush1.bf16.msra.mxu0 0
      %533 = vmatprep.subr.bf16.mxu0 0
      %534 = vmatpush1.bf16.msra.mxu0 0
      %535 = vmatprep.subr.bf16.mxu0 0
      %536 = vmatpush1.bf16.msra.mxu0 0
      %537 = vmatprep.subr.bf16.mxu0 0
      %538 = vmatpush1.bf16.msra.mxu0 0
      %539 = vmatprep.subr.bf16.mxu0 0
      %540 = vmatpush1.bf16.msra.mxu0 0
      %541 = vmatprep.subr.bf16.mxu0 0
      %542 = vmatpush1.bf16.msra.mxu0 0
      %543 = vmatprep.subr.bf16.mxu0 0
      %544 = vmatpush1.bf16.msra.mxu0 0
      %545 = vmatprep.subr.bf16.mxu0 0
      %546 = vmatpush1.bf16.msra.mxu0 0
      %547 = vmatprep.subr.bf16.mxu0 0
      %548 = vmatpush1.bf16.msra.mxu0 0
      %549 = vmatprep.mubr.bf16.mxu0 0
      %550 = vmatmul.mubr.bf16.gmra.mrb[0].mxu0 %v466
      %v551 = vpop.f32.mrb[0].mxu0
      %v552 = vadd.f32 0.0, %v551
      %v553 = vpop.f32.mrb[0].mxu0
      %v554 = vpop.f32.mrb[0].mxu0
      %v555 = vadd.f32 0.0, %v554
      %v556 = vpop.f32.mrb[0].mxu0
      %557 = vmatprep.mubr.bf16.mxu0 0
      %558 = vmatmul.mubr.bf16.gmra.mrb[0].mxu0 %v469
      %v559 = vpop.f32.mrb[0].mxu0
      %v560 = vadd.f32 0.0, %v559
      %v561 = vpop.f32.mrb[0].mxu0
      %v562 = vpop.f32.mrb[0].mxu0
      %v563 = vadd.f32 0.0, %v562
      %v564 = vpop.f32.mrb[0].mxu0
      %565 = vmatprep.mubr.bf16.mxu0 0
      %566 = vmatmul.mubr.bf16.gmra.mrb[0].mxu0 %v472
      %v567 = vpop.f32.mrb[0].mxu0
      %v568 = vadd.f32 0.0, %v567
      %v569 = vpop.f32.mrb[0].mxu0
      %v570 = vpop.f32.mrb[0].mxu0
      %v571 = vadd.f32 0.0, %v570
      %v572 = vpop.f32.mrb[0].mxu0
      %573 = vmatprep.mubr.bf16.mxu0 0
      %574 = vmatmul.mubr.bf16.gmra.mrb[0].mxu0 %v475
      %v575 = vpop.f32.mrb[0].mxu0
      %v576 = vadd.f32 0.0, %v575
      %v577 = vpop.f32.mrb[0].mxu0
      %v578 = vpop.f32.mrb[0].mxu0
      %v579 = vadd.f32 0.0, %v578
      %v580 = vpop.f32.mrb[0].mxu0
      %581 = vmatprep.mubr.bf16.mxu0 0
      %582 = vmatmul.mubr.bf16.gmra.mrb[0].mxu0 %v478
      %v583 = vpop.f32.mrb[0].mxu0
      %v584 = vadd.f32 0.0, %v583
      %v585 = vpop.f32.mrb[0].mxu0
      %v586 = vpop.f32.mrb[0].mxu0
      %v587 = vadd.f32 0.0, %v586
      %v588 = vpop.f32.mrb[0].mxu0
      %589 = vmatprep.mubr.bf16.mxu0 0
      %590 = vmatmul.mubr.bf16.gmra.mrb[0].mxu0 %v481
      %v591 = vpop.f32.mrb[0].mxu0
      %v592 = vadd.f32 0.0, %v591
      %v593 = vpop.f32.mrb[0].mxu0
      %v594 = vpop.f32.mrb[0].mxu0
      %v595 = vadd.f32 0.0, %v594
      %v596 = vpop.f32.mrb[0].mxu0
      %597 = vmatprep.mubr.bf16.mxu0 0
      %598 = vmatmul.mubr.bf16.gmra.mrb[0].mxu0 %v484
      %v599 = vpop.f32.mrb[0].mxu0
      %v600 = vadd.f32 0.0, %v599
      %v601 = vpop.f32.mrb[0].mxu0
      %v602 = vpop.f32.mrb[0].mxu0
      %v603 = vadd.f32 0.0, %v602
      %v604 = vpop.f32.mrb[0].mxu0
      %605 = vmatprep.mubr.bf16.mxu0 0
      %606 = vmatmul.mubr.bf16.gmra.mrb[0].mxu0 %v487
      %v607 = vpop.f32.mrb[0].mxu0
      %v608 = vadd.f32 0.0, %v607
      %v609 = vpop.f32.mrb[0].mxu0
      %v610 = vpop.f32.mrb[0].mxu0
      %v611 = vadd.f32 0.0, %v610
      %v612 = vpop.f32.mrb[0].mxu0
      %613 = vmatprep.mubr.bf16.mxu0 0
      %614 = vmatmul.mubr.bf16.gmra.mrb[0].mxu0 %v490
      %v615 = vpop.f32.mrb[0].mxu0
      %v616 = vadd.f32 0.0, %v615
      %v617 = vpop.f32.mrb[0].mxu0
      %v618 = vpop.f32.mrb[0].mxu0
      %v619 = vadd.f32 0.0, %v618
      %v620 = vpop.f32.mrb[0].mxu0
      %621 = vmatprep.mubr.bf16.mxu0 0
      %622 = vmatmul.mubr.bf16.gmra.mrb[0].mxu0 %v493
      %v623 = vpop.f32.mrb[0].mxu0
      %v624 = vadd.f32 0.0, %v623
      %v625 = vpop.f32.mrb[0].mxu0
      %v626 = vpop.f32.mrb[0].mxu0
      %v627 = vadd.f32 0.0, %v626
      %v628 = vpop.f32.mrb[0].mxu0
      %629 = vmatprep.mubr.bf16.mxu0 0
      %630 = vmatmul.mubr.bf16.gmra.mrb[0].mxu0 %v496
      %v631 = vpop.f32.mrb[0].mxu0
      %v632 = vadd.f32 0.0, %v631
      %v633 = vpop.f32.mrb[0].mxu0
      %v634 = vpop.f32.mrb[0].mxu0
      %v635 = vadd.f32 0.0, %v634
      %v636 = vpop.f32.mrb[0].mxu0
      %637 = vmatprep.mubr.bf16.mxu0 0
      %638 = vmatmul.mubr.bf16.gmra.mrb[0].mxu0 %v499
      %v639 = vpop.f32.mrb[0].mxu0
      %v640 = vadd.f32 0.0, %v639
      %v641 = vpop.f32.mrb[0].mxu0
      %v642 = vpop.f32.mrb[0].mxu0
      %v643 = vadd.f32 0.0, %v642
      %v644 = vpop.f32.mrb[0].mxu0
      %645 = vmatprep.mubr.bf16.mxu0 0
      %646 = vmatmul.mubr.bf16.gmra.mrb[0].mxu0 %v502
      %v647 = vpop.f32.mrb[0].mxu0
      %v648 = vadd.f32 0.0, %v647
      %v649 = vpop.f32.mrb[0].mxu0
      %v650 = vpop.f32.mrb[0].mxu0
      %v651 = vadd.f32 0.0, %v650
      %v652 = vpop.f32.mrb[0].mxu0
      %653 = vmatprep.mubr.bf16.mxu0 0
      %654 = vmatmul.mubr.bf16.gmra.mrb[0].mxu0 %v505
      %v655 = vpop.f32.mrb[0].mxu0
      %v656 = vadd.f32 0.0, %v655
      %v657 = vpop.f32.mrb[0].mxu0
      %v658 = vpop.f32.mrb[0].mxu0
      %v659 = vadd.f32 0.0, %v658
      %v660 = vpop.f32.mrb[0].mxu0
      %661 = vmatprep.mubr.bf16.mxu0 0
      %662 = vmatmul.mubr.bf16.gmra.mrb[0].mxu0 %v508
      %v663 = vpop.f32.mrb[0].mxu0
      %v664 = vadd.f32 0.0, %v663
      %v665 = vpop.f32.mrb[0].mxu0
      %v666 = vpop.f32.mrb[0].mxu0
      %v667 = vadd.f32 0.0, %v666
      %v668 = vpop.f32.mrb[0].mxu0
      %669 = vmatprep.mubr.bf16.mxu0 0
      %670 = vmatmul.mubr.bf16.gmra.mrb[0].mxu0 %v511
      %v671 = vpop.f32.mrb[0].mxu0
      %v672 = vadd.f32 0.0, %v671
      %v673 = vpop.f32.mrb[0].mxu0
      %v674 = vpop.f32.mrb[0].mxu0
      %v675 = vadd.f32 0.0, %v674
      %v676 = vpop.f32.mrb[0].mxu0
      %677 = vdwg.mxu0
      %v678 = vld [vmem:[%s5] sm:$0x1]
      %v680 = vlaneseq
      %v681 = vshrl.u32 %v680, 7
      %v682 = vsub.s32 0, %v681
      %v683 = vrot.slane %v678, %v682
      %v685 = vmul.f32 %v552, %v683
      %v686 = vmul.f32 %v555, %v683
      %v687 = vmul.f32 %v560, %v683
      %v688 = vmul.f32 %v563, %v683
      %v689 = vmul.f32 %v568, %v683
      %v690 = vmul.f32 %v571, %v683
      %v691 = vmul.f32 %v576, %v683
      %v692 = vmul.f32 %v579, %v683
      %v693 = vmul.f32 %v584, %v683
      %v694 = vmul.f32 %v587, %v683
      %v695 = vmul.f32 %v592, %v683
      %v696 = vmul.f32 %v595, %v683
      %v697 = vmul.f32 %v600, %v683
      %v698 = vmul.f32 %v603, %v683
      %v699 = vmul.f32 %v608, %v683
      %v700 = vmul.f32 %v611, %v683
      %v701 = vmul.f32 %v616, %v683
      %v702 = vmul.f32 %v619, %v683
      %v703 = vmul.f32 %v624, %v683
      %v704 = vmul.f32 %v627, %v683
      %v705 = vmul.f32 %v632, %v683
      %v706 = vmul.f32 %v635, %v683
      %v707 = vmul.f32 %v640, %v683
      %v708 = vmul.f32 %v643, %v683
      %v709 = vmul.f32 %v648, %v683
      %v710 = vmul.f32 %v651, %v683
      %v711 = vmul.f32 %v656, %v683
      %v712 = vmul.f32 %v659, %v683
      %v713 = vmul.f32 %v664, %v683
      %v714 = vmul.f32 %v667, %v683
      %v715 = vmul.f32 %v672, %v683
      %v716 = vmul.f32 %v675, %v683
      %v717 = vld [vmem:[%s6] sm:$0x1]
      %v719 = vlaneseq
      %v720 = vshrl.u32 %v719, 7
      %v721 = vsub.s32 0, %v720
      %v722 = vrot.slane %v717, %v721
      %v724 = vadd.f32 %v685, %v722
      %v725 = vadd.f32 %v686, %v722
      %v726 = vadd.f32 %v687, %v722
      %v727 = vadd.f32 %v688, %v722
      %v728 = vadd.f32 %v689, %v722
      %v729 = vadd.f32 %v690, %v722
      %v730 = vadd.f32 %v691, %v722
      %v731 = vadd.f32 %v692, %v722
      %v732 = vadd.f32 %v693, %v722
      %v733 = vadd.f32 %v694, %v722
      %v734 = vadd.f32 %v695, %v722
      %v735 = vadd.f32 %v696, %v722
      %v736 = vadd.f32 %v697, %v722
      %v737 = vadd.f32 %v698, %v722
      %v738 = vadd.f32 %v699, %v722
      %v739 = vadd.f32 %v700, %v722
      %v740 = vadd.f32 %v701, %v722
      %v741 = vadd.f32 %v702, %v722
      %v742 = vadd.f32 %v703, %v722
      %v743 = vadd.f32 %v704, %v722
      %v744 = vadd.f32 %v705, %v722
      %v745 = vadd.f32 %v706, %v722
      %v746 = vadd.f32 %v707, %v722
      %v747 = vadd.f32 %v708, %v722
      %v748 = vadd.f32 %v709, %v722
      %v749 = vadd.f32 %v710, %v722
      %v750 = vadd.f32 %v711, %v722
      %v751 = vadd.f32 %v712, %v722
      %v752 = vadd.f32 %v713, %v722
      %v753 = vadd.f32 %v714, %v722
      %v754 = vadd.f32 %v715, %v722
      %v755 = vadd.f32 %v716, %v722
      %v756 = vadd.f32 %v383, %v724
      %v757 = vadd.f32 %v384, %v725
      %v758 = vadd.f32 %v385, %v726
      %v759 = vadd.f32 %v386, %v727
      %v760 = vadd.f32 %v387, %v728
      %v761 = vadd.f32 %v388, %v729
      %v762 = vadd.f32 %v389, %v730
      %v763 = vadd.f32 %v390, %v731
      %v764 = vadd.f32 %v391, %v732
      %v765 = vadd.f32 %v392, %v733
      %v766 = vadd.f32 %v393, %v734
      %v767 = vadd.f32 %v394, %v735
      %v768 = vadd.f32 %v395, %v736
      %v769 = vadd.f32 %v396, %v737
      %v770 = vadd.f32 %v397, %v738
      %v771 = vadd.f32 %v398, %v739
      %v772 = vadd.f32 %v399, %v740
      %v773 = vadd.f32 %v400, %v741
      %v774 = vadd.f32 %v401, %v742
      %v775 = vadd.f32 %v402, %v743
      %v776 = vadd.f32 %v403, %v744
      %v777 = vadd.f32 %v404, %v745
      %v778 = vadd.f32 %v405, %v746
      %v779 = vadd.f32 %v406, %v747
      %v780 = vadd.f32 %v407, %v748
      %v781 = vadd.f32 %v408, %v749
      %v782 = vadd.f32 %v409, %v750
      %v783 = vadd.f32 %v410, %v751
      %v784 = vadd.f32 %v411, %v752
      %v785 = vadd.f32 %v412, %v753
      %v786 = vadd.f32 %v413, %v754
      %v787 = vadd.f32 %v414, %v755
      %vm788 = vcmask 64512
      %789 = vst.msk [vmem:[%s302] sm:$0xff] %vm788, %v756
      %790 = vst.msk [vmem:[%s302 + $0x8] sm:$0xff] %vm788, %v757
      %791 = vst.msk [vmem:[%s302 + $0x10] sm:$0xff] %vm788, %v758
      %792 = vst.msk [vmem:[%s302 + $0x18] sm:$0xff] %vm788, %v759
      %793 = vst.msk [vmem:[%s302 + $0x20] sm:$0xff] %vm788, %v760
      %794 = vst.msk [vmem:[%s302 + $0x28] sm:$0xff] %vm788, %v761
      %795 = vst.msk [vmem:[%s302 + $0x30] sm:$0xff] %vm788, %v762
      %796 = vst.msk [vmem:[%s302 + $0x38] sm:$0xff] %vm788, %v763
      %797 = vst.msk [vmem:[%s302 + $0x40] sm:$0xff] %vm788, %v764
      %798 = vst.msk [vmem:[%s302 + $0x48] sm:$0xff] %vm788, %v765
      %799 = vst.msk [vmem:[%s302 + $0x50] sm:$0xff] %vm788, %v766
      %800 = vst.msk [vmem:[%s302 + $0x58] sm:$0xff] %vm788, %v767
      %801 = vst.msk [vmem:[%s302 + $0x60] sm:$0xff] %vm788, %v768
      %802 = vst.msk [vmem:[%s302 + $0x68] sm:$0xff] %vm788, %v769
      %803 = vst.msk [vmem:[%s302 + $0x70] sm:$0xff] %vm788, %v770
      %804 = vst.msk [vmem:[%s302 + $0x78] sm:$0xff] %vm788, %v771
      %805 = vst.msk [vmem:[%s302 + $0x80] sm:$0xff] %vm788, %v772
      %806 = vst.msk [vmem:[%s302 + $0x88] sm:$0xff] %vm788, %v773
      %807 = vst.msk [vmem:[%s302 + $0x90] sm:$0xff] %vm788, %v774
      %808 = vst.msk [vmem:[%s302 + $0x98] sm:$0xff] %vm788, %v775
      %809 = vst.msk [vmem:[%s302 + $0xa0] sm:$0xff] %vm788, %v776
      %810 = vst.msk [vmem:[%s302 + $0xa8] sm:$0xff] %vm788, %v777
      %811 = vst.msk [vmem:[%s302 + $0xb0] sm:$0xff] %vm788, %v778
      %812 = vst.msk [vmem:[%s302 + $0xb8] sm:$0xff] %vm788, %v779
      %813 = vst.msk [vmem:[%s302 + $0xc0] sm:$0xff] %vm788, %v780
      %814 = vst.msk [vmem:[%s302 + $0xc8] sm:$0xff] %vm788, %v781
      %815 = vst.msk [vmem:[%s302 + $0xd0] sm:$0xff] %vm788, %v782
      %816 = vst.msk [vmem:[%s302 + $0xd8] sm:$0xff] %vm788, %v783
      %817 = vst.msk [vmem:[%s302 + $0xe0] sm:$0xff] %vm788, %v784
      %818 = vst.msk [vmem:[%s302 + $0xe8] sm:$0xff] %vm788, %v785
      %819 = vst.msk [vmem:[%s302 + $0xf0] sm:$0xff] %vm788, %v786
      %820 = vst.msk [vmem:[%s302 + $0xf8] sm:$0xff] %vm788, %v787
      %s821 = smul.u32 32, %s18
      %p822 = scmp.lt.s32.totalorder %s821, 63
      %s823 = scalar_select %p822, %s821, 63
      %s824 = smul.addr %s823, 8
      %s825 = scalar_lea.vmem %s7, %s824
      // Predicated region
      $region49: #{block_forward.9} parent=47 // pred_check
        %p826 = pneg %p193
      $region50: #{block_forward.9} parent=47 // pred_check_branch
        %828 = sbr.rel (%p826) target = $region52
      $region51: #{block_forward.9} parent=47 // pred_region
        %s829 = smul.u32 32, %s18
      $region52: #{block_forward.9} parent=47 // pred_fallthru
        _
    $region48: #{block_forward.9} parent=5 // pred_fallthru
      _
    %p830 = scmp.le.s32.totalorder 2, %s13
    // Predicated region
    $region53: #{block_forward.9} parent=5 // pred_check
      %p831 = pneg %p830
    $region54: #{block_forward.9} parent=5 // pred_check_branch
      %833 = sbr.rel (%p831) target = $region56
    $region55: #{block_forward.9} parent=5 // pred_region
      %s834 = ssub.s32 %s13, 2
      // Predicated region
      $region57: #{block_forward.9} parent=55 // pred_check
        %p835 = pneg %p199
      $region58: #{block_forward.9} parent=55 // pred_check_branch
        %837 = sbr.rel (%p835) target = $region60
      $region59: #{block_forward.9} parent=55 // pred_region
        %s838 = smul.u32 32, %s19
        %p839 = scmp.lt.s32.totalorder %s838, 63
        %s840 = scalar_select %p839, %s838, 63
        %s841 = smul.addr %s840, 8
        %s842 = scalar_lea.vmem %s7, %s841
      $region60: #{block_forward.9} parent=55 // pred_fallthru
        _
    $region56: #{block_forward.9} parent=5 // pred_fallthru
      _
  $region6: #{block_forward.9} parent=0 // loop_footer
    %s17 = sadd.s32 1, %s13
  $region7: #{block_forward.9} parent=0 // loop_footer_branch
    %12 = sbr.rel target = $region3
  $region8: #{block_forward.9} parent=0 // loop_exit
    _

</llo_original>
